<compile_context>
chip_gen: v5e
topology: v5e:2x2
jax: 0.10.0
libtpu: 0.0.40
codegen_flags: <defaults>
</compile_context>

<pallas_src>
import functools

import numpy as np
import jax
import jax.numpy as jnp
from jax import lax
from jax.experimental import pallas as pl
from jax.experimental.pallas import tpu as pltpu

EPS = 1e-5  # PyTorch InstanceNorm2d default (affine=False, biased variance)


# ----------------------- in-kernel helpers (value ops) ---------------------- #
def _conv_fused(x_bf, pad_mat, w_slab, K, Wp, Lw):
    """One conv layer = pad-matmul + a single deep-contraction MXU dot.

    x_bf    : (Cin, Lin)   bf16 activation in the caller's wrap layout.
    pad_mat : (Lin, Hp*Wp) bf16 0/1 matrix: pad + drop wrap columns (exact).
    w_slab  : (Cout, K*K*Cin) bf16, column order (ky*K + kx)*Cin + ci.
    Returns (Cout, Lw) f32 in wrap layout (valid (oy,ox) at lane oy*Wp + ox).
    """
    xp = jnp.dot(x_bf, pad_mat, preferred_element_type=jnp.float32)
    xp = xp.astype(jnp.bfloat16)                       # exact: pad_mat is 0/1
    pieces = [xp[:, ky * Wp + kx: ky * Wp + kx + Lw]
              for ky in range(K) for kx in range(K)]
    stacked = jnp.concatenate(pieces, axis=0)          # (K*K*Cin, Lw) bf16
    return jnp.dot(w_slab, stacked, preferred_element_type=jnp.float32)


def _instance_norm(y, mcol, relu):
    """InstanceNorm2d(affine=False) on a wrap-layout (C, Lw) f32 activation.

    mcol is a precomputed (Lw, 1) column with 1/npix on valid lanes and 0 on
    wrap lanes, so both stats are masked MXU mat-vec dots; centered two-pass
    variance for better parity with PyTorch.
    """
    mean = jnp.dot(y, mcol, preferred_element_type=jnp.float32)     # (C, 1)
    d = y - mean
    var = jnp.dot(d * d, mcol, preferred_element_type=jnp.float32)  # biased
    out = d * lax.rsqrt(var + EPS)
    if relu:
        out = jnp.maximum(out, 0.0)
    return out


# --------------------------- fused decoder kernel --------------------------- #
def _decoder_kernel(x_ref, s0_ref, pres_ref, pup0_ref, pup1_ref, pout_ref,
                    m1_ref, m2_ref, m3_ref,
                    wres_ref, wup0_ref, wup1_ref, wout_ref, bout_ref,
                    o_ref, *, H, W):
    # --- static wrap-layout geometry (pitch = padded width of producing conv)
    Wp1 = W + 2                       # ResBlock stage: HxW @ pitch W+2
    L1 = (H - 1) * Wp1 + W            # 286 for 16x16
    H2, W2 = H + 2, W + 2             # after up0: 18x18 @ pitch 20
    Wp2 = W2 + 2
    L2 = (H2 - 1) * Wp2 + W2          # 358
    H3, W3 = H2 + 2, W2 + 2           # after up1: 20x20 @ pitch 22
    Wp3 = W3 + 2
    L3 = (H3 - 1) * Wp3 + W3          # 438
    Wp4 = W3 + 6                      # head conv padded width 26
    L4 = (H3 - 1) * Wp4 + W3          # 514

    p_res = pres_ref[...]
    m1, m2, m3 = m1_ref[...], m2_ref[...], m3_ref[...]

    # dense (Cin, H*W) bf16 -> wrap-layout f32 residual carrier (one MXU dot).
    x = jnp.dot(x_ref[...], s0_ref[...], preferred_element_type=jnp.float32)

    # res = Sequential(shared ResBlock, resblock0..2):
    #   ReflPad1+Conv3+IN+ReLU, ReflPad1+Conv3+IN, residual add.
    # Conv biases are cancelled exactly by the IN mean subtraction.
    for i in range(4):
        h = _conv_fused(x.astype(jnp.bfloat16), p_res, wres_ref[2 * i],
                        3, Wp1, L1)
        h = _instance_norm(h, m1, relu=True)
        h = _conv_fused(h.astype(jnp.bfloat16), p_res, wres_ref[2 * i + 1],
                        3, Wp1, L1)
        h = _instance_norm(h, m1, relu=False)
        x = x + h

    # up = conv_up(C) + conv_up(C//2):
    # ConvTranspose2d(k3,s1,p0,bias=False) == zero-pad(2) + conv(flipped w).
    y = _conv_fused(x.astype(jnp.bfloat16), pup0_ref[...], wup0_ref[...],
                    3, Wp2, L2)
    y = _instance_norm(y, m2, relu=True)
    y = _conv_fused(y.astype(jnp.bfloat16), pup1_ref[...], wup1_ref[...],
                    3, Wp3, L3)
    y = _instance_norm(y, m3, relu=True)

    # output head: ReflectionPad2d(3) + Conv2d(k=7, bias=True) + Tanh
    z = _conv_fused(y.astype(jnp.bfloat16), pout_ref[...], wout_ref[...],
                    7, Wp4, L4)
    z = z + bout_ref[...]                               # (Cout,1) broadcast
    o_ref[...] = jnp.tanh(z)


# --------------------- host-side constant matrix builders ------------------- #
def _reflect_idx(t, n):
    if t < 0:
        return -t
    if t >= n:
        return 2 * n - 2 - t
    return t


def _dense_to_wrap_matrix(H, W, pitch):
    """(H*W, (H-1)*pitch+W) 0/1: row-major dense -> lane-strided wrap layout."""
    L = (H - 1) * pitch + W
    m = np.zeros((H * W, L), np.float32)
    for y in range(H):
        for x in range(W):
            m[y * W + x, y * pitch + x] = 1.0
    return m


def _pad_matrix(H, W, pitch, pad, mode):
    """(Lin, Hp*Wp) 0/1: wrap-layout input (valid (y,x) at y*pitch+x) ->
    reflect/zero padded dense (H+2p)x(W+2p) flat; wrap columns are dropped."""
    Hp, Wpad = H + 2 * pad, W + 2 * pad
    Lin = (H - 1) * pitch + W
    m = np.zeros((Lin, Hp * Wpad), np.float32)
    for py in range(Hp):
        for px in range(Wpad):
            ty, tx = py - pad, px - pad
            if mode == "reflect":
                sy, sx = _reflect_idx(ty, H), _reflect_idx(tx, W)
            else:  # zero padding (ConvTranspose2d "full" convolution)
                if not (0 <= ty < H and 0 <= tx < W):
                    continue
                sy, sx = ty, tx
            m[sy * pitch + sx, py * Wpad + px] = 1.0
    return m


def _stat_col(H, W, pitch):
    """(L,1) f32: 1/(H*W) on valid lanes of the wrap layout, 0 on wrap lanes."""
    L = (H - 1) * pitch + W
    m = np.zeros((L, 1), np.float32)
    for y in range(H):
        m[y * pitch: y * pitch + W, 0] = 1.0 / (H * W)
    return m


# ------------------------------ host wrapper -------------------------------- #
def decoder_forward(params, x_nchw):
    N, c_in, H, W = x_nchw.shape
    c_out = params["out_w"].shape[0]
    Ho, Wo = H + 4, W + 4                     # two k3/s1/p0 deconvs: +2 each

    # --- static geometry (must match _decoder_kernel) ---
    Wp1 = W + 2
    H2, W2 = H + 2, W + 2
    Wp2 = W2 + 2
    H3, W3 = H2 + 2, W2 + 2
    Wp3 = W3 + 2
    Wp4 = W3 + 6
    L4 = (H3 - 1) * Wp4 + W3

    # --- precomputed 0/1 layout / pad matrices (bf16, applied on the MXU) ---
    s0 = jnp.asarray(_dense_to_wrap_matrix(H, W, Wp1), jnp.bfloat16)
    p_res = jnp.asarray(_pad_matrix(H, W, Wp1, 1, "reflect"), jnp.bfloat16)
    p_up0 = jnp.asarray(_pad_matrix(H, W, Wp1, 2, "zero"), jnp.bfloat16)
    p_up1 = jnp.asarray(_pad_matrix(H2, W2, Wp2, 2, "zero"), jnp.bfloat16)
    p_out = jnp.asarray(_pad_matrix(H3, W3, Wp3, 3, "reflect"), jnp.bfloat16)
    m1 = jnp.asarray(_stat_col(H, W, Wp1), jnp.float32)
    m2 = jnp.asarray(_stat_col(H2, W2, Wp2), jnp.float32)
    m3 = jnp.asarray(_stat_col(H3, W3, Wp3), jnp.float32)

    # --- weights: torch layouts -> (Cout, K*K*Cin) bf16 slabs whose column
    #     order matches the in-kernel (ky, kx, ci) tap stacking ---
    def conv_w_slab(w):        # torch Conv2d weight (Cout, Cin, K, K)
        Cout, Cin, K, _ = w.shape
        return jnp.transpose(w, (0, 2, 3, 1)).reshape(Cout, K * K * Cin) \
                  .astype(jnp.bfloat16)

    def convT_w_slab(w):       # torch ConvTranspose2d weight (Cin, Cout, K, K)
        w = jnp.transpose(w[:, :, ::-1, ::-1], (1, 0, 2, 3))   # equiv. Conv2d w
        return conv_w_slab(w)

    # ResBlock Conv2d biases are exactly cancelled by the following
    # InstanceNorm2d(affine=False) mean subtraction, so they are not passed.
    w_res = jnp.stack([conv_w_slab(params[n][k])
                       for n in ("shared", "r0", "r1", "r2")
                       for k in ("w1", "w2")])                  # (8, C, 9C)
    w_up0 = convT_w_slab(params["up0_w"])
    w_up1 = convT_w_slab(params["up1_w"])
    w_out = conv_w_slab(params["out_w"])
    b_out = params["out_b"].reshape(c_out, 1).astype(jnp.float32)

    # ship the activation as bf16 (first conv casts to bf16 anyway)
    x_flat = x_nchw.reshape(N, c_in, H * W).astype(jnp.bfloat16)
    kernel = functools.partial(_decoder_kernel, H=H, W=W)

    out_wrap = pl.pallas_call(
        kernel,
        out_shape=jax.ShapeDtypeStruct((N, c_out, L4), jnp.float32),
        grid=(N,),
        in_specs=[
            pl.BlockSpec((None, c_in, H * W), lambda n: (n, 0, 0)),
            pl.BlockSpec(s0.shape, lambda n: (0, 0)),
            pl.BlockSpec(p_res.shape, lambda n: (0, 0)),
            pl.BlockSpec(p_up0.shape, lambda n: (0, 0)),
            pl.BlockSpec(p_up1.shape, lambda n: (0, 0)),
            pl.BlockSpec(p_out.shape, lambda n: (0, 0)),
            pl.BlockSpec(m1.shape, lambda n: (0, 0)),
            pl.BlockSpec(m2.shape, lambda n: (0, 0)),
            pl.BlockSpec(m3.shape, lambda n: (0, 0)),
            pl.BlockSpec(w_res.shape, lambda n: (0, 0, 0)),
            pl.BlockSpec(w_up0.shape, lambda n: (0, 0)),
            pl.BlockSpec(w_up1.shape, lambda n: (0, 0)),
            pl.BlockSpec(w_out.shape, lambda n: (0, 0)),
            pl.BlockSpec(b_out.shape, lambda n: (0, 0)),
        ],
        out_specs=pl.BlockSpec((None, c_out, L4), lambda n: (n, 0, 0)),
        compiler_params=pltpu.CompilerParams(
            dimension_semantics=("parallel",)),
    )(x_flat, s0, p_res, p_up0, p_up1, p_out, m1, m2, m3,
      w_res, w_up0, w_up1, w_out, b_out)

    # host-side: gather the valid Ho x Wo pixels out of the lane-strided layout
    cols = (np.arange(Ho)[:, None] * Wp4 + np.arange(Wo)[None, :]) \
        .reshape(-1).astype(np.int32)
    out = jnp.take(out_wrap, jnp.asarray(cols), axis=2)
    return out.reshape(N, c_out, Ho, Wo)


# ------------------------------ parameter init ------------------------------ #
def init_params(key, channel_in, channel_out):
    c = channel_in
    assert c % 4 == 0
    keys = iter(jax.random.split(key, 20))

    def w(k, shape, fan_in):
        return jax.random.normal(k, shape, jnp.float32) / jnp.sqrt(fan_in)

    p = {}
    # TODO(synk): shared_layer is constructor-injected in the PyTorch Decoder;
    # modeled here as the standard UNIT shared-latent ResBlock(channel_in).
    for name in ("shared", "r0", "r1", "r2"):
        p[name] = {
            "w1": w(next(keys), (c, c, 3, 3), 9 * c),
            "b1": 0.1 * jax.random.normal(next(keys), (c,), jnp.float32),  # absorbed by IN
            "w2": w(next(keys), (c, c, 3, 3), 9 * c),
            "b2": 0.1 * jax.random.normal(next(keys), (c,), jnp.float32),  # absorbed by IN
        }
    p["up0_w"] = w(next(keys), (c, c // 2, 3, 3), 9 * c)          # ConvTranspose2d, bias=False
    p["up1_w"] = w(next(keys), (c // 2, c // 4, 3, 3), 9 * (c // 2))
    p["out_w"] = w(next(keys), (channel_out, c // 4, 7, 7), 49 * (c // 4))
    p["out_b"] = 0.1 * jax.random.normal(next(keys), (channel_out,), jnp.float32)
    return p


if __name__ == "__main__":
    key = jax.random.PRNGKey(0)
    pkey, xkey = jax.random.split(key)

    # Decoder(channel_in, channel_out, up_channel, shared_layer); up_channel is
    # unused by the PyTorch Decoder's forward.
    channel_in, channel_out = 16, 3
    params = init_params(pkey, channel_in, channel_out)

    x = jax.random.normal(xkey, (2, channel_in, 16, 16), jnp.float32)  # NCHW latent
    out = jax.jit(decoder_forward)(params, x)
    out = jax.block_until_ready(out)

    # 16x16 -> resblocks 16x16 -> deconv 18x18 -> deconv 20x20 -> head 20x20
    assert out.shape == (2, channel_out, 20, 20), out.shape
    assert bool(jnp.all(jnp.isfinite(out)))
    assert bool(jnp.all(jnp.abs(out) <= 1.0))  # tanh output range
    print("KERNEL_OK")
</pallas_src>

<mosaic_0001>
module attributes {stable_mosaic.version = 11 : i64} {
  func.func @_decoder_kernel(%arg0: i32, %arg1: memref<1x16x256xbf16, #tpu.memory_space<vmem>>, %arg2: memref<256x286xbf16, #tpu.memory_space<vmem>>, %arg3: memref<286x324xbf16, #tpu.memory_space<vmem>>, %arg4: memref<286x400xbf16, #tpu.memory_space<vmem>>, %arg5: memref<358x484xbf16, #tpu.memory_space<vmem>>, %arg6: memref<438x676xbf16, #tpu.memory_space<vmem>>, %arg7: memref<286x1xf32, #tpu.memory_space<vmem>>, %arg8: memref<358x1xf32, #tpu.memory_space<vmem>>, %arg9: memref<438x1xf32, #tpu.memory_space<vmem>>, %arg10: memref<8x16x144xbf16, #tpu.memory_space<vmem>>, %arg11: memref<8x144xbf16, #tpu.memory_space<vmem>>, %arg12: memref<4x72xbf16, #tpu.memory_space<vmem>>, %arg13: memref<3x196xbf16, #tpu.memory_space<vmem>>, %arg14: memref<3x1xf32, #tpu.memory_space<vmem>>, %arg15: memref<1x3x514xf32, #tpu.memory_space<vmem>>) attributes {dimension_semantics = [#tpu.dimension_semantics<parallel>], iteration_bounds = array<i64: 2>, scalar_prefetch = 0 : i64, scratch_operands = 0 : i64, tpu.core_type = #tpu.core_type<tc>, window_params = [{transform_indices = @transform_0, window_bounds = array<i64: 1, 16, 256>}, {pipeline_mode = #tpu.pipeline_mode<synchronous>, transform_indices = @transform_1, window_bounds = array<i64: 256, 286>}, {pipeline_mode = #tpu.pipeline_mode<synchronous>, transform_indices = @transform_2, window_bounds = array<i64: 286, 324>}, {pipeline_mode = #tpu.pipeline_mode<synchronous>, transform_indices = @transform_3, window_bounds = array<i64: 286, 400>}, {pipeline_mode = #tpu.pipeline_mode<synchronous>, transform_indices = @transform_4, window_bounds = array<i64: 358, 484>}, {pipeline_mode = #tpu.pipeline_mode<synchronous>, transform_indices = @transform_5, window_bounds = array<i64: 438, 676>}, {pipeline_mode = #tpu.pipeline_mode<synchronous>, transform_indices = @transform_6, window_bounds = array<i64: 286, 1>}, {pipeline_mode = #tpu.pipeline_mode<synchronous>, transform_indices = @transform_7, window_bounds = array<i64: 358, 1>}, {pipeline_mode = #tpu.pipeline_mode<synchronous>, transform_indices = @transform_8, window_bounds = array<i64: 438, 1>}, {pipeline_mode = #tpu.pipeline_mode<synchronous>, transform_indices = @transform_9, window_bounds = array<i64: 8, 16, 144>}, {pipeline_mode = #tpu.pipeline_mode<synchronous>, transform_indices = @transform_10, window_bounds = array<i64: 8, 144>}, {pipeline_mode = #tpu.pipeline_mode<synchronous>, transform_indices = @transform_11, window_bounds = array<i64: 4, 72>}, {pipeline_mode = #tpu.pipeline_mode<synchronous>, transform_indices = @transform_12, window_bounds = array<i64: 3, 196>}, {pipeline_mode = #tpu.pipeline_mode<synchronous>, transform_indices = @transform_13, window_bounds = array<i64: 3, 1>}, {transform_indices = @transform_14, window_bounds = array<i64: 1, 3, 514>}]} {
    %c0 = arith.constant 0 : index
    %c0_0 = arith.constant 0 : index
    %0 = vector.load %arg3[%c0, %c0_0] : memref<286x324xbf16, #tpu.memory_space<vmem>>, vector<286x324xbf16>
    %c0_1 = arith.constant 0 : index
    %c0_2 = arith.constant 0 : index
    %1 = vector.load %arg7[%c0_1, %c0_2] : memref<286x1xf32, #tpu.memory_space<vmem>>, vector<286x1xf32>
    %c0_3 = arith.constant 0 : index
    %c0_4 = arith.constant 0 : index
    %2 = vector.load %arg8[%c0_3, %c0_4] : memref<358x1xf32, #tpu.memory_space<vmem>>, vector<358x1xf32>
    %c0_5 = arith.constant 0 : index
    %c0_6 = arith.constant 0 : index
    %3 = vector.load %arg9[%c0_5, %c0_6] : memref<438x1xf32, #tpu.memory_space<vmem>>, vector<438x1xf32>
    %c0_7 = arith.constant 0 : index
    %c0_8 = arith.constant 0 : index
    %c0_9 = arith.constant 0 : index
    %4 = vector.load %arg1[%c0_7, %c0_8, %c0_9] : memref<1x16x256xbf16, #tpu.memory_space<vmem>>, vector<1x16x256xbf16>
    %5 = vector.shape_cast %4 : vector<1x16x256xbf16> to vector<16x256xbf16>
    %c0_10 = arith.constant 0 : index
    %c0_11 = arith.constant 0 : index
    %6 = vector.load %arg2[%c0_10, %c0_11] : memref<256x286xbf16, #tpu.memory_space<vmem>>, vector<256x286xbf16>
    %cst = arith.constant dense<0.000000e+00> : vector<16x286xf32>
    %7 = tpu.matmul %5, %6, %cst {dimension_numbers = #tpu.dot_dimension_numbers<[1], [0], [0], [1], [0, 0, 1, 1], [], []>} : vector<16x256xbf16>, vector<256x286xbf16>, vector<16x286xf32> -> vector<16x286xf32>
    %8 = arith.truncf %7 : vector<16x286xf32> to vector<16x286xbf16>
    %c0_12 = arith.constant 0 : index
    %c0_13 = arith.constant 0 : index
    %c0_14 = arith.constant 0 : index
    %9 = vector.load %arg10[%c0_12, %c0_13, %c0_14] : memref<8x16x144xbf16, #tpu.memory_space<vmem>>, vector<1x16x144xbf16>
    %10 = vector.shape_cast %9 : vector<1x16x144xbf16> to vector<16x144xbf16>
    %cst_15 = arith.constant dense<0.000000e+00> : vector<16x324xf32>
    %11 = tpu.matmul %8, %0, %cst_15 {dimension_numbers = #tpu.dot_dimension_numbers<[1], [0], [0], [1], [0, 0, 1, 1], [], []>} : vector<16x286xbf16>, vector<286x324xbf16>, vector<16x324xf32> -> vector<16x324xf32>
    %12 = arith.truncf %11 : vector<16x324xf32> to vector<16x324xbf16>
    %13 = vector.extract_strided_slice %12 {offsets = [0, 0], sizes = [16, 286], strides = [1, 1]} : vector<16x324xbf16> to vector<16x286xbf16>
    %14 = vector.extract_strided_slice %12 {offsets = [0, 1], sizes = [16, 286], strides = [1, 1]} : vector<16x324xbf16> to vector<16x286xbf16>
    %15 = vector.extract_strided_slice %12 {offsets = [0, 2], sizes = [16, 286], strides = [1, 1]} : vector<16x324xbf16> to vector<16x286xbf16>
    %16 = vector.extract_strided_slice %12 {offsets = [0, 18], sizes = [16, 286], strides = [1, 1]} : vector<16x324xbf16> to vector<16x286xbf16>
    %17 = vector.extract_strided_slice %12 {offsets = [0, 19], sizes = [16, 286], strides = [1, 1]} : vector<16x324xbf16> to vector<16x286xbf16>
    %18 = vector.extract_strided_slice %12 {offsets = [0, 20], sizes = [16, 286], strides = [1, 1]} : vector<16x324xbf16> to vector<16x286xbf16>
    %19 = vector.extract_strided_slice %12 {offsets = [0, 36], sizes = [16, 286], strides = [1, 1]} : vector<16x324xbf16> to vector<16x286xbf16>
    %20 = vector.extract_strided_slice %12 {offsets = [0, 37], sizes = [16, 286], strides = [1, 1]} : vector<16x324xbf16> to vector<16x286xbf16>
    %21 = vector.extract_strided_slice %12 {offsets = [0, 38], sizes = [16, 286], strides = [1, 1]} : vector<16x324xbf16> to vector<16x286xbf16>
    %22 = tpu.concatenate %13, %14, %15, %16, %17, %18, %19, %20, %21 in 0 : vector<16x286xbf16>, vector<16x286xbf16>, vector<16x286xbf16>, vector<16x286xbf16>, vector<16x286xbf16>, vector<16x286xbf16>, vector<16x286xbf16>, vector<16x286xbf16>, vector<16x286xbf16> -> vector<144x286xbf16>
    %cst_16 = arith.constant dense<0.000000e+00> : vector<16x286xf32>
    %23 = tpu.matmul %10, %22, %cst_16 {dimension_numbers = #tpu.dot_dimension_numbers<[1], [0], [0], [1], [0, 0, 1, 1], [], []>} : vector<16x144xbf16>, vector<144x286xbf16>, vector<16x286xf32> -> vector<16x286xf32>
    %cst_17 = arith.constant dense<0.000000e+00> : vector<16x1xf32>
    %24 = tpu.matmul %23, %1, %cst_17 {dimension_numbers = #tpu.dot_dimension_numbers<[1], [0], [0], [1], [0, 0, 1, 1], [], []>} : vector<16x286xf32>, vector<286x1xf32>, vector<16x1xf32> -> vector<16x1xf32>
    %25 = vector.broadcast %24 : vector<16x1xf32> to vector<16x286xf32>
    %26 = arith.subf %23, %25 : vector<16x286xf32>
    %27 = arith.mulf %26, %26 : vector<16x286xf32>
    %cst_18 = arith.constant dense<0.000000e+00> : vector<16x1xf32>
    %28 = tpu.matmul %27, %1, %cst_18 {dimension_numbers = #tpu.dot_dimension_numbers<[1], [0], [0], [1], [0, 0, 1, 1], [], []>} : vector<16x286xf32>, vector<286x1xf32>, vector<16x1xf32> -> vector<16x1xf32>
    %cst_19 = arith.constant 9.99999974E-6 : f32
    %29 = vector.broadcast %cst_19 : f32 to vector<16x1xf32>
    %30 = arith.addf %28, %29 : vector<16x1xf32>
    %31 = math.rsqrt %30 : vector<16x1xf32>
    %32 = vector.broadcast %31 : vector<16x1xf32> to vector<16x286xf32>
    %33 = arith.mulf %26, %32 : vector<16x286xf32>
    %cst_20 = arith.constant 0.000000e+00 : f32
    %34 = vector.broadcast %cst_20 : f32 to vector<16x286xf32>
    %35 = arith.maximumf %33, %34 : vector<16x286xf32>
    %36 = arith.truncf %35 : vector<16x286xf32> to vector<16x286xbf16>
    %c1 = arith.constant 1 : index
    %c0_21 = arith.constant 0 : index
    %c0_22 = arith.constant 0 : index
    %37 = vector.load %arg10[%c1, %c0_21, %c0_22] : memref<8x16x144xbf16, #tpu.memory_space<vmem>>, vector<1x16x144xbf16>
    %38 = vector.shape_cast %37 : vector<1x16x144xbf16> to vector<16x144xbf16>
    %cst_23 = arith.constant dense<0.000000e+00> : vector<16x324xf32>
    %39 = tpu.matmul %36, %0, %cst_23 {dimension_numbers = #tpu.dot_dimension_numbers<[1], [0], [0], [1], [0, 0, 1, 1], [], []>} : vector<16x286xbf16>, vector<286x324xbf16>, vector<16x324xf32> -> vector<16x324xf32>
    %40 = arith.truncf %39 : vector<16x324xf32> to vector<16x324xbf16>
    %41 = vector.extract_strided_slice %40 {offsets = [0, 0], sizes = [16, 286], strides = [1, 1]} : vector<16x324xbf16> to vector<16x286xbf16>
    %42 = vector.extract_strided_slice %40 {offsets = [0, 1], sizes = [16, 286], strides = [1, 1]} : vector<16x324xbf16> to vector<16x286xbf16>
    %43 = vector.extract_strided_slice %40 {offsets = [0, 2], sizes = [16, 286], strides = [1, 1]} : vector<16x324xbf16> to vector<16x286xbf16>
    %44 = vector.extract_strided_slice %40 {offsets = [0, 18], sizes = [16, 286], strides = [1, 1]} : vector<16x324xbf16> to vector<16x286xbf16>
    %45 = vector.extract_strided_slice %40 {offsets = [0, 19], sizes = [16, 286], strides = [1, 1]} : vector<16x324xbf16> to vector<16x286xbf16>
    %46 = vector.extract_strided_slice %40 {offsets = [0, 20], sizes = [16, 286], strides = [1, 1]} : vector<16x324xbf16> to vector<16x286xbf16>
    %47 = vector.extract_strided_slice %40 {offsets = [0, 36], sizes = [16, 286], strides = [1, 1]} : vector<16x324xbf16> to vector<16x286xbf16>
    %48 = vector.extract_strided_slice %40 {offsets = [0, 37], sizes = [16, 286], strides = [1, 1]} : vector<16x324xbf16> to vector<16x286xbf16>
    %49 = vector.extract_strided_slice %40 {offsets = [0, 38], sizes = [16, 286], strides = [1, 1]} : vector<16x324xbf16> to vector<16x286xbf16>
    %50 = tpu.concatenate %41, %42, %43, %44, %45, %46, %47, %48, %49 in 0 : vector<16x286xbf16>, vector<16x286xbf16>, vector<16x286xbf16>, vector<16x286xbf16>, vector<16x286xbf16>, vector<16x286xbf16>, vector<16x286xbf16>, vector<16x286xbf16>, vector<16x286xbf16> -> vector<144x286xbf16>
    %cst_24 = arith.constant dense<0.000000e+00> : vector<16x286xf32>
    %51 = tpu.matmul %38, %50, %cst_24 {dimension_numbers = #tpu.dot_dimension_numbers<[1], [0], [0], [1], [0, 0, 1, 1], [], []>} : vector<16x144xbf16>, vector<144x286xbf16>, vector<16x286xf32> -> vector<16x286xf32>
    %cst_25 = arith.constant dense<0.000000e+00> : vector<16x1xf32>
    %52 = tpu.matmul %51, %1, %cst_25 {dimension_numbers = #tpu.dot_dimension_numbers<[1], [0], [0], [1], [0, 0, 1, 1], [], []>} : vector<16x286xf32>, vector<286x1xf32>, vector<16x1xf32> -> vector<16x1xf32>
    %53 = vector.broadcast %52 : vector<16x1xf32> to vector<16x286xf32>
    %54 = arith.subf %51, %53 : vector<16x286xf32>
    %55 = arith.mulf %54, %54 : vector<16x286xf32>
    %cst_26 = arith.constant dense<0.000000e+00> : vector<16x1xf32>
    %56 = tpu.matmul %55, %1, %cst_26 {dimension_numbers = #tpu.dot_dimension_numbers<[1], [0], [0], [1], [0, 0, 1, 1], [], []>} : vector<16x286xf32>, vector<286x1xf32>, vector<16x1xf32> -> vector<16x1xf32>
    %cst_27 = arith.constant 9.99999974E-6 : f32
    %57 = vector.broadcast %cst_27 : f32 to vector<16x1xf32>
    %58 = arith.addf %56, %57 : vector<16x1xf32>
    %59 = math.rsqrt %58 : vector<16x1xf32>
    %60 = vector.broadcast %59 : vector<16x1xf32> to vector<16x286xf32>
    %61 = arith.mulf %54, %60 : vector<16x286xf32>
    %62 = arith.addf %7, %61 : vector<16x286xf32>
    %63 = arith.truncf %62 : vector<16x286xf32> to vector<16x286xbf16>
    %c2 = arith.constant 2 : index
    %c0_28 = arith.constant 0 : index
    %c0_29 = arith.constant 0 : index
    %64 = vector.load %arg10[%c2, %c0_28, %c0_29] : memref<8x16x144xbf16, #tpu.memory_space<vmem>>, vector<1x16x144xbf16>
    %65 = vector.shape_cast %64 : vector<1x16x144xbf16> to vector<16x144xbf16>
    %cst_30 = arith.constant dense<0.000000e+00> : vector<16x324xf32>
    %66 = tpu.matmul %63, %0, %cst_30 {dimension_numbers = #tpu.dot_dimension_numbers<[1], [0], [0], [1], [0, 0, 1, 1], [], []>} : vector<16x286xbf16>, vector<286x324xbf16>, vector<16x324xf32> -> vector<16x324xf32>
    %67 = arith.truncf %66 : vector<16x324xf32> to vector<16x324xbf16>
    %68 = vector.extract_strided_slice %67 {offsets = [0, 0], sizes = [16, 286], strides = [1, 1]} : vector<16x324xbf16> to vector<16x286xbf16>
    %69 = vector.extract_strided_slice %67 {offsets = [0, 1], sizes = [16, 286], strides = [1, 1]} : vector<16x324xbf16> to vector<16x286xbf16>
    %70 = vector.extract_strided_slice %67 {offsets = [0, 2], sizes = [16, 286], strides = [1, 1]} : vector<16x324xbf16> to vector<16x286xbf16>
    %71 = vector.extract_strided_slice %67 {offsets = [0, 18], sizes = [16, 286], strides = [1, 1]} : vector<16x324xbf16> to vector<16x286xbf16>
    %72 = vector.extract_strided_slice %67 {offsets = [0, 19], sizes = [16, 286], strides = [1, 1]} : vector<16x324xbf16> to vector<16x286xbf16>
    %73 = vector.extract_strided_slice %67 {offsets = [0, 20], sizes = [16, 286], strides = [1, 1]} : vector<16x324xbf16> to vector<16x286xbf16>
    %74 = vector.extract_strided_slice %67 {offsets = [0, 36], sizes = [16, 286], strides = [1, 1]} : vector<16x324xbf16> to vector<16x286xbf16>
    %75 = vector.extract_strided_slice %67 {offsets = [0, 37], sizes = [16, 286], strides = [1, 1]} : vector<16x324xbf16> to vector<16x286xbf16>
    %76 = vector.extract_strided_slice %67 {offsets = [0, 38], sizes = [16, 286], strides = [1, 1]} : vector<16x324xbf16> to vector<16x286xbf16>
    %77 = tpu.concatenate %68, %69, %70, %71, %72, %73, %74, %75, %76 in 0 : vector<16x286xbf16>, vector<16x286xbf16>, vector<16x286xbf16>, vector<16x286xbf16>, vector<16x286xbf16>, vector<16x286xbf16>, vector<16x286xbf16>, vector<16x286xbf16>, vector<16x286xbf16> -> vector<144x286xbf16>
    %cst_31 = arith.constant dense<0.000000e+00> : vector<16x286xf32>
    %78 = tpu.matmul %65, %77, %cst_31 {dimension_numbers = #tpu.dot_dimension_numbers<[1], [0], [0], [1], [0, 0, 1, 1], [], []>} : vector<16x144xbf16>, vector<144x286xbf16>, vector<16x286xf32> -> vector<16x286xf32>
    %cst_32 = arith.constant dense<0.000000e+00> : vector<16x1xf32>
    %79 = tpu.matmul %78, %1, %cst_32 {dimension_numbers = #tpu.dot_dimension_numbers<[1], [0], [0], [1], [0, 0, 1, 1], [], []>} : vector<16x286xf32>, vector<286x1xf32>, vector<16x1xf32> -> vector<16x1xf32>
    %80 = vector.broadcast %79 : vector<16x1xf32> to vector<16x286xf32>
    %81 = arith.subf %78, %80 : vector<16x286xf32>
    %82 = arith.mulf %81, %81 : vector<16x286xf32>
    %cst_33 = arith.constant dense<0.000000e+00> : vector<16x1xf32>
    %83 = tpu.matmul %82, %1, %cst_33 {dimension_numbers = #tpu.dot_dimension_numbers<[1], [0], [0], [1], [0, 0, 1, 1], [], []>} : vector<16x286xf32>, vector<286x1xf32>, vector<16x1xf32> -> vector<16x1xf32>
    %cst_34 = arith.constant 9.99999974E-6 : f32
    %84 = vector.broadcast %cst_34 : f32 to vector<16x1xf32>
    %85 = arith.addf %83, %84 : vector<16x1xf32>
    %86 = math.rsqrt %85 : vector<16x1xf32>
    %87 = vector.broadcast %86 : vector<16x1xf32> to vector<16x286xf32>
    %88 = arith.mulf %81, %87 : vector<16x286xf32>
    %cst_35 = arith.constant 0.000000e+00 : f32
    %89 = vector.broadcast %cst_35 : f32 to vector<16x286xf32>
    %90 = arith.maximumf %88, %89 : vector<16x286xf32>
    %91 = arith.truncf %90 : vector<16x286xf32> to vector<16x286xbf16>
    %c3 = arith.constant 3 : index
    %c0_36 = arith.constant 0 : index
    %c0_37 = arith.constant 0 : index
    %92 = vector.load %arg10[%c3, %c0_36, %c0_37] : memref<8x16x144xbf16, #tpu.memory_space<vmem>>, vector<1x16x144xbf16>
    %93 = vector.shape_cast %92 : vector<1x16x144xbf16> to vector<16x144xbf16>
    %cst_38 = arith.constant dense<0.000000e+00> : vector<16x324xf32>
    %94 = tpu.matmul %91, %0, %cst_38 {dimension_numbers = #tpu.dot_dimension_numbers<[1], [0], [0], [1], [0, 0, 1, 1], [], []>} : vector<16x286xbf16>, vector<286x324xbf16>, vector<16x324xf32> -> vector<16x324xf32>
    %95 = arith.truncf %94 : vector<16x324xf32> to vector<16x324xbf16>
    %96 = vector.extract_strided_slice %95 {offsets = [0, 0], sizes = [16, 286], strides = [1, 1]} : vector<16x324xbf16> to vector<16x286xbf16>
    %97 = vector.extract_strided_slice %95 {offsets = [0, 1], sizes = [16, 286], strides = [1, 1]} : vector<16x324xbf16> to vector<16x286xbf16>
    %98 = vector.extract_strided_slice %95 {offsets = [0, 2], sizes = [16, 286], strides = [1, 1]} : vector<16x324xbf16> to vector<16x286xbf16>
    %99 = vector.extract_strided_slice %95 {offsets = [0, 18], sizes = [16, 286], strides = [1, 1]} : vector<16x324xbf16> to vector<16x286xbf16>
    %100 = vector.extract_strided_slice %95 {offsets = [0, 19], sizes = [16, 286], strides = [1, 1]} : vector<16x324xbf16> to vector<16x286xbf16>
    %101 = vector.extract_strided_slice %95 {offsets = [0, 20], sizes = [16, 286], strides = [1, 1]} : vector<16x324xbf16> to vector<16x286xbf16>
    %102 = vector.extract_strided_slice %95 {offsets = [0, 36], sizes = [16, 286], strides = [1, 1]} : vector<16x324xbf16> to vector<16x286xbf16>
    %103 = vector.extract_strided_slice %95 {offsets = [0, 37], sizes = [16, 286], strides = [1, 1]} : vector<16x324xbf16> to vector<16x286xbf16>
    %104 = vector.extract_strided_slice %95 {offsets = [0, 38], sizes = [16, 286], strides = [1, 1]} : vector<16x324xbf16> to vector<16x286xbf16>
    %105 = tpu.concatenate %96, %97, %98, %99, %100, %101, %102, %103, %104 in 0 : vector<16x286xbf16>, vector<16x286xbf16>, vector<16x286xbf16>, vector<16x286xbf16>, vector<16x286xbf16>, vector<16x286xbf16>, vector<16x286xbf16>, vector<16x286xbf16>, vector<16x286xbf16> -> vector<144x286xbf16>
    %cst_39 = arith.constant dense<0.000000e+00> : vector<16x286xf32>
    %106 = tpu.matmul %93, %105, %cst_39 {dimension_numbers = #tpu.dot_dimension_numbers<[1], [0], [0], [1], [0, 0, 1, 1], [], []>} : vector<16x144xbf16>, vector<144x286xbf16>, vector<16x286xf32> -> vector<16x286xf32>
    %cst_40 = arith.constant dense<0.000000e+00> : vector<16x1xf32>
    %107 = tpu.matmul %106, %1, %cst_40 {dimension_numbers = #tpu.dot_dimension_numbers<[1], [0], [0], [1], [0, 0, 1, 1], [], []>} : vector<16x286xf32>, vector<286x1xf32>, vector<16x1xf32> -> vector<16x1xf32>
    %108 = vector.broadcast %107 : vector<16x1xf32> to vector<16x286xf32>
    %109 = arith.subf %106, %108 : vector<16x286xf32>
    %110 = arith.mulf %109, %109 : vector<16x286xf32>
    %cst_41 = arith.constant dense<0.000000e+00> : vector<16x1xf32>
    %111 = tpu.matmul %110, %1, %cst_41 {dimension_numbers = #tpu.dot_dimension_numbers<[1], [0], [0], [1], [0, 0, 1, 1], [], []>} : vector<16x286xf32>, vector<286x1xf32>, vector<16x1xf32> -> vector<16x1xf32>
    %cst_42 = arith.constant 9.99999974E-6 : f32
    %112 = vector.broadcast %cst_42 : f32 to vector<16x1xf32>
    %113 = arith.addf %111, %112 : vector<16x1xf32>
    %114 = math.rsqrt %113 : vector<16x1xf32>
    %115 = vector.broadcast %114 : vector<16x1xf32> to vector<16x286xf32>
    %116 = arith.mulf %109, %115 : vector<16x286xf32>
    %117 = arith.addf %62, %116 : vector<16x286xf32>
    %118 = arith.truncf %117 : vector<16x286xf32> to vector<16x286xbf16>
    %c4 = arith.constant 4 : index
    %c0_43 = arith.constant 0 : index
    %c0_44 = arith.constant 0 : index
    %119 = vector.load %arg10[%c4, %c0_43, %c0_44] : memref<8x16x144xbf16, #tpu.memory_space<vmem>>, vector<1x16x144xbf16>
    %120 = vector.shape_cast %119 : vector<1x16x144xbf16> to vector<16x144xbf16>
    %cst_45 = arith.constant dense<0.000000e+00> : vector<16x324xf32>
    %121 = tpu.matmul %118, %0, %cst_45 {dimension_numbers = #tpu.dot_dimension_numbers<[1], [0], [0], [1], [0, 0, 1, 1], [], []>} : vector<16x286xbf16>, vector<286x324xbf16>, vector<16x324xf32> -> vector<16x324xf32>
    %122 = arith.truncf %121 : vector<16x324xf32> to vector<16x324xbf16>
    %123 = vector.extract_strided_slice %122 {offsets = [0, 0], sizes = [16, 286], strides = [1, 1]} : vector<16x324xbf16> to vector<16x286xbf16>
    %124 = vector.extract_strided_slice %122 {offsets = [0, 1], sizes = [16, 286], strides = [1, 1]} : vector<16x324xbf16> to vector<16x286xbf16>
    %125 = vector.extract_strided_slice %122 {offsets = [0, 2], sizes = [16, 286], strides = [1, 1]} : vector<16x324xbf16> to vector<16x286xbf16>
    %126 = vector.extract_strided_slice %122 {offsets = [0, 18], sizes = [16, 286], strides = [1, 1]} : vector<16x324xbf16> to vector<16x286xbf16>
    %127 = vector.extract_strided_slice %122 {offsets = [0, 19], sizes = [16, 286], strides = [1, 1]} : vector<16x324xbf16> to vector<16x286xbf16>
    %128 = vector.extract_strided_slice %122 {offsets = [0, 20], sizes = [16, 286], strides = [1, 1]} : vector<16x324xbf16> to vector<16x286xbf16>
    %129 = vector.extract_strided_slice %122 {offsets = [0, 36], sizes = [16, 286], strides = [1, 1]} : vector<16x324xbf16> to vector<16x286xbf16>
    %130 = vector.extract_strided_slice %122 {offsets = [0, 37], sizes = [16, 286], strides = [1, 1]} : vector<16x324xbf16> to vector<16x286xbf16>
    %131 = vector.extract_strided_slice %122 {offsets = [0, 38], sizes = [16, 286], strides = [1, 1]} : vector<16x324xbf16> to vector<16x286xbf16>
    %132 = tpu.concatenate %123, %124, %125, %126, %127, %128, %129, %130, %131 in 0 : vector<16x286xbf16>, vector<16x286xbf16>, vector<16x286xbf16>, vector<16x286xbf16>, vector<16x286xbf16>, vector<16x286xbf16>, vector<16x286xbf16>, vector<16x286xbf16>, vector<16x286xbf16> -> vector<144x286xbf16>
    %cst_46 = arith.constant dense<0.000000e+00> : vector<16x286xf32>
    %133 = tpu.matmul %120, %132, %cst_46 {dimension_numbers = #tpu.dot_dimension_numbers<[1], [0], [0], [1], [0, 0, 1, 1], [], []>} : vector<16x144xbf16>, vector<144x286xbf16>, vector<16x286xf32> -> vector<16x286xf32>
    %cst_47 = arith.constant dense<0.000000e+00> : vector<16x1xf32>
    %134 = tpu.matmul %133, %1, %cst_47 {dimension_numbers = #tpu.dot_dimension_numbers<[1], [0], [0], [1], [0, 0, 1, 1], [], []>} : vector<16x286xf32>, vector<286x1xf32>, vector<16x1xf32> -> vector<16x1xf32>
    %135 = vector.broadcast %134 : vector<16x1xf32> to vector<16x286xf32>
    %136 = arith.subf %133, %135 : vector<16x286xf32>
    %137 = arith.mulf %136, %136 : vector<16x286xf32>
    %cst_48 = arith.constant dense<0.000000e+00> : vector<16x1xf32>
    %138 = tpu.matmul %137, %1, %cst_48 {dimension_numbers = #tpu.dot_dimension_numbers<[1], [0], [0], [1], [0, 0, 1, 1], [], []>} : vector<16x286xf32>, vector<286x1xf32>, vector<16x1xf32> -> vector<16x1xf32>
    %cst_49 = arith.constant 9.99999974E-6 : f32
    %139 = vector.broadcast %cst_49 : f32 to vector<16x1xf32>
    %140 = arith.addf %138, %139 : vector<16x1xf32>
    %141 = math.rsqrt %140 : vector<16x1xf32>
    %142 = vector.broadcast %141 : vector<16x1xf32> to vector<16x286xf32>
    %143 = arith.mulf %136, %142 : vector<16x286xf32>
    %cst_50 = arith.constant 0.000000e+00 : f32
    %144 = vector.broadcast %cst_50 : f32 to vector<16x286xf32>
    %145 = arith.maximumf %143, %144 : vector<16x286xf32>
    %146 = arith.truncf %145 : vector<16x286xf32> to vector<16x286xbf16>
    %c5 = arith.constant 5 : index
    %c0_51 = arith.constant 0 : index
    %c0_52 = arith.constant 0 : index
    %147 = vector.load %arg10[%c5, %c0_51, %c0_52] : memref<8x16x144xbf16, #tpu.memory_space<vmem>>, vector<1x16x144xbf16>
    %148 = vector.shape_cast %147 : vector<1x16x144xbf16> to vector<16x144xbf16>
    %cst_53 = arith.constant dense<0.000000e+00> : vector<16x324xf32>
    %149 = tpu.matmul %146, %0, %cst_53 {dimension_numbers = #tpu.dot_dimension_numbers<[1], [0], [0], [1], [0, 0, 1, 1], [], []>} : vector<16x286xbf16>, vector<286x324xbf16>, vector<16x324xf32> -> vector<16x324xf32>
    %150 = arith.truncf %149 : vector<16x324xf32> to vector<16x324xbf16>
    %151 = vector.extract_strided_slice %150 {offsets = [0, 0], sizes = [16, 286], strides = [1, 1]} : vector<16x324xbf16> to vector<16x286xbf16>
    %152 = vector.extract_strided_slice %150 {offsets = [0, 1], sizes = [16, 286], strides = [1, 1]} : vector<16x324xbf16> to vector<16x286xbf16>
    %153 = vector.extract_strided_slice %150 {offsets = [0, 2], sizes = [16, 286], strides = [1, 1]} : vector<16x324xbf16> to vector<16x286xbf16>
    %154 = vector.extract_strided_slice %150 {offsets = [0, 18], sizes = [16, 286], strides = [1, 1]} : vector<16x324xbf16> to vector<16x286xbf16>
    %155 = vector.extract_strided_slice %150 {offsets = [0, 19], sizes = [16, 286], strides = [1, 1]} : vector<16x324xbf16> to vector<16x286xbf16>
    %156 = vector.extract_strided_slice %150 {offsets = [0, 20], sizes = [16, 286], strides = [1, 1]} : vector<16x324xbf16> to vector<16x286xbf16>
    %157 = vector.extract_strided_slice %150 {offsets = [0, 36], sizes = [16, 286], strides = [1, 1]} : vector<16x324xbf16> to vector<16x286xbf16>
    %158 = vector.extract_strided_slice %150 {offsets = [0, 37], sizes = [16, 286], strides = [1, 1]} : vector<16x324xbf16> to vector<16x286xbf16>
    %159 = vector.extract_strided_slice %150 {offsets = [0, 38], sizes = [16, 286], strides = [1, 1]} : vector<16x324xbf16> to vector<16x286xbf16>
    %160 = tpu.concatenate %151, %152, %153, %154, %155, %156, %157, %158, %159 in 0 : vector<16x286xbf16>, vector<16x286xbf16>, vector<16x286xbf16>, vector<16x286xbf16>, vector<16x286xbf16>, vector<16x286xbf16>, vector<16x286xbf16>, vector<16x286xbf16>, vector<16x286xbf16> -> vector<144x286xbf16>
    %cst_54 = arith.constant dense<0.000000e+00> : vector<16x286xf32>
    %161 = tpu.matmul %148, %160, %cst_54 {dimension_numbers = #tpu.dot_dimension_numbers<[1], [0], [0], [1], [0, 0, 1, 1], [], []>} : vector<16x144xbf16>, vector<144x286xbf16>, vector<16x286xf32> -> vector<16x286xf32>
    %cst_55 = arith.constant dense<0.000000e+00> : vector<16x1xf32>
    %162 = tpu.matmul %161, %1, %cst_55 {dimension_numbers = #tpu.dot_dimension_numbers<[1], [0], [0], [1], [0, 0, 1, 1], [], []>} : vector<16x286xf32>, vector<286x1xf32>, vector<16x1xf32> -> vector<16x1xf32>
    %163 = vector.broadcast %162 : vector<16x1xf32> to vector<16x286xf32>
    %164 = arith.subf %161, %163 : vector<16x286xf32>
    %165 = arith.mulf %164, %164 : vector<16x286xf32>
    %cst_56 = arith.constant dense<0.000000e+00> : vector<16x1xf32>
    %166 = tpu.matmul %165, %1, %cst_56 {dimension_numbers = #tpu.dot_dimension_numbers<[1], [0], [0], [1], [0, 0, 1, 1], [], []>} : vector<16x286xf32>, vector<286x1xf32>, vector<16x1xf32> -> vector<16x1xf32>
    %cst_57 = arith.constant 9.99999974E-6 : f32
    %167 = vector.broadcast %cst_57 : f32 to vector<16x1xf32>
    %168 = arith.addf %166, %167 : vector<16x1xf32>
    %169 = math.rsqrt %168 : vector<16x1xf32>
    %170 = vector.broadcast %169 : vector<16x1xf32> to vector<16x286xf32>
    %171 = arith.mulf %164, %170 : vector<16x286xf32>
    %172 = arith.addf %117, %171 : vector<16x286xf32>
    %173 = arith.truncf %172 : vector<16x286xf32> to vector<16x286xbf16>
    %c6 = arith.constant 6 : index
    %c0_58 = arith.constant 0 : index
    %c0_59 = arith.constant 0 : index
    %174 = vector.load %arg10[%c6, %c0_58, %c0_59] : memref<8x16x144xbf16, #tpu.memory_space<vmem>>, vector<1x16x144xbf16>
    %175 = vector.shape_cast %174 : vector<1x16x144xbf16> to vector<16x144xbf16>
    %cst_60 = arith.constant dense<0.000000e+00> : vector<16x324xf32>
    %176 = tpu.matmul %173, %0, %cst_60 {dimension_numbers = #tpu.dot_dimension_numbers<[1], [0], [0], [1], [0, 0, 1, 1], [], []>} : vector<16x286xbf16>, vector<286x324xbf16>, vector<16x324xf32> -> vector<16x324xf32>
    %177 = arith.truncf %176 : vector<16x324xf32> to vector<16x324xbf16>
    %178 = vector.extract_strided_slice %177 {offsets = [0, 0], sizes = [16, 286], strides = [1, 1]} : vector<16x324xbf16> to vector<16x286xbf16>
    %179 = vector.extract_strided_slice %177 {offsets = [0, 1], sizes = [16, 286], strides = [1, 1]} : vector<16x324xbf16> to vector<16x286xbf16>
    %180 = vector.extract_strided_slice %177 {offsets = [0, 2], sizes = [16, 286], strides = [1, 1]} : vector<16x324xbf16> to vector<16x286xbf16>
    %181 = vector.extract_strided_slice %177 {offsets = [0, 18], sizes = [16, 286], strides = [1, 1]} : vector<16x324xbf16> to vector<16x286xbf16>
    %182 = vector.extract_strided_slice %177 {offsets = [0, 19], sizes = [16, 286], strides = [1, 1]} : vector<16x324xbf16> to vector<16x286xbf16>
    %183 = vector.extract_strided_slice %177 {offsets = [0, 20], sizes = [16, 286], strides = [1, 1]} : vector<16x324xbf16> to vector<16x286xbf16>
    %184 = vector.extract_strided_slice %177 {offsets = [0, 36], sizes = [16, 286], strides = [1, 1]} : vector<16x324xbf16> to vector<16x286xbf16>
    %185 = vector.extract_strided_slice %177 {offsets = [0, 37], sizes = [16, 286], strides = [1, 1]} : vector<16x324xbf16> to vector<16x286xbf16>
    %186 = vector.extract_strided_slice %177 {offsets = [0, 38], sizes = [16, 286], strides = [1, 1]} : vector<16x324xbf16> to vector<16x286xbf16>
    %187 = tpu.concatenate %178, %179, %180, %181, %182, %183, %184, %185, %186 in 0 : vector<16x286xbf16>, vector<16x286xbf16>, vector<16x286xbf16>, vector<16x286xbf16>, vector<16x286xbf16>, vector<16x286xbf16>, vector<16x286xbf16>, vector<16x286xbf16>, vector<16x286xbf16> -> vector<144x286xbf16>
    %cst_61 = arith.constant dense<0.000000e+00> : vector<16x286xf32>
    %188 = tpu.matmul %175, %187, %cst_61 {dimension_numbers = #tpu.dot_dimension_numbers<[1], [0], [0], [1], [0, 0, 1, 1], [], []>} : vector<16x144xbf16>, vector<144x286xbf16>, vector<16x286xf32> -> vector<16x286xf32>
    %cst_62 = arith.constant dense<0.000000e+00> : vector<16x1xf32>
    %189 = tpu.matmul %188, %1, %cst_62 {dimension_numbers = #tpu.dot_dimension_numbers<[1], [0], [0], [1], [0, 0, 1, 1], [], []>} : vector<16x286xf32>, vector<286x1xf32>, vector<16x1xf32> -> vector<16x1xf32>
    %190 = vector.broadcast %189 : vector<16x1xf32> to vector<16x286xf32>
    %191 = arith.subf %188, %190 : vector<16x286xf32>
    %192 = arith.mulf %191, %191 : vector<16x286xf32>
    %cst_63 = arith.constant dense<0.000000e+00> : vector<16x1xf32>
    %193 = tpu.matmul %192, %1, %cst_63 {dimension_numbers = #tpu.dot_dimension_numbers<[1], [0], [0], [1], [0, 0, 1, 1], [], []>} : vector<16x286xf32>, vector<286x1xf32>, vector<16x1xf32> -> vector<16x1xf32>
    %cst_64 = arith.constant 9.99999974E-6 : f32
    %194 = vector.broadcast %cst_64 : f32 to vector<16x1xf32>
    %195 = arith.addf %193, %194 : vector<16x1xf32>
    %196 = math.rsqrt %195 : vector<16x1xf32>
    %197 = vector.broadcast %196 : vector<16x1xf32> to vector<16x286xf32>
    %198 = arith.mulf %191, %197 : vector<16x286xf32>
    %cst_65 = arith.constant 0.000000e+00 : f32
    %199 = vector.broadcast %cst_65 : f32 to vector<16x286xf32>
    %200 = arith.maximumf %198, %199 : vector<16x286xf32>
    %201 = arith.truncf %200 : vector<16x286xf32> to vector<16x286xbf16>
    %c7 = arith.constant 7 : index
    %c0_66 = arith.constant 0 : index
    %c0_67 = arith.constant 0 : index
    %202 = vector.load %arg10[%c7, %c0_66, %c0_67] : memref<8x16x144xbf16, #tpu.memory_space<vmem>>, vector<1x16x144xbf16>
    %203 = vector.shape_cast %202 : vector<1x16x144xbf16> to vector<16x144xbf16>
    %cst_68 = arith.constant dense<0.000000e+00> : vector<16x324xf32>
    %204 = tpu.matmul %201, %0, %cst_68 {dimension_numbers = #tpu.dot_dimension_numbers<[1], [0], [0], [1], [0, 0, 1, 1], [], []>} : vector<16x286xbf16>, vector<286x324xbf16>, vector<16x324xf32> -> vector<16x324xf32>
    %205 = arith.truncf %204 : vector<16x324xf32> to vector<16x324xbf16>
    %206 = vector.extract_strided_slice %205 {offsets = [0, 0], sizes = [16, 286], strides = [1, 1]} : vector<16x324xbf16> to vector<16x286xbf16>
    %207 = vector.extract_strided_slice %205 {offsets = [0, 1], sizes = [16, 286], strides = [1, 1]} : vector<16x324xbf16> to vector<16x286xbf16>
    %208 = vector.extract_strided_slice %205 {offsets = [0, 2], sizes = [16, 286], strides = [1, 1]} : vector<16x324xbf16> to vector<16x286xbf16>
    %209 = vector.extract_strided_slice %205 {offsets = [0, 18], sizes = [16, 286], strides = [1, 1]} : vector<16x324xbf16> to vector<16x286xbf16>
    %210 = vector.extract_strided_slice %205 {offsets = [0, 19], sizes = [16, 286], strides = [1, 1]} : vector<16x324xbf16> to vector<16x286xbf16>
    %211 = vector.extract_strided_slice %205 {offsets = [0, 20], sizes = [16, 286], strides = [1, 1]} : vector<16x324xbf16> to vector<16x286xbf16>
    %212 = vector.extract_strided_slice %205 {offsets = [0, 36], sizes = [16, 286], strides = [1, 1]} : vector<16x324xbf16> to vector<16x286xbf16>
    %213 = vector.extract_strided_slice %205 {offsets = [0, 37], sizes = [16, 286], strides = [1, 1]} : vector<16x324xbf16> to vector<16x286xbf16>
    %214 = vector.extract_strided_slice %205 {offsets = [0, 38], sizes = [16, 286], strides = [1, 1]} : vector<16x324xbf16> to vector<16x286xbf16>
    %215 = tpu.concatenate %206, %207, %208, %209, %210, %211, %212, %213, %214 in 0 : vector<16x286xbf16>, vector<16x286xbf16>, vector<16x286xbf16>, vector<16x286xbf16>, vector<16x286xbf16>, vector<16x286xbf16>, vector<16x286xbf16>, vector<16x286xbf16>, vector<16x286xbf16> -> vector<144x286xbf16>
    %cst_69 = arith.constant dense<0.000000e+00> : vector<16x286xf32>
    %216 = tpu.matmul %203, %215, %cst_69 {dimension_numbers = #tpu.dot_dimension_numbers<[1], [0], [0], [1], [0, 0, 1, 1], [], []>} : vector<16x144xbf16>, vector<144x286xbf16>, vector<16x286xf32> -> vector<16x286xf32>
    %cst_70 = arith.constant dense<0.000000e+00> : vector<16x1xf32>
    %217 = tpu.matmul %216, %1, %cst_70 {dimension_numbers = #tpu.dot_dimension_numbers<[1], [0], [0], [1], [0, 0, 1, 1], [], []>} : vector<16x286xf32>, vector<286x1xf32>, vector<16x1xf32> -> vector<16x1xf32>
    %218 = vector.broadcast %217 : vector<16x1xf32> to vector<16x286xf32>
    %219 = arith.subf %216, %218 : vector<16x286xf32>
    %220 = arith.mulf %219, %219 : vector<16x286xf32>
    %cst_71 = arith.constant dense<0.000000e+00> : vector<16x1xf32>
    %221 = tpu.matmul %220, %1, %cst_71 {dimension_numbers = #tpu.dot_dimension_numbers<[1], [0], [0], [1], [0, 0, 1, 1], [], []>} : vector<16x286xf32>, vector<286x1xf32>, vector<16x1xf32> -> vector<16x1xf32>
    %cst_72 = arith.constant 9.99999974E-6 : f32
    %222 = vector.broadcast %cst_72 : f32 to vector<16x1xf32>
    %223 = arith.addf %221, %222 : vector<16x1xf32>
    %224 = math.rsqrt %223 : vector<16x1xf32>
    %225 = vector.broadcast %224 : vector<16x1xf32> to vector<16x286xf32>
    %226 = arith.mulf %219, %225 : vector<16x286xf32>
    %227 = arith.addf %172, %226 : vector<16x286xf32>
    %228 = arith.truncf %227 : vector<16x286xf32> to vector<16x286xbf16>
    %c0_73 = arith.constant 0 : index
    %c0_74 = arith.constant 0 : index
    %229 = vector.load %arg4[%c0_73, %c0_74] : memref<286x400xbf16, #tpu.memory_space<vmem>>, vector<286x400xbf16>
    %c0_75 = arith.constant 0 : index
    %c0_76 = arith.constant 0 : index
    %230 = vector.load %arg11[%c0_75, %c0_76] : memref<8x144xbf16, #tpu.memory_space<vmem>>, vector<8x144xbf16>
    %cst_77 = arith.constant dense<0.000000e+00> : vector<16x400xf32>
    %231 = tpu.matmul %228, %229, %cst_77 {dimension_numbers = #tpu.dot_dimension_numbers<[1], [0], [0], [1], [0, 0, 1, 1], [], []>} : vector<16x286xbf16>, vector<286x400xbf16>, vector<16x400xf32> -> vector<16x400xf32>
    %232 = arith.truncf %231 : vector<16x400xf32> to vector<16x400xbf16>
    %233 = vector.extract_strided_slice %232 {offsets = [0, 0], sizes = [16, 358], strides = [1, 1]} : vector<16x400xbf16> to vector<16x358xbf16>
    %234 = vector.extract_strided_slice %232 {offsets = [0, 1], sizes = [16, 358], strides = [1, 1]} : vector<16x400xbf16> to vector<16x358xbf16>
    %235 = vector.extract_strided_slice %232 {offsets = [0, 2], sizes = [16, 358], strides = [1, 1]} : vector<16x400xbf16> to vector<16x358xbf16>
    %236 = vector.extract_strided_slice %232 {offsets = [0, 20], sizes = [16, 358], strides = [1, 1]} : vector<16x400xbf16> to vector<16x358xbf16>
    %237 = vector.extract_strided_slice %232 {offsets = [0, 21], sizes = [16, 358], strides = [1, 1]} : vector<16x400xbf16> to vector<16x358xbf16>
    %238 = vector.extract_strided_slice %232 {offsets = [0, 22], sizes = [16, 358], strides = [1, 1]} : vector<16x400xbf16> to vector<16x358xbf16>
    %239 = vector.extract_strided_slice %232 {offsets = [0, 40], sizes = [16, 358], strides = [1, 1]} : vector<16x400xbf16> to vector<16x358xbf16>
    %240 = vector.extract_strided_slice %232 {offsets = [0, 41], sizes = [16, 358], strides = [1, 1]} : vector<16x400xbf16> to vector<16x358xbf16>
    %241 = vector.extract_strided_slice %232 {offsets = [0, 42], sizes = [16, 358], strides = [1, 1]} : vector<16x400xbf16> to vector<16x358xbf16>
    %242 = tpu.concatenate %233, %234, %235, %236, %237, %238, %239, %240, %241 in 0 : vector<16x358xbf16>, vector<16x358xbf16>, vector<16x358xbf16>, vector<16x358xbf16>, vector<16x358xbf16>, vector<16x358xbf16>, vector<16x358xbf16>, vector<16x358xbf16>, vector<16x358xbf16> -> vector<144x358xbf16>
    %cst_78 = arith.constant dense<0.000000e+00> : vector<8x358xf32>
    %243 = tpu.matmul %230, %242, %cst_78 {dimension_numbers = #tpu.dot_dimension_numbers<[1], [0], [0], [1], [0, 0, 1, 1], [], []>} : vector<8x144xbf16>, vector<144x358xbf16>, vector<8x358xf32> -> vector<8x358xf32>
    %cst_79 = arith.constant dense<0.000000e+00> : vector<8x1xf32>
    %244 = tpu.matmul %243, %2, %cst_79 {dimension_numbers = #tpu.dot_dimension_numbers<[1], [0], [0], [1], [0, 0, 1, 1], [], []>} : vector<8x358xf32>, vector<358x1xf32>, vector<8x1xf32> -> vector<8x1xf32>
    %245 = vector.broadcast %244 : vector<8x1xf32> to vector<8x358xf32>
    %246 = arith.subf %243, %245 : vector<8x358xf32>
    %247 = arith.mulf %246, %246 : vector<8x358xf32>
    %cst_80 = arith.constant dense<0.000000e+00> : vector<8x1xf32>
    %248 = tpu.matmul %247, %2, %cst_80 {dimension_numbers = #tpu.dot_dimension_numbers<[1], [0], [0], [1], [0, 0, 1, 1], [], []>} : vector<8x358xf32>, vector<358x1xf32>, vector<8x1xf32> -> vector<8x1xf32>
    %cst_81 = arith.constant 9.99999974E-6 : f32
    %249 = vector.broadcast %cst_81 : f32 to vector<8x1xf32>
    %250 = arith.addf %248, %249 : vector<8x1xf32>
    %251 = math.rsqrt %250 : vector<8x1xf32>
    %252 = vector.broadcast %251 : vector<8x1xf32> to vector<8x358xf32>
    %253 = arith.mulf %246, %252 : vector<8x358xf32>
    %cst_82 = arith.constant 0.000000e+00 : f32
    %254 = vector.broadcast %cst_82 : f32 to vector<8x358xf32>
    %255 = arith.maximumf %253, %254 : vector<8x358xf32>
    %256 = arith.truncf %255 : vector<8x358xf32> to vector<8x358xbf16>
    %c0_83 = arith.constant 0 : index
    %c0_84 = arith.constant 0 : index
    %257 = vector.load %arg5[%c0_83, %c0_84] : memref<358x484xbf16, #tpu.memory_space<vmem>>, vector<358x484xbf16>
    %c0_85 = arith.constant 0 : index
    %c0_86 = arith.constant 0 : index
    %258 = vector.load %arg12[%c0_85, %c0_86] : memref<4x72xbf16, #tpu.memory_space<vmem>>, vector<4x72xbf16>
    %cst_87 = arith.constant dense<0.000000e+00> : vector<8x484xf32>
    %259 = tpu.matmul %256, %257, %cst_87 {dimension_numbers = #tpu.dot_dimension_numbers<[1], [0], [0], [1], [0, 0, 1, 1], [], []>} : vector<8x358xbf16>, vector<358x484xbf16>, vector<8x484xf32> -> vector<8x484xf32>
    %260 = arith.truncf %259 : vector<8x484xf32> to vector<8x484xbf16>
    %261 = vector.extract_strided_slice %260 {offsets = [0, 0], sizes = [8, 438], strides = [1, 1]} : vector<8x484xbf16> to vector<8x438xbf16>
    %262 = vector.extract_strided_slice %260 {offsets = [0, 1], sizes = [8, 438], strides = [1, 1]} : vector<8x484xbf16> to vector<8x438xbf16>
    %263 = vector.extract_strided_slice %260 {offsets = [0, 2], sizes = [8, 438], strides = [1, 1]} : vector<8x484xbf16> to vector<8x438xbf16>
    %264 = vector.extract_strided_slice %260 {offsets = [0, 22], sizes = [8, 438], strides = [1, 1]} : vector<8x484xbf16> to vector<8x438xbf16>
    %265 = vector.extract_strided_slice %260 {offsets = [0, 23], sizes = [8, 438], strides = [1, 1]} : vector<8x484xbf16> to vector<8x438xbf16>
    %266 = vector.extract_strided_slice %260 {offsets = [0, 24], sizes = [8, 438], strides = [1, 1]} : vector<8x484xbf16> to vector<8x438xbf16>
    %267 = vector.extract_strided_slice %260 {offsets = [0, 44], sizes = [8, 438], strides = [1, 1]} : vector<8x484xbf16> to vector<8x438xbf16>
    %268 = vector.extract_strided_slice %260 {offsets = [0, 45], sizes = [8, 438], strides = [1, 1]} : vector<8x484xbf16> to vector<8x438xbf16>
    %269 = vector.extract_strided_slice %260 {offsets = [0, 46], sizes = [8, 438], strides = [1, 1]} : vector<8x484xbf16> to vector<8x438xbf16>
    %270 = tpu.concatenate %261, %262, %263, %264, %265, %266, %267, %268, %269 in 0 : vector<8x438xbf16>, vector<8x438xbf16>, vector<8x438xbf16>, vector<8x438xbf16>, vector<8x438xbf16>, vector<8x438xbf16>, vector<8x438xbf16>, vector<8x438xbf16>, vector<8x438xbf16> -> vector<72x438xbf16>
    %cst_88 = arith.constant dense<0.000000e+00> : vector<4x438xf32>
    %271 = tpu.matmul %258, %270, %cst_88 {dimension_numbers = #tpu.dot_dimension_numbers<[1], [0], [0], [1], [0, 0, 1, 1], [], []>} : vector<4x72xbf16>, vector<72x438xbf16>, vector<4x438xf32> -> vector<4x438xf32>
    %cst_89 = arith.constant dense<0.000000e+00> : vector<4x1xf32>
    %272 = tpu.matmul %271, %3, %cst_89 {dimension_numbers = #tpu.dot_dimension_numbers<[1], [0], [0], [1], [0, 0, 1, 1], [], []>} : vector<4x438xf32>, vector<438x1xf32>, vector<4x1xf32> -> vector<4x1xf32>
    %273 = vector.broadcast %272 : vector<4x1xf32> to vector<4x438xf32>
    %274 = arith.subf %271, %273 : vector<4x438xf32>
    %275 = arith.mulf %274, %274 : vector<4x438xf32>
    %cst_90 = arith.constant dense<0.000000e+00> : vector<4x1xf32>
    %276 = tpu.matmul %275, %3, %cst_90 {dimension_numbers = #tpu.dot_dimension_numbers<[1], [0], [0], [1], [0, 0, 1, 1], [], []>} : vector<4x438xf32>, vector<438x1xf32>, vector<4x1xf32> -> vector<4x1xf32>
    %cst_91 = arith.constant 9.99999974E-6 : f32
    %277 = vector.broadcast %cst_91 : f32 to vector<4x1xf32>
    %278 = arith.addf %276, %277 : vector<4x1xf32>
    %279 = math.rsqrt %278 : vector<4x1xf32>
    %280 = vector.broadcast %279 : vector<4x1xf32> to vector<4x438xf32>
    %281 = arith.mulf %274, %280 : vector<4x438xf32>
    %cst_92 = arith.constant 0.000000e+00 : f32
    %282 = vector.broadcast %cst_92 : f32 to vector<4x438xf32>
    %283 = arith.maximumf %281, %282 : vector<4x438xf32>
    %284 = arith.truncf %283 : vector<4x438xf32> to vector<4x438xbf16>
    %c0_93 = arith.constant 0 : index
    %c0_94 = arith.constant 0 : index
    %285 = vector.load %arg6[%c0_93, %c0_94] : memref<438x676xbf16, #tpu.memory_space<vmem>>, vector<438x676xbf16>
    %c0_95 = arith.constant 0 : index
    %c0_96 = arith.constant 0 : index
    %286 = vector.load %arg13[%c0_95, %c0_96] : memref<3x196xbf16, #tpu.memory_space<vmem>>, vector<3x196xbf16>
    %cst_97 = arith.constant dense<0.000000e+00> : vector<4x676xf32>
    %287 = tpu.matmul %284, %285, %cst_97 {dimension_numbers = #tpu.dot_dimension_numbers<[1], [0], [0], [1], [0, 0, 1, 1], [], []>} : vector<4x438xbf16>, vector<438x676xbf16>, vector<4x676xf32> -> vector<4x676xf32>
    %288 = arith.truncf %287 : vector<4x676xf32> to vector<4x676xbf16>
    %289 = vector.extract_strided_slice %288 {offsets = [0, 0], sizes = [4, 514], strides = [1, 1]} : vector<4x676xbf16> to vector<4x514xbf16>
    %290 = vector.extract_strided_slice %288 {offsets = [0, 1], sizes = [4, 514], strides = [1, 1]} : vector<4x676xbf16> to vector<4x514xbf16>
    %291 = vector.extract_strided_slice %288 {offsets = [0, 2], sizes = [4, 514], strides = [1, 1]} : vector<4x676xbf16> to vector<4x514xbf16>
    %292 = vector.extract_strided_slice %288 {offsets = [0, 3], sizes = [4, 514], strides = [1, 1]} : vector<4x676xbf16> to vector<4x514xbf16>
    %293 = vector.extract_strided_slice %288 {offsets = [0, 4], sizes = [4, 514], strides = [1, 1]} : vector<4x676xbf16> to vector<4x514xbf16>
    %294 = vector.extract_strided_slice %288 {offsets = [0, 5], sizes = [4, 514], strides = [1, 1]} : vector<4x676xbf16> to vector<4x514xbf16>
    %295 = vector.extract_strided_slice %288 {offsets = [0, 6], sizes = [4, 514], strides = [1, 1]} : vector<4x676xbf16> to vector<4x514xbf16>
    %296 = vector.extract_strided_slice %288 {offsets = [0, 26], sizes = [4, 514], strides = [1, 1]} : vector<4x676xbf16> to vector<4x514xbf16>
    %297 = vector.extract_strided_slice %288 {offsets = [0, 27], sizes = [4, 514], strides = [1, 1]} : vector<4x676xbf16> to vector<4x514xbf16>
    %298 = vector.extract_strided_slice %288 {offsets = [0, 28], sizes = [4, 514], strides = [1, 1]} : vector<4x676xbf16> to vector<4x514xbf16>
    %299 = vector.extract_strided_slice %288 {offsets = [0, 29], sizes = [4, 514], strides = [1, 1]} : vector<4x676xbf16> to vector<4x514xbf16>
    %300 = vector.extract_strided_slice %288 {offsets = [0, 30], sizes = [4, 514], strides = [1, 1]} : vector<4x676xbf16> to vector<4x514xbf16>
    %301 = vector.extract_strided_slice %288 {offsets = [0, 31], sizes = [4, 514], strides = [1, 1]} : vector<4x676xbf16> to vector<4x514xbf16>
    %302 = vector.extract_strided_slice %288 {offsets = [0, 32], sizes = [4, 514], strides = [1, 1]} : vector<4x676xbf16> to vector<4x514xbf16>
    %303 = vector.extract_strided_slice %288 {offsets = [0, 52], sizes = [4, 514], strides = [1, 1]} : vector<4x676xbf16> to vector<4x514xbf16>
    %304 = vector.extract_strided_slice %288 {offsets = [0, 53], sizes = [4, 514], strides = [1, 1]} : vector<4x676xbf16> to vector<4x514xbf16>
    %305 = vector.extract_strided_slice %288 {offsets = [0, 54], sizes = [4, 514], strides = [1, 1]} : vector<4x676xbf16> to vector<4x514xbf16>
    %306 = vector.extract_strided_slice %288 {offsets = [0, 55], sizes = [4, 514], strides = [1, 1]} : vector<4x676xbf16> to vector<4x514xbf16>
    %307 = vector.extract_strided_slice %288 {offsets = [0, 56], sizes = [4, 514], strides = [1, 1]} : vector<4x676xbf16> to vector<4x514xbf16>
    %308 = vector.extract_strided_slice %288 {offsets = [0, 57], sizes = [4, 514], strides = [1, 1]} : vector<4x676xbf16> to vector<4x514xbf16>
    %309 = vector.extract_strided_slice %288 {offsets = [0, 58], sizes = [4, 514], strides = [1, 1]} : vector<4x676xbf16> to vector<4x514xbf16>
    %310 = vector.extract_strided_slice %288 {offsets = [0, 78], sizes = [4, 514], strides = [1, 1]} : vector<4x676xbf16> to vector<4x514xbf16>
    %311 = vector.extract_strided_slice %288 {offsets = [0, 79], sizes = [4, 514], strides = [1, 1]} : vector<4x676xbf16> to vector<4x514xbf16>
    %312 = vector.extract_strided_slice %288 {offsets = [0, 80], sizes = [4, 514], strides = [1, 1]} : vector<4x676xbf16> to vector<4x514xbf16>
    %313 = vector.extract_strided_slice %288 {offsets = [0, 81], sizes = [4, 514], strides = [1, 1]} : vector<4x676xbf16> to vector<4x514xbf16>
    %314 = vector.extract_strided_slice %288 {offsets = [0, 82], sizes = [4, 514], strides = [1, 1]} : vector<4x676xbf16> to vector<4x514xbf16>
    %315 = vector.extract_strided_slice %288 {offsets = [0, 83], sizes = [4, 514], strides = [1, 1]} : vector<4x676xbf16> to vector<4x514xbf16>
    %316 = vector.extract_strided_slice %288 {offsets = [0, 84], sizes = [4, 514], strides = [1, 1]} : vector<4x676xbf16> to vector<4x514xbf16>
    %317 = vector.extract_strided_slice %288 {offsets = [0, 104], sizes = [4, 514], strides = [1, 1]} : vector<4x676xbf16> to vector<4x514xbf16>
    %318 = vector.extract_strided_slice %288 {offsets = [0, 105], sizes = [4, 514], strides = [1, 1]} : vector<4x676xbf16> to vector<4x514xbf16>
    %319 = vector.extract_strided_slice %288 {offsets = [0, 106], sizes = [4, 514], strides = [1, 1]} : vector<4x676xbf16> to vector<4x514xbf16>
    %320 = vector.extract_strided_slice %288 {offsets = [0, 107], sizes = [4, 514], strides = [1, 1]} : vector<4x676xbf16> to vector<4x514xbf16>
    %321 = vector.extract_strided_slice %288 {offsets = [0, 108], sizes = [4, 514], strides = [1, 1]} : vector<4x676xbf16> to vector<4x514xbf16>
    %322 = vector.extract_strided_slice %288 {offsets = [0, 109], sizes = [4, 514], strides = [1, 1]} : vector<4x676xbf16> to vector<4x514xbf16>
    %323 = vector.extract_strided_slice %288 {offsets = [0, 110], sizes = [4, 514], strides = [1, 1]} : vector<4x676xbf16> to vector<4x514xbf16>
    %324 = vector.extract_strided_slice %288 {offsets = [0, 130], sizes = [4, 514], strides = [1, 1]} : vector<4x676xbf16> to vector<4x514xbf16>
    %325 = vector.extract_strided_slice %288 {offsets = [0, 131], sizes = [4, 514], strides = [1, 1]} : vector<4x676xbf16> to vector<4x514xbf16>
    %326 = vector.extract_strided_slice %288 {offsets = [0, 132], sizes = [4, 514], strides = [1, 1]} : vector<4x676xbf16> to vector<4x514xbf16>
    %327 = vector.extract_strided_slice %288 {offsets = [0, 133], sizes = [4, 514], strides = [1, 1]} : vector<4x676xbf16> to vector<4x514xbf16>
    %328 = vector.extract_strided_slice %288 {offsets = [0, 134], sizes = [4, 514], strides = [1, 1]} : vector<4x676xbf16> to vector<4x514xbf16>
    %329 = vector.extract_strided_slice %288 {offsets = [0, 135], sizes = [4, 514], strides = [1, 1]} : vector<4x676xbf16> to vector<4x514xbf16>
    %330 = vector.extract_strided_slice %288 {offsets = [0, 136], sizes = [4, 514], strides = [1, 1]} : vector<4x676xbf16> to vector<4x514xbf16>
    %331 = vector.extract_strided_slice %288 {offsets = [0, 156], sizes = [4, 514], strides = [1, 1]} : vector<4x676xbf16> to vector<4x514xbf16>
    %332 = vector.extract_strided_slice %288 {offsets = [0, 157], sizes = [4, 514], strides = [1, 1]} : vector<4x676xbf16> to vector<4x514xbf16>
    %333 = vector.extract_strided_slice %288 {offsets = [0, 158], sizes = [4, 514], strides = [1, 1]} : vector<4x676xbf16> to vector<4x514xbf16>
    %334 = vector.extract_strided_slice %288 {offsets = [0, 159], sizes = [4, 514], strides = [1, 1]} : vector<4x676xbf16> to vector<4x514xbf16>
    %335 = vector.extract_strided_slice %288 {offsets = [0, 160], sizes = [4, 514], strides = [1, 1]} : vector<4x676xbf16> to vector<4x514xbf16>
    %336 = vector.extract_strided_slice %288 {offsets = [0, 161], sizes = [4, 514], strides = [1, 1]} : vector<4x676xbf16> to vector<4x514xbf16>
    %337 = vector.extract_strided_slice %288 {offsets = [0, 162], sizes = [4, 514], strides = [1, 1]} : vector<4x676xbf16> to vector<4x514xbf16>
    %338 = tpu.concatenate %289, %290, %291, %292, %293, %294, %295, %296, %297, %298, %299, %300, %301, %302, %303, %304 in 0 : vector<4x514xbf16>, vector<4x514xbf16>, vector<4x514xbf16>, vector<4x514xbf16>, vector<4x514xbf16>, vector<4x514xbf16>, vector<4x514xbf16>, vector<4x514xbf16>, vector<4x514xbf16>, vector<4x514xbf16>, vector<4x514xbf16>, vector<4x514xbf16>, vector<4x514xbf16>, vector<4x514xbf16>, vector<4x514xbf16>, vector<4x514xbf16> -> vector<64x514xbf16>
    %339 = tpu.concatenate %305, %306, %307, %308, %309, %310, %311, %312, %313, %314, %315, %316, %317, %318, %319, %320 in 0 : vector<4x514xbf16>, vector<4x514xbf16>, vector<4x514xbf16>, vector<4x514xbf16>, vector<4x514xbf16>, vector<4x514xbf16>, vector<4x514xbf16>, vector<4x514xbf16>, vector<4x514xbf16>, vector<4x514xbf16>, vector<4x514xbf16>, vector<4x514xbf16>, vector<4x514xbf16>, vector<4x514xbf16>, vector<4x514xbf16>, vector<4x514xbf16> -> vector<64x514xbf16>
    %340 = tpu.concatenate %321, %322, %323, %324, %325, %326, %327, %328, %329, %330, %331, %332, %333, %334, %335, %336 in 0 : vector<4x514xbf16>, vector<4x514xbf16>, vector<4x514xbf16>, vector<4x514xbf16>, vector<4x514xbf16>, vector<4x514xbf16>, vector<4x514xbf16>, vector<4x514xbf16>, vector<4x514xbf16>, vector<4x514xbf16>, vector<4x514xbf16>, vector<4x514xbf16>, vector<4x514xbf16>, vector<4x514xbf16>, vector<4x514xbf16>, vector<4x514xbf16> -> vector<64x514xbf16>
    %341 = tpu.concatenate %338, %339, %340, %337 in 0 : vector<64x514xbf16>, vector<64x514xbf16>, vector<64x514xbf16>, vector<4x514xbf16> -> vector<196x514xbf16>
    %cst_98 = arith.constant dense<0.000000e+00> : vector<3x514xf32>
    %342 = tpu.matmul %286, %341, %cst_98 {dimension_numbers = #tpu.dot_dimension_numbers<[1], [0], [0], [1], [0, 0, 1, 1], [], []>} : vector<3x196xbf16>, vector<196x514xbf16>, vector<3x514xf32> -> vector<3x514xf32>
    %c0_99 = arith.constant 0 : index
    %c0_100 = arith.constant 0 : index
    %343 = vector.load %arg14[%c0_99, %c0_100] : memref<3x1xf32, #tpu.memory_space<vmem>>, vector<3x1xf32>
    %344 = vector.broadcast %343 : vector<3x1xf32> to vector<3x514xf32>
    %345 = arith.addf %342, %344 : vector<3x514xf32>
    %346 = math.tanh %345 : vector<3x514xf32>
    %c0_101 = arith.constant 0 : index
    %c0_102 = arith.constant 0 : index
    %c0_103 = arith.constant 0 : index
    %347 = vector.load %arg15[%c0_101, %c0_102, %c0_103] : memref<1x3x514xf32, #tpu.memory_space<vmem>>, vector<1x3x514xf32>
    %348 = vector.shape_cast %347 : vector<1x3x514xf32> to vector<3x514xf32>
    %349 = vector.shape_cast %346 : vector<3x514xf32> to vector<1x3x514xf32>
    tpu.vector_store %arg15[%c0_101, %c0_102, %c0_103], %349 {strides = array<i32>} : memref<1x3x514xf32, #tpu.memory_space<vmem>>, vector<1x3x514xf32>,
    return
  }
  func.func @transform_0(%arg0: i32) -> (i32, i32, i32) {
    %c0_i32 = arith.constant 0 : i32
    %c0_i32_0 = arith.constant 0 : i32
    %c0_i32_1 = arith.constant 0 : i32
    return %arg0, %c0_i32, %c0_i32_0 : i32, i32, i32
  }
  func.func @transform_1(%arg0: i32) -> (i32, i32) {
    %c0_i32 = arith.constant 0 : i32
    %c0_i32_0 = arith.constant 0 : i32
    %c0_i32_1 = arith.constant 0 : i32
    return %c0_i32, %c0_i32_0 : i32, i32
  }
  func.func @transform_2(%arg0: i32) -> (i32, i32) {
    %c0_i32 = arith.constant 0 : i32
    %c0_i32_0 = arith.constant 0 : i32
    %c0_i32_1 = arith.constant 0 : i32
    return %c0_i32, %c0_i32_0 : i32, i32
  }
  func.func @transform_3(%arg0: i32) -> (i32, i32) {
    %c0_i32 = arith.constant 0 : i32
    %c0_i32_0 = arith.constant 0 : i32
    %c0_i32_1 = arith.constant 0 : i32
    return %c0_i32, %c0_i32_0 : i32, i32
  }
  func.func @transform_4(%arg0: i32) -> (i32, i32) {
    %c0_i32 = arith.constant 0 : i32
    %c0_i32_0 = arith.constant 0 : i32
    %c0_i32_1 = arith.constant 0 : i32
    return %c0_i32, %c0_i32_0 : i32, i32
  }
  func.func @transform_5(%arg0: i32) -> (i32, i32) {
    %c0_i32 = arith.constant 0 : i32
    %c0_i32_0 = arith.constant 0 : i32
    %c0_i32_1 = arith.constant 0 : i32
    return %c0_i32, %c0_i32_0 : i32, i32
  }
  func.func @transform_6(%arg0: i32) -> (i32, i32) {
    %c0_i32 = arith.constant 0 : i32
    %c0_i32_0 = arith.constant 0 : i32
    %c0_i32_1 = arith.constant 0 : i32
    return %c0_i32, %c0_i32_0 : i32, i32
  }
  func.func @transform_7(%arg0: i32) -> (i32, i32) {
    %c0_i32 = arith.constant 0 : i32
    %c0_i32_0 = arith.constant 0 : i32
    %c0_i32_1 = arith.constant 0 : i32
    return %c0_i32, %c0_i32_0 : i32, i32
  }
  func.func @transform_8(%arg0: i32) -> (i32, i32) {
    %c0_i32 = arith.constant 0 : i32
    %c0_i32_0 = arith.constant 0 : i32
    %c0_i32_1 = arith.constant 0 : i32
    return %c0_i32, %c0_i32_0 : i32, i32
  }
  func.func @transform_9(%arg0: i32) -> (i32, i32, i32) {
    %c0_i32 = arith.constant 0 : i32
    %c0_i32_0 = arith.constant 0 : i32
    %c0_i32_1 = arith.constant 0 : i32
    %c0_i32_2 = arith.constant 0 : i32
    return %c0_i32, %c0_i32_0, %c0_i32_1 : i32, i32, i32
  }
  func.func @transform_10(%arg0: i32) -> (i32, i32) {
    %c0_i32 = arith.constant 0 : i32
    %c0_i32_0 = arith.constant 0 : i32
    %c0_i32_1 = arith.constant 0 : i32
    return %c0_i32, %c0_i32_0 : i32, i32
  }
  func.func @transform_11(%arg0: i32) -> (i32, i32) {
    %c0_i32 = arith.constant 0 : i32
    %c0_i32_0 = arith.constant 0 : i32
    %c0_i32_1 = arith.constant 0 : i32
    return %c0_i32, %c0_i32_0 : i32, i32
  }
  func.func @transform_12(%arg0: i32) -> (i32, i32) {
    %c0_i32 = arith.constant 0 : i32
    %c0_i32_0 = arith.constant 0 : i32
    %c0_i32_1 = arith.constant 0 : i32
    return %c0_i32, %c0_i32_0 : i32, i32
  }
  func.func @transform_13(%arg0: i32) -> (i32, i32) {
    %c0_i32 = arith.constant 0 : i32
    %c0_i32_0 = arith.constant 0 : i32
    %c0_i32_1 = arith.constant 0 : i32
    return %c0_i32, %c0_i32_0 : i32, i32
  }
  func.func @transform_14(%arg0: i32) -> (i32, i32, i32) {
    %c0_i32 = arith.constant 0 : i32
    %c0_i32_0 = arith.constant 0 : i32
    %c0_i32_1 = arith.constant 0 : i32
    return %arg0, %c0_i32, %c0_i32_0 : i32, i32, i32
  }
}

</mosaic_0001>

<llo_original>
// kernel: decoder_forward.1
$region0: #{decoder_forward.1}
  #allocation0 [shape = 'u32[]', space=smem, size = 0x4, offset = 0x4, fixed_abs, tag = 'smem constant byte address 0x4 - core index']
  #allocation1 [shape = 'u32[72,128]{1,0:T(1,128)}', space=vmem, size = 0x9000, scoped, tag = 'internal scratch']
  %s0 = inlined_call_operand.vmem [shape: bf16[2,16,256], index: 0, kind: input, shape index: {}]
  %s1 = inlined_call_operand.vmem [shape: bf16[256,286], index: 1, kind: input, shape index: {}]
  %s2 = inlined_call_operand.vmem [shape: bf16[286,324], index: 2, kind: input, shape index: {}]
  %s3 = inlined_call_operand.hbm [shape: bf16[286,400], index: 3, kind: input, shape index: {}]
  %s4 = inlined_call_operand.hbm [shape: bf16[358,484], index: 4, kind: input, shape index: {}]
  %s5 = inlined_call_operand.vmem [shape: bf16[438,676], index: 5, kind: input, shape index: {}]
  %s6 = inlined_call_operand.vmem [shape: f32[286,1], index: 6, kind: input, shape index: {}]
  %s7 = inlined_call_operand.vmem [shape: f32[358,1], index: 7, kind: input, shape index: {}]
  %s8 = inlined_call_operand.vmem [shape: f32[438,1], index: 8, kind: input, shape index: {}]
  %s9 = inlined_call_operand.vmem [shape: bf16[8,16,144], index: 9, kind: input, shape index: {}]
  %s10 = inlined_call_operand.vmem [shape: bf16[8,144], index: 10, kind: input, shape index: {}]
  %s11 = inlined_call_operand.vmem [shape: bf16[4,72], index: 11, kind: input, shape index: {}]
  %s12 = inlined_call_operand.vmem [shape: bf16[3,196], index: 12, kind: input, shape index: {}]
  %s13 = inlined_call_operand.vmem [shape: f32[3,1], index: 13, kind: input, shape index: {}]
  %s14 = inlined_call_operand.vmem [shape: f32[2,3,514], index: 14, kind: output, shape index: {}]
  %s15 = sld [smem:[#allocation0]]
  $region97: #{decoder_forward.1} parent=0
    _
  %s17 = ssub.s32 1, %s15
  %s18 = scalar_select 0, %s17, %s15
  $region1: #{decoder_forward.1} parent=0
    #allocation2 [shape = 'u8[294912]{0}', space=vmem, size = 0x48000, scoped, tag = 'input window, operand 3, single buffered']
    #allocation3 [shape = 's32[2]{0}', space=sflag, size = 0x8, scoped, tag = 'scoped memory for decoder_forward.1']
    #allocation4 [shape = 'u8[368640]{0}', space=vmem, size = 0x5a000, scoped, tag = 'input window, operand 4, single buffered']
    #allocation5 [shape = 's32[1]{0}', space=sflag, size = 0x4, scoped, tag = 'scoped memory for decoder_forward.1']
    %19 = vsyncpa [#allocation3], 0
    %20 = vsyncpa [#allocation5], 0
    loop: start=0, step=1, limit=4
    $region2: #{decoder_forward.1} parent=1 // loop_pre_header
      _
    $region3: #{decoder_forward.1} parent=1 // loop_header
      %s22 = sphi 0, %s26
      %p23 = scmp.ge.s32.totalorder %s22, 4
      %s32 = sphi 0, %s34
      %s35 = sphi 0, %s32
      %s36 = sphi 0, %s35
      %s52 = sphi 0, %s36
      %s56 = sphi 0, %s56
      %s58 = sphi 0, %s56
      %s59 = sphi 0, %s58
      %s73 = sphi 0, %s59
      %s77 = sphi 0, %s77
      %s79 = sphi 0, %s77
      %s80 = sphi 0, %s79
      %s94 = sphi 0, %s80
      %s98 = sphi 0, %s98
      %s100 = sphi 0, %s98
      %s101 = sphi 0, %s100
      %s115 = sphi 0, %s101
      %s119 = sphi 0, %s119
      %s121 = sphi 0, %s119
      %s122 = sphi 0, %s121
      %s136 = sphi 0, %s122
      %s140 = sphi 0, %s140
      %s142 = sphi 0, %s140
      %s143 = sphi 0, %s142
      %s157 = sphi 0, %s143
      %s161 = sphi 0, %s161
      %s163 = sphi 0, %s161
      %s164 = sphi 0, %s163
      %s178 = sphi 0, %s164
      %s182 = sphi 0, %s182
      %s184 = sphi 0, %s182
      %s185 = sphi 0, %s184
      %s199 = sphi 0, %s185
      %s203 = sphi 0, %s203
      %s205 = sphi 0, %s203
      %s206 = sphi 0, %s205
      %s220 = sphi 0, %s206
      %s224 = sphi 0, %s224
      %s226 = sphi 0, %s224
      %s227 = sphi 0, %s226
      %s241 = sphi 0, %s227
      %s245 = sphi 0, %s245
      %s247 = sphi 0, %s245
      %s248 = sphi 0, %s247
      %s262 = sphi 0, %s248
      %s266 = sphi 0, %s266
      %s268 = sphi 0, %s266
      %s269 = sphi 0, %s268
      %s283 = sphi 0, %s269
      %s287 = sphi 0, %s287
      %s289 = sphi 0, %s287
      %s290 = sphi 0, %s289
      %s304 = sphi 0, %s290
      %s308 = sphi 0, %s308
      %s310 = sphi 0, %s308
      %s311 = sphi 0, %s310
      %s325 = sphi 0, %s311
      %s331 = sphi 0, %s333
      %s334 = sphi 0, %s331
      %s335 = sphi 0, %s334
      %s351 = sphi 0, %s335
    $region4: #{decoder_forward.1} parent=1 // loop_header_branch
      %25 = sbr.rel (%p23) target = $region8
    $region5: #{decoder_forward.1} parent=1 // loop_body
      %s27 = ssub.s32 %s22, 1
      %s28 = ssub.s32 %s22, 2
      %s29 = sadd.s32 %s22, 1
      %s30 = ssub.s32 %s22, %s29
      %p31 = scmp.eq.s32.totalorder %s30, 0
      %s33 = sadd.s32 %s32, 1
      %s34 = scalar_select %p31, %s32, %s33
      %p37 = pneg %p31
      %p38 = scmp.eq.s32.totalorder %s22, 1
      %p39 = por %p37, %p38
      %p40 = scmp.ne.s32.totalorder %s32, %s35
      %p41 = scmp.eq.s32.totalorder %s22, 0
      %p42 = por %p40, %p41
      %p43 = scmp.ne.s32.totalorder %s32, %s35
      %p44 = scmp.eq.s32.totalorder %s27, 1
      %p45 = por %p43, %p44
      %p46 = scmp.ne.s32.totalorder %s35, %s36
      %p47 = scmp.eq.s32.totalorder %s27, 0
      %p48 = por %p46, %p47
      %p49 = scmp.ne.s32.totalorder %s35, %s36
      %p50 = scmp.eq.s32.totalorder %s28, 1
      %p51 = por %p49, %p50
      %p53 = scmp.ne.s32.totalorder %s36, %s52
      %p54 = scmp.eq.s32.totalorder %s28, 0
      %p55 = por %p53, %p54
      %s57 = sadd.s32 %s56, 1
      %p60 = scmp.eq.s32.totalorder %s22, 1
      %p61 = scmp.ne.s32.totalorder %s56, %s58
      %p62 = scmp.eq.s32.totalorder %s22, 0
      %p63 = por %p61, %p62
      %p64 = scmp.ne.s32.totalorder %s56, %s58
      %p65 = scmp.eq.s32.totalorder %s27, 1
      %p66 = por %p64, %p65
      %p67 = scmp.ne.s32.totalorder %s58, %s59
      %p68 = scmp.eq.s32.totalorder %s27, 0
      %p69 = por %p67, %p68
      %p70 = scmp.ne.s32.totalorder %s58, %s59
      %p71 = scmp.eq.s32.totalorder %s28, 1
      %p72 = por %p70, %p71
      %p74 = scmp.ne.s32.totalorder %s59, %s73
      %p75 = scmp.eq.s32.totalorder %s28, 0
      %p76 = por %p74, %p75
      %s78 = sadd.s32 %s77, 1
      %p81 = scmp.eq.s32.totalorder %s22, 1
      %p82 = scmp.ne.s32.totalorder %s77, %s79
      %p83 = scmp.eq.s32.totalorder %s22, 0
      %p84 = por %p82, %p83
      %p85 = scmp.ne.s32.totalorder %s77, %s79
      %p86 = scmp.eq.s32.totalorder %s27, 1
      %p87 = por %p85, %p86
      %p88 = scmp.ne.s32.totalorder %s79, %s80
      %p89 = scmp.eq.s32.totalorder %s27, 0
      %p90 = por %p88, %p89
      %p91 = scmp.ne.s32.totalorder %s79, %s80
      %p92 = scmp.eq.s32.totalorder %s28, 1
      %p93 = por %p91, %p92
      %p95 = scmp.ne.s32.totalorder %s80, %s94
      %p96 = scmp.eq.s32.totalorder %s28, 0
      %p97 = por %p95, %p96
      %s99 = sadd.s32 %s98, 1
      %p102 = scmp.eq.s32.totalorder %s22, 1
      %p103 = scmp.ne.s32.totalorder %s98, %s100
      %p104 = scmp.eq.s32.totalorder %s22, 0
      %p105 = por %p103, %p104
      %p106 = scmp.ne.s32.totalorder %s98, %s100
      %p107 = scmp.eq.s32.totalorder %s27, 1
      %p108 = por %p106, %p107
      %p109 = scmp.ne.s32.totalorder %s100, %s101
      %p110 = scmp.eq.s32.totalorder %s27, 0
      %p111 = por %p109, %p110
      %p112 = scmp.ne.s32.totalorder %s100, %s101
      %p113 = scmp.eq.s32.totalorder %s28, 1
      %p114 = por %p112, %p113
      %p116 = scmp.ne.s32.totalorder %s101, %s115
      %p117 = scmp.eq.s32.totalorder %s28, 0
      %p118 = por %p116, %p117
      %s120 = sadd.s32 %s119, 1
      %p123 = scmp.eq.s32.totalorder %s22, 1
      %p124 = scmp.ne.s32.totalorder %s119, %s121
      %p125 = scmp.eq.s32.totalorder %s22, 0
      %p126 = por %p124, %p125
      %p127 = scmp.ne.s32.totalorder %s119, %s121
      %p128 = scmp.eq.s32.totalorder %s27, 1
      %p129 = por %p127, %p128
      %p130 = scmp.ne.s32.totalorder %s121, %s122
      %p131 = scmp.eq.s32.totalorder %s27, 0
      %p132 = por %p130, %p131
      %p133 = scmp.ne.s32.totalorder %s121, %s122
      %p134 = scmp.eq.s32.totalorder %s28, 1
      %p135 = por %p133, %p134
      %p137 = scmp.ne.s32.totalorder %s122, %s136
      %p138 = scmp.eq.s32.totalorder %s28, 0
      %p139 = por %p137, %p138
      %s141 = sadd.s32 %s140, 1
      %p144 = scmp.eq.s32.totalorder %s22, 1
      %p145 = scmp.ne.s32.totalorder %s140, %s142
      %p146 = scmp.eq.s32.totalorder %s22, 0
      %p147 = por %p145, %p146
      %p148 = scmp.ne.s32.totalorder %s140, %s142
      %p149 = scmp.eq.s32.totalorder %s27, 1
      %p150 = por %p148, %p149
      %p151 = scmp.ne.s32.totalorder %s142, %s143
      %p152 = scmp.eq.s32.totalorder %s27, 0
      %p153 = por %p151, %p152
      %p154 = scmp.ne.s32.totalorder %s142, %s143
      %p155 = scmp.eq.s32.totalorder %s28, 1
      %p156 = por %p154, %p155
      %p158 = scmp.ne.s32.totalorder %s143, %s157
      %p159 = scmp.eq.s32.totalorder %s28, 0
      %p160 = por %p158, %p159
      %s162 = sadd.s32 %s161, 1
      %p165 = scmp.eq.s32.totalorder %s22, 1
      %p166 = scmp.ne.s32.totalorder %s161, %s163
      %p167 = scmp.eq.s32.totalorder %s22, 0
      %p168 = por %p166, %p167
      %p169 = scmp.ne.s32.totalorder %s161, %s163
      %p170 = scmp.eq.s32.totalorder %s27, 1
      %p171 = por %p169, %p170
      %p172 = scmp.ne.s32.totalorder %s163, %s164
      %p173 = scmp.eq.s32.totalorder %s27, 0
      %p174 = por %p172, %p173
      %p175 = scmp.ne.s32.totalorder %s163, %s164
      %p176 = scmp.eq.s32.totalorder %s28, 1
      %p177 = por %p175, %p176
      %p179 = scmp.ne.s32.totalorder %s164, %s178
      %p180 = scmp.eq.s32.totalorder %s28, 0
      %p181 = por %p179, %p180
      %s183 = sadd.s32 %s182, 1
      %p186 = scmp.eq.s32.totalorder %s22, 1
      %p187 = scmp.ne.s32.totalorder %s182, %s184
      %p188 = scmp.eq.s32.totalorder %s22, 0
      %p189 = por %p187, %p188
      %p190 = scmp.ne.s32.totalorder %s182, %s184
      %p191 = scmp.eq.s32.totalorder %s27, 1
      %p192 = por %p190, %p191
      %p193 = scmp.ne.s32.totalorder %s184, %s185
      %p194 = scmp.eq.s32.totalorder %s27, 0
      %p195 = por %p193, %p194
      %p196 = scmp.ne.s32.totalorder %s184, %s185
      %p197 = scmp.eq.s32.totalorder %s28, 1
      %p198 = por %p196, %p197
      %p200 = scmp.ne.s32.totalorder %s185, %s199
      %p201 = scmp.eq.s32.totalorder %s28, 0
      %p202 = por %p200, %p201
      %s204 = sadd.s32 %s203, 1
      %p207 = scmp.eq.s32.totalorder %s22, 1
      %p208 = scmp.ne.s32.totalorder %s203, %s205
      %p209 = scmp.eq.s32.totalorder %s22, 0
      %p210 = por %p208, %p209
      %p211 = scmp.ne.s32.totalorder %s203, %s205
      %p212 = scmp.eq.s32.totalorder %s27, 1
      %p213 = por %p211, %p212
      %p214 = scmp.ne.s32.totalorder %s205, %s206
      %p215 = scmp.eq.s32.totalorder %s27, 0
      %p216 = por %p214, %p215
      %p217 = scmp.ne.s32.totalorder %s205, %s206
      %p218 = scmp.eq.s32.totalorder %s28, 1
      %p219 = por %p217, %p218
      %p221 = scmp.ne.s32.totalorder %s206, %s220
      %p222 = scmp.eq.s32.totalorder %s28, 0
      %p223 = por %p221, %p222
      %s225 = sadd.s32 %s224, 1
      %p228 = scmp.eq.s32.totalorder %s22, 1
      %p229 = scmp.ne.s32.totalorder %s224, %s226
      %p230 = scmp.eq.s32.totalorder %s22, 0
      %p231 = por %p229, %p230
      %p232 = scmp.ne.s32.totalorder %s224, %s226
      %p233 = scmp.eq.s32.totalorder %s27, 1
      %p234 = por %p232, %p233
      %p235 = scmp.ne.s32.totalorder %s226, %s227
      %p236 = scmp.eq.s32.totalorder %s27, 0
      %p237 = por %p235, %p236
      %p238 = scmp.ne.s32.totalorder %s226, %s227
      %p239 = scmp.eq.s32.totalorder %s28, 1
      %p240 = por %p238, %p239
      %p242 = scmp.ne.s32.totalorder %s227, %s241
      %p243 = scmp.eq.s32.totalorder %s28, 0
      %p244 = por %p242, %p243
      %s246 = sadd.s32 %s245, 1
      %p249 = scmp.eq.s32.totalorder %s22, 1
      %p250 = scmp.ne.s32.totalorder %s245, %s247
      %p251 = scmp.eq.s32.totalorder %s22, 0
      %p252 = por %p250, %p251
      %p253 = scmp.ne.s32.totalorder %s245, %s247
      %p254 = scmp.eq.s32.totalorder %s27, 1
      %p255 = por %p253, %p254
      %p256 = scmp.ne.s32.totalorder %s247, %s248
      %p257 = scmp.eq.s32.totalorder %s27, 0
      %p258 = por %p256, %p257
      %p259 = scmp.ne.s32.totalorder %s247, %s248
      %p260 = scmp.eq.s32.totalorder %s28, 1
      %p261 = por %p259, %p260
      %p263 = scmp.ne.s32.totalorder %s248, %s262
      %p264 = scmp.eq.s32.totalorder %s28, 0
      %p265 = por %p263, %p264
      %s267 = sadd.s32 %s266, 1
      %p270 = scmp.eq.s32.totalorder %s22, 1
      %p271 = scmp.ne.s32.totalorder %s266, %s268
      %p272 = scmp.eq.s32.totalorder %s22, 0
      %p273 = por %p271, %p272
      %p274 = scmp.ne.s32.totalorder %s266, %s268
      %p275 = scmp.eq.s32.totalorder %s27, 1
      %p276 = por %p274, %p275
      %p277 = scmp.ne.s32.totalorder %s268, %s269
      %p278 = scmp.eq.s32.totalorder %s27, 0
      %p279 = por %p277, %p278
      %p280 = scmp.ne.s32.totalorder %s268, %s269
      %p281 = scmp.eq.s32.totalorder %s28, 1
      %p282 = por %p280, %p281
      %p284 = scmp.ne.s32.totalorder %s269, %s283
      %p285 = scmp.eq.s32.totalorder %s28, 0
      %p286 = por %p284, %p285
      %s288 = sadd.s32 %s287, 1
      %p291 = scmp.eq.s32.totalorder %s22, 1
      %p292 = scmp.ne.s32.totalorder %s287, %s289
      %p293 = scmp.eq.s32.totalorder %s22, 0
      %p294 = por %p292, %p293
      %p295 = scmp.ne.s32.totalorder %s287, %s289
      %p296 = scmp.eq.s32.totalorder %s27, 1
      %p297 = por %p295, %p296
      %p298 = scmp.ne.s32.totalorder %s289, %s290
      %p299 = scmp.eq.s32.totalorder %s27, 0
      %p300 = por %p298, %p299
      %p301 = scmp.ne.s32.totalorder %s289, %s290
      %p302 = scmp.eq.s32.totalorder %s28, 1
      %p303 = por %p301, %p302
      %p305 = scmp.ne.s32.totalorder %s290, %s304
      %p306 = scmp.eq.s32.totalorder %s28, 0
      %p307 = por %p305, %p306
      %s309 = sadd.s32 %s308, 1
      %p312 = scmp.eq.s32.totalorder %s22, 1
      %p313 = scmp.ne.s32.totalorder %s308, %s310
      %p314 = scmp.eq.s32.totalorder %s22, 0
      %p315 = por %p313, %p314
      %p316 = scmp.ne.s32.totalorder %s308, %s310
      %p317 = scmp.eq.s32.totalorder %s27, 1
      %p318 = por %p316, %p317
      %p319 = scmp.ne.s32.totalorder %s310, %s311
      %p320 = scmp.eq.s32.totalorder %s27, 0
      %p321 = por %p319, %p320
      %p322 = scmp.ne.s32.totalorder %s310, %s311
      %p323 = scmp.eq.s32.totalorder %s28, 1
      %p324 = por %p322, %p323
      %p326 = scmp.ne.s32.totalorder %s311, %s325
      %p327 = scmp.eq.s32.totalorder %s28, 0
      %p328 = por %p326, %p327
      %s329 = ssub.s32 %s22, %s29
      %p330 = scmp.eq.s32.totalorder %s329, 0
      %s332 = sadd.s32 %s331, 1
      %s333 = scalar_select %p330, %s331, %s332
      %p336 = pneg %p330
      %p337 = scmp.eq.s32.totalorder %s22, 1
      %p338 = por %p336, %p337
      %p339 = scmp.ne.s32.totalorder %s331, %s334
      %p340 = scmp.eq.s32.totalorder %s22, 0
      %p341 = por %p339, %p340
      %p342 = scmp.ne.s32.totalorder %s331, %s334
      %p343 = scmp.eq.s32.totalorder %s27, 1
      %p344 = por %p342, %p343
      %p345 = scmp.ne.s32.totalorder %s334, %s335
      %p346 = scmp.eq.s32.totalorder %s27, 0
      %p347 = por %p345, %p346
      %p348 = scmp.ne.s32.totalorder %s334, %s335
      %p349 = scmp.eq.s32.totalorder %s28, 1
      %p350 = por %p348, %p349
      %p352 = scmp.ne.s32.totalorder %s335, %s351
      %p353 = scmp.eq.s32.totalorder %s28, 0
      %p354 = por %p352, %p353
      %p355 = scmp.le.s32.totalorder 1, %s22
      %p356 = scmp.lt.s32.totalorder %s22, 3
      %p357 = pnand %p355, %p356
      %p358 = pneg %p357
      // Predicated region
      $region9: #{decoder_forward.1} parent=5 // pred_check
        _
      $region10: #{decoder_forward.1} parent=5 // pred_check_branch
        %360 = sbr.rel (%p357) target = $region12
      $region11: #{decoder_forward.1} parent=5 // pred_region
        %s361 = ssub.s32 %s22, 1
        // Predicated region
        $region13: #{decoder_forward.1} parent=11 // pred_check
          %p362 = pneg %p69
        $region14: #{decoder_forward.1} parent=11 // pred_check_branch
          %364 = sbr.rel (%p362) target = $region16
        $region15: #{decoder_forward.1} parent=11 // pred_region
          _
        $region16: #{decoder_forward.1} parent=11 // pred_fallthru
          _
        // Predicated region
        $region17: #{decoder_forward.1} parent=11 // pred_check
          %p365 = pneg %p90
        $region18: #{decoder_forward.1} parent=11 // pred_check_branch
          %367 = sbr.rel (%p365) target = $region20
        $region19: #{decoder_forward.1} parent=11 // pred_region
          _
        $region20: #{decoder_forward.1} parent=11 // pred_fallthru
          _
        // Predicated region
        $region21: #{decoder_forward.1} parent=11 // pred_check
          %p368 = pneg %p111
        $region22: #{decoder_forward.1} parent=11 // pred_check_branch
          %370 = sbr.rel (%p368) target = $region24
        $region23: #{decoder_forward.1} parent=11 // pred_region
          %372 = vsyncadd [#allocation3], 0
          %s373 = sshll.u32 %s3, 4
          %s374 = int_to_ptr.hbm [resolvable:$true] %s373
          %s375 = sshll.u32 [#allocation2], 4
          %s376 = int_to_ptr.vmem [resolvable:$true] %s375
          %381 = dma.hbm_to_vmem [thread:$0]  %s374, 9216, %s376, [#allocation3], 256, 256, 16
        $region24: #{decoder_forward.1} parent=11 // pred_fallthru
          _
        // Predicated region
        $region25: #{decoder_forward.1} parent=11 // pred_check
          %p382 = pneg %p132
        $region26: #{decoder_forward.1} parent=11 // pred_check_branch
          %384 = sbr.rel (%p382) target = $region28
        $region27: #{decoder_forward.1} parent=11 // pred_region
          %386 = vsyncadd [#allocation5], 0
          %s387 = sshll.u32 %s4, 4
          %s388 = int_to_ptr.hbm [resolvable:$true] %s387
          %s389 = sshll.u32 [#allocation4], 4
          %s390 = int_to_ptr.vmem [resolvable:$true] %s389
          %395 = dma.hbm_to_vmem [thread:$0]  %s388, 11520, %s390, [#allocation5], 256, 256, 16
        $region28: #{decoder_forward.1} parent=11 // pred_fallthru
          _
        // Predicated region
        $region29: #{decoder_forward.1} parent=11 // pred_check
          %p396 = pneg %p153
        $region30: #{decoder_forward.1} parent=11 // pred_check_branch
          %398 = sbr.rel (%p396) target = $region32
        $region31: #{decoder_forward.1} parent=11 // pred_region
          _
        $region32: #{decoder_forward.1} parent=11 // pred_fallthru
          _
        // Predicated region
        $region33: #{decoder_forward.1} parent=11 // pred_check
          %p399 = pneg %p174
        $region34: #{decoder_forward.1} parent=11 // pred_check_branch
          %401 = sbr.rel (%p399) target = $region36
        $region35: #{decoder_forward.1} parent=11 // pred_region
          _
        $region36: #{decoder_forward.1} parent=11 // pred_fallthru
          _
        // Predicated region
        $region37: #{decoder_forward.1} parent=11 // pred_check
          %p402 = pneg %p195
        $region38: #{decoder_forward.1} parent=11 // pred_check_branch
          %404 = sbr.rel (%p402) target = $region40
        $region39: #{decoder_forward.1} parent=11 // pred_region
          _
        $region40: #{decoder_forward.1} parent=11 // pred_fallthru
          _
        // Predicated region
        $region41: #{decoder_forward.1} parent=11 // pred_check
          %p405 = pneg %p216
        $region42: #{decoder_forward.1} parent=11 // pred_check_branch
          %407 = sbr.rel (%p405) target = $region44
        $region43: #{decoder_forward.1} parent=11 // pred_region
          _
        $region44: #{decoder_forward.1} parent=11 // pred_fallthru
          _
        // Predicated region
        $region45: #{decoder_forward.1} parent=11 // pred_check
          %p408 = pneg %p237
        $region46: #{decoder_forward.1} parent=11 // pred_check_branch
          %410 = sbr.rel (%p408) target = $region48
        $region47: #{decoder_forward.1} parent=11 // pred_region
          _
        $region48: #{decoder_forward.1} parent=11 // pred_fallthru
          _
        // Predicated region
        $region49: #{decoder_forward.1} parent=11 // pred_check
          %p411 = pneg %p258
        $region50: #{decoder_forward.1} parent=11 // pred_check_branch
          %413 = sbr.rel (%p411) target = $region52
        $region51: #{decoder_forward.1} parent=11 // pred_region
          _
        $region52: #{decoder_forward.1} parent=11 // pred_fallthru
          _
        // Predicated region
        $region53: #{decoder_forward.1} parent=11 // pred_check
          %p414 = pneg %p279
        $region54: #{decoder_forward.1} parent=11 // pred_check_branch
          %416 = sbr.rel (%p414) target = $region56
        $region55: #{decoder_forward.1} parent=11 // pred_region
          _
        $region56: #{decoder_forward.1} parent=11 // pred_fallthru
          _
        // Predicated region
        $region57: #{decoder_forward.1} parent=11 // pred_check
          %p417 = pneg %p300
        $region58: #{decoder_forward.1} parent=11 // pred_check_branch
          %419 = sbr.rel (%p417) target = $region60
        $region59: #{decoder_forward.1} parent=11 // pred_region
          _
        $region60: #{decoder_forward.1} parent=11 // pred_fallthru
          _
        // Predicated region
        $region61: #{decoder_forward.1} parent=11 // pred_check
          %p420 = pneg %p321
        $region62: #{decoder_forward.1} parent=11 // pred_check_branch
          %422 = sbr.rel (%p420) target = $region64
        $region63: #{decoder_forward.1} parent=11 // pred_region
          _
        $region64: #{decoder_forward.1} parent=11 // pred_fallthru
          _
      $region12: #{decoder_forward.1} parent=5 // pred_fallthru
        _
      %p423 = scmp.lt.s32.totalorder %s22, 2
      // Predicated region
      $region65: #{decoder_forward.1} parent=5 // pred_check
        %p424 = pneg %p423
      $region66: #{decoder_forward.1} parent=5 // pred_check_branch
        %426 = sbr.rel (%p424) target = $region68
      $region67: #{decoder_forward.1} parent=5 // pred_region
        // Predicated region
        $region69: #{decoder_forward.1} parent=67 // pred_check
          %p427 = pneg %p42
        $region70: #{decoder_forward.1} parent=67 // pred_check_branch
          %429 = sbr.rel (%p427) target = $region72
        $region71: #{decoder_forward.1} parent=67 // pred_region
          %p430 = scmp.lt.s32.totalorder %s22, 1
          %s431 = scalar_select %p430, %s22, 1
          %s432 = smul.addr %s431, 4
          %s433 = smul.addr %s432, 4
          %s434 = scalar_lea.vmem %s0, %s433
        $region72: #{decoder_forward.1} parent=67 // pred_fallthru
          _
      $region68: #{decoder_forward.1} parent=5 // pred_fallthru
        _
      %p435 = scmp.le.s32.totalorder 1, %s22
      %p436 = scmp.lt.s32.totalorder %s22, 3
      %p437 = pnand %p435, %p436
      %p438 = pneg %p437
      // Predicated region
      $region73: #{decoder_forward.1} parent=5 // pred_check
        _
      $region74: #{decoder_forward.1} parent=5 // pred_check_branch
        %440 = sbr.rel (%p437) target = $region76
      $region75: #{decoder_forward.1} parent=5 // pred_region
        %s441 = ssub.s32 %s22, 1
        // Predicated region
        $region77: #{decoder_forward.1} parent=75 // pred_check
          %p442 = pneg %p111
        $region78: #{decoder_forward.1} parent=75 // pred_check_branch
          %444 = sbr.rel (%p442) target = $region80
        $region79: #{decoder_forward.1} parent=75 // pred_region
          %446 = dma.done [#allocation3], 9216
        $region80: #{decoder_forward.1} parent=75 // pred_fallthru
          _
        // Predicated region
        $region81: #{decoder_forward.1} parent=75 // pred_check
          %p447 = pneg %p132
        $region82: #{decoder_forward.1} parent=75 // pred_check_branch
          %449 = sbr.rel (%p447) target = $region84
        $region83: #{decoder_forward.1} parent=75 // pred_region
          %451 = dma.done [#allocation5], 11520
        $region84: #{decoder_forward.1} parent=75 // pred_fallthru
          _
        %p452 = scmp.lt.s32.totalorder %s27, 1
        %s453 = scalar_select %p452, %s27, 1
        %s454 = smul.addr %s453, 4
        %s455 = smul.addr %s454, 4
        %s456 = scalar_lea.vmem %s0, %s455
        %p457 = pneg %p48
        %p458 = pneg %p45
        %p459 = pneg %p69
        %p460 = pneg %p66
        %p461 = pneg %p90
        %p462 = pneg %p87
        %p463 = pneg %p111
        %p464 = pneg %p108
        %p465 = pneg %p132
        %p466 = pneg %p129
        %p467 = pneg %p153
        %p468 = pneg %p150
        %p469 = pneg %p174
        %p470 = pneg %p171
        %p471 = pneg %p195
        %p472 = pneg %p192
        %p473 = pneg %p216
        %p474 = pneg %p213
        %p475 = pneg %p237
        %p476 = pneg %p234
        %p477 = pneg %p258
        %p478 = pneg %p255
        %p479 = pneg %p279
        %p480 = pneg %p276
        %p481 = pneg %p300
        %p482 = pneg %p297
        %p483 = pneg %p321
        %p484 = pneg %p318
        %p485 = pneg %p347
        %p486 = pneg %p344
        %p487 = scmp.lt.s32.totalorder %s27, 1
        %s488 = scalar_select %p487, %s27, 1
        %s489 = smul.addr %s488, 5
        %s490 = smul.addr %s489, 4
        %s491 = scalar_lea.vmem %s14, %s490
        %p492 = scmp.lt.s32.totalorder %s27, 1
        %s493 = scalar_select %p492, %s27, 1
        %s494 = smul.addr %s493, 4
        %s495 = smul.addr %s494, 4
        %s496 = scalar_lea.vmem %s0, %s495
        %p497 = scmp.lt.s32.totalorder %s27, 1
        %s498 = scalar_select %p497, %s27, 1
        %s499 = smul.addr %s498, 5
        %s500 = smul.addr %s499, 4
        %s501 = scalar_lea.vmem %s14, %s500
        %v503 = vld [vmem:[%s2] sm:$0xff]
        %v504 = vld [vmem:[%s2 + $0x8] sm:$0xf]
        %v505 = vld [vmem:[%s2 + $0xc] sm:$0xff]
        %v506 = vld [vmem:[%s2 + $0x14] sm:$0xf]
        %v507 = vld [vmem:[%s2 + $0x18] sm:$0xff]
        %v508 = vld [vmem:[%s2 + $0x20] sm:$0xf]
        %v509 = vld [vmem:[%s2 + $0x24] sm:$0xff]
        %v510 = vld [vmem:[%s2 + $0x2c] sm:$0xf]
        %v511 = vld [vmem:[%s2 + $0x30] sm:$0xff]
        %v512 = vld [vmem:[%s2 + $0x38] sm:$0xf]
        %v513 = vld [vmem:[%s2 + $0x3c] sm:$0xff]
        %v514 = vld [vmem:[%s2 + $0x44] sm:$0xf]
        %v515 = vld [vmem:[%s2 + $0x48] sm:$0xff]
        %v516 = vld [vmem:[%s2 + $0x50] sm:$0xf]
        %v517 = vld [vmem:[%s2 + $0x54] sm:$0xff]
        %v518 = vld [vmem:[%s2 + $0x5c] sm:$0xf]
        %v519 = vld [vmem:[%s2 + $0x60] sm:$0xff]
        %v520 = vld [vmem:[%s2 + $0x68] sm:$0xf]
        %v521 = vld [vmem:[%s2 + $0x6c] sm:$0xff]
        %v522 = vld [vmem:[%s2 + $0x74] sm:$0xf]
        %v523 = vld [vmem:[%s2 + $0x78] sm:$0xff]
        %v524 = vld [vmem:[%s2 + $0x80] sm:$0xf]
        %v525 = vld [vmem:[%s2 + $0x84] sm:$0xff]
        %v526 = vld [vmem:[%s2 + $0x8c] sm:$0xf]
        %v527 = vld [vmem:[%s2 + $0x90] sm:$0xff]
        %v528 = vld [vmem:[%s2 + $0x98] sm:$0xf]
        %v529 = vld [vmem:[%s2 + $0x9c] sm:$0xff]
        %v530 = vld [vmem:[%s2 + $0xa4] sm:$0xf]
        %v531 = vld [vmem:[%s2 + $0xa8] sm:$0xff]
        %v532 = vld [vmem:[%s2 + $0xb0] sm:$0xf]
        %v533 = vld [vmem:[%s2 + $0xb4] sm:$0xff]
        %v534 = vld [vmem:[%s2 + $0xbc] sm:$0xf]
        %v535 = vld [vmem:[%s2 + $0xc0] sm:$0xff]
        %v536 = vld [vmem:[%s2 + $0xc8] sm:$0xf]
        %v537 = vld [vmem:[%s2 + $0xcc] sm:$0xff]
        %v538 = vld [vmem:[%s2 + $0xd4] sm:$0xf]
        %v539 = vld [vmem:[%s2 + $0xd8] sm:$0xff]
        %v540 = vld [vmem:[%s2 + $0xe0] sm:$0xf]
        %v541 = vld [vmem:[%s2 + $0xe4] sm:$0xff]
        %v542 = vld [vmem:[%s2 + $0xec] sm:$0xf]
        %v543 = vld [vmem:[%s2 + $0xf0] sm:$0xff]
        %v544 = vld [vmem:[%s2 + $0xf8] sm:$0xf]
        %v545 = vld [vmem:[%s2 + $0xfc] sm:$0xff]
        %v546 = vld [vmem:[%s2 + $0x104] sm:$0xf]
        %v547 = vld [vmem:[%s2 + $0x108] sm:$0xff]
        %v548 = vld [vmem:[%s2 + $0x110] sm:$0xf]
        %v549 = vld [vmem:[%s2 + $0x114] sm:$0xff]
        %v550 = vld [vmem:[%s2 + $0x11c] sm:$0xf]
        %v551 = vld [vmem:[%s2 + $0x120] sm:$0xff]
        %v552 = vld [vmem:[%s2 + $0x128] sm:$0xf]
        %v553 = vld [vmem:[%s2 + $0x12c] sm:$0xff]
        %v554 = vld [vmem:[%s2 + $0x134] sm:$0xf]
        %v555 = vld [vmem:[%s2 + $0x138] sm:$0xff]
        %v556 = vld [vmem:[%s2 + $0x140] sm:$0xf]
        %v557 = vld [vmem:[%s2 + $0x144] sm:$0xff]
        %v558 = vld [vmem:[%s2 + $0x14c] sm:$0xf]
        %v559 = vld [vmem:[%s2 + $0x150] sm:$0xff]
        %v560 = vld [vmem:[%s2 + $0x158] sm:$0xf]
        %v561 = vld [vmem:[%s2 + $0x15c] sm:$0xff]
        %v562 = vld [vmem:[%s2 + $0x164] sm:$0xf]
        %v563 = vld [vmem:[%s2 + $0x168] sm:$0xff]
        %v564 = vld [vmem:[%s2 + $0x170] sm:$0xf]
        %v565 = vld [vmem:[%s2 + $0x174] sm:$0xff]
        %v566 = vld [vmem:[%s2 + $0x17c] sm:$0xf]
        %v567 = vld [vmem:[%s2 + $0x180] sm:$0xff]
        %v568 = vld [vmem:[%s2 + $0x188] sm:$0xf]
        %v569 = vld [vmem:[%s2 + $0x18c] sm:$0xff]
        %v570 = vld [vmem:[%s2 + $0x194] sm:$0xf]
        %v571 = vld [vmem:[%s2 + $0x198] sm:$0xff]
        %v572 = vld [vmem:[%s2 + $0x1a0] sm:$0xf]
        %v573 = vld [vmem:[%s2 + $0x1a4] sm:$0x77]
        %v574 = vld [vmem:[%s2 + $0x1ac] sm:$0x7]
        %v575 = vld [vmem:[%s6] sm:$0xff]
        %v576 = vld [vmem:[%s6 + $0x8] sm:$0xff]
        %v577 = vld [vmem:[%s6 + $0x10] sm:$0xff]
        %v578 = vld [vmem:[%s6 + $0x18] sm:$0xff]
        %v579 = vld [vmem:[%s6 + $0x20] sm:$0xff]
        %v580 = vld [vmem:[%s6 + $0x28] sm:$0xff]
        %v581 = vld [vmem:[%s6 + $0x30] sm:$0xff]
        %v582 = vld [vmem:[%s6 + $0x38] sm:$0xff]
        %v583 = vld [vmem:[%s6 + $0x40] sm:$0xff]
        %v584 = vld [vmem:[%s6 + $0x48] sm:$0xff]
        %v585 = vld [vmem:[%s6 + $0x50] sm:$0xff]
        %v586 = vld [vmem:[%s6 + $0x58] sm:$0xff]
        %v587 = vld [vmem:[%s6 + $0x60] sm:$0xff]
        %v588 = vld [vmem:[%s6 + $0x68] sm:$0xff]
        %v589 = vld [vmem:[%s6 + $0x70] sm:$0xff]
        %v590 = vld [vmem:[%s6 + $0x78] sm:$0xff]
        %v591 = vld [vmem:[%s6 + $0x80] sm:$0xff]
        %v592 = vld [vmem:[%s6 + $0x88] sm:$0xff]
        %v593 = vld [vmem:[%s6 + $0x90] sm:$0xff]
        %v594 = vld [vmem:[%s6 + $0x98] sm:$0xff]
        %v595 = vld [vmem:[%s6 + $0xa0] sm:$0xff]
        %v596 = vld [vmem:[%s6 + $0xa8] sm:$0xff]
        %v597 = vld [vmem:[%s6 + $0xb0] sm:$0xff]
        %v598 = vld [vmem:[%s6 + $0xb8] sm:$0xff]
        %v599 = vld [vmem:[%s6 + $0xc0] sm:$0xff]
        %v600 = vld [vmem:[%s6 + $0xc8] sm:$0xff]
        %v601 = vld [vmem:[%s6 + $0xd0] sm:$0xff]
        %v602 = vld [vmem:[%s6 + $0xd8] sm:$0xff]
        %v603 = vld [vmem:[%s6 + $0xe0] sm:$0xff]
        %v604 = vld [vmem:[%s6 + $0xe8] sm:$0xff]
        %v605 = vld [vmem:[%s6 + $0xf0] sm:$0xff]
        %v606 = vld [vmem:[%s6 + $0xf8] sm:$0xff]
        %v607 = vld [vmem:[%s6 + $0x100] sm:$0xff]
        %v608 = vld [vmem:[%s6 + $0x108] sm:$0xff]
        %v609 = vld [vmem:[%s6 + $0x110] sm:$0xff]
        %v610 = vld [vmem:[%s6 + $0x118] sm:$0x3f]
        %v611 = vld [vmem:[%s7] sm:$0xff]
        %v612 = vld [vmem:[%s7 + $0x8] sm:$0xff]
        %v613 = vld [vmem:[%s7 + $0x10] sm:$0xff]
        %v614 = vld [vmem:[%s7 + $0x18] sm:$0xff]
        %v615 = vld [vmem:[%s7 + $0x20] sm:$0xff]
        %v616 = vld [vmem:[%s7 + $0x28] sm:$0xff]
        %v617 = vld [vmem:[%s7 + $0x30] sm:$0xff]
        %v618 = vld [vmem:[%s7 + $0x38] sm:$0xff]
        %v619 = vld [vmem:[%s7 + $0x40] sm:$0xff]
        %v620 = vld [vmem:[%s7 + $0x48] sm:$0xff]
        %v621 = vld [vmem:[%s7 + $0x50] sm:$0xff]
        %v622 = vld [vmem:[%s7 + $0x58] sm:$0xff]
        %v623 = vld [vmem:[%s7 + $0x60] sm:$0xff]
        %v624 = vld [vmem:[%s7 + $0x68] sm:$0xff]
        %v625 = vld [vmem:[%s7 + $0x70] sm:$0xff]
        %v626 = vld [vmem:[%s7 + $0x78] sm:$0xff]
        %v627 = vld [vmem:[%s7 + $0x80] sm:$0xff]
        %v628 = vld [vmem:[%s7 + $0x88] sm:$0xff]
        %v629 = vld [vmem:[%s7 + $0x90] sm:$0xff]
        %v630 = vld [vmem:[%s7 + $0x98] sm:$0xff]
        %v631 = vld [vmem:[%s7 + $0xa0] sm:$0xff]
        %v632 = vld [vmem:[%s7 + $0xa8] sm:$0xff]
        %v633 = vld [vmem:[%s7 + $0xb0] sm:$0xff]
        %v634 = vld [vmem:[%s7 + $0xb8] sm:$0xff]
        %v635 = vld [vmem:[%s7 + $0xc0] sm:$0xff]
        %v636 = vld [vmem:[%s7 + $0xc8] sm:$0xff]
        %v637 = vld [vmem:[%s7 + $0xd0] sm:$0xff]
        %v638 = vld [vmem:[%s7 + $0xd8] sm:$0xff]
        %v639 = vld [vmem:[%s7 + $0xe0] sm:$0xff]
        %v640 = vld [vmem:[%s7 + $0xe8] sm:$0xff]
        %v641 = vld [vmem:[%s7 + $0xf0] sm:$0xff]
        %v642 = vld [vmem:[%s7 + $0xf8] sm:$0xff]
        %v643 = vld [vmem:[%s7 + $0x100] sm:$0xff]
        %v644 = vld [vmem:[%s7 + $0x108] sm:$0xff]
        %v645 = vld [vmem:[%s7 + $0x110] sm:$0xff]
        %v646 = vld [vmem:[%s7 + $0x118] sm:$0xff]
        %v647 = vld [vmem:[%s7 + $0x120] sm:$0xff]
        %v648 = vld [vmem:[%s7 + $0x128] sm:$0xff]
        %v649 = vld [vmem:[%s7 + $0x130] sm:$0xff]
        %v650 = vld [vmem:[%s7 + $0x138] sm:$0xff]
        %v651 = vld [vmem:[%s7 + $0x140] sm:$0xff]
        %v652 = vld [vmem:[%s7 + $0x148] sm:$0xff]
        %v653 = vld [vmem:[%s7 + $0x150] sm:$0xff]
        %v654 = vld [vmem:[%s7 + $0x158] sm:$0xff]
        %v655 = vld [vmem:[%s7 + $0x160] sm:$0x3f]
        %v656 = vld [vmem:[%s8] sm:$0xff]
        %v657 = vld [vmem:[%s8 + $0x8] sm:$0xff]
        %v658 = vld [vmem:[%s8 + $0x10] sm:$0xff]
        %v659 = vld [vmem:[%s8 + $0x18] sm:$0xff]
        %v660 = vld [vmem:[%s8 + $0x20] sm:$0xff]
        %v661 = vld [vmem:[%s8 + $0x28] sm:$0xff]
        %v662 = vld [vmem:[%s8 + $0x30] sm:$0xff]
        %v663 = vld [vmem:[%s8 + $0x38] sm:$0xff]
        %v664 = vld [vmem:[%s8 + $0x40] sm:$0xff]
        %v665 = vld [vmem:[%s8 + $0x48] sm:$0xff]
        %v666 = vld [vmem:[%s8 + $0x50] sm:$0xff]
        %v667 = vld [vmem:[%s8 + $0x58] sm:$0xff]
        %v668 = vld [vmem:[%s8 + $0x60] sm:$0xff]
        %v669 = vld [vmem:[%s8 + $0x68] sm:$0xff]
        %v670 = vld [vmem:[%s8 + $0x70] sm:$0xff]
        %v671 = vld [vmem:[%s8 + $0x78] sm:$0xff]
        %v672 = vld [vmem:[%s8 + $0x80] sm:$0xff]
        %v673 = vld [vmem:[%s8 + $0x88] sm:$0xff]
        %v674 = vld [vmem:[%s8 + $0x90] sm:$0xff]
        %v675 = vld [vmem:[%s8 + $0x98] sm:$0xff]
        %v676 = vld [vmem:[%s8 + $0xa0] sm:$0xff]
        %v677 = vld [vmem:[%s8 + $0xa8] sm:$0xff]
        %v678 = vld [vmem:[%s8 + $0xb0] sm:$0xff]
        %v679 = vld [vmem:[%s8 + $0xb8] sm:$0xff]
        %v680 = vld [vmem:[%s8 + $0xc0] sm:$0xff]
        %v681 = vld [vmem:[%s8 + $0xc8] sm:$0xff]
        %v682 = vld [vmem:[%s8 + $0xd0] sm:$0xff]
        %v683 = vld [vmem:[%s8 + $0xd8] sm:$0xff]
        %v684 = vld [vmem:[%s8 + $0xe0] sm:$0xff]
        %v685 = vld [vmem:[%s8 + $0xe8] sm:$0xff]
        %v686 = vld [vmem:[%s8 + $0xf0] sm:$0xff]
        %v687 = vld [vmem:[%s8 + $0xf8] sm:$0xff]
        %v688 = vld [vmem:[%s8 + $0x100] sm:$0xff]
        %v689 = vld [vmem:[%s8 + $0x108] sm:$0xff]
        %v690 = vld [vmem:[%s8 + $0x110] sm:$0xff]
        %v691 = vld [vmem:[%s8 + $0x118] sm:$0xff]
        %v692 = vld [vmem:[%s8 + $0x120] sm:$0xff]
        %v693 = vld [vmem:[%s8 + $0x128] sm:$0xff]
        %v694 = vld [vmem:[%s8 + $0x130] sm:$0xff]
        %v695 = vld [vmem:[%s8 + $0x138] sm:$0xff]
        %v696 = vld [vmem:[%s8 + $0x140] sm:$0xff]
        %v697 = vld [vmem:[%s8 + $0x148] sm:$0xff]
        %v698 = vld [vmem:[%s8 + $0x150] sm:$0xff]
        %v699 = vld [vmem:[%s8 + $0x158] sm:$0xff]
        %v700 = vld [vmem:[%s8 + $0x160] sm:$0xff]
        %v701 = vld [vmem:[%s8 + $0x168] sm:$0xff]
        %v702 = vld [vmem:[%s8 + $0x170] sm:$0xff]
        %v703 = vld [vmem:[%s8 + $0x178] sm:$0xff]
        %v704 = vld [vmem:[%s8 + $0x180] sm:$0xff]
        %v705 = vld [vmem:[%s8 + $0x188] sm:$0xff]
        %v706 = vld [vmem:[%s8 + $0x190] sm:$0xff]
        %v707 = vld [vmem:[%s8 + $0x198] sm:$0xff]
        %v708 = vld [vmem:[%s8 + $0x1a0] sm:$0xff]
        %v709 = vld [vmem:[%s8 + $0x1a8] sm:$0xff]
        %v710 = vld [vmem:[%s8 + $0x1b0] sm:$0x3f]
        %v711 = vld [vmem:[%s496] sm:$0xff]
        %v712 = vld [vmem:[%s496 + $0x8] sm:$0xff]
        %v713 = vld [vmem:[%s1] sm:$0xff]
        %v714 = vld [vmem:[%s1 + $0x8] sm:$0xf]
        %v715 = vld [vmem:[%s1 + $0xc] sm:$0xff]
        %v716 = vld [vmem:[%s1 + $0x14] sm:$0xf]
        %v717 = vld [vmem:[%s1 + $0x18] sm:$0xff]
        %v718 = vld [vmem:[%s1 + $0x20] sm:$0xf]
        %v719 = vld [vmem:[%s1 + $0x24] sm:$0xff]
        %v720 = vld [vmem:[%s1 + $0x2c] sm:$0xf]
        %v721 = vld [vmem:[%s1 + $0x30] sm:$0xff]
        %v722 = vld [vmem:[%s1 + $0x38] sm:$0xf]
        %v723 = vld [vmem:[%s1 + $0x3c] sm:$0xff]
        %v724 = vld [vmem:[%s1 + $0x44] sm:$0xf]
        %v725 = vld [vmem:[%s1 + $0x48] sm:$0xff]
        %v726 = vld [vmem:[%s1 + $0x50] sm:$0xf]
        %v727 = vld [vmem:[%s1 + $0x54] sm:$0xff]
        %v728 = vld [vmem:[%s1 + $0x5c] sm:$0xf]
        %v729 = vld [vmem:[%s1 + $0x60] sm:$0xff]
        %v730 = vld [vmem:[%s1 + $0x68] sm:$0xf]
        %v731 = vld [vmem:[%s1 + $0x6c] sm:$0xff]
        %v732 = vld [vmem:[%s1 + $0x74] sm:$0xf]
        %v733 = vld [vmem:[%s1 + $0x78] sm:$0xff]
        %v734 = vld [vmem:[%s1 + $0x80] sm:$0xf]
        %v735 = vld [vmem:[%s1 + $0x84] sm:$0xff]
        %v736 = vld [vmem:[%s1 + $0x8c] sm:$0xf]
        %v737 = vld [vmem:[%s1 + $0x90] sm:$0xff]
        %v738 = vld [vmem:[%s1 + $0x98] sm:$0xf]
        %v739 = vld [vmem:[%s1 + $0x9c] sm:$0xff]
        %v740 = vld [vmem:[%s1 + $0xa4] sm:$0xf]
        %v741 = vld [vmem:[%s1 + $0xa8] sm:$0xff]
        %v742 = vld [vmem:[%s1 + $0xb0] sm:$0xf]
        %v743 = vld [vmem:[%s1 + $0xb4] sm:$0xff]
        %v744 = vld [vmem:[%s1 + $0xbc] sm:$0xf]
        %v745 = vld [vmem:[%s1 + $0xc0] sm:$0xff]
        %v746 = vld [vmem:[%s1 + $0xc8] sm:$0xf]
        %v747 = vld [vmem:[%s1 + $0xcc] sm:$0xff]
        %v748 = vld [vmem:[%s1 + $0xd4] sm:$0xf]
        %v749 = vld [vmem:[%s1 + $0xd8] sm:$0xff]
        %v750 = vld [vmem:[%s1 + $0xe0] sm:$0xf]
        %v751 = vld [vmem:[%s1 + $0xe4] sm:$0xff]
        %v752 = vld [vmem:[%s1 + $0xec] sm:$0xf]
        %v753 = vld [vmem:[%s1 + $0xf0] sm:$0xff]
        %v754 = vld [vmem:[%s1 + $0xf8] sm:$0xf]
        %v755 = vld [vmem:[%s1 + $0xfc] sm:$0xff]
        %v756 = vld [vmem:[%s1 + $0x104] sm:$0xf]
        %v757 = vld [vmem:[%s1 + $0x108] sm:$0xff]
        %v758 = vld [vmem:[%s1 + $0x110] sm:$0xf]
        %v759 = vld [vmem:[%s1 + $0x114] sm:$0xff]
        %v760 = vld [vmem:[%s1 + $0x11c] sm:$0xf]
        %v761 = vld [vmem:[%s1 + $0x120] sm:$0xff]
        %v762 = vld [vmem:[%s1 + $0x128] sm:$0xf]
        %v763 = vld [vmem:[%s1 + $0x12c] sm:$0xff]
        %v764 = vld [vmem:[%s1 + $0x134] sm:$0xf]
        %v765 = vld [vmem:[%s1 + $0x138] sm:$0xff]
        %v766 = vld [vmem:[%s1 + $0x140] sm:$0xf]
        %v767 = vld [vmem:[%s1 + $0x144] sm:$0xff]
        %v768 = vld [vmem:[%s1 + $0x14c] sm:$0xf]
        %v769 = vld [vmem:[%s1 + $0x150] sm:$0xff]
        %v770 = vld [vmem:[%s1 + $0x158] sm:$0xf]
        %v771 = vld [vmem:[%s1 + $0x15c] sm:$0xff]
        %v772 = vld [vmem:[%s1 + $0x164] sm:$0xf]
        %v773 = vld [vmem:[%s1 + $0x168] sm:$0xff]
        %v774 = vld [vmem:[%s1 + $0x170] sm:$0xf]
        %v775 = vld [vmem:[%s1 + $0x174] sm:$0xff]
        %v776 = vld [vmem:[%s1 + $0x17c] sm:$0xf]
        %v779 = vunpack.c.l.b16 %v711
        %v780 = vunpack.c.h.b16 %v711
        %v781 = vunpack.c.l.b16 %v712
        %v782 = vunpack.c.h.b16 %v712
        %v783 = vpack.c.b16 %v781, %v779
        %v784 = vpack.c.b16 %v782, %v780
        %v851 = vunpack.c.l.b16 %v713
        %v852 = vunpack.c.h.b16 %v713
        %v853 = vunpack.c.l.b16 %v714
        %v854 = vunpack.c.l.b16 %v715
        %v855 = vunpack.c.h.b16 %v715
        %v856 = vunpack.c.l.b16 %v716
        %v857 = vunpack.c.l.b16 %v717
        %v858 = vunpack.c.h.b16 %v717
        %v859 = vunpack.c.l.b16 %v718
        %v860 = vunpack.c.l.b16 %v719
        %v861 = vunpack.c.h.b16 %v719
        %v862 = vunpack.c.l.b16 %v720
        %v863 = vunpack.c.l.b16 %v721
        %v864 = vunpack.c.h.b16 %v721
        %v865 = vunpack.c.l.b16 %v722
        %v866 = vunpack.c.l.b16 %v723
        %v867 = vunpack.c.h.b16 %v723
        %v868 = vunpack.c.l.b16 %v724
        %v869 = vunpack.c.l.b16 %v725
        %v870 = vunpack.c.h.b16 %v725
        %v871 = vunpack.c.l.b16 %v726
        %v872 = vunpack.c.l.b16 %v727
        %v873 = vunpack.c.h.b16 %v727
        %v874 = vunpack.c.l.b16 %v728
        %v875 = vunpack.c.l.b16 %v729
        %v876 = vunpack.c.h.b16 %v729
        %v877 = vunpack.c.l.b16 %v730
        %v878 = vunpack.c.l.b16 %v731
        %v879 = vunpack.c.h.b16 %v731
        %v880 = vunpack.c.l.b16 %v732
        %v881 = vunpack.c.l.b16 %v733
        %v882 = vunpack.c.h.b16 %v733
        %v883 = vunpack.c.l.b16 %v734
        %v884 = vunpack.c.l.b16 %v735
        %v885 = vunpack.c.h.b16 %v735
        %v886 = vunpack.c.l.b16 %v736
        %v887 = vunpack.c.l.b16 %v737
        %v888 = vunpack.c.h.b16 %v737
        %v889 = vunpack.c.l.b16 %v738
        %v890 = vunpack.c.l.b16 %v739
        %v891 = vunpack.c.h.b16 %v739
        %v892 = vunpack.c.l.b16 %v740
        %v893 = vunpack.c.l.b16 %v741
        %v894 = vunpack.c.h.b16 %v741
        %v895 = vunpack.c.l.b16 %v742
        %v896 = vunpack.c.l.b16 %v743
        %v897 = vunpack.c.h.b16 %v743
        %v898 = vunpack.c.l.b16 %v744
        %v899 = vunpack.c.l.b16 %v745
        %v900 = vunpack.c.h.b16 %v745
        %v901 = vunpack.c.l.b16 %v746
        %v902 = vunpack.c.l.b16 %v747
        %v903 = vunpack.c.h.b16 %v747
        %v904 = vunpack.c.l.b16 %v748
        %v905 = vunpack.c.l.b16 %v749
        %v906 = vunpack.c.h.b16 %v749
        %v907 = vunpack.c.l.b16 %v750
        %v908 = vunpack.c.l.b16 %v751
        %v909 = vunpack.c.h.b16 %v751
        %v910 = vunpack.c.l.b16 %v752
        %v911 = vunpack.c.l.b16 %v753
        %v912 = vunpack.c.h.b16 %v753
        %v913 = vunpack.c.l.b16 %v754
        %v914 = vunpack.c.l.b16 %v755
        %v915 = vunpack.c.h.b16 %v755
        %v916 = vunpack.c.l.b16 %v756
        %v917 = vunpack.c.l.b16 %v757
        %v918 = vunpack.c.h.b16 %v757
        %v919 = vunpack.c.l.b16 %v758
        %v920 = vunpack.c.l.b16 %v759
        %v921 = vunpack.c.h.b16 %v759
        %v922 = vunpack.c.l.b16 %v760
        %v923 = vunpack.c.l.b16 %v761
        %v924 = vunpack.c.h.b16 %v761
        %v925 = vunpack.c.l.b16 %v762
        %v926 = vunpack.c.l.b16 %v763
        %v927 = vunpack.c.h.b16 %v763
        %v928 = vunpack.c.l.b16 %v764
        %v929 = vunpack.c.l.b16 %v765
        %v930 = vunpack.c.h.b16 %v765
        %v931 = vunpack.c.l.b16 %v766
        %v932 = vunpack.c.l.b16 %v767
        %v933 = vunpack.c.h.b16 %v767
        %v934 = vunpack.c.l.b16 %v768
        %v935 = vunpack.c.l.b16 %v769
        %v936 = vunpack.c.h.b16 %v769
        %v937 = vunpack.c.l.b16 %v770
        %v938 = vunpack.c.l.b16 %v771
        %v939 = vunpack.c.h.b16 %v771
        %v940 = vunpack.c.l.b16 %v772
        %v941 = vunpack.c.l.b16 %v773
        %v942 = vunpack.c.h.b16 %v773
        %v943 = vunpack.c.l.b16 %v774
        %v944 = vunpack.c.l.b16 %v775
        %v945 = vunpack.c.h.b16 %v775
        %v946 = vunpack.c.l.b16 %v776
        %v947 = vpack.c.b16 %v854, %v851
        %v948 = vpack.c.b16 %v855, %v852
        %v949 = vpack.c.b16 %v856, %v853
        %v950 = vpack.c.b16 %v860, %v857
        %v951 = vpack.c.b16 %v861, %v858
        %v952 = vpack.c.b16 %v862, %v859
        %v953 = vpack.c.b16 %v866, %v863
        %v954 = vpack.c.b16 %v867, %v864
        %v955 = vpack.c.b16 %v868, %v865
        %v956 = vpack.c.b16 %v872, %v869
        %v957 = vpack.c.b16 %v873, %v870
        %v958 = vpack.c.b16 %v874, %v871
        %v959 = vpack.c.b16 %v878, %v875
        %v960 = vpack.c.b16 %v879, %v876
        %v961 = vpack.c.b16 %v880, %v877
        %v962 = vpack.c.b16 %v884, %v881
        %v963 = vpack.c.b16 %v885, %v882
        %v964 = vpack.c.b16 %v886, %v883
        %v965 = vpack.c.b16 %v890, %v887
        %v966 = vpack.c.b16 %v891, %v888
        %v967 = vpack.c.b16 %v892, %v889
        %v968 = vpack.c.b16 %v896, %v893
        %v969 = vpack.c.b16 %v897, %v894
        %v970 = vpack.c.b16 %v898, %v895
        %v971 = vpack.c.b16 %v902, %v899
        %v972 = vpack.c.b16 %v903, %v900
        %v973 = vpack.c.b16 %v904, %v901
        %v974 = vpack.c.b16 %v908, %v905
        %v975 = vpack.c.b16 %v909, %v906
        %v976 = vpack.c.b16 %v910, %v907
        %v977 = vpack.c.b16 %v914, %v911
        %v978 = vpack.c.b16 %v915, %v912
        %v979 = vpack.c.b16 %v916, %v913
        %v980 = vpack.c.b16 %v920, %v917
        %v981 = vpack.c.b16 %v921, %v918
        %v982 = vpack.c.b16 %v922, %v919
        %v983 = vpack.c.b16 %v926, %v923
        %v984 = vpack.c.b16 %v927, %v924
        %v985 = vpack.c.b16 %v928, %v925
        %v986 = vpack.c.b16 %v932, %v929
        %v987 = vpack.c.b16 %v933, %v930
        %v988 = vpack.c.b16 %v934, %v931
        %v989 = vpack.c.b16 %v938, %v935
        %v990 = vpack.c.b16 %v939, %v936
        %v991 = vpack.c.b16 %v940, %v937
        %v992 = vpack.c.b16 %v944, %v941
        %v993 = vpack.c.b16 %v945, %v942
        %v994 = vpack.c.b16 %v946, %v943
        %1043 = vmatpush.bf16.msra.mxu0 %v968
        %1044 = vmatpush.bf16.msra.mxu0 %v965
        %1045 = vmatpush.bf16.msra.mxu0 %v962
        %1046 = vmatpush.bf16.msra.mxu0 %v959
        %1047 = vmatpush.bf16.msra.mxu0 %v956
        %1048 = vmatpush.bf16.msra.mxu0 %v953
        %1049 = vmatpush.bf16.msra.mxu0 %v950
        %1050 = vmatpush.bf16.msra.mxu0 %v947
        %1051 = vmatmul.bf16.gmra.mxu0 %v783
        %v1052 = vpop.f32.mrf.mxu0
        %v1053 = vadd.f32 0.0, %v1052
        %v1054 = vpop.f32.mrf.mxu0
        %v1055 = vadd.f32 0.0, %v1054
        %1056 = vdwg.mxu0
        %1057 = vmatpush.bf16.msra.mxu0 %v992
        %1058 = vmatpush.bf16.msra.mxu0 %v989
        %1059 = vmatpush.bf16.msra.mxu0 %v986
        %1060 = vmatpush.bf16.msra.mxu0 %v983
        %1061 = vmatpush.bf16.msra.mxu0 %v980
        %1062 = vmatpush.bf16.msra.mxu0 %v977
        %1063 = vmatpush.bf16.msra.mxu0 %v974
        %1064 = vmatpush.bf16.msra.mxu0 %v971
        %1065 = vmatmul.bf16.gmra.mxu0 %v784
        %v1066 = vpop.f32.mrf.mxu0
        %v1067 = vadd.f32 %v1053, %v1066
        %v1068 = vpop.f32.mrf.mxu0
        %v1069 = vadd.f32 %v1055, %v1068
        %1070 = vdwg.mxu0
        %1071 = vmatpush.bf16.msra.mxu0 %v969
        %1072 = vmatpush.bf16.msra.mxu0 %v966
        %1073 = vmatpush.bf16.msra.mxu0 %v963
        %1074 = vmatpush.bf16.msra.mxu0 %v960
        %1075 = vmatpush.bf16.msra.mxu0 %v957
        %1076 = vmatpush.bf16.msra.mxu0 %v954
        %1077 = vmatpush.bf16.msra.mxu0 %v951
        %1078 = vmatpush.bf16.msra.mxu0 %v948
        %1079 = vmatmul.bf16.gmra.mxu0 %v783
        %v1080 = vpop.f32.mrf.mxu0
        %v1081 = vadd.f32 0.0, %v1080
        %v1082 = vpop.f32.mrf.mxu0
        %v1083 = vadd.f32 0.0, %v1082
        %1084 = vdwg.mxu0
        %1085 = vmatpush.bf16.msra.mxu0 %v993
        %1086 = vmatpush.bf16.msra.mxu0 %v990
        %1087 = vmatpush.bf16.msra.mxu0 %v987
        %1088 = vmatpush.bf16.msra.mxu0 %v984
        %1089 = vmatpush.bf16.msra.mxu0 %v981
        %1090 = vmatpush.bf16.msra.mxu0 %v978
        %1091 = vmatpush.bf16.msra.mxu0 %v975
        %1092 = vmatpush.bf16.msra.mxu0 %v972
        %1093 = vmatmul.bf16.gmra.mxu0 %v784
        %v1094 = vpop.f32.mrf.mxu0
        %v1095 = vadd.f32 %v1081, %v1094
        %v1096 = vpop.f32.mrf.mxu0
        %v1097 = vadd.f32 %v1083, %v1096
        %1098 = vdwg.mxu0
        %1099 = vmatpush.bf16.msra.mxu0 %v970
        %1100 = vmatpush.bf16.msra.mxu0 %v967
        %1101 = vmatpush.bf16.msra.mxu0 %v964
        %1102 = vmatpush.bf16.msra.mxu0 %v961
        %1103 = vmatpush.bf16.msra.mxu0 %v958
        %1104 = vmatpush.bf16.msra.mxu0 %v955
        %1105 = vmatpush.bf16.msra.mxu0 %v952
        %1106 = vmatpush.bf16.msra.mxu0 %v949
        %1107 = vmatmul.bf16.gmra.mxu0 %v783
        %v1108 = vpop.f32.mrf.mxu0
        %v1109 = vadd.f32 0.0, %v1108
        %v1110 = vpop.f32.mrf.mxu0
        %v1111 = vadd.f32 0.0, %v1110
        %1112 = vdwg.mxu0
        %1113 = vmatpush.bf16.msra.mxu0 %v994
        %1114 = vmatpush.bf16.msra.mxu0 %v991
        %1115 = vmatpush.bf16.msra.mxu0 %v988
        %1116 = vmatpush.bf16.msra.mxu0 %v985
        %1117 = vmatpush.bf16.msra.mxu0 %v982
        %1118 = vmatpush.bf16.msra.mxu0 %v979
        %1119 = vmatpush.bf16.msra.mxu0 %v976
        %1120 = vmatpush.bf16.msra.mxu0 %v973
        %1121 = vmatmul.bf16.gmra.mxu0 %v784
        %v1122 = vpop.f32.mrf.mxu0
        %v1123 = vadd.f32 %v1109, %v1122
        %v1124 = vpop.f32.mrf.mxu0
        %v1125 = vadd.f32 %v1111, %v1124
        %1126 = vdwg.mxu0
        %v1127 = vpack.c.bf16 %v1069, %v1067
        %v1128 = vpack.c.bf16 %v1097, %v1095
        %v1129 = vpack.c.bf16 %v1125, %v1123
        %v1130 = vld [vmem:[%s9] sm:$0xff]
        %v1131 = vld [vmem:[%s9 + $0x8] sm:$0xff]
        %v1204 = vunpack.c.l.b16 %v503
        %v1205 = vunpack.c.h.b16 %v503
        %v1206 = vunpack.c.l.b16 %v504
        %v1207 = vunpack.c.l.b16 %v505
        %v1208 = vunpack.c.h.b16 %v505
        %v1209 = vunpack.c.l.b16 %v506
        %v1210 = vunpack.c.l.b16 %v507
        %v1211 = vunpack.c.h.b16 %v507
        %v1212 = vunpack.c.l.b16 %v508
        %v1213 = vunpack.c.l.b16 %v509
        %v1214 = vunpack.c.h.b16 %v509
        %v1215 = vunpack.c.l.b16 %v510
        %v1216 = vunpack.c.l.b16 %v511
        %v1217 = vunpack.c.h.b16 %v511
        %v1218 = vunpack.c.l.b16 %v512
        %v1219 = vunpack.c.l.b16 %v513
        %v1220 = vunpack.c.h.b16 %v513
        %v1221 = vunpack.c.l.b16 %v514
        %v1222 = vunpack.c.l.b16 %v515
        %v1223 = vunpack.c.h.b16 %v515
        %v1224 = vunpack.c.l.b16 %v516
        %v1225 = vunpack.c.l.b16 %v517
        %v1226 = vunpack.c.h.b16 %v517
        %v1227 = vunpack.c.l.b16 %v518
        %v1228 = vunpack.c.l.b16 %v519
        %v1229 = vunpack.c.h.b16 %v519
        %v1230 = vunpack.c.l.b16 %v520
        %v1231 = vunpack.c.l.b16 %v521
        %v1232 = vunpack.c.h.b16 %v521
        %v1233 = vunpack.c.l.b16 %v522
        %v1234 = vunpack.c.l.b16 %v523
        %v1235 = vunpack.c.h.b16 %v523
        %v1236 = vunpack.c.l.b16 %v524
        %v1237 = vunpack.c.l.b16 %v525
        %v1238 = vunpack.c.h.b16 %v525
        %v1239 = vunpack.c.l.b16 %v526
        %v1240 = vunpack.c.l.b16 %v527
        %v1241 = vunpack.c.h.b16 %v527
        %v1242 = vunpack.c.l.b16 %v528
        %v1243 = vunpack.c.l.b16 %v529
        %v1244 = vunpack.c.h.b16 %v529
        %v1245 = vunpack.c.l.b16 %v530
        %v1246 = vunpack.c.l.b16 %v531
        %v1247 = vunpack.c.h.b16 %v531
        %v1248 = vunpack.c.l.b16 %v532
        %v1249 = vunpack.c.l.b16 %v533
        %v1250 = vunpack.c.h.b16 %v533
        %v1251 = vunpack.c.l.b16 %v534
        %v1252 = vunpack.c.l.b16 %v535
        %v1253 = vunpack.c.h.b16 %v535
        %v1254 = vunpack.c.l.b16 %v536
        %v1255 = vunpack.c.l.b16 %v537
        %v1256 = vunpack.c.h.b16 %v537
        %v1257 = vunpack.c.l.b16 %v538
        %v1258 = vunpack.c.l.b16 %v539
        %v1259 = vunpack.c.h.b16 %v539
        %v1260 = vunpack.c.l.b16 %v540
        %v1261 = vunpack.c.l.b16 %v541
        %v1262 = vunpack.c.h.b16 %v541
        %v1263 = vunpack.c.l.b16 %v542
        %v1264 = vunpack.c.l.b16 %v543
        %v1265 = vunpack.c.h.b16 %v543
        %v1266 = vunpack.c.l.b16 %v544
        %v1267 = vunpack.c.l.b16 %v545
        %v1268 = vunpack.c.h.b16 %v545
        %v1269 = vunpack.c.l.b16 %v546
        %v1270 = vunpack.c.l.b16 %v547
        %v1271 = vunpack.c.h.b16 %v547
        %v1272 = vunpack.c.l.b16 %v548
        %v1273 = vunpack.c.l.b16 %v549
        %v1274 = vunpack.c.h.b16 %v549
        %v1275 = vunpack.c.l.b16 %v550
        %v1276 = vunpack.c.l.b16 %v551
        %v1277 = vunpack.c.h.b16 %v551
        %v1278 = vunpack.c.l.b16 %v552
        %v1279 = vunpack.c.l.b16 %v553
        %v1280 = vunpack.c.h.b16 %v553
        %v1281 = vunpack.c.l.b16 %v554
        %v1282 = vunpack.c.l.b16 %v555
        %v1283 = vunpack.c.h.b16 %v555
        %v1284 = vunpack.c.l.b16 %v556
        %v1285 = vunpack.c.l.b16 %v557
        %v1286 = vunpack.c.h.b16 %v557
        %v1287 = vunpack.c.l.b16 %v558
        %v1288 = vunpack.c.l.b16 %v559
        %v1289 = vunpack.c.h.b16 %v559
        %v1290 = vunpack.c.l.b16 %v560
        %v1291 = vunpack.c.l.b16 %v561
        %v1292 = vunpack.c.h.b16 %v561
        %v1293 = vunpack.c.l.b16 %v562
        %v1294 = vunpack.c.l.b16 %v563
        %v1295 = vunpack.c.h.b16 %v563
        %v1296 = vunpack.c.l.b16 %v564
        %v1297 = vunpack.c.l.b16 %v565
        %v1298 = vunpack.c.h.b16 %v565
        %v1299 = vunpack.c.l.b16 %v566
        %v1300 = vunpack.c.l.b16 %v567
        %v1301 = vunpack.c.h.b16 %v567
        %v1302 = vunpack.c.l.b16 %v568
        %v1303 = vunpack.c.l.b16 %v569
        %v1304 = vunpack.c.h.b16 %v569
        %v1305 = vunpack.c.l.b16 %v570
        %v1306 = vunpack.c.l.b16 %v571
        %v1307 = vunpack.c.h.b16 %v571
        %v1308 = vunpack.c.l.b16 %v572
        %v1309 = vunpack.c.l.b16 %v573
        %v1310 = vunpack.c.h.b16 %v573
        %v1311 = vunpack.c.l.b16 %v574
        %v1312 = vpack.c.b16 %v1207, %v1204
        %v1313 = vpack.c.b16 %v1208, %v1205
        %v1314 = vpack.c.b16 %v1209, %v1206
        %v1315 = vpack.c.b16 %v1213, %v1210
        %v1316 = vpack.c.b16 %v1214, %v1211
        %v1317 = vpack.c.b16 %v1215, %v1212
        %v1318 = vpack.c.b16 %v1219, %v1216
        %v1319 = vpack.c.b16 %v1220, %v1217
        %v1320 = vpack.c.b16 %v1221, %v1218
        %v1321 = vpack.c.b16 %v1225, %v1222
        %v1322 = vpack.c.b16 %v1226, %v1223
        %v1323 = vpack.c.b16 %v1227, %v1224
        %v1324 = vpack.c.b16 %v1231, %v1228
        %v1325 = vpack.c.b16 %v1232, %v1229
        %v1326 = vpack.c.b16 %v1233, %v1230
        %v1327 = vpack.c.b16 %v1237, %v1234
        %v1328 = vpack.c.b16 %v1238, %v1235
        %v1329 = vpack.c.b16 %v1239, %v1236
        %v1330 = vpack.c.b16 %v1243, %v1240
        %v1331 = vpack.c.b16 %v1244, %v1241
        %v1332 = vpack.c.b16 %v1245, %v1242
        %v1333 = vpack.c.b16 %v1249, %v1246
        %v1334 = vpack.c.b16 %v1250, %v1247
        %v1335 = vpack.c.b16 %v1251, %v1248
        %v1336 = vpack.c.b16 %v1255, %v1252
        %v1337 = vpack.c.b16 %v1256, %v1253
        %v1338 = vpack.c.b16 %v1257, %v1254
        %v1339 = vpack.c.b16 %v1261, %v1258
        %v1340 = vpack.c.b16 %v1262, %v1259
        %v1341 = vpack.c.b16 %v1263, %v1260
        %v1342 = vpack.c.b16 %v1267, %v1264
        %v1343 = vpack.c.b16 %v1268, %v1265
        %v1344 = vpack.c.b16 %v1269, %v1266
        %v1345 = vpack.c.b16 %v1273, %v1270
        %v1346 = vpack.c.b16 %v1274, %v1271
        %v1347 = vpack.c.b16 %v1275, %v1272
        %v1348 = vpack.c.b16 %v1279, %v1276
        %v1349 = vpack.c.b16 %v1280, %v1277
        %v1350 = vpack.c.b16 %v1281, %v1278
        %v1351 = vpack.c.b16 %v1285, %v1282
        %v1352 = vpack.c.b16 %v1286, %v1283
        %v1353 = vpack.c.b16 %v1287, %v1284
        %v1354 = vpack.c.b16 %v1291, %v1288
        %v1355 = vpack.c.b16 %v1292, %v1289
        %v1356 = vpack.c.b16 %v1293, %v1290
        %v1357 = vpack.c.b16 %v1297, %v1294
        %v1358 = vpack.c.b16 %v1298, %v1295
        %v1359 = vpack.c.b16 %v1299, %v1296
        %v1360 = vpack.c.b16 %v1303, %v1300
        %v1361 = vpack.c.b16 %v1304, %v1301
        %v1362 = vpack.c.b16 %v1305, %v1302
        %v1363 = vpack.c.b16 %v1309, %v1306
        %v1364 = vpack.c.b16 %v1310, %v1307
        %v1365 = vpack.c.b16 %v1311, %v1308
        %vm1417 = vcmask 244736
        %v1419 = vsel %vm1417, %v1129, 0
        %vm1421 = vcmask 1046528
        %v1423 = vsel %vm1421, %v1363, 0
        %v1426 = vsel %vm1421, %v1364, 0
        %v1429 = vsel %vm1421, %v1365, 0
        %1431 = vmatpush.bf16.msra.mxu0 %v1333
        %1432 = vmatpush.bf16.msra.mxu0 %v1330
        %1433 = vmatpush.bf16.msra.mxu0 %v1327
        %1434 = vmatpush.bf16.msra.mxu0 %v1324
        %1435 = vmatpush.bf16.msra.mxu0 %v1321
        %1436 = vmatpush.bf16.msra.mxu0 %v1318
        %1437 = vmatpush.bf16.msra.mxu0 %v1315
        %1438 = vmatpush.bf16.msra.mxu0 %v1312
        %1439 = vmatmul.bf16.gmra.mxu0 %v1127
        %v1440 = vpop.f32.mrf.mxu0
        %v1441 = vadd.f32 0.0, %v1440
        %v1442 = vpop.f32.mrf.mxu0
        %v1443 = vadd.f32 0.0, %v1442
        %1444 = vdwg.mxu0
        %1445 = vmatpush.bf16.msra.mxu0 %v1357
        %1446 = vmatpush.bf16.msra.mxu0 %v1354
        %1447 = vmatpush.bf16.msra.mxu0 %v1351
        %1448 = vmatpush.bf16.msra.mxu0 %v1348
        %1449 = vmatpush.bf16.msra.mxu0 %v1345
        %1450 = vmatpush.bf16.msra.mxu0 %v1342
        %1451 = vmatpush.bf16.msra.mxu0 %v1339
        %1452 = vmatpush.bf16.msra.mxu0 %v1336
        %1453 = vmatmul.bf16.gmra.mxu0 %v1128
        %v1454 = vpop.f32.mrf.mxu0
        %v1455 = vadd.f32 %v1441, %v1454
        %v1456 = vpop.f32.mrf.mxu0
        %v1457 = vadd.f32 %v1443, %v1456
        %1458 = vdwg.mxu0
        %1459 = vmatpush.bf16.msra.mxu0 0
        %1460 = vmatpush.bf16.msra.mxu0 0
        %1461 = vmatpush.bf16.msra.mxu0 0
        %1462 = vmatpush.bf16.msra.mxu0 0
        %1463 = vmatpush.bf16.msra.mxu0 0
        %1464 = vmatpush.bf16.msra.mxu0 0
        %1465 = vmatpush.bf16.msra.mxu0 %v1423
        %1466 = vmatpush.bf16.msra.mxu0 %v1360
        %1467 = vmatmul.bf16.gmra.mxu0 %v1419
        %v1468 = vpop.f32.mrf.mxu0
        %v1469 = vadd.f32 %v1455, %v1468
        %v1470 = vpop.f32.mrf.mxu0
        %v1471 = vadd.f32 %v1457, %v1470
        %1472 = vdwg.mxu0
        %1473 = vmatpush.bf16.msra.mxu0 %v1334
        %1474 = vmatpush.bf16.msra.mxu0 %v1331
        %1475 = vmatpush.bf16.msra.mxu0 %v1328
        %1476 = vmatpush.bf16.msra.mxu0 %v1325
        %1477 = vmatpush.bf16.msra.mxu0 %v1322
        %1478 = vmatpush.bf16.msra.mxu0 %v1319
        %1479 = vmatpush.bf16.msra.mxu0 %v1316
        %1480 = vmatpush.bf16.msra.mxu0 %v1313
        %1481 = vmatmul.bf16.gmra.mxu0 %v1127
        %v1482 = vpop.f32.mrf.mxu0
        %v1483 = vadd.f32 0.0, %v1482
        %v1484 = vpop.f32.mrf.mxu0
        %v1485 = vadd.f32 0.0, %v1484
        %1486 = vdwg.mxu0
        %1487 = vmatpush.bf16.msra.mxu0 %v1358
        %1488 = vmatpush.bf16.msra.mxu0 %v1355
        %1489 = vmatpush.bf16.msra.mxu0 %v1352
        %1490 = vmatpush.bf16.msra.mxu0 %v1349
        %1491 = vmatpush.bf16.msra.mxu0 %v1346
        %1492 = vmatpush.bf16.msra.mxu0 %v1343
        %1493 = vmatpush.bf16.msra.mxu0 %v1340
        %1494 = vmatpush.bf16.msra.mxu0 %v1337
        %1495 = vmatmul.bf16.gmra.mxu0 %v1128
        %v1496 = vpop.f32.mrf.mxu0
        %v1497 = vadd.f32 %v1483, %v1496
        %v1498 = vpop.f32.mrf.mxu0
        %v1499 = vadd.f32 %v1485, %v1498
        %1500 = vdwg.mxu0
        %1501 = vmatpush.bf16.msra.mxu0 0
        %1502 = vmatpush.bf16.msra.mxu0 0
        %1503 = vmatpush.bf16.msra.mxu0 0
        %1504 = vmatpush.bf16.msra.mxu0 0
        %1505 = vmatpush.bf16.msra.mxu0 0
        %1506 = vmatpush.bf16.msra.mxu0 0
        %1507 = vmatpush.bf16.msra.mxu0 %v1426
        %1508 = vmatpush.bf16.msra.mxu0 %v1361
        %1509 = vmatmul.bf16.gmra.mxu0 %v1419
        %v1510 = vpop.f32.mrf.mxu0
        %v1511 = vadd.f32 %v1497, %v1510
        %v1512 = vpop.f32.mrf.mxu0
        %v1513 = vadd.f32 %v1499, %v1512
        %1514 = vdwg.mxu0
        %1515 = vmatpush.bf16.msra.mxu0 %v1335
        %1516 = vmatpush.bf16.msra.mxu0 %v1332
        %1517 = vmatpush.bf16.msra.mxu0 %v1329
        %1518 = vmatpush.bf16.msra.mxu0 %v1326
        %1519 = vmatpush.bf16.msra.mxu0 %v1323
        %1520 = vmatpush.bf16.msra.mxu0 %v1320
        %1521 = vmatpush.bf16.msra.mxu0 %v1317
        %1522 = vmatpush.bf16.msra.mxu0 %v1314
        %1523 = vmatmul.bf16.gmra.mxu0 %v1127
        %v1524 = vpop.f32.mrf.mxu0
        %v1525 = vadd.f32 0.0, %v1524
        %v1526 = vpop.f32.mrf.mxu0
        %v1527 = vadd.f32 0.0, %v1526
        %1528 = vdwg.mxu0
        %1529 = vmatpush.bf16.msra.mxu0 %v1359
        %1530 = vmatpush.bf16.msra.mxu0 %v1356
        %1531 = vmatpush.bf16.msra.mxu0 %v1353
        %1532 = vmatpush.bf16.msra.mxu0 %v1350
        %1533 = vmatpush.bf16.msra.mxu0 %v1347
        %1534 = vmatpush.bf16.msra.mxu0 %v1344
        %1535 = vmatpush.bf16.msra.mxu0 %v1341
        %1536 = vmatpush.bf16.msra.mxu0 %v1338
        %1537 = vmatmul.bf16.gmra.mxu0 %v1128
        %v1538 = vpop.f32.mrf.mxu0
        %v1539 = vadd.f32 %v1525, %v1538
        %v1540 = vpop.f32.mrf.mxu0
        %v1541 = vadd.f32 %v1527, %v1540
        %1542 = vdwg.mxu0
        %1543 = vmatpush.bf16.msra.mxu0 0
        %1544 = vmatpush.bf16.msra.mxu0 0
        %1545 = vmatpush.bf16.msra.mxu0 0
        %1546 = vmatpush.bf16.msra.mxu0 0
        %1547 = vmatpush.bf16.msra.mxu0 0
        %1548 = vmatpush.bf16.msra.mxu0 0
        %1549 = vmatpush.bf16.msra.mxu0 %v1429
        %1550 = vmatpush.bf16.msra.mxu0 %v1362
        %1551 = vmatmul.bf16.gmra.mxu0 %v1419
        %v1552 = vpop.f32.mrf.mxu0
        %v1553 = vadd.f32 %v1539, %v1552
        %v1554 = vpop.f32.mrf.mxu0
        %v1555 = vadd.f32 %v1541, %v1554
        %1556 = vdwg.mxu0
        %v1557 = vpack.c.bf16 %v1511, %v1469
        %v1558 = vpack.c.bf16 %v1553, %v1553
        %v1559 = vpack.c.bf16 %v1513, %v1471
        %v1560 = vpack.c.bf16 %v1555, %v1555
        %v1565 = vunpack.c.l.b16 %v1557
        %v1566 = vunpack.c.h.b16 %v1557
        %v1567 = vunpack.c.l.b16 %v1558
        %v1568 = vunpack.c.l.b16 %v1559
        %v1569 = vunpack.c.h.b16 %v1559
        %v1570 = vunpack.c.l.b16 %v1560
        %v1571 = vpack.c.b16 %v1568, %v1565
        %v1572 = vpack.c.b16 %v1569, %v1566
        %v1573 = vpack.c.b16 %v1570, %v1567
        %1577 = vrot.lane.b32.xlu0 %v1571, 127
        %v1578 = vpop.permute.xlu0 %1577
        %1579 = vrot.lane.b32.xlu0 %v1572, 127
        %v1580 = vpop.permute.xlu0 %1579
        %1581 = vrot.lane.b32.xlu0 %v1573, 127
        %v1582 = vpop.permute.xlu0 %1581
        %vm1583 = vcmask 1039360
        %v1584 = vsel %vm1583, %v1578, %v1580
        %v1585 = vsel %vm1583, %v1580, %v1582
        %1589 = vrot.lane.b32.xlu0 %v1571, 126
        %v1590 = vpop.permute.xlu0 %1589
        %1591 = vrot.lane.b32.xlu0 %v1572, 126
        %v1592 = vpop.permute.xlu0 %1591
        %1593 = vrot.lane.b32.xlu0 %v1573, 126
        %v1594 = vpop.permute.xlu0 %1593
        %vm1595 = vcmask 1031168
        %v1596 = vsel %vm1595, %v1590, %v1592
        %v1597 = vsel %vm1595, %v1592, %v1594
        %1601 = vrot.lane.b32.xlu0 %v1571, 110
        %v1602 = vpop.permute.xlu0 %1601
        %1603 = vrot.lane.b32.xlu0 %v1572, 110
        %v1604 = vpop.permute.xlu0 %1603
        %1605 = vrot.lane.b32.xlu0 %v1573, 110
        %v1606 = vpop.permute.xlu0 %1605
        %vm1607 = vcmask 900096
        %v1608 = vsel %vm1607, %v1602, %v1604
        %v1609 = vsel %vm1607, %v1604, %v1606
        %1613 = vrot.lane.b32.xlu0 %v1571, 109
        %v1614 = vpop.permute.xlu0 %1613
        %1615 = vrot.lane.b32.xlu0 %v1572, 109
        %v1616 = vpop.permute.xlu0 %1615
        %1617 = vrot.lane.b32.xlu0 %v1573, 109
        %v1618 = vpop.permute.xlu0 %1617
        %vm1619 = vcmask 891904
        %v1620 = vsel %vm1619, %v1614, %v1616
        %v1621 = vsel %vm1619, %v1616, %v1618
        %1625 = vrot.lane.b32.xlu0 %v1571, 108
        %v1626 = vpop.permute.xlu0 %1625
        %1627 = vrot.lane.b32.xlu0 %v1572, 108
        %v1628 = vpop.permute.xlu0 %1627
        %1629 = vrot.lane.b32.xlu0 %v1573, 108
        %v1630 = vpop.permute.xlu0 %1629
        %vm1631 = vcmask 883712
        %v1632 = vsel %vm1631, %v1626, %v1628
        %v1633 = vsel %vm1631, %v1628, %v1630
        %1637 = vrot.lane.b32.xlu0 %v1571, 92
        %v1638 = vpop.permute.xlu0 %1637
        %1639 = vrot.lane.b32.xlu0 %v1572, 92
        %v1640 = vpop.permute.xlu0 %1639
        %1641 = vrot.lane.b32.xlu0 %v1573, 92
        %v1642 = vpop.permute.xlu0 %1641
        %vm1643 = vcmask 752640
        %v1644 = vsel %vm1643, %v1638, %v1640
        %v1645 = vsel %vm1643, %v1640, %v1642
        %1649 = vrot.lane.b32.xlu0 %v1571, 91
        %v1650 = vpop.permute.xlu0 %1649
        %1651 = vrot.lane.b32.xlu0 %v1572, 91
        %v1652 = vpop.permute.xlu0 %1651
        %1653 = vrot.lane.b32.xlu0 %v1573, 91
        %v1654 = vpop.permute.xlu0 %1653
        %vm1655 = vcmask 744448
        %v1656 = vsel %vm1655, %v1650, %v1652
        %v1657 = vsel %vm1655, %v1652, %v1654
        %1661 = vrot.lane.b32.xlu0 %v1571, 90
        %v1662 = vpop.permute.xlu0 %1661
        %1663 = vrot.lane.b32.xlu0 %v1572, 90
        %v1664 = vpop.permute.xlu0 %1663
        %1665 = vrot.lane.b32.xlu0 %v1573, 90
        %v1666 = vpop.permute.xlu0 %1665
        %vm1667 = vcmask 736256
        %v1668 = vsel %vm1667, %v1662, %v1664
        %v1669 = vsel %vm1667, %v1664, %v1666
        %v1675 = vunpack.c.l.b16 %v1130
        %v1676 = vunpack.c.h.b16 %v1130
        %v1677 = vunpack.c.l.b16 %v1131
        %v1678 = vunpack.c.h.b16 %v1131
        %v1679 = vpack.c.b16 %v1677, %v1675
        %v1680 = vpack.c.b16 %v1678, %v1676
        %vm1682 = vcmask 130048
        %v1684 = vsel %vm1682, %v1680, 0
        %1686 = vmatpush.bf16.msra.mxu0 %v1656
        %1687 = vmatpush.bf16.msra.mxu0 %v1644
        %1688 = vmatpush.bf16.msra.mxu0 %v1632
        %1689 = vmatpush.bf16.msra.mxu0 %v1620
        %1690 = vmatpush.bf16.msra.mxu0 %v1608
        %1691 = vmatpush.bf16.msra.mxu0 %v1596
        %1692 = vmatpush.bf16.msra.mxu0 %v1584
        %1693 = vmatpush.bf16.msra.mxu0 %v1571
        %1694 = vmatmul.bf16.gmra.mxu0 %v1679
        %v1695 = vpop.f32.mrf.mxu0
        %v1696 = vadd.f32 0.0, %v1695
        %v1697 = vpop.f32.mrf.mxu0
        %v1698 = vadd.f32 0.0, %v1697
        %1699 = vdwg.mxu0
        %1700 = vmatpush.bf16.msra.mxu0 0
        %1701 = vmatpush.bf16.msra.mxu0 0
        %1702 = vmatpush.bf16.msra.mxu0 0
        %1703 = vmatpush.bf16.msra.mxu0 0
        %1704 = vmatpush.bf16.msra.mxu0 0
        %1705 = vmatpush.bf16.msra.mxu0 0
        %1706 = vmatpush.bf16.msra.mxu0 0
        %1707 = vmatpush.bf16.msra.mxu0 %v1668
        %1708 = vmatmul.bf16.gmra.mxu0 %v1684
        %v1709 = vpop.f32.mrf.mxu0
        %v1710 = vadd.f32 %v1696, %v1709
        %v1711 = vpop.f32.mrf.mxu0
        %v1712 = vadd.f32 %v1698, %v1711
        %1713 = vdwg.mxu0
        %1714 = vmatpush.bf16.msra.mxu0 %v1657
        %1715 = vmatpush.bf16.msra.mxu0 %v1645
        %1716 = vmatpush.bf16.msra.mxu0 %v1633
        %1717 = vmatpush.bf16.msra.mxu0 %v1621
        %1718 = vmatpush.bf16.msra.mxu0 %v1609
        %1719 = vmatpush.bf16.msra.mxu0 %v1597
        %1720 = vmatpush.bf16.msra.mxu0 %v1585
        %1721 = vmatpush.bf16.msra.mxu0 %v1572
        %1722 = vmatmul.bf16.gmra.mxu0 %v1679
        %v1723 = vpop.f32.mrf.mxu0
        %v1724 = vadd.f32 0.0, %v1723
        %v1725 = vpop.f32.mrf.mxu0
        %v1726 = vadd.f32 0.0, %v1725
        %1727 = vdwg.mxu0
        %1728 = vmatpush.bf16.msra.mxu0 0
        %1729 = vmatpush.bf16.msra.mxu0 0
        %1730 = vmatpush.bf16.msra.mxu0 0
        %1731 = vmatpush.bf16.msra.mxu0 0
        %1732 = vmatpush.bf16.msra.mxu0 0
        %1733 = vmatpush.bf16.msra.mxu0 0
        %1734 = vmatpush.bf16.msra.mxu0 0
        %1735 = vmatpush.bf16.msra.mxu0 %v1669
        %1736 = vmatmul.bf16.gmra.mxu0 %v1684
        %v1737 = vpop.f32.mrf.mxu0
        %v1738 = vadd.f32 %v1724, %v1737
        %v1739 = vpop.f32.mrf.mxu0
        %v1740 = vadd.f32 %v1726, %v1739
        %1741 = vdwg.mxu0
        %1742 = vmatpush.bf16.msra.mxu0 %v1654
        %1743 = vmatpush.bf16.msra.mxu0 %v1642
        %1744 = vmatpush.bf16.msra.mxu0 %v1630
        %1745 = vmatpush.bf16.msra.mxu0 %v1618
        %1746 = vmatpush.bf16.msra.mxu0 %v1606
        %1747 = vmatpush.bf16.msra.mxu0 %v1594
        %1748 = vmatpush.bf16.msra.mxu0 %v1582
        %1749 = vmatpush.bf16.msra.mxu0 %v1573
        %1750 = vmatmul.bf16.gmra.mxu0 %v1679
        %v1751 = vpop.f32.mrf.mxu0
        %v1752 = vadd.f32 0.0, %v1751
        %v1753 = vpop.f32.mrf.mxu0
        %v1754 = vadd.f32 0.0, %v1753
        %1755 = vdwg.mxu0
        %1756 = vmatpush.bf16.msra.mxu0 0
        %1757 = vmatpush.bf16.msra.mxu0 0
        %1758 = vmatpush.bf16.msra.mxu0 0
        %1759 = vmatpush.bf16.msra.mxu0 0
        %1760 = vmatpush.bf16.msra.mxu0 0
        %1761 = vmatpush.bf16.msra.mxu0 0
        %1762 = vmatpush.bf16.msra.mxu0 0
        %1763 = vmatpush.bf16.msra.mxu0 %v1666
        %1764 = vmatmul.bf16.gmra.mxu0 %v1684
        %v1765 = vpop.f32.mrf.mxu0
        %v1766 = vadd.f32 %v1752, %v1765
        %v1767 = vpop.f32.mrf.mxu0
        %v1768 = vadd.f32 %v1754, %v1767
        %1769 = vdwg.mxu0
        %v1771 = vsel %vm1417, %v1766, 0
        %v1774 = vsel %vm1417, %v1768, 0
        %vm1776 = vcmask 1045504
        %v1778 = vsel %vm1776, %v610, 0
        %1780 = vmatpush.msra.mxu0 %v590
        %1781 = vmatpush.msra.mxu0 %v589
        %1782 = vmatpush.msra.mxu0 %v588
        %1783 = vmatpush.msra.mxu0 %v587
        %1784 = vmatpush.msra.mxu0 %v586
        %1785 = vmatpush.msra.mxu0 %v585
        %1786 = vmatpush.msra.mxu0 %v584
        %1787 = vmatpush.msra.mxu0 %v583
        %1788 = vmatpush.msra.mxu0 %v582
        %1789 = vmatpush.msra.mxu0 %v581
        %1790 = vmatpush.msra.mxu0 %v580
        %1791 = vmatpush.msra.mxu0 %v579
        %1792 = vmatpush.msra.mxu0 %v578
        %1793 = vmatpush.msra.mxu0 %v577
        %1794 = vmatpush.msra.mxu0 %v576
        %1795 = vmatpush.msra.mxu0 %v575
        %1796 = vmatmul.f32.gmra.mxu0 %v1710
        %v1797 = vpop.f32.mrf.mxu0
        %v1798 = vadd.f32 0.0, %v1797
        %1799 = vmatmul.f32.gmra.mxu0 %v1712
        %v1800 = vpop.f32.mrf.mxu0
        %v1801 = vadd.f32 0.0, %v1800
        %1802 = vdwg.mxu0
        %1803 = vmatpush.msra.mxu0 %v606
        %1804 = vmatpush.msra.mxu0 %v605
        %1805 = vmatpush.msra.mxu0 %v604
        %1806 = vmatpush.msra.mxu0 %v603
        %1807 = vmatpush.msra.mxu0 %v602
        %1808 = vmatpush.msra.mxu0 %v601
        %1809 = vmatpush.msra.mxu0 %v600
        %1810 = vmatpush.msra.mxu0 %v599
        %1811 = vmatpush.msra.mxu0 %v598
        %1812 = vmatpush.msra.mxu0 %v597
        %1813 = vmatpush.msra.mxu0 %v596
        %1814 = vmatpush.msra.mxu0 %v595
        %1815 = vmatpush.msra.mxu0 %v594
        %1816 = vmatpush.msra.mxu0 %v593
        %1817 = vmatpush.msra.mxu0 %v592
        %1818 = vmatpush.msra.mxu0 %v591
        %1819 = vmatmul.f32.gmra.mxu0 %v1738
        %v1820 = vpop.f32.mrf.mxu0
        %v1821 = vadd.f32 %v1798, %v1820
        %1822 = vmatmul.f32.gmra.mxu0 %v1740
        %v1823 = vpop.f32.mrf.mxu0
        %v1824 = vadd.f32 %v1801, %v1823
        %1825 = vdwg.mxu0
        %1826 = vmatpush.msra.mxu0 0.0
        %1827 = vmatpush.msra.mxu0 0.0
        %1828 = vmatpush.msra.mxu0 0.0
        %1829 = vmatpush.msra.mxu0 0.0
        %1830 = vmatpush.msra.mxu0 0.0
        %1831 = vmatpush.msra.mxu0 0.0
        %1832 = vmatpush.msra.mxu0 0.0
        %1833 = vmatpush.msra.mxu0 0.0
        %1834 = vmatpush.msra.mxu0 0.0
        %1835 = vmatpush.msra.mxu0 0.0
        %1836 = vmatpush.msra.mxu0 0.0
        %1837 = vmatpush.msra.mxu0 0.0
        %1838 = vmatpush.msra.mxu0 %v1778
        %1839 = vmatpush.msra.mxu0 %v609
        %1840 = vmatpush.msra.mxu0 %v608
        %1841 = vmatpush.msra.mxu0 %v607
        %1842 = vmatmul.f32.gmra.mxu0 %v1771
        %v1843 = vpop.f32.mrf.mxu0
        %v1844 = vadd.f32 %v1821, %v1843
        %1845 = vmatmul.f32.gmra.mxu0 %v1774
        %v1846 = vpop.f32.mrf.mxu0
        %v1847 = vadd.f32 %v1824, %v1846
        %1848 = vdwg.mxu0
        %1850 = vset.pattern.permute.xlu0 0
        %1851 = vperm.xlu0 %1850, %v1844
        %v1852 = vpop.permute.xlu0 %1851
        %1855 = vset.pattern.permute.xlu0 0
        %1856 = vperm.xlu0 %1855, %v1847
        %v1857 = vpop.permute.xlu0 %1856
        %v1859 = vsub.f32 %v1710, %v1852
        %v1860 = vsub.f32 %v1738, %v1852
        %v1861 = vsub.f32 %v1766, %v1852
        %v1862 = vsub.f32 %v1712, %v1857
        %v1863 = vsub.f32 %v1740, %v1857
        %v1864 = vsub.f32 %v1768, %v1857
        %v1865 = vmul.f32 %v1859, %v1859
        %v1866 = vmul.f32 %v1860, %v1860
        %v1867 = vmul.f32 %v1861, %v1861
        %v1868 = vmul.f32 %v1862, %v1862
        %v1869 = vmul.f32 %v1863, %v1863
        %v1870 = vmul.f32 %v1864, %v1864
        %v1872 = vsel %vm1417, %v1867, 0
        %v1875 = vsel %vm1417, %v1870, 0
        %1877 = vmatpush.msra.mxu0 %v590
        %1878 = vmatpush.msra.mxu0 %v589
        %1879 = vmatpush.msra.mxu0 %v588
        %1880 = vmatpush.msra.mxu0 %v587
        %1881 = vmatpush.msra.mxu0 %v586
        %1882 = vmatpush.msra.mxu0 %v585
        %1883 = vmatpush.msra.mxu0 %v584
        %1884 = vmatpush.msra.mxu0 %v583
        %1885 = vmatpush.msra.mxu0 %v582
        %1886 = vmatpush.msra.mxu0 %v581
        %1887 = vmatpush.msra.mxu0 %v580
        %1888 = vmatpush.msra.mxu0 %v579
        %1889 = vmatpush.msra.mxu0 %v578
        %1890 = vmatpush.msra.mxu0 %v577
        %1891 = vmatpush.msra.mxu0 %v576
        %1892 = vmatpush.msra.mxu0 %v575
        %1893 = vmatmul.f32.gmra.mxu0 %v1865
        %v1894 = vpop.f32.mrf.mxu0
        %v1895 = vadd.f32 1e-05, %v1894
        %1896 = vmatmul.f32.gmra.mxu0 %v1868
        %v1897 = vpop.f32.mrf.mxu0
        %v1898 = vadd.f32 1e-05, %v1897
        %1899 = vdwg.mxu0
        %1900 = vmatpush.msra.mxu0 %v606
        %1901 = vmatpush.msra.mxu0 %v605
        %1902 = vmatpush.msra.mxu0 %v604
        %1903 = vmatpush.msra.mxu0 %v603
        %1904 = vmatpush.msra.mxu0 %v602
        %1905 = vmatpush.msra.mxu0 %v601
        %1906 = vmatpush.msra.mxu0 %v600
        %1907 = vmatpush.msra.mxu0 %v599
        %1908 = vmatpush.msra.mxu0 %v598
        %1909 = vmatpush.msra.mxu0 %v597
        %1910 = vmatpush.msra.mxu0 %v596
        %1911 = vmatpush.msra.mxu0 %v595
        %1912 = vmatpush.msra.mxu0 %v594
        %1913 = vmatpush.msra.mxu0 %v593
        %1914 = vmatpush.msra.mxu0 %v592
        %1915 = vmatpush.msra.mxu0 %v591
        %1916 = vmatmul.f32.gmra.mxu0 %v1866
        %v1917 = vpop.f32.mrf.mxu0
        %v1918 = vadd.f32 %v1895, %v1917
        %1919 = vmatmul.f32.gmra.mxu0 %v1869
        %v1920 = vpop.f32.mrf.mxu0
        %v1921 = vadd.f32 %v1898, %v1920
        %1922 = vdwg.mxu0
        %1923 = vmatpush.msra.mxu0 0.0
        %1924 = vmatpush.msra.mxu0 0.0
        %1925 = vmatpush.msra.mxu0 0.0
        %1926 = vmatpush.msra.mxu0 0.0
        %1927 = vmatpush.msra.mxu0 0.0
        %1928 = vmatpush.msra.mxu0 0.0
        %1929 = vmatpush.msra.mxu0 0.0
        %1930 = vmatpush.msra.mxu0 0.0
        %1931 = vmatpush.msra.mxu0 0.0
        %1932 = vmatpush.msra.mxu0 0.0
        %1933 = vmatpush.msra.mxu0 0.0
        %1934 = vmatpush.msra.mxu0 0.0
        %1935 = vmatpush.msra.mxu0 %v1778
        %1936 = vmatpush.msra.mxu0 %v609
        %1937 = vmatpush.msra.mxu0 %v608
        %1938 = vmatpush.msra.mxu0 %v607
        %1939 = vmatmul.f32.gmra.mxu0 %v1872
        %v1940 = vpop.f32.mrf.mxu0
        %v1941 = vadd.f32 %v1918, %v1940
        %1942 = vmatmul.f32.gmra.mxu0 %v1875
        %v1943 = vpop.f32.mrf.mxu0
        %v1944 = vadd.f32 %v1921, %v1943
        %1945 = vdwg.mxu0
        %v1946 = vrsqrt.pop %v1941
        %v1947 = vmul.f32 %v1946, %v1941
        %v1948 = vmul.f32 %v1947, %v1946
        %v1949 = vmul.f32 0.5, %v1948
        %v1950 = vsub.f32 1.5, %v1949
        %v1951 = vmul.f32 %v1946, %v1950
        %vm1952 = vweird.f32 %v1941
        %vm1953 = vweird.f32 %v1946
        %vm1954 = vmor %vm1952, %vm1953
        %v1955 = vsel %vm1954, %v1946, %v1951
        %v1956 = vrsqrt.pop %v1944
        %v1957 = vmul.f32 %v1956, %v1944
        %v1958 = vmul.f32 %v1957, %v1956
        %v1959 = vmul.f32 0.5, %v1958
        %v1960 = vsub.f32 1.5, %v1959
        %v1961 = vmul.f32 %v1956, %v1960
        %vm1962 = vweird.f32 %v1944
        %vm1963 = vweird.f32 %v1956
        %vm1964 = vmor %vm1962, %vm1963
        %v1965 = vsel %vm1964, %v1956, %v1961
        %1967 = vset.pattern.permute.xlu0 0
        %1968 = vperm.xlu0 %1967, %v1955
        %v1969 = vpop.permute.xlu0 %1968
        %1972 = vset.pattern.permute.xlu0 0
        %1973 = vperm.xlu0 %1972, %v1965
        %v1974 = vpop.permute.xlu0 %1973
        %v1976 = vmul.f32 %v1859, %v1969
        %v1977 = vmul.f32 %v1860, %v1969
        %v1978 = vmul.f32 %v1861, %v1969
        %v1979 = vmul.f32 %v1862, %v1974
        %v1980 = vmul.f32 %v1863, %v1974
        %v1981 = vmul.f32 %v1864, %v1974
        %v1982 = vmax.f32 %v1976, 0.0
        %v1983 = vmax.f32 %v1977, 0.0
        %v1984 = vmax.f32 %v1978, 0.0
        %v1985 = vmax.f32 %v1979, 0.0
        %v1986 = vmax.f32 %v1980, 0.0
        %v1987 = vmax.f32 %v1981, 0.0
        %v1988 = vpack.c.bf16 %v1985, %v1982
        %v1989 = vpack.c.bf16 %v1986, %v1983
        %v1990 = vpack.c.bf16 %v1987, %v1984
        %s1991 = scalar_lea.vmem %s9, 16
        %v1992 = vld [vmem:[%s1991] sm:$0xff]
        %v1993 = vld [vmem:[%s1991 + $0x8] sm:$0xff]
        %v1995 = vsel %vm1417, %v1990, 0
        %1997 = vmatpush.bf16.msra.mxu0 %v1333
        %1998 = vmatpush.bf16.msra.mxu0 %v1330
        %1999 = vmatpush.bf16.msra.mxu0 %v1327
        %2000 = vmatpush.bf16.msra.mxu0 %v1324
        %2001 = vmatpush.bf16.msra.mxu0 %v1321
        %2002 = vmatpush.bf16.msra.mxu0 %v1318
        %2003 = vmatpush.bf16.msra.mxu0 %v1315
        %2004 = vmatpush.bf16.msra.mxu0 %v1312
        %2005 = vmatmul.bf16.gmra.mxu0 %v1988
        %v2006 = vpop.f32.mrf.mxu0
        %v2007 = vadd.f32 0.0, %v2006
        %v2008 = vpop.f32.mrf.mxu0
        %v2009 = vadd.f32 0.0, %v2008
        %2010 = vdwg.mxu0
        %2011 = vmatpush.bf16.msra.mxu0 %v1357
        %2012 = vmatpush.bf16.msra.mxu0 %v1354
        %2013 = vmatpush.bf16.msra.mxu0 %v1351
        %2014 = vmatpush.bf16.msra.mxu0 %v1348
        %2015 = vmatpush.bf16.msra.mxu0 %v1345
        %2016 = vmatpush.bf16.msra.mxu0 %v1342
        %2017 = vmatpush.bf16.msra.mxu0 %v1339
        %2018 = vmatpush.bf16.msra.mxu0 %v1336
        %2019 = vmatmul.bf16.gmra.mxu0 %v1989
        %v2020 = vpop.f32.mrf.mxu0
        %v2021 = vadd.f32 %v2007, %v2020
        %v2022 = vpop.f32.mrf.mxu0
        %v2023 = vadd.f32 %v2009, %v2022
        %2024 = vdwg.mxu0
        %2025 = vmatpush.bf16.msra.mxu0 0
        %2026 = vmatpush.bf16.msra.mxu0 0
        %2027 = vmatpush.bf16.msra.mxu0 0
        %2028 = vmatpush.bf16.msra.mxu0 0
        %2029 = vmatpush.bf16.msra.mxu0 0
        %2030 = vmatpush.bf16.msra.mxu0 0
        %2031 = vmatpush.bf16.msra.mxu0 %v1423
        %2032 = vmatpush.bf16.msra.mxu0 %v1360
        %2033 = vmatmul.bf16.gmra.mxu0 %v1995
        %v2034 = vpop.f32.mrf.mxu0
        %v2035 = vadd.f32 %v2021, %v2034
        %v2036 = vpop.f32.mrf.mxu0
        %v2037 = vadd.f32 %v2023, %v2036
        %2038 = vdwg.mxu0
        %2039 = vmatpush.bf16.msra.mxu0 %v1334
        %2040 = vmatpush.bf16.msra.mxu0 %v1331
        %2041 = vmatpush.bf16.msra.mxu0 %v1328
        %2042 = vmatpush.bf16.msra.mxu0 %v1325
        %2043 = vmatpush.bf16.msra.mxu0 %v1322
        %2044 = vmatpush.bf16.msra.mxu0 %v1319
        %2045 = vmatpush.bf16.msra.mxu0 %v1316
        %2046 = vmatpush.bf16.msra.mxu0 %v1313
        %2047 = vmatmul.bf16.gmra.mxu0 %v1988
        %v2048 = vpop.f32.mrf.mxu0
        %v2049 = vadd.f32 0.0, %v2048
        %v2050 = vpop.f32.mrf.mxu0
        %v2051 = vadd.f32 0.0, %v2050
        %2052 = vdwg.mxu0
        %2053 = vmatpush.bf16.msra.mxu0 %v1358
        %2054 = vmatpush.bf16.msra.mxu0 %v1355
        %2055 = vmatpush.bf16.msra.mxu0 %v1352
        %2056 = vmatpush.bf16.msra.mxu0 %v1349
        %2057 = vmatpush.bf16.msra.mxu0 %v1346
        %2058 = vmatpush.bf16.msra.mxu0 %v1343
        %2059 = vmatpush.bf16.msra.mxu0 %v1340
        %2060 = vmatpush.bf16.msra.mxu0 %v1337
        %2061 = vmatmul.bf16.gmra.mxu0 %v1989
        %v2062 = vpop.f32.mrf.mxu0
        %v2063 = vadd.f32 %v2049, %v2062
        %v2064 = vpop.f32.mrf.mxu0
        %v2065 = vadd.f32 %v2051, %v2064
        %2066 = vdwg.mxu0
        %2067 = vmatpush.bf16.msra.mxu0 0
        %2068 = vmatpush.bf16.msra.mxu0 0
        %2069 = vmatpush.bf16.msra.mxu0 0
        %2070 = vmatpush.bf16.msra.mxu0 0
        %2071 = vmatpush.bf16.msra.mxu0 0
        %2072 = vmatpush.bf16.msra.mxu0 0
        %2073 = vmatpush.bf16.msra.mxu0 %v1426
        %2074 = vmatpush.bf16.msra.mxu0 %v1361
        %2075 = vmatmul.bf16.gmra.mxu0 %v1995
        %v2076 = vpop.f32.mrf.mxu0
        %v2077 = vadd.f32 %v2063, %v2076
        %v2078 = vpop.f32.mrf.mxu0
        %v2079 = vadd.f32 %v2065, %v2078
        %2080 = vdwg.mxu0
        %2081 = vmatpush.bf16.msra.mxu0 %v1335
        %2082 = vmatpush.bf16.msra.mxu0 %v1332
        %2083 = vmatpush.bf16.msra.mxu0 %v1329
        %2084 = vmatpush.bf16.msra.mxu0 %v1326
        %2085 = vmatpush.bf16.msra.mxu0 %v1323
        %2086 = vmatpush.bf16.msra.mxu0 %v1320
        %2087 = vmatpush.bf16.msra.mxu0 %v1317
        %2088 = vmatpush.bf16.msra.mxu0 %v1314
        %2089 = vmatmul.bf16.gmra.mxu0 %v1988
        %v2090 = vpop.f32.mrf.mxu0
        %v2091 = vadd.f32 0.0, %v2090
        %v2092 = vpop.f32.mrf.mxu0
        %v2093 = vadd.f32 0.0, %v2092
        %2094 = vdwg.mxu0
        %2095 = vmatpush.bf16.msra.mxu0 %v1359
        %2096 = vmatpush.bf16.msra.mxu0 %v1356
        %2097 = vmatpush.bf16.msra.mxu0 %v1353
        %2098 = vmatpush.bf16.msra.mxu0 %v1350
        %2099 = vmatpush.bf16.msra.mxu0 %v1347
        %2100 = vmatpush.bf16.msra.mxu0 %v1344
        %2101 = vmatpush.bf16.msra.mxu0 %v1341
        %2102 = vmatpush.bf16.msra.mxu0 %v1338
        %2103 = vmatmul.bf16.gmra.mxu0 %v1989
        %v2104 = vpop.f32.mrf.mxu0
        %v2105 = vadd.f32 %v2091, %v2104
        %v2106 = vpop.f32.mrf.mxu0
        %v2107 = vadd.f32 %v2093, %v2106
        %2108 = vdwg.mxu0
        %2109 = vmatpush.bf16.msra.mxu0 0
        %2110 = vmatpush.bf16.msra.mxu0 0
        %2111 = vmatpush.bf16.msra.mxu0 0
        %2112 = vmatpush.bf16.msra.mxu0 0
        %2113 = vmatpush.bf16.msra.mxu0 0
        %2114 = vmatpush.bf16.msra.mxu0 0
        %2115 = vmatpush.bf16.msra.mxu0 %v1429
        %2116 = vmatpush.bf16.msra.mxu0 %v1362
        %2117 = vmatmul.bf16.gmra.mxu0 %v1995
        %v2118 = vpop.f32.mrf.mxu0
        %v2119 = vadd.f32 %v2105, %v2118
        %v2120 = vpop.f32.mrf.mxu0
        %v2121 = vadd.f32 %v2107, %v2120
        %2122 = vdwg.mxu0
        %v2123 = vpack.c.bf16 %v2077, %v2035
        %v2124 = vpack.c.bf16 %v2119, %v2119
        %v2125 = vpack.c.bf16 %v2079, %v2037
        %v2126 = vpack.c.bf16 %v2121, %v2121
        %v2131 = vunpack.c.l.b16 %v2123
        %v2132 = vunpack.c.h.b16 %v2123
        %v2133 = vunpack.c.l.b16 %v2124
        %v2134 = vunpack.c.l.b16 %v2125
        %v2135 = vunpack.c.h.b16 %v2125
        %v2136 = vunpack.c.l.b16 %v2126
        %v2137 = vpack.c.b16 %v2134, %v2131
        %v2138 = vpack.c.b16 %v2135, %v2132
        %v2139 = vpack.c.b16 %v2136, %v2133
        %2143 = vrot.lane.b32.xlu0 %v2137, 127
        %v2144 = vpop.permute.xlu0 %2143
        %2145 = vrot.lane.b32.xlu0 %v2138, 127
        %v2146 = vpop.permute.xlu0 %2145
        %2147 = vrot.lane.b32.xlu0 %v2139, 127
        %v2148 = vpop.permute.xlu0 %2147
        %v2149 = vsel %vm1583, %v2144, %v2146
        %v2150 = vsel %vm1583, %v2146, %v2148
        %2154 = vrot.lane.b32.xlu0 %v2137, 126
        %v2155 = vpop.permute.xlu0 %2154
        %2156 = vrot.lane.b32.xlu0 %v2138, 126
        %v2157 = vpop.permute.xlu0 %2156
        %2158 = vrot.lane.b32.xlu0 %v2139, 126
        %v2159 = vpop.permute.xlu0 %2158
        %v2160 = vsel %vm1595, %v2155, %v2157
        %v2161 = vsel %vm1595, %v2157, %v2159
        %2165 = vrot.lane.b32.xlu0 %v2137, 110
        %v2166 = vpop.permute.xlu0 %2165
        %2167 = vrot.lane.b32.xlu0 %v2138, 110
        %v2168 = vpop.permute.xlu0 %2167
        %2169 = vrot.lane.b32.xlu0 %v2139, 110
        %v2170 = vpop.permute.xlu0 %2169
        %v2171 = vsel %vm1607, %v2166, %v2168
        %v2172 = vsel %vm1607, %v2168, %v2170
        %2176 = vrot.lane.b32.xlu0 %v2137, 109
        %v2177 = vpop.permute.xlu0 %2176
        %2178 = vrot.lane.b32.xlu0 %v2138, 109
        %v2179 = vpop.permute.xlu0 %2178
        %2180 = vrot.lane.b32.xlu0 %v2139, 109
        %v2181 = vpop.permute.xlu0 %2180
        %v2182 = vsel %vm1619, %v2177, %v2179
        %v2183 = vsel %vm1619, %v2179, %v2181
        %2187 = vrot.lane.b32.xlu0 %v2137, 108
        %v2188 = vpop.permute.xlu0 %2187
        %2189 = vrot.lane.b32.xlu0 %v2138, 108
        %v2190 = vpop.permute.xlu0 %2189
        %2191 = vrot.lane.b32.xlu0 %v2139, 108
        %v2192 = vpop.permute.xlu0 %2191
        %v2193 = vsel %vm1631, %v2188, %v2190
        %v2194 = vsel %vm1631, %v2190, %v2192
        %2198 = vrot.lane.b32.xlu0 %v2137, 92
        %v2199 = vpop.permute.xlu0 %2198
        %2200 = vrot.lane.b32.xlu0 %v2138, 92
        %v2201 = vpop.permute.xlu0 %2200
        %2202 = vrot.lane.b32.xlu0 %v2139, 92
        %v2203 = vpop.permute.xlu0 %2202
        %v2204 = vsel %vm1643, %v2199, %v2201
        %v2205 = vsel %vm1643, %v2201, %v2203
        %2209 = vrot.lane.b32.xlu0 %v2137, 91
        %v2210 = vpop.permute.xlu0 %2209
        %2211 = vrot.lane.b32.xlu0 %v2138, 91
        %v2212 = vpop.permute.xlu0 %2211
        %2213 = vrot.lane.b32.xlu0 %v2139, 91
        %v2214 = vpop.permute.xlu0 %2213
        %v2215 = vsel %vm1655, %v2210, %v2212
        %v2216 = vsel %vm1655, %v2212, %v2214
        %2220 = vrot.lane.b32.xlu0 %v2137, 90
        %v2221 = vpop.permute.xlu0 %2220
        %2222 = vrot.lane.b32.xlu0 %v2138, 90
        %v2223 = vpop.permute.xlu0 %2222
        %2224 = vrot.lane.b32.xlu0 %v2139, 90
        %v2225 = vpop.permute.xlu0 %2224
        %v2226 = vsel %vm1667, %v2221, %v2223
        %v2227 = vsel %vm1667, %v2223, %v2225
        %v2233 = vunpack.c.l.b16 %v1992
        %v2234 = vunpack.c.h.b16 %v1992
        %v2235 = vunpack.c.l.b16 %v1993
        %v2236 = vunpack.c.h.b16 %v1993
        %v2237 = vpack.c.b16 %v2235, %v2233
        %v2238 = vpack.c.b16 %v2236, %v2234
        %v2241 = vsel %vm1682, %v2238, 0
        %2243 = vmatpush.bf16.msra.mxu0 %v2215
        %2244 = vmatpush.bf16.msra.mxu0 %v2204
        %2245 = vmatpush.bf16.msra.mxu0 %v2193
        %2246 = vmatpush.bf16.msra.mxu0 %v2182
        %2247 = vmatpush.bf16.msra.mxu0 %v2171
        %2248 = vmatpush.bf16.msra.mxu0 %v2160
        %2249 = vmatpush.bf16.msra.mxu0 %v2149
        %2250 = vmatpush.bf16.msra.mxu0 %v2137
        %2251 = vmatmul.bf16.gmra.mxu0 %v2237
        %v2252 = vpop.f32.mrf.mxu0
        %v2253 = vadd.f32 0.0, %v2252
        %v2254 = vpop.f32.mrf.mxu0
        %v2255 = vadd.f32 0.0, %v2254
        %2256 = vdwg.mxu0
        %2257 = vmatpush.bf16.msra.mxu0 0
        %2258 = vmatpush.bf16.msra.mxu0 0
        %2259 = vmatpush.bf16.msra.mxu0 0
        %2260 = vmatpush.bf16.msra.mxu0 0
        %2261 = vmatpush.bf16.msra.mxu0 0
        %2262 = vmatpush.bf16.msra.mxu0 0
        %2263 = vmatpush.bf16.msra.mxu0 0
        %2264 = vmatpush.bf16.msra.mxu0 %v2226
        %2265 = vmatmul.bf16.gmra.mxu0 %v2241
        %v2266 = vpop.f32.mrf.mxu0
        %v2267 = vadd.f32 %v2253, %v2266
        %v2268 = vpop.f32.mrf.mxu0
        %v2269 = vadd.f32 %v2255, %v2268
        %2270 = vdwg.mxu0
        %2271 = vmatpush.bf16.msra.mxu0 %v2216
        %2272 = vmatpush.bf16.msra.mxu0 %v2205
        %2273 = vmatpush.bf16.msra.mxu0 %v2194
        %2274 = vmatpush.bf16.msra.mxu0 %v2183
        %2275 = vmatpush.bf16.msra.mxu0 %v2172
        %2276 = vmatpush.bf16.msra.mxu0 %v2161
        %2277 = vmatpush.bf16.msra.mxu0 %v2150
        %2278 = vmatpush.bf16.msra.mxu0 %v2138
        %2279 = vmatmul.bf16.gmra.mxu0 %v2237
        %v2280 = vpop.f32.mrf.mxu0
        %v2281 = vadd.f32 0.0, %v2280
        %v2282 = vpop.f32.mrf.mxu0
        %v2283 = vadd.f32 0.0, %v2282
        %2284 = vdwg.mxu0
        %2285 = vmatpush.bf16.msra.mxu0 0
        %2286 = vmatpush.bf16.msra.mxu0 0
        %2287 = vmatpush.bf16.msra.mxu0 0
        %2288 = vmatpush.bf16.msra.mxu0 0
        %2289 = vmatpush.bf16.msra.mxu0 0
        %2290 = vmatpush.bf16.msra.mxu0 0
        %2291 = vmatpush.bf16.msra.mxu0 0
        %2292 = vmatpush.bf16.msra.mxu0 %v2227
        %2293 = vmatmul.bf16.gmra.mxu0 %v2241
        %v2294 = vpop.f32.mrf.mxu0
        %v2295 = vadd.f32 %v2281, %v2294
        %v2296 = vpop.f32.mrf.mxu0
        %v2297 = vadd.f32 %v2283, %v2296
        %2298 = vdwg.mxu0
        %2299 = vmatpush.bf16.msra.mxu0 %v2214
        %2300 = vmatpush.bf16.msra.mxu0 %v2203
        %2301 = vmatpush.bf16.msra.mxu0 %v2192
        %2302 = vmatpush.bf16.msra.mxu0 %v2181
        %2303 = vmatpush.bf16.msra.mxu0 %v2170
        %2304 = vmatpush.bf16.msra.mxu0 %v2159
        %2305 = vmatpush.bf16.msra.mxu0 %v2148
        %2306 = vmatpush.bf16.msra.mxu0 %v2139
        %2307 = vmatmul.bf16.gmra.mxu0 %v2237
        %v2308 = vpop.f32.mrf.mxu0
        %v2309 = vadd.f32 0.0, %v2308
        %v2310 = vpop.f32.mrf.mxu0
        %v2311 = vadd.f32 0.0, %v2310
        %2312 = vdwg.mxu0
        %2313 = vmatpush.bf16.msra.mxu0 0
        %2314 = vmatpush.bf16.msra.mxu0 0
        %2315 = vmatpush.bf16.msra.mxu0 0
        %2316 = vmatpush.bf16.msra.mxu0 0
        %2317 = vmatpush.bf16.msra.mxu0 0
        %2318 = vmatpush.bf16.msra.mxu0 0
        %2319 = vmatpush.bf16.msra.mxu0 0
        %2320 = vmatpush.bf16.msra.mxu0 %v2225
        %2321 = vmatmul.bf16.gmra.mxu0 %v2241
        %v2322 = vpop.f32.mrf.mxu0
        %v2323 = vadd.f32 %v2309, %v2322
        %v2324 = vpop.f32.mrf.mxu0
        %v2325 = vadd.f32 %v2311, %v2324
        %2326 = vdwg.mxu0
        %v2328 = vsel %vm1417, %v2323, 0
        %v2331 = vsel %vm1417, %v2325, 0
        %2333 = vmatpush.msra.mxu0 %v590
        %2334 = vmatpush.msra.mxu0 %v589
        %2335 = vmatpush.msra.mxu0 %v588
        %2336 = vmatpush.msra.mxu0 %v587
        %2337 = vmatpush.msra.mxu0 %v586
        %2338 = vmatpush.msra.mxu0 %v585
        %2339 = vmatpush.msra.mxu0 %v584
        %2340 = vmatpush.msra.mxu0 %v583
        %2341 = vmatpush.msra.mxu0 %v582
        %2342 = vmatpush.msra.mxu0 %v581
        %2343 = vmatpush.msra.mxu0 %v580
        %2344 = vmatpush.msra.mxu0 %v579
        %2345 = vmatpush.msra.mxu0 %v578
        %2346 = vmatpush.msra.mxu0 %v577
        %2347 = vmatpush.msra.mxu0 %v576
        %2348 = vmatpush.msra.mxu0 %v575
        %2349 = vmatmul.f32.gmra.mxu0 %v2267
        %v2350 = vpop.f32.mrf.mxu0
        %v2351 = vadd.f32 0.0, %v2350
        %2352 = vmatmul.f32.gmra.mxu0 %v2269
        %v2353 = vpop.f32.mrf.mxu0
        %v2354 = vadd.f32 0.0, %v2353
        %2355 = vdwg.mxu0
        %2356 = vmatpush.msra.mxu0 %v606
        %2357 = vmatpush.msra.mxu0 %v605
        %2358 = vmatpush.msra.mxu0 %v604
        %2359 = vmatpush.msra.mxu0 %v603
        %2360 = vmatpush.msra.mxu0 %v602
        %2361 = vmatpush.msra.mxu0 %v601
        %2362 = vmatpush.msra.mxu0 %v600
        %2363 = vmatpush.msra.mxu0 %v599
        %2364 = vmatpush.msra.mxu0 %v598
        %2365 = vmatpush.msra.mxu0 %v597
        %2366 = vmatpush.msra.mxu0 %v596
        %2367 = vmatpush.msra.mxu0 %v595
        %2368 = vmatpush.msra.mxu0 %v594
        %2369 = vmatpush.msra.mxu0 %v593
        %2370 = vmatpush.msra.mxu0 %v592
        %2371 = vmatpush.msra.mxu0 %v591
        %2372 = vmatmul.f32.gmra.mxu0 %v2295
        %v2373 = vpop.f32.mrf.mxu0
        %v2374 = vadd.f32 %v2351, %v2373
        %2375 = vmatmul.f32.gmra.mxu0 %v2297
        %v2376 = vpop.f32.mrf.mxu0
        %v2377 = vadd.f32 %v2354, %v2376
        %2378 = vdwg.mxu0
        %2379 = vmatpush.msra.mxu0 0.0
        %2380 = vmatpush.msra.mxu0 0.0
        %2381 = vmatpush.msra.mxu0 0.0
        %2382 = vmatpush.msra.mxu0 0.0
        %2383 = vmatpush.msra.mxu0 0.0
        %2384 = vmatpush.msra.mxu0 0.0
        %2385 = vmatpush.msra.mxu0 0.0
        %2386 = vmatpush.msra.mxu0 0.0
        %2387 = vmatpush.msra.mxu0 0.0
        %2388 = vmatpush.msra.mxu0 0.0
        %2389 = vmatpush.msra.mxu0 0.0
        %2390 = vmatpush.msra.mxu0 0.0
        %2391 = vmatpush.msra.mxu0 %v1778
        %2392 = vmatpush.msra.mxu0 %v609
        %2393 = vmatpush.msra.mxu0 %v608
        %2394 = vmatpush.msra.mxu0 %v607
        %2395 = vmatmul.f32.gmra.mxu0 %v2328
        %v2396 = vpop.f32.mrf.mxu0
        %v2397 = vadd.f32 %v2374, %v2396
        %2398 = vmatmul.f32.gmra.mxu0 %v2331
        %v2399 = vpop.f32.mrf.mxu0
        %v2400 = vadd.f32 %v2377, %v2399
        %2401 = vdwg.mxu0
        %2403 = vset.pattern.permute.xlu0 0
        %2404 = vperm.xlu0 %2403, %v2397
        %v2405 = vpop.permute.xlu0 %2404
        %2408 = vset.pattern.permute.xlu0 0
        %2409 = vperm.xlu0 %2408, %v2400
        %v2410 = vpop.permute.xlu0 %2409
        %v2412 = vsub.f32 %v2267, %v2405
        %v2413 = vsub.f32 %v2295, %v2405
        %v2414 = vsub.f32 %v2323, %v2405
        %v2415 = vsub.f32 %v2269, %v2410
        %v2416 = vsub.f32 %v2297, %v2410
        %v2417 = vsub.f32 %v2325, %v2410
        %v2418 = vmul.f32 %v2412, %v2412
        %v2419 = vmul.f32 %v2413, %v2413
        %v2420 = vmul.f32 %v2414, %v2414
        %v2421 = vmul.f32 %v2415, %v2415
        %v2422 = vmul.f32 %v2416, %v2416
        %v2423 = vmul.f32 %v2417, %v2417
        %v2425 = vsel %vm1417, %v2420, 0
        %v2428 = vsel %vm1417, %v2423, 0
        %2430 = vmatpush.msra.mxu0 %v590
        %2431 = vmatpush.msra.mxu0 %v589
        %2432 = vmatpush.msra.mxu0 %v588
        %2433 = vmatpush.msra.mxu0 %v587
        %2434 = vmatpush.msra.mxu0 %v586
        %2435 = vmatpush.msra.mxu0 %v585
        %2436 = vmatpush.msra.mxu0 %v584
        %2437 = vmatpush.msra.mxu0 %v583
        %2438 = vmatpush.msra.mxu0 %v582
        %2439 = vmatpush.msra.mxu0 %v581
        %2440 = vmatpush.msra.mxu0 %v580
        %2441 = vmatpush.msra.mxu0 %v579
        %2442 = vmatpush.msra.mxu0 %v578
        %2443 = vmatpush.msra.mxu0 %v577
        %2444 = vmatpush.msra.mxu0 %v576
        %2445 = vmatpush.msra.mxu0 %v575
        %2446 = vmatmul.f32.gmra.mxu0 %v2418
        %v2447 = vpop.f32.mrf.mxu0
        %v2448 = vadd.f32 1e-05, %v2447
        %2449 = vmatmul.f32.gmra.mxu0 %v2421
        %v2450 = vpop.f32.mrf.mxu0
        %v2451 = vadd.f32 1e-05, %v2450
        %2452 = vdwg.mxu0
        %2453 = vmatpush.msra.mxu0 %v606
        %2454 = vmatpush.msra.mxu0 %v605
        %2455 = vmatpush.msra.mxu0 %v604
        %2456 = vmatpush.msra.mxu0 %v603
        %2457 = vmatpush.msra.mxu0 %v602
        %2458 = vmatpush.msra.mxu0 %v601
        %2459 = vmatpush.msra.mxu0 %v600
        %2460 = vmatpush.msra.mxu0 %v599
        %2461 = vmatpush.msra.mxu0 %v598
        %2462 = vmatpush.msra.mxu0 %v597
        %2463 = vmatpush.msra.mxu0 %v596
        %2464 = vmatpush.msra.mxu0 %v595
        %2465 = vmatpush.msra.mxu0 %v594
        %2466 = vmatpush.msra.mxu0 %v593
        %2467 = vmatpush.msra.mxu0 %v592
        %2468 = vmatpush.msra.mxu0 %v591
        %2469 = vmatmul.f32.gmra.mxu0 %v2419
        %v2470 = vpop.f32.mrf.mxu0
        %v2471 = vadd.f32 %v2448, %v2470
        %2472 = vmatmul.f32.gmra.mxu0 %v2422
        %v2473 = vpop.f32.mrf.mxu0
        %v2474 = vadd.f32 %v2451, %v2473
        %2475 = vdwg.mxu0
        %2476 = vmatpush.msra.mxu0 0.0
        %2477 = vmatpush.msra.mxu0 0.0
        %2478 = vmatpush.msra.mxu0 0.0
        %2479 = vmatpush.msra.mxu0 0.0
        %2480 = vmatpush.msra.mxu0 0.0
        %2481 = vmatpush.msra.mxu0 0.0
        %2482 = vmatpush.msra.mxu0 0.0
        %2483 = vmatpush.msra.mxu0 0.0
        %2484 = vmatpush.msra.mxu0 0.0
        %2485 = vmatpush.msra.mxu0 0.0
        %2486 = vmatpush.msra.mxu0 0.0
        %2487 = vmatpush.msra.mxu0 0.0
        %2488 = vmatpush.msra.mxu0 %v1778
        %2489 = vmatpush.msra.mxu0 %v609
        %2490 = vmatpush.msra.mxu0 %v608
        %2491 = vmatpush.msra.mxu0 %v607
        %2492 = vmatmul.f32.gmra.mxu0 %v2425
        %v2493 = vpop.f32.mrf.mxu0
        %v2494 = vadd.f32 %v2471, %v2493
        %2495 = vmatmul.f32.gmra.mxu0 %v2428
        %v2496 = vpop.f32.mrf.mxu0
        %v2497 = vadd.f32 %v2474, %v2496
        %2498 = vdwg.mxu0
        %v2499 = vrsqrt.pop %v2494
        %v2500 = vmul.f32 %v2499, %v2494
        %v2501 = vmul.f32 %v2500, %v2499
        %v2502 = vmul.f32 0.5, %v2501
        %v2503 = vsub.f32 1.5, %v2502
        %v2504 = vmul.f32 %v2499, %v2503
        %vm2505 = vweird.f32 %v2494
        %vm2506 = vweird.f32 %v2499
        %vm2507 = vmor %vm2505, %vm2506
        %v2508 = vsel %vm2507, %v2499, %v2504
        %v2509 = vrsqrt.pop %v2497
        %v2510 = vmul.f32 %v2509, %v2497
        %v2511 = vmul.f32 %v2510, %v2509
        %v2512 = vmul.f32 0.5, %v2511
        %v2513 = vsub.f32 1.5, %v2512
        %v2514 = vmul.f32 %v2509, %v2513
        %vm2515 = vweird.f32 %v2497
        %vm2516 = vweird.f32 %v2509
        %vm2517 = vmor %vm2515, %vm2516
        %v2518 = vsel %vm2517, %v2509, %v2514
        %2520 = vset.pattern.permute.xlu0 0
        %2521 = vperm.xlu0 %2520, %v2508
        %v2522 = vpop.permute.xlu0 %2521
        %2525 = vset.pattern.permute.xlu0 0
        %2526 = vperm.xlu0 %2525, %v2518
        %v2527 = vpop.permute.xlu0 %2526
        %v2529 = vmul.f32 %v2412, %v2522
        %v2530 = vmul.f32 %v2413, %v2522
        %v2531 = vmul.f32 %v2414, %v2522
        %v2532 = vmul.f32 %v2415, %v2527
        %v2533 = vmul.f32 %v2416, %v2527
        %v2534 = vmul.f32 %v2417, %v2527
        %v2535 = vadd.f32 %v1067, %v2529
        %v2536 = vadd.f32 %v1095, %v2530
        %v2537 = vadd.f32 %v1123, %v2531
        %v2538 = vadd.f32 %v1069, %v2532
        %v2539 = vadd.f32 %v1097, %v2533
        %v2540 = vadd.f32 %v1125, %v2534
        %v2541 = vpack.c.bf16 %v2538, %v2535
        %v2542 = vpack.c.bf16 %v2539, %v2536
        %v2543 = vpack.c.bf16 %v2540, %v2537
        %s2544 = scalar_lea.vmem %s9, 32
        %v2545 = vld [vmem:[%s2544] sm:$0xff]
        %v2546 = vld [vmem:[%s2544 + $0x8] sm:$0xff]
        %v2548 = vsel %vm1417, %v2543, 0
        %2550 = vmatpush.bf16.msra.mxu0 %v1333
        %2551 = vmatpush.bf16.msra.mxu0 %v1330
        %2552 = vmatpush.bf16.msra.mxu0 %v1327
        %2553 = vmatpush.bf16.msra.mxu0 %v1324
        %2554 = vmatpush.bf16.msra.mxu0 %v1321
        %2555 = vmatpush.bf16.msra.mxu0 %v1318
        %2556 = vmatpush.bf16.msra.mxu0 %v1315
        %2557 = vmatpush.bf16.msra.mxu0 %v1312
        %2558 = vmatmul.bf16.gmra.mxu0 %v2541
        %v2559 = vpop.f32.mrf.mxu0
        %v2560 = vadd.f32 0.0, %v2559
        %v2561 = vpop.f32.mrf.mxu0
        %v2562 = vadd.f32 0.0, %v2561
        %2563 = vdwg.mxu0
        %2564 = vmatpush.bf16.msra.mxu0 %v1357
        %2565 = vmatpush.bf16.msra.mxu0 %v1354
        %2566 = vmatpush.bf16.msra.mxu0 %v1351
        %2567 = vmatpush.bf16.msra.mxu0 %v1348
        %2568 = vmatpush.bf16.msra.mxu0 %v1345
        %2569 = vmatpush.bf16.msra.mxu0 %v1342
        %2570 = vmatpush.bf16.msra.mxu0 %v1339
        %2571 = vmatpush.bf16.msra.mxu0 %v1336
        %2572 = vmatmul.bf16.gmra.mxu0 %v2542
        %v2573 = vpop.f32.mrf.mxu0
        %v2574 = vadd.f32 %v2560, %v2573
        %v2575 = vpop.f32.mrf.mxu0
        %v2576 = vadd.f32 %v2562, %v2575
        %2577 = vdwg.mxu0
        %2578 = vmatpush.bf16.msra.mxu0 0
        %2579 = vmatpush.bf16.msra.mxu0 0
        %2580 = vmatpush.bf16.msra.mxu0 0
        %2581 = vmatpush.bf16.msra.mxu0 0
        %2582 = vmatpush.bf16.msra.mxu0 0
        %2583 = vmatpush.bf16.msra.mxu0 0
        %2584 = vmatpush.bf16.msra.mxu0 %v1423
        %2585 = vmatpush.bf16.msra.mxu0 %v1360
        %2586 = vmatmul.bf16.gmra.mxu0 %v2548
        %v2587 = vpop.f32.mrf.mxu0
        %v2588 = vadd.f32 %v2574, %v2587
        %v2589 = vpop.f32.mrf.mxu0
        %v2590 = vadd.f32 %v2576, %v2589
        %2591 = vdwg.mxu0
        %2592 = vmatpush.bf16.msra.mxu0 %v1334
        %2593 = vmatpush.bf16.msra.mxu0 %v1331
        %2594 = vmatpush.bf16.msra.mxu0 %v1328
        %2595 = vmatpush.bf16.msra.mxu0 %v1325
        %2596 = vmatpush.bf16.msra.mxu0 %v1322
        %2597 = vmatpush.bf16.msra.mxu0 %v1319
        %2598 = vmatpush.bf16.msra.mxu0 %v1316
        %2599 = vmatpush.bf16.msra.mxu0 %v1313
        %2600 = vmatmul.bf16.gmra.mxu0 %v2541
        %v2601 = vpop.f32.mrf.mxu0
        %v2602 = vadd.f32 0.0, %v2601
        %v2603 = vpop.f32.mrf.mxu0
        %v2604 = vadd.f32 0.0, %v2603
        %2605 = vdwg.mxu0
        %2606 = vmatpush.bf16.msra.mxu0 %v1358
        %2607 = vmatpush.bf16.msra.mxu0 %v1355
        %2608 = vmatpush.bf16.msra.mxu0 %v1352
        %2609 = vmatpush.bf16.msra.mxu0 %v1349
        %2610 = vmatpush.bf16.msra.mxu0 %v1346
        %2611 = vmatpush.bf16.msra.mxu0 %v1343
        %2612 = vmatpush.bf16.msra.mxu0 %v1340
        %2613 = vmatpush.bf16.msra.mxu0 %v1337
        %2614 = vmatmul.bf16.gmra.mxu0 %v2542
        %v2615 = vpop.f32.mrf.mxu0
        %v2616 = vadd.f32 %v2602, %v2615
        %v2617 = vpop.f32.mrf.mxu0
        %v2618 = vadd.f32 %v2604, %v2617
        %2619 = vdwg.mxu0
        %2620 = vmatpush.bf16.msra.mxu0 0
        %2621 = vmatpush.bf16.msra.mxu0 0
        %2622 = vmatpush.bf16.msra.mxu0 0
        %2623 = vmatpush.bf16.msra.mxu0 0
        %2624 = vmatpush.bf16.msra.mxu0 0
        %2625 = vmatpush.bf16.msra.mxu0 0
        %2626 = vmatpush.bf16.msra.mxu0 %v1426
        %2627 = vmatpush.bf16.msra.mxu0 %v1361
        %2628 = vmatmul.bf16.gmra.mxu0 %v2548
        %v2629 = vpop.f32.mrf.mxu0
        %v2630 = vadd.f32 %v2616, %v2629
        %v2631 = vpop.f32.mrf.mxu0
        %v2632 = vadd.f32 %v2618, %v2631
        %2633 = vdwg.mxu0
        %2634 = vmatpush.bf16.msra.mxu0 %v1335
        %2635 = vmatpush.bf16.msra.mxu0 %v1332
        %2636 = vmatpush.bf16.msra.mxu0 %v1329
        %2637 = vmatpush.bf16.msra.mxu0 %v1326
        %2638 = vmatpush.bf16.msra.mxu0 %v1323
        %2639 = vmatpush.bf16.msra.mxu0 %v1320
        %2640 = vmatpush.bf16.msra.mxu0 %v1317
        %2641 = vmatpush.bf16.msra.mxu0 %v1314
        %2642 = vmatmul.bf16.gmra.mxu0 %v2541
        %v2643 = vpop.f32.mrf.mxu0
        %v2644 = vadd.f32 0.0, %v2643
        %v2645 = vpop.f32.mrf.mxu0
        %v2646 = vadd.f32 0.0, %v2645
        %2647 = vdwg.mxu0
        %2648 = vmatpush.bf16.msra.mxu0 %v1359
        %2649 = vmatpush.bf16.msra.mxu0 %v1356
        %2650 = vmatpush.bf16.msra.mxu0 %v1353
        %2651 = vmatpush.bf16.msra.mxu0 %v1350
        %2652 = vmatpush.bf16.msra.mxu0 %v1347
        %2653 = vmatpush.bf16.msra.mxu0 %v1344
        %2654 = vmatpush.bf16.msra.mxu0 %v1341
        %2655 = vmatpush.bf16.msra.mxu0 %v1338
        %2656 = vmatmul.bf16.gmra.mxu0 %v2542
        %v2657 = vpop.f32.mrf.mxu0
        %v2658 = vadd.f32 %v2644, %v2657
        %v2659 = vpop.f32.mrf.mxu0
        %v2660 = vadd.f32 %v2646, %v2659
        %2661 = vdwg.mxu0
        %2662 = vmatpush.bf16.msra.mxu0 0
        %2663 = vmatpush.bf16.msra.mxu0 0
        %2664 = vmatpush.bf16.msra.mxu0 0
        %2665 = vmatpush.bf16.msra.mxu0 0
        %2666 = vmatpush.bf16.msra.mxu0 0
        %2667 = vmatpush.bf16.msra.mxu0 0
        %2668 = vmatpush.bf16.msra.mxu0 %v1429
        %2669 = vmatpush.bf16.msra.mxu0 %v1362
        %2670 = vmatmul.bf16.gmra.mxu0 %v2548
        %v2671 = vpop.f32.mrf.mxu0
        %v2672 = vadd.f32 %v2658, %v2671
        %v2673 = vpop.f32.mrf.mxu0
        %v2674 = vadd.f32 %v2660, %v2673
        %2675 = vdwg.mxu0
        %v2676 = vpack.c.bf16 %v2630, %v2588
        %v2677 = vpack.c.bf16 %v2672, %v2672
        %v2678 = vpack.c.bf16 %v2632, %v2590
        %v2679 = vpack.c.bf16 %v2674, %v2674
        %v2684 = vunpack.c.l.b16 %v2676
        %v2685 = vunpack.c.h.b16 %v2676
        %v2686 = vunpack.c.l.b16 %v2677
        %v2687 = vunpack.c.l.b16 %v2678
        %v2688 = vunpack.c.h.b16 %v2678
        %v2689 = vunpack.c.l.b16 %v2679
        %v2690 = vpack.c.b16 %v2687, %v2684
        %v2691 = vpack.c.b16 %v2688, %v2685
        %v2692 = vpack.c.b16 %v2689, %v2686
        %2696 = vrot.lane.b32.xlu0 %v2690, 127
        %v2697 = vpop.permute.xlu0 %2696
        %2698 = vrot.lane.b32.xlu0 %v2691, 127
        %v2699 = vpop.permute.xlu0 %2698
        %2700 = vrot.lane.b32.xlu0 %v2692, 127
        %v2701 = vpop.permute.xlu0 %2700
        %v2702 = vsel %vm1583, %v2697, %v2699
        %v2703 = vsel %vm1583, %v2699, %v2701
        %2707 = vrot.lane.b32.xlu0 %v2690, 126
        %v2708 = vpop.permute.xlu0 %2707
        %2709 = vrot.lane.b32.xlu0 %v2691, 126
        %v2710 = vpop.permute.xlu0 %2709
        %2711 = vrot.lane.b32.xlu0 %v2692, 126
        %v2712 = vpop.permute.xlu0 %2711
        %v2713 = vsel %vm1595, %v2708, %v2710
        %v2714 = vsel %vm1595, %v2710, %v2712
        %2718 = vrot.lane.b32.xlu0 %v2690, 110
        %v2719 = vpop.permute.xlu0 %2718
        %2720 = vrot.lane.b32.xlu0 %v2691, 110
        %v2721 = vpop.permute.xlu0 %2720
        %2722 = vrot.lane.b32.xlu0 %v2692, 110
        %v2723 = vpop.permute.xlu0 %2722
        %v2724 = vsel %vm1607, %v2719, %v2721
        %v2725 = vsel %vm1607, %v2721, %v2723
        %2729 = vrot.lane.b32.xlu0 %v2690, 109
        %v2730 = vpop.permute.xlu0 %2729
        %2731 = vrot.lane.b32.xlu0 %v2691, 109
        %v2732 = vpop.permute.xlu0 %2731
        %2733 = vrot.lane.b32.xlu0 %v2692, 109
        %v2734 = vpop.permute.xlu0 %2733
        %v2735 = vsel %vm1619, %v2730, %v2732
        %v2736 = vsel %vm1619, %v2732, %v2734
        %2740 = vrot.lane.b32.xlu0 %v2690, 108
        %v2741 = vpop.permute.xlu0 %2740
        %2742 = vrot.lane.b32.xlu0 %v2691, 108
        %v2743 = vpop.permute.xlu0 %2742
        %2744 = vrot.lane.b32.xlu0 %v2692, 108
        %v2745 = vpop.permute.xlu0 %2744
        %v2746 = vsel %vm1631, %v2741, %v2743
        %v2747 = vsel %vm1631, %v2743, %v2745
        %2751 = vrot.lane.b32.xlu0 %v2690, 92
        %v2752 = vpop.permute.xlu0 %2751
        %2753 = vrot.lane.b32.xlu0 %v2691, 92
        %v2754 = vpop.permute.xlu0 %2753
        %2755 = vrot.lane.b32.xlu0 %v2692, 92
        %v2756 = vpop.permute.xlu0 %2755
        %v2757 = vsel %vm1643, %v2752, %v2754
        %v2758 = vsel %vm1643, %v2754, %v2756
        %2762 = vrot.lane.b32.xlu0 %v2690, 91
        %v2763 = vpop.permute.xlu0 %2762
        %2764 = vrot.lane.b32.xlu0 %v2691, 91
        %v2765 = vpop.permute.xlu0 %2764
        %2766 = vrot.lane.b32.xlu0 %v2692, 91
        %v2767 = vpop.permute.xlu0 %2766
        %v2768 = vsel %vm1655, %v2763, %v2765
        %v2769 = vsel %vm1655, %v2765, %v2767
        %2773 = vrot.lane.b32.xlu0 %v2690, 90
        %v2774 = vpop.permute.xlu0 %2773
        %2775 = vrot.lane.b32.xlu0 %v2691, 90
        %v2776 = vpop.permute.xlu0 %2775
        %2777 = vrot.lane.b32.xlu0 %v2692, 90
        %v2778 = vpop.permute.xlu0 %2777
        %v2779 = vsel %vm1667, %v2774, %v2776
        %v2780 = vsel %vm1667, %v2776, %v2778
        %v2786 = vunpack.c.l.b16 %v2545
        %v2787 = vunpack.c.h.b16 %v2545
        %v2788 = vunpack.c.l.b16 %v2546
        %v2789 = vunpack.c.h.b16 %v2546
        %v2790 = vpack.c.b16 %v2788, %v2786
        %v2791 = vpack.c.b16 %v2789, %v2787
        %v2794 = vsel %vm1682, %v2791, 0
        %2796 = vmatpush.bf16.msra.mxu0 %v2768
        %2797 = vmatpush.bf16.msra.mxu0 %v2757
        %2798 = vmatpush.bf16.msra.mxu0 %v2746
        %2799 = vmatpush.bf16.msra.mxu0 %v2735
        %2800 = vmatpush.bf16.msra.mxu0 %v2724
        %2801 = vmatpush.bf16.msra.mxu0 %v2713
        %2802 = vmatpush.bf16.msra.mxu0 %v2702
        %2803 = vmatpush.bf16.msra.mxu0 %v2690
        %2804 = vmatmul.bf16.gmra.mxu0 %v2790
        %v2805 = vpop.f32.mrf.mxu0
        %v2806 = vadd.f32 0.0, %v2805
        %v2807 = vpop.f32.mrf.mxu0
        %v2808 = vadd.f32 0.0, %v2807
        %2809 = vdwg.mxu0
        %2810 = vmatpush.bf16.msra.mxu0 0
        %2811 = vmatpush.bf16.msra.mxu0 0
        %2812 = vmatpush.bf16.msra.mxu0 0
        %2813 = vmatpush.bf16.msra.mxu0 0
        %2814 = vmatpush.bf16.msra.mxu0 0
        %2815 = vmatpush.bf16.msra.mxu0 0
        %2816 = vmatpush.bf16.msra.mxu0 0
        %2817 = vmatpush.bf16.msra.mxu0 %v2779
        %2818 = vmatmul.bf16.gmra.mxu0 %v2794
        %v2819 = vpop.f32.mrf.mxu0
        %v2820 = vadd.f32 %v2806, %v2819
        %v2821 = vpop.f32.mrf.mxu0
        %v2822 = vadd.f32 %v2808, %v2821
        %2823 = vdwg.mxu0
        %2824 = vmatpush.bf16.msra.mxu0 %v2769
        %2825 = vmatpush.bf16.msra.mxu0 %v2758
        %2826 = vmatpush.bf16.msra.mxu0 %v2747
        %2827 = vmatpush.bf16.msra.mxu0 %v2736
        %2828 = vmatpush.bf16.msra.mxu0 %v2725
        %2829 = vmatpush.bf16.msra.mxu0 %v2714
        %2830 = vmatpush.bf16.msra.mxu0 %v2703
        %2831 = vmatpush.bf16.msra.mxu0 %v2691
        %2832 = vmatmul.bf16.gmra.mxu0 %v2790
        %v2833 = vpop.f32.mrf.mxu0
        %v2834 = vadd.f32 0.0, %v2833
        %v2835 = vpop.f32.mrf.mxu0
        %v2836 = vadd.f32 0.0, %v2835
        %2837 = vdwg.mxu0
        %2838 = vmatpush.bf16.msra.mxu0 0
        %2839 = vmatpush.bf16.msra.mxu0 0
        %2840 = vmatpush.bf16.msra.mxu0 0
        %2841 = vmatpush.bf16.msra.mxu0 0
        %2842 = vmatpush.bf16.msra.mxu0 0
        %2843 = vmatpush.bf16.msra.mxu0 0
        %2844 = vmatpush.bf16.msra.mxu0 0
        %2845 = vmatpush.bf16.msra.mxu0 %v2780
        %2846 = vmatmul.bf16.gmra.mxu0 %v2794
        %v2847 = vpop.f32.mrf.mxu0
        %v2848 = vadd.f32 %v2834, %v2847
        %v2849 = vpop.f32.mrf.mxu0
        %v2850 = vadd.f32 %v2836, %v2849
        %2851 = vdwg.mxu0
        %2852 = vmatpush.bf16.msra.mxu0 %v2767
        %2853 = vmatpush.bf16.msra.mxu0 %v2756
        %2854 = vmatpush.bf16.msra.mxu0 %v2745
        %2855 = vmatpush.bf16.msra.mxu0 %v2734
        %2856 = vmatpush.bf16.msra.mxu0 %v2723
        %2857 = vmatpush.bf16.msra.mxu0 %v2712
        %2858 = vmatpush.bf16.msra.mxu0 %v2701
        %2859 = vmatpush.bf16.msra.mxu0 %v2692
        %2860 = vmatmul.bf16.gmra.mxu0 %v2790
        %v2861 = vpop.f32.mrf.mxu0
        %v2862 = vadd.f32 0.0, %v2861
        %v2863 = vpop.f32.mrf.mxu0
        %v2864 = vadd.f32 0.0, %v2863
        %2865 = vdwg.mxu0
        %2866 = vmatpush.bf16.msra.mxu0 0
        %2867 = vmatpush.bf16.msra.mxu0 0
        %2868 = vmatpush.bf16.msra.mxu0 0
        %2869 = vmatpush.bf16.msra.mxu0 0
        %2870 = vmatpush.bf16.msra.mxu0 0
        %2871 = vmatpush.bf16.msra.mxu0 0
        %2872 = vmatpush.bf16.msra.mxu0 0
        %2873 = vmatpush.bf16.msra.mxu0 %v2778
        %2874 = vmatmul.bf16.gmra.mxu0 %v2794
        %v2875 = vpop.f32.mrf.mxu0
        %v2876 = vadd.f32 %v2862, %v2875
        %v2877 = vpop.f32.mrf.mxu0
        %v2878 = vadd.f32 %v2864, %v2877
        %2879 = vdwg.mxu0
        %v2881 = vsel %vm1417, %v2876, 0
        %v2884 = vsel %vm1417, %v2878, 0
        %2886 = vmatpush.msra.mxu0 %v590
        %2887 = vmatpush.msra.mxu0 %v589
        %2888 = vmatpush.msra.mxu0 %v588
        %2889 = vmatpush.msra.mxu0 %v587
        %2890 = vmatpush.msra.mxu0 %v586
        %2891 = vmatpush.msra.mxu0 %v585
        %2892 = vmatpush.msra.mxu0 %v584
        %2893 = vmatpush.msra.mxu0 %v583
        %2894 = vmatpush.msra.mxu0 %v582
        %2895 = vmatpush.msra.mxu0 %v581
        %2896 = vmatpush.msra.mxu0 %v580
        %2897 = vmatpush.msra.mxu0 %v579
        %2898 = vmatpush.msra.mxu0 %v578
        %2899 = vmatpush.msra.mxu0 %v577
        %2900 = vmatpush.msra.mxu0 %v576
        %2901 = vmatpush.msra.mxu0 %v575
        %2902 = vmatmul.f32.gmra.mxu0 %v2820
        %v2903 = vpop.f32.mrf.mxu0
        %v2904 = vadd.f32 0.0, %v2903
        %2905 = vmatmul.f32.gmra.mxu0 %v2822
        %v2906 = vpop.f32.mrf.mxu0
        %v2907 = vadd.f32 0.0, %v2906
        %2908 = vdwg.mxu0
        %2909 = vmatpush.msra.mxu0 %v606
        %2910 = vmatpush.msra.mxu0 %v605
        %2911 = vmatpush.msra.mxu0 %v604
        %2912 = vmatpush.msra.mxu0 %v603
        %2913 = vmatpush.msra.mxu0 %v602
        %2914 = vmatpush.msra.mxu0 %v601
        %2915 = vmatpush.msra.mxu0 %v600
        %2916 = vmatpush.msra.mxu0 %v599
        %2917 = vmatpush.msra.mxu0 %v598
        %2918 = vmatpush.msra.mxu0 %v597
        %2919 = vmatpush.msra.mxu0 %v596
        %2920 = vmatpush.msra.mxu0 %v595
        %2921 = vmatpush.msra.mxu0 %v594
        %2922 = vmatpush.msra.mxu0 %v593
        %2923 = vmatpush.msra.mxu0 %v592
        %2924 = vmatpush.msra.mxu0 %v591
        %2925 = vmatmul.f32.gmra.mxu0 %v2848
        %v2926 = vpop.f32.mrf.mxu0
        %v2927 = vadd.f32 %v2904, %v2926
        %2928 = vmatmul.f32.gmra.mxu0 %v2850
        %v2929 = vpop.f32.mrf.mxu0
        %v2930 = vadd.f32 %v2907, %v2929
        %2931 = vdwg.mxu0
        %2932 = vmatpush.msra.mxu0 0.0
        %2933 = vmatpush.msra.mxu0 0.0
        %2934 = vmatpush.msra.mxu0 0.0
        %2935 = vmatpush.msra.mxu0 0.0
        %2936 = vmatpush.msra.mxu0 0.0
        %2937 = vmatpush.msra.mxu0 0.0
        %2938 = vmatpush.msra.mxu0 0.0
        %2939 = vmatpush.msra.mxu0 0.0
        %2940 = vmatpush.msra.mxu0 0.0
        %2941 = vmatpush.msra.mxu0 0.0
        %2942 = vmatpush.msra.mxu0 0.0
        %2943 = vmatpush.msra.mxu0 0.0
        %2944 = vmatpush.msra.mxu0 %v1778
        %2945 = vmatpush.msra.mxu0 %v609
        %2946 = vmatpush.msra.mxu0 %v608
        %2947 = vmatpush.msra.mxu0 %v607
        %2948 = vmatmul.f32.gmra.mxu0 %v2881
        %v2949 = vpop.f32.mrf.mxu0
        %v2950 = vadd.f32 %v2927, %v2949
        %2951 = vmatmul.f32.gmra.mxu0 %v2884
        %v2952 = vpop.f32.mrf.mxu0
        %v2953 = vadd.f32 %v2930, %v2952
        %2954 = vdwg.mxu0
        %2956 = vset.pattern.permute.xlu0 0
        %2957 = vperm.xlu0 %2956, %v2950
        %v2958 = vpop.permute.xlu0 %2957
        %2961 = vset.pattern.permute.xlu0 0
        %2962 = vperm.xlu0 %2961, %v2953
        %v2963 = vpop.permute.xlu0 %2962
        %v2965 = vsub.f32 %v2820, %v2958
        %v2966 = vsub.f32 %v2848, %v2958
        %v2967 = vsub.f32 %v2876, %v2958
        %v2968 = vsub.f32 %v2822, %v2963
        %v2969 = vsub.f32 %v2850, %v2963
        %v2970 = vsub.f32 %v2878, %v2963
        %v2971 = vmul.f32 %v2965, %v2965
        %v2972 = vmul.f32 %v2966, %v2966
        %v2973 = vmul.f32 %v2967, %v2967
        %v2974 = vmul.f32 %v2968, %v2968
        %v2975 = vmul.f32 %v2969, %v2969
        %v2976 = vmul.f32 %v2970, %v2970
        %v2978 = vsel %vm1417, %v2973, 0
        %v2981 = vsel %vm1417, %v2976, 0
        %2983 = vmatpush.msra.mxu0 %v590
        %2984 = vmatpush.msra.mxu0 %v589
        %2985 = vmatpush.msra.mxu0 %v588
        %2986 = vmatpush.msra.mxu0 %v587
        %2987 = vmatpush.msra.mxu0 %v586
        %2988 = vmatpush.msra.mxu0 %v585
        %2989 = vmatpush.msra.mxu0 %v584
        %2990 = vmatpush.msra.mxu0 %v583
        %2991 = vmatpush.msra.mxu0 %v582
        %2992 = vmatpush.msra.mxu0 %v581
        %2993 = vmatpush.msra.mxu0 %v580
        %2994 = vmatpush.msra.mxu0 %v579
        %2995 = vmatpush.msra.mxu0 %v578
        %2996 = vmatpush.msra.mxu0 %v577
        %2997 = vmatpush.msra.mxu0 %v576
        %2998 = vmatpush.msra.mxu0 %v575
        %2999 = vmatmul.f32.gmra.mxu0 %v2971
        %v3000 = vpop.f32.mrf.mxu0
        %v3001 = vadd.f32 1e-05, %v3000
        %3002 = vmatmul.f32.gmra.mxu0 %v2974
        %v3003 = vpop.f32.mrf.mxu0
        %v3004 = vadd.f32 1e-05, %v3003
        %3005 = vdwg.mxu0
        %3006 = vmatpush.msra.mxu0 %v606
        %3007 = vmatpush.msra.mxu0 %v605
        %3008 = vmatpush.msra.mxu0 %v604
        %3009 = vmatpush.msra.mxu0 %v603
        %3010 = vmatpush.msra.mxu0 %v602
        %3011 = vmatpush.msra.mxu0 %v601
        %3012 = vmatpush.msra.mxu0 %v600
        %3013 = vmatpush.msra.mxu0 %v599
        %3014 = vmatpush.msra.mxu0 %v598
        %3015 = vmatpush.msra.mxu0 %v597
        %3016 = vmatpush.msra.mxu0 %v596
        %3017 = vmatpush.msra.mxu0 %v595
        %3018 = vmatpush.msra.mxu0 %v594
        %3019 = vmatpush.msra.mxu0 %v593
        %3020 = vmatpush.msra.mxu0 %v592
        %3021 = vmatpush.msra.mxu0 %v591
        %3022 = vmatmul.f32.gmra.mxu0 %v2972
        %v3023 = vpop.f32.mrf.mxu0
        %v3024 = vadd.f32 %v3001, %v3023
        %3025 = vmatmul.f32.gmra.mxu0 %v2975
        %v3026 = vpop.f32.mrf.mxu0
        %v3027 = vadd.f32 %v3004, %v3026
        %3028 = vdwg.mxu0
        %3029 = vmatpush.msra.mxu0 0.0
        %3030 = vmatpush.msra.mxu0 0.0
        %3031 = vmatpush.msra.mxu0 0.0
        %3032 = vmatpush.msra.mxu0 0.0
        %3033 = vmatpush.msra.mxu0 0.0
        %3034 = vmatpush.msra.mxu0 0.0
        %3035 = vmatpush.msra.mxu0 0.0
        %3036 = vmatpush.msra.mxu0 0.0
        %3037 = vmatpush.msra.mxu0 0.0
        %3038 = vmatpush.msra.mxu0 0.0
        %3039 = vmatpush.msra.mxu0 0.0
        %3040 = vmatpush.msra.mxu0 0.0
        %3041 = vmatpush.msra.mxu0 %v1778
        %3042 = vmatpush.msra.mxu0 %v609
        %3043 = vmatpush.msra.mxu0 %v608
        %3044 = vmatpush.msra.mxu0 %v607
        %3045 = vmatmul.f32.gmra.mxu0 %v2978
        %v3046 = vpop.f32.mrf.mxu0
        %v3047 = vadd.f32 %v3024, %v3046
        %3048 = vmatmul.f32.gmra.mxu0 %v2981
        %v3049 = vpop.f32.mrf.mxu0
        %v3050 = vadd.f32 %v3027, %v3049
        %3051 = vdwg.mxu0
        %v3052 = vrsqrt.pop %v3047
        %v3053 = vmul.f32 %v3052, %v3047
        %v3054 = vmul.f32 %v3053, %v3052
        %v3055 = vmul.f32 0.5, %v3054
        %v3056 = vsub.f32 1.5, %v3055
        %v3057 = vmul.f32 %v3052, %v3056
        %vm3058 = vweird.f32 %v3047
        %vm3059 = vweird.f32 %v3052
        %vm3060 = vmor %vm3058, %vm3059
        %v3061 = vsel %vm3060, %v3052, %v3057
        %v3062 = vrsqrt.pop %v3050
        %v3063 = vmul.f32 %v3062, %v3050
        %v3064 = vmul.f32 %v3063, %v3062
        %v3065 = vmul.f32 0.5, %v3064
        %v3066 = vsub.f32 1.5, %v3065
        %v3067 = vmul.f32 %v3062, %v3066
        %vm3068 = vweird.f32 %v3050
        %vm3069 = vweird.f32 %v3062
        %vm3070 = vmor %vm3068, %vm3069
        %v3071 = vsel %vm3070, %v3062, %v3067
        %3073 = vset.pattern.permute.xlu0 0
        %3074 = vperm.xlu0 %3073, %v3061
        %v3075 = vpop.permute.xlu0 %3074
        %3078 = vset.pattern.permute.xlu0 0
        %3079 = vperm.xlu0 %3078, %v3071
        %v3080 = vpop.permute.xlu0 %3079
        %v3082 = vmul.f32 %v2965, %v3075
        %v3083 = vmul.f32 %v2966, %v3075
        %v3084 = vmul.f32 %v2967, %v3075
        %v3085 = vmul.f32 %v2968, %v3080
        %v3086 = vmul.f32 %v2969, %v3080
        %v3087 = vmul.f32 %v2970, %v3080
        %v3088 = vmax.f32 %v3082, 0.0
        %v3089 = vmax.f32 %v3083, 0.0
        %v3090 = vmax.f32 %v3084, 0.0
        %v3091 = vmax.f32 %v3085, 0.0
        %v3092 = vmax.f32 %v3086, 0.0
        %v3093 = vmax.f32 %v3087, 0.0
        %v3094 = vpack.c.bf16 %v3091, %v3088
        %v3095 = vpack.c.bf16 %v3092, %v3089
        %v3096 = vpack.c.bf16 %v3093, %v3090
        %s3097 = scalar_lea.vmem %s9, 48
        %v3098 = vld [vmem:[%s3097] sm:$0xff]
        %v3099 = vld [vmem:[%s3097 + $0x8] sm:$0xff]
        %v3101 = vsel %vm1417, %v3096, 0
        %3103 = vmatpush.bf16.msra.mxu0 %v1333
        %3104 = vmatpush.bf16.msra.mxu0 %v1330
        %3105 = vmatpush.bf16.msra.mxu0 %v1327
        %3106 = vmatpush.bf16.msra.mxu0 %v1324
        %3107 = vmatpush.bf16.msra.mxu0 %v1321
        %3108 = vmatpush.bf16.msra.mxu0 %v1318
        %3109 = vmatpush.bf16.msra.mxu0 %v1315
        %3110 = vmatpush.bf16.msra.mxu0 %v1312
        %3111 = vmatmul.bf16.gmra.mxu0 %v3094
        %v3112 = vpop.f32.mrf.mxu0
        %v3113 = vadd.f32 0.0, %v3112
        %v3114 = vpop.f32.mrf.mxu0
        %v3115 = vadd.f32 0.0, %v3114
        %3116 = vdwg.mxu0
        %3117 = vmatpush.bf16.msra.mxu0 %v1357
        %3118 = vmatpush.bf16.msra.mxu0 %v1354
        %3119 = vmatpush.bf16.msra.mxu0 %v1351
        %3120 = vmatpush.bf16.msra.mxu0 %v1348
        %3121 = vmatpush.bf16.msra.mxu0 %v1345
        %3122 = vmatpush.bf16.msra.mxu0 %v1342
        %3123 = vmatpush.bf16.msra.mxu0 %v1339
        %3124 = vmatpush.bf16.msra.mxu0 %v1336
        %3125 = vmatmul.bf16.gmra.mxu0 %v3095
        %v3126 = vpop.f32.mrf.mxu0
        %v3127 = vadd.f32 %v3113, %v3126
        %v3128 = vpop.f32.mrf.mxu0
        %v3129 = vadd.f32 %v3115, %v3128
        %3130 = vdwg.mxu0
        %3131 = vmatpush.bf16.msra.mxu0 0
        %3132 = vmatpush.bf16.msra.mxu0 0
        %3133 = vmatpush.bf16.msra.mxu0 0
        %3134 = vmatpush.bf16.msra.mxu0 0
        %3135 = vmatpush.bf16.msra.mxu0 0
        %3136 = vmatpush.bf16.msra.mxu0 0
        %3137 = vmatpush.bf16.msra.mxu0 %v1423
        %3138 = vmatpush.bf16.msra.mxu0 %v1360
        %3139 = vmatmul.bf16.gmra.mxu0 %v3101
        %v3140 = vpop.f32.mrf.mxu0
        %v3141 = vadd.f32 %v3127, %v3140
        %v3142 = vpop.f32.mrf.mxu0
        %v3143 = vadd.f32 %v3129, %v3142
        %3144 = vdwg.mxu0
        %3145 = vmatpush.bf16.msra.mxu0 %v1334
        %3146 = vmatpush.bf16.msra.mxu0 %v1331
        %3147 = vmatpush.bf16.msra.mxu0 %v1328
        %3148 = vmatpush.bf16.msra.mxu0 %v1325
        %3149 = vmatpush.bf16.msra.mxu0 %v1322
        %3150 = vmatpush.bf16.msra.mxu0 %v1319
        %3151 = vmatpush.bf16.msra.mxu0 %v1316
        %3152 = vmatpush.bf16.msra.mxu0 %v1313
        %3153 = vmatmul.bf16.gmra.mxu0 %v3094
        %v3154 = vpop.f32.mrf.mxu0
        %v3155 = vadd.f32 0.0, %v3154
        %v3156 = vpop.f32.mrf.mxu0
        %v3157 = vadd.f32 0.0, %v3156
        %3158 = vdwg.mxu0
        %3159 = vmatpush.bf16.msra.mxu0 %v1358
        %3160 = vmatpush.bf16.msra.mxu0 %v1355
        %3161 = vmatpush.bf16.msra.mxu0 %v1352
        %3162 = vmatpush.bf16.msra.mxu0 %v1349
        %3163 = vmatpush.bf16.msra.mxu0 %v1346
        %3164 = vmatpush.bf16.msra.mxu0 %v1343
        %3165 = vmatpush.bf16.msra.mxu0 %v1340
        %3166 = vmatpush.bf16.msra.mxu0 %v1337
        %3167 = vmatmul.bf16.gmra.mxu0 %v3095
        %v3168 = vpop.f32.mrf.mxu0
        %v3169 = vadd.f32 %v3155, %v3168
        %v3170 = vpop.f32.mrf.mxu0
        %v3171 = vadd.f32 %v3157, %v3170
        %3172 = vdwg.mxu0
        %3173 = vmatpush.bf16.msra.mxu0 0
        %3174 = vmatpush.bf16.msra.mxu0 0
        %3175 = vmatpush.bf16.msra.mxu0 0
        %3176 = vmatpush.bf16.msra.mxu0 0
        %3177 = vmatpush.bf16.msra.mxu0 0
        %3178 = vmatpush.bf16.msra.mxu0 0
        %3179 = vmatpush.bf16.msra.mxu0 %v1426
        %3180 = vmatpush.bf16.msra.mxu0 %v1361
        %3181 = vmatmul.bf16.gmra.mxu0 %v3101
        %v3182 = vpop.f32.mrf.mxu0
        %v3183 = vadd.f32 %v3169, %v3182
        %v3184 = vpop.f32.mrf.mxu0
        %v3185 = vadd.f32 %v3171, %v3184
        %3186 = vdwg.mxu0
        %3187 = vmatpush.bf16.msra.mxu0 %v1335
        %3188 = vmatpush.bf16.msra.mxu0 %v1332
        %3189 = vmatpush.bf16.msra.mxu0 %v1329
        %3190 = vmatpush.bf16.msra.mxu0 %v1326
        %3191 = vmatpush.bf16.msra.mxu0 %v1323
        %3192 = vmatpush.bf16.msra.mxu0 %v1320
        %3193 = vmatpush.bf16.msra.mxu0 %v1317
        %3194 = vmatpush.bf16.msra.mxu0 %v1314
        %3195 = vmatmul.bf16.gmra.mxu0 %v3094
        %v3196 = vpop.f32.mrf.mxu0
        %v3197 = vadd.f32 0.0, %v3196
        %v3198 = vpop.f32.mrf.mxu0
        %v3199 = vadd.f32 0.0, %v3198
        %3200 = vdwg.mxu0
        %3201 = vmatpush.bf16.msra.mxu0 %v1359
        %3202 = vmatpush.bf16.msra.mxu0 %v1356
        %3203 = vmatpush.bf16.msra.mxu0 %v1353
        %3204 = vmatpush.bf16.msra.mxu0 %v1350
        %3205 = vmatpush.bf16.msra.mxu0 %v1347
        %3206 = vmatpush.bf16.msra.mxu0 %v1344
        %3207 = vmatpush.bf16.msra.mxu0 %v1341
        %3208 = vmatpush.bf16.msra.mxu0 %v1338
        %3209 = vmatmul.bf16.gmra.mxu0 %v3095
        %v3210 = vpop.f32.mrf.mxu0
        %v3211 = vadd.f32 %v3197, %v3210
        %v3212 = vpop.f32.mrf.mxu0
        %v3213 = vadd.f32 %v3199, %v3212
        %3214 = vdwg.mxu0
        %3215 = vmatpush.bf16.msra.mxu0 0
        %3216 = vmatpush.bf16.msra.mxu0 0
        %3217 = vmatpush.bf16.msra.mxu0 0
        %3218 = vmatpush.bf16.msra.mxu0 0
        %3219 = vmatpush.bf16.msra.mxu0 0
        %3220 = vmatpush.bf16.msra.mxu0 0
        %3221 = vmatpush.bf16.msra.mxu0 %v1429
        %3222 = vmatpush.bf16.msra.mxu0 %v1362
        %3223 = vmatmul.bf16.gmra.mxu0 %v3101
        %v3224 = vpop.f32.mrf.mxu0
        %v3225 = vadd.f32 %v3211, %v3224
        %v3226 = vpop.f32.mrf.mxu0
        %v3227 = vadd.f32 %v3213, %v3226
        %3228 = vdwg.mxu0
        %v3229 = vpack.c.bf16 %v3183, %v3141
        %v3230 = vpack.c.bf16 %v3225, %v3225
        %v3231 = vpack.c.bf16 %v3185, %v3143
        %v3232 = vpack.c.bf16 %v3227, %v3227
        %v3237 = vunpack.c.l.b16 %v3229
        %v3238 = vunpack.c.h.b16 %v3229
        %v3239 = vunpack.c.l.b16 %v3230
        %v3240 = vunpack.c.l.b16 %v3231
        %v3241 = vunpack.c.h.b16 %v3231
        %v3242 = vunpack.c.l.b16 %v3232
        %v3243 = vpack.c.b16 %v3240, %v3237
        %v3244 = vpack.c.b16 %v3241, %v3238
        %v3245 = vpack.c.b16 %v3242, %v3239
        %3249 = vrot.lane.b32.xlu0 %v3243, 127
        %v3250 = vpop.permute.xlu0 %3249
        %3251 = vrot.lane.b32.xlu0 %v3244, 127
        %v3252 = vpop.permute.xlu0 %3251
        %3253 = vrot.lane.b32.xlu0 %v3245, 127
        %v3254 = vpop.permute.xlu0 %3253
        %v3255 = vsel %vm1583, %v3250, %v3252
        %v3256 = vsel %vm1583, %v3252, %v3254
        %3260 = vrot.lane.b32.xlu0 %v3243, 126
        %v3261 = vpop.permute.xlu0 %3260
        %3262 = vrot.lane.b32.xlu0 %v3244, 126
        %v3263 = vpop.permute.xlu0 %3262
        %3264 = vrot.lane.b32.xlu0 %v3245, 126
        %v3265 = vpop.permute.xlu0 %3264
        %v3266 = vsel %vm1595, %v3261, %v3263
        %v3267 = vsel %vm1595, %v3263, %v3265
        %3271 = vrot.lane.b32.xlu0 %v3243, 110
        %v3272 = vpop.permute.xlu0 %3271
        %3273 = vrot.lane.b32.xlu0 %v3244, 110
        %v3274 = vpop.permute.xlu0 %3273
        %3275 = vrot.lane.b32.xlu0 %v3245, 110
        %v3276 = vpop.permute.xlu0 %3275
        %v3277 = vsel %vm1607, %v3272, %v3274
        %v3278 = vsel %vm1607, %v3274, %v3276
        %3282 = vrot.lane.b32.xlu0 %v3243, 109
        %v3283 = vpop.permute.xlu0 %3282
        %3284 = vrot.lane.b32.xlu0 %v3244, 109
        %v3285 = vpop.permute.xlu0 %3284
        %3286 = vrot.lane.b32.xlu0 %v3245, 109
        %v3287 = vpop.permute.xlu0 %3286
        %v3288 = vsel %vm1619, %v3283, %v3285
        %v3289 = vsel %vm1619, %v3285, %v3287
        %3293 = vrot.lane.b32.xlu0 %v3243, 108
        %v3294 = vpop.permute.xlu0 %3293
        %3295 = vrot.lane.b32.xlu0 %v3244, 108
        %v3296 = vpop.permute.xlu0 %3295
        %3297 = vrot.lane.b32.xlu0 %v3245, 108
        %v3298 = vpop.permute.xlu0 %3297
        %v3299 = vsel %vm1631, %v3294, %v3296
        %v3300 = vsel %vm1631, %v3296, %v3298
        %3304 = vrot.lane.b32.xlu0 %v3243, 92
        %v3305 = vpop.permute.xlu0 %3304
        %3306 = vrot.lane.b32.xlu0 %v3244, 92
        %v3307 = vpop.permute.xlu0 %3306
        %3308 = vrot.lane.b32.xlu0 %v3245, 92
        %v3309 = vpop.permute.xlu0 %3308
        %v3310 = vsel %vm1643, %v3305, %v3307
        %v3311 = vsel %vm1643, %v3307, %v3309
        %3315 = vrot.lane.b32.xlu0 %v3243, 91
        %v3316 = vpop.permute.xlu0 %3315
        %3317 = vrot.lane.b32.xlu0 %v3244, 91
        %v3318 = vpop.permute.xlu0 %3317
        %3319 = vrot.lane.b32.xlu0 %v3245, 91
        %v3320 = vpop.permute.xlu0 %3319
        %v3321 = vsel %vm1655, %v3316, %v3318
        %v3322 = vsel %vm1655, %v3318, %v3320
        %3326 = vrot.lane.b32.xlu0 %v3243, 90
        %v3327 = vpop.permute.xlu0 %3326
        %3328 = vrot.lane.b32.xlu0 %v3244, 90
        %v3329 = vpop.permute.xlu0 %3328
        %3330 = vrot.lane.b32.xlu0 %v3245, 90
        %v3331 = vpop.permute.xlu0 %3330
        %v3332 = vsel %vm1667, %v3327, %v3329
        %v3333 = vsel %vm1667, %v3329, %v3331
        %v3339 = vunpack.c.l.b16 %v3098
        %v3340 = vunpack.c.h.b16 %v3098
        %v3341 = vunpack.c.l.b16 %v3099
        %v3342 = vunpack.c.h.b16 %v3099
        %v3343 = vpack.c.b16 %v3341, %v3339
        %v3344 = vpack.c.b16 %v3342, %v3340
        %v3347 = vsel %vm1682, %v3344, 0
        %3349 = vmatpush.bf16.msra.mxu0 %v3321
        %3350 = vmatpush.bf16.msra.mxu0 %v3310
        %3351 = vmatpush.bf16.msra.mxu0 %v3299
        %3352 = vmatpush.bf16.msra.mxu0 %v3288
        %3353 = vmatpush.bf16.msra.mxu0 %v3277
        %3354 = vmatpush.bf16.msra.mxu0 %v3266
        %3355 = vmatpush.bf16.msra.mxu0 %v3255
        %3356 = vmatpush.bf16.msra.mxu0 %v3243
        %3357 = vmatmul.bf16.gmra.mxu0 %v3343
        %v3358 = vpop.f32.mrf.mxu0
        %v3359 = vadd.f32 0.0, %v3358
        %v3360 = vpop.f32.mrf.mxu0
        %v3361 = vadd.f32 0.0, %v3360
        %3362 = vdwg.mxu0
        %3363 = vmatpush.bf16.msra.mxu0 0
        %3364 = vmatpush.bf16.msra.mxu0 0
        %3365 = vmatpush.bf16.msra.mxu0 0
        %3366 = vmatpush.bf16.msra.mxu0 0
        %3367 = vmatpush.bf16.msra.mxu0 0
        %3368 = vmatpush.bf16.msra.mxu0 0
        %3369 = vmatpush.bf16.msra.mxu0 0
        %3370 = vmatpush.bf16.msra.mxu0 %v3332
        %3371 = vmatmul.bf16.gmra.mxu0 %v3347
        %v3372 = vpop.f32.mrf.mxu0
        %v3373 = vadd.f32 %v3359, %v3372
        %v3374 = vpop.f32.mrf.mxu0
        %v3375 = vadd.f32 %v3361, %v3374
        %3376 = vdwg.mxu0
        %3377 = vmatpush.bf16.msra.mxu0 %v3322
        %3378 = vmatpush.bf16.msra.mxu0 %v3311
        %3379 = vmatpush.bf16.msra.mxu0 %v3300
        %3380 = vmatpush.bf16.msra.mxu0 %v3289
        %3381 = vmatpush.bf16.msra.mxu0 %v3278
        %3382 = vmatpush.bf16.msra.mxu0 %v3267
        %3383 = vmatpush.bf16.msra.mxu0 %v3256
        %3384 = vmatpush.bf16.msra.mxu0 %v3244
        %3385 = vmatmul.bf16.gmra.mxu0 %v3343
        %v3386 = vpop.f32.mrf.mxu0
        %v3387 = vadd.f32 0.0, %v3386
        %v3388 = vpop.f32.mrf.mxu0
        %v3389 = vadd.f32 0.0, %v3388
        %3390 = vdwg.mxu0
        %3391 = vmatpush.bf16.msra.mxu0 0
        %3392 = vmatpush.bf16.msra.mxu0 0
        %3393 = vmatpush.bf16.msra.mxu0 0
        %3394 = vmatpush.bf16.msra.mxu0 0
        %3395 = vmatpush.bf16.msra.mxu0 0
        %3396 = vmatpush.bf16.msra.mxu0 0
        %3397 = vmatpush.bf16.msra.mxu0 0
        %3398 = vmatpush.bf16.msra.mxu0 %v3333
        %3399 = vmatmul.bf16.gmra.mxu0 %v3347
        %v3400 = vpop.f32.mrf.mxu0
        %v3401 = vadd.f32 %v3387, %v3400
        %v3402 = vpop.f32.mrf.mxu0
        %v3403 = vadd.f32 %v3389, %v3402
        %3404 = vdwg.mxu0
        %3405 = vmatpush.bf16.msra.mxu0 %v3320
        %3406 = vmatpush.bf16.msra.mxu0 %v3309
        %3407 = vmatpush.bf16.msra.mxu0 %v3298
        %3408 = vmatpush.bf16.msra.mxu0 %v3287
        %3409 = vmatpush.bf16.msra.mxu0 %v3276
        %3410 = vmatpush.bf16.msra.mxu0 %v3265
        %3411 = vmatpush.bf16.msra.mxu0 %v3254
        %3412 = vmatpush.bf16.msra.mxu0 %v3245
        %3413 = vmatmul.bf16.gmra.mxu0 %v3343
        %v3414 = vpop.f32.mrf.mxu0
        %v3415 = vadd.f32 0.0, %v3414
        %v3416 = vpop.f32.mrf.mxu0
        %v3417 = vadd.f32 0.0, %v3416
        %3418 = vdwg.mxu0
        %3419 = vmatpush.bf16.msra.mxu0 0
        %3420 = vmatpush.bf16.msra.mxu0 0
        %3421 = vmatpush.bf16.msra.mxu0 0
        %3422 = vmatpush.bf16.msra.mxu0 0
        %3423 = vmatpush.bf16.msra.mxu0 0
        %3424 = vmatpush.bf16.msra.mxu0 0
        %3425 = vmatpush.bf16.msra.mxu0 0
        %3426 = vmatpush.bf16.msra.mxu0 %v3331
        %3427 = vmatmul.bf16.gmra.mxu0 %v3347
        %v3428 = vpop.f32.mrf.mxu0
        %v3429 = vadd.f32 %v3415, %v3428
        %v3430 = vpop.f32.mrf.mxu0
        %v3431 = vadd.f32 %v3417, %v3430
        %3432 = vdwg.mxu0
        %v3434 = vsel %vm1417, %v3429, 0
        %v3437 = vsel %vm1417, %v3431, 0
        %3439 = vmatpush.msra.mxu0 %v590
        %3440 = vmatpush.msra.mxu0 %v589
        %3441 = vmatpush.msra.mxu0 %v588
        %3442 = vmatpush.msra.mxu0 %v587
        %3443 = vmatpush.msra.mxu0 %v586
        %3444 = vmatpush.msra.mxu0 %v585
        %3445 = vmatpush.msra.mxu0 %v584
        %3446 = vmatpush.msra.mxu0 %v583
        %3447 = vmatpush.msra.mxu0 %v582
        %3448 = vmatpush.msra.mxu0 %v581
        %3449 = vmatpush.msra.mxu0 %v580
        %3450 = vmatpush.msra.mxu0 %v579
        %3451 = vmatpush.msra.mxu0 %v578
        %3452 = vmatpush.msra.mxu0 %v577
        %3453 = vmatpush.msra.mxu0 %v576
        %3454 = vmatpush.msra.mxu0 %v575
        %3455 = vmatmul.f32.gmra.mxu0 %v3373
        %v3456 = vpop.f32.mrf.mxu0
        %v3457 = vadd.f32 0.0, %v3456
        %3458 = vmatmul.f32.gmra.mxu0 %v3375
        %v3459 = vpop.f32.mrf.mxu0
        %v3460 = vadd.f32 0.0, %v3459
        %3461 = vdwg.mxu0
        %3462 = vmatpush.msra.mxu0 %v606
        %3463 = vmatpush.msra.mxu0 %v605
        %3464 = vmatpush.msra.mxu0 %v604
        %3465 = vmatpush.msra.mxu0 %v603
        %3466 = vmatpush.msra.mxu0 %v602
        %3467 = vmatpush.msra.mxu0 %v601
        %3468 = vmatpush.msra.mxu0 %v600
        %3469 = vmatpush.msra.mxu0 %v599
        %3470 = vmatpush.msra.mxu0 %v598
        %3471 = vmatpush.msra.mxu0 %v597
        %3472 = vmatpush.msra.mxu0 %v596
        %3473 = vmatpush.msra.mxu0 %v595
        %3474 = vmatpush.msra.mxu0 %v594
        %3475 = vmatpush.msra.mxu0 %v593
        %3476 = vmatpush.msra.mxu0 %v592
        %3477 = vmatpush.msra.mxu0 %v591
        %3478 = vmatmul.f32.gmra.mxu0 %v3401
        %v3479 = vpop.f32.mrf.mxu0
        %v3480 = vadd.f32 %v3457, %v3479
        %3481 = vmatmul.f32.gmra.mxu0 %v3403
        %v3482 = vpop.f32.mrf.mxu0
        %v3483 = vadd.f32 %v3460, %v3482
        %3484 = vdwg.mxu0
        %3485 = vmatpush.msra.mxu0 0.0
        %3486 = vmatpush.msra.mxu0 0.0
        %3487 = vmatpush.msra.mxu0 0.0
        %3488 = vmatpush.msra.mxu0 0.0
        %3489 = vmatpush.msra.mxu0 0.0
        %3490 = vmatpush.msra.mxu0 0.0
        %3491 = vmatpush.msra.mxu0 0.0
        %3492 = vmatpush.msra.mxu0 0.0
        %3493 = vmatpush.msra.mxu0 0.0
        %3494 = vmatpush.msra.mxu0 0.0
        %3495 = vmatpush.msra.mxu0 0.0
        %3496 = vmatpush.msra.mxu0 0.0
        %3497 = vmatpush.msra.mxu0 %v1778
        %3498 = vmatpush.msra.mxu0 %v609
        %3499 = vmatpush.msra.mxu0 %v608
        %3500 = vmatpush.msra.mxu0 %v607
        %3501 = vmatmul.f32.gmra.mxu0 %v3434
        %v3502 = vpop.f32.mrf.mxu0
        %v3503 = vadd.f32 %v3480, %v3502
        %3504 = vmatmul.f32.gmra.mxu0 %v3437
        %v3505 = vpop.f32.mrf.mxu0
        %v3506 = vadd.f32 %v3483, %v3505
        %3507 = vdwg.mxu0
        %3509 = vset.pattern.permute.xlu0 0
        %3510 = vperm.xlu0 %3509, %v3503
        %v3511 = vpop.permute.xlu0 %3510
        %3514 = vset.pattern.permute.xlu0 0
        %3515 = vperm.xlu0 %3514, %v3506
        %v3516 = vpop.permute.xlu0 %3515
        %v3518 = vsub.f32 %v3373, %v3511
        %v3519 = vsub.f32 %v3401, %v3511
        %v3520 = vsub.f32 %v3429, %v3511
        %v3521 = vsub.f32 %v3375, %v3516
        %v3522 = vsub.f32 %v3403, %v3516
        %v3523 = vsub.f32 %v3431, %v3516
        %v3524 = vmul.f32 %v3518, %v3518
        %v3525 = vmul.f32 %v3519, %v3519
        %v3526 = vmul.f32 %v3520, %v3520
        %v3527 = vmul.f32 %v3521, %v3521
        %v3528 = vmul.f32 %v3522, %v3522
        %v3529 = vmul.f32 %v3523, %v3523
        %v3531 = vsel %vm1417, %v3526, 0
        %v3534 = vsel %vm1417, %v3529, 0
        %3536 = vmatpush.msra.mxu0 %v590
        %3537 = vmatpush.msra.mxu0 %v589
        %3538 = vmatpush.msra.mxu0 %v588
        %3539 = vmatpush.msra.mxu0 %v587
        %3540 = vmatpush.msra.mxu0 %v586
        %3541 = vmatpush.msra.mxu0 %v585
        %3542 = vmatpush.msra.mxu0 %v584
        %3543 = vmatpush.msra.mxu0 %v583
        %3544 = vmatpush.msra.mxu0 %v582
        %3545 = vmatpush.msra.mxu0 %v581
        %3546 = vmatpush.msra.mxu0 %v580
        %3547 = vmatpush.msra.mxu0 %v579
        %3548 = vmatpush.msra.mxu0 %v578
        %3549 = vmatpush.msra.mxu0 %v577
        %3550 = vmatpush.msra.mxu0 %v576
        %3551 = vmatpush.msra.mxu0 %v575
        %3552 = vmatmul.f32.gmra.mxu0 %v3524
        %v3553 = vpop.f32.mrf.mxu0
        %v3554 = vadd.f32 1e-05, %v3553
        %3555 = vmatmul.f32.gmra.mxu0 %v3527
        %v3556 = vpop.f32.mrf.mxu0
        %v3557 = vadd.f32 1e-05, %v3556
        %3558 = vdwg.mxu0
        %3559 = vmatpush.msra.mxu0 %v606
        %3560 = vmatpush.msra.mxu0 %v605
        %3561 = vmatpush.msra.mxu0 %v604
        %3562 = vmatpush.msra.mxu0 %v603
        %3563 = vmatpush.msra.mxu0 %v602
        %3564 = vmatpush.msra.mxu0 %v601
        %3565 = vmatpush.msra.mxu0 %v600
        %3566 = vmatpush.msra.mxu0 %v599
        %3567 = vmatpush.msra.mxu0 %v598
        %3568 = vmatpush.msra.mxu0 %v597
        %3569 = vmatpush.msra.mxu0 %v596
        %3570 = vmatpush.msra.mxu0 %v595
        %3571 = vmatpush.msra.mxu0 %v594
        %3572 = vmatpush.msra.mxu0 %v593
        %3573 = vmatpush.msra.mxu0 %v592
        %3574 = vmatpush.msra.mxu0 %v591
        %3575 = vmatmul.f32.gmra.mxu0 %v3525
        %v3576 = vpop.f32.mrf.mxu0
        %v3577 = vadd.f32 %v3554, %v3576
        %3578 = vmatmul.f32.gmra.mxu0 %v3528
        %v3579 = vpop.f32.mrf.mxu0
        %v3580 = vadd.f32 %v3557, %v3579
        %3581 = vdwg.mxu0
        %3582 = vmatpush.msra.mxu0 0.0
        %3583 = vmatpush.msra.mxu0 0.0
        %3584 = vmatpush.msra.mxu0 0.0
        %3585 = vmatpush.msra.mxu0 0.0
        %3586 = vmatpush.msra.mxu0 0.0
        %3587 = vmatpush.msra.mxu0 0.0
        %3588 = vmatpush.msra.mxu0 0.0
        %3589 = vmatpush.msra.mxu0 0.0
        %3590 = vmatpush.msra.mxu0 0.0
        %3591 = vmatpush.msra.mxu0 0.0
        %3592 = vmatpush.msra.mxu0 0.0
        %3593 = vmatpush.msra.mxu0 0.0
        %3594 = vmatpush.msra.mxu0 %v1778
        %3595 = vmatpush.msra.mxu0 %v609
        %3596 = vmatpush.msra.mxu0 %v608
        %3597 = vmatpush.msra.mxu0 %v607
        %3598 = vmatmul.f32.gmra.mxu0 %v3531
        %v3599 = vpop.f32.mrf.mxu0
        %v3600 = vadd.f32 %v3577, %v3599
        %3601 = vmatmul.f32.gmra.mxu0 %v3534
        %v3602 = vpop.f32.mrf.mxu0
        %v3603 = vadd.f32 %v3580, %v3602
        %3604 = vdwg.mxu0
        %v3605 = vrsqrt.pop %v3600
        %v3606 = vmul.f32 %v3605, %v3600
        %v3607 = vmul.f32 %v3606, %v3605
        %v3608 = vmul.f32 0.5, %v3607
        %v3609 = vsub.f32 1.5, %v3608
        %v3610 = vmul.f32 %v3605, %v3609
        %vm3611 = vweird.f32 %v3600
        %vm3612 = vweird.f32 %v3605
        %vm3613 = vmor %vm3611, %vm3612
        %v3614 = vsel %vm3613, %v3605, %v3610
        %v3615 = vrsqrt.pop %v3603
        %v3616 = vmul.f32 %v3615, %v3603
        %v3617 = vmul.f32 %v3616, %v3615
        %v3618 = vmul.f32 0.5, %v3617
        %v3619 = vsub.f32 1.5, %v3618
        %v3620 = vmul.f32 %v3615, %v3619
        %vm3621 = vweird.f32 %v3603
        %vm3622 = vweird.f32 %v3615
        %vm3623 = vmor %vm3621, %vm3622
        %v3624 = vsel %vm3623, %v3615, %v3620
        %3626 = vset.pattern.permute.xlu0 0
        %3627 = vperm.xlu0 %3626, %v3614
        %v3628 = vpop.permute.xlu0 %3627
        %3631 = vset.pattern.permute.xlu0 0
        %3632 = vperm.xlu0 %3631, %v3624
        %v3633 = vpop.permute.xlu0 %3632
        %v3635 = vmul.f32 %v3518, %v3628
        %v3636 = vmul.f32 %v3519, %v3628
        %v3637 = vmul.f32 %v3520, %v3628
        %v3638 = vmul.f32 %v3521, %v3633
        %v3639 = vmul.f32 %v3522, %v3633
        %v3640 = vmul.f32 %v3523, %v3633
        %v3641 = vadd.f32 %v2535, %v3635
        %v3642 = vadd.f32 %v2536, %v3636
        %v3643 = vadd.f32 %v2537, %v3637
        %v3644 = vadd.f32 %v2538, %v3638
        %v3645 = vadd.f32 %v2539, %v3639
        %v3646 = vadd.f32 %v2540, %v3640
        %v3647 = vpack.c.bf16 %v3644, %v3641
        %v3648 = vpack.c.bf16 %v3645, %v3642
        %v3649 = vpack.c.bf16 %v3646, %v3643
        %s3650 = scalar_lea.vmem %s9, 64
        %v3651 = vld [vmem:[%s3650] sm:$0xff]
        %v3652 = vld [vmem:[%s3650 + $0x8] sm:$0xff]
        %v3654 = vsel %vm1417, %v3649, 0
        %3656 = vmatpush.bf16.msra.mxu0 %v1333
        %3657 = vmatpush.bf16.msra.mxu0 %v1330
        %3658 = vmatpush.bf16.msra.mxu0 %v1327
        %3659 = vmatpush.bf16.msra.mxu0 %v1324
        %3660 = vmatpush.bf16.msra.mxu0 %v1321
        %3661 = vmatpush.bf16.msra.mxu0 %v1318
        %3662 = vmatpush.bf16.msra.mxu0 %v1315
        %3663 = vmatpush.bf16.msra.mxu0 %v1312
        %3664 = vmatmul.bf16.gmra.mxu0 %v3647
        %v3665 = vpop.f32.mrf.mxu0
        %v3666 = vadd.f32 0.0, %v3665
        %v3667 = vpop.f32.mrf.mxu0
        %v3668 = vadd.f32 0.0, %v3667
        %3669 = vdwg.mxu0
        %3670 = vmatpush.bf16.msra.mxu0 %v1357
        %3671 = vmatpush.bf16.msra.mxu0 %v1354
        %3672 = vmatpush.bf16.msra.mxu0 %v1351
        %3673 = vmatpush.bf16.msra.mxu0 %v1348
        %3674 = vmatpush.bf16.msra.mxu0 %v1345
        %3675 = vmatpush.bf16.msra.mxu0 %v1342
        %3676 = vmatpush.bf16.msra.mxu0 %v1339
        %3677 = vmatpush.bf16.msra.mxu0 %v1336
        %3678 = vmatmul.bf16.gmra.mxu0 %v3648
        %v3679 = vpop.f32.mrf.mxu0
        %v3680 = vadd.f32 %v3666, %v3679
        %v3681 = vpop.f32.mrf.mxu0
        %v3682 = vadd.f32 %v3668, %v3681
        %3683 = vdwg.mxu0
        %3684 = vmatpush.bf16.msra.mxu0 0
        %3685 = vmatpush.bf16.msra.mxu0 0
        %3686 = vmatpush.bf16.msra.mxu0 0
        %3687 = vmatpush.bf16.msra.mxu0 0
        %3688 = vmatpush.bf16.msra.mxu0 0
        %3689 = vmatpush.bf16.msra.mxu0 0
        %3690 = vmatpush.bf16.msra.mxu0 %v1423
        %3691 = vmatpush.bf16.msra.mxu0 %v1360
        %3692 = vmatmul.bf16.gmra.mxu0 %v3654
        %v3693 = vpop.f32.mrf.mxu0
        %v3694 = vadd.f32 %v3680, %v3693
        %v3695 = vpop.f32.mrf.mxu0
        %v3696 = vadd.f32 %v3682, %v3695
        %3697 = vdwg.mxu0
        %3698 = vmatpush.bf16.msra.mxu0 %v1334
        %3699 = vmatpush.bf16.msra.mxu0 %v1331
        %3700 = vmatpush.bf16.msra.mxu0 %v1328
        %3701 = vmatpush.bf16.msra.mxu0 %v1325
        %3702 = vmatpush.bf16.msra.mxu0 %v1322
        %3703 = vmatpush.bf16.msra.mxu0 %v1319
        %3704 = vmatpush.bf16.msra.mxu0 %v1316
        %3705 = vmatpush.bf16.msra.mxu0 %v1313
        %3706 = vmatmul.bf16.gmra.mxu0 %v3647
        %v3707 = vpop.f32.mrf.mxu0
        %v3708 = vadd.f32 0.0, %v3707
        %v3709 = vpop.f32.mrf.mxu0
        %v3710 = vadd.f32 0.0, %v3709
        %3711 = vdwg.mxu0
        %3712 = vmatpush.bf16.msra.mxu0 %v1358
        %3713 = vmatpush.bf16.msra.mxu0 %v1355
        %3714 = vmatpush.bf16.msra.mxu0 %v1352
        %3715 = vmatpush.bf16.msra.mxu0 %v1349
        %3716 = vmatpush.bf16.msra.mxu0 %v1346
        %3717 = vmatpush.bf16.msra.mxu0 %v1343
        %3718 = vmatpush.bf16.msra.mxu0 %v1340
        %3719 = vmatpush.bf16.msra.mxu0 %v1337
        %3720 = vmatmul.bf16.gmra.mxu0 %v3648
        %v3721 = vpop.f32.mrf.mxu0
        %v3722 = vadd.f32 %v3708, %v3721
        %v3723 = vpop.f32.mrf.mxu0
        %v3724 = vadd.f32 %v3710, %v3723
        %3725 = vdwg.mxu0
        %3726 = vmatpush.bf16.msra.mxu0 0
        %3727 = vmatpush.bf16.msra.mxu0 0
        %3728 = vmatpush.bf16.msra.mxu0 0
        %3729 = vmatpush.bf16.msra.mxu0 0
        %3730 = vmatpush.bf16.msra.mxu0 0
        %3731 = vmatpush.bf16.msra.mxu0 0
        %3732 = vmatpush.bf16.msra.mxu0 %v1426
        %3733 = vmatpush.bf16.msra.mxu0 %v1361
        %3734 = vmatmul.bf16.gmra.mxu0 %v3654
        %v3735 = vpop.f32.mrf.mxu0
        %v3736 = vadd.f32 %v3722, %v3735
        %v3737 = vpop.f32.mrf.mxu0
        %v3738 = vadd.f32 %v3724, %v3737
        %3739 = vdwg.mxu0
        %3740 = vmatpush.bf16.msra.mxu0 %v1335
        %3741 = vmatpush.bf16.msra.mxu0 %v1332
        %3742 = vmatpush.bf16.msra.mxu0 %v1329
        %3743 = vmatpush.bf16.msra.mxu0 %v1326
        %3744 = vmatpush.bf16.msra.mxu0 %v1323
        %3745 = vmatpush.bf16.msra.mxu0 %v1320
        %3746 = vmatpush.bf16.msra.mxu0 %v1317
        %3747 = vmatpush.bf16.msra.mxu0 %v1314
        %3748 = vmatmul.bf16.gmra.mxu0 %v3647
        %v3749 = vpop.f32.mrf.mxu0
        %v3750 = vadd.f32 0.0, %v3749
        %v3751 = vpop.f32.mrf.mxu0
        %v3752 = vadd.f32 0.0, %v3751
        %3753 = vdwg.mxu0
        %3754 = vmatpush.bf16.msra.mxu0 %v1359
        %3755 = vmatpush.bf16.msra.mxu0 %v1356
        %3756 = vmatpush.bf16.msra.mxu0 %v1353
        %3757 = vmatpush.bf16.msra.mxu0 %v1350
        %3758 = vmatpush.bf16.msra.mxu0 %v1347
        %3759 = vmatpush.bf16.msra.mxu0 %v1344
        %3760 = vmatpush.bf16.msra.mxu0 %v1341
        %3761 = vmatpush.bf16.msra.mxu0 %v1338
        %3762 = vmatmul.bf16.gmra.mxu0 %v3648
        %v3763 = vpop.f32.mrf.mxu0
        %v3764 = vadd.f32 %v3750, %v3763
        %v3765 = vpop.f32.mrf.mxu0
        %v3766 = vadd.f32 %v3752, %v3765
        %3767 = vdwg.mxu0
        %3768 = vmatpush.bf16.msra.mxu0 0
        %3769 = vmatpush.bf16.msra.mxu0 0
        %3770 = vmatpush.bf16.msra.mxu0 0
        %3771 = vmatpush.bf16.msra.mxu0 0
        %3772 = vmatpush.bf16.msra.mxu0 0
        %3773 = vmatpush.bf16.msra.mxu0 0
        %3774 = vmatpush.bf16.msra.mxu0 %v1429
        %3775 = vmatpush.bf16.msra.mxu0 %v1362
        %3776 = vmatmul.bf16.gmra.mxu0 %v3654
        %v3777 = vpop.f32.mrf.mxu0
        %v3778 = vadd.f32 %v3764, %v3777
        %v3779 = vpop.f32.mrf.mxu0
        %v3780 = vadd.f32 %v3766, %v3779
        %3781 = vdwg.mxu0
        %v3782 = vpack.c.bf16 %v3736, %v3694
        %v3783 = vpack.c.bf16 %v3778, %v3778
        %v3784 = vpack.c.bf16 %v3738, %v3696
        %v3785 = vpack.c.bf16 %v3780, %v3780
        %v3790 = vunpack.c.l.b16 %v3782
        %v3791 = vunpack.c.h.b16 %v3782
        %v3792 = vunpack.c.l.b16 %v3783
        %v3793 = vunpack.c.l.b16 %v3784
        %v3794 = vunpack.c.h.b16 %v3784
        %v3795 = vunpack.c.l.b16 %v3785
        %v3796 = vpack.c.b16 %v3793, %v3790
        %v3797 = vpack.c.b16 %v3794, %v3791
        %v3798 = vpack.c.b16 %v3795, %v3792
        %3802 = vrot.lane.b32.xlu0 %v3796, 127
        %v3803 = vpop.permute.xlu0 %3802
        %3804 = vrot.lane.b32.xlu0 %v3797, 127
        %v3805 = vpop.permute.xlu0 %3804
        %3806 = vrot.lane.b32.xlu0 %v3798, 127
        %v3807 = vpop.permute.xlu0 %3806
        %v3808 = vsel %vm1583, %v3803, %v3805
        %v3809 = vsel %vm1583, %v3805, %v3807
        %3813 = vrot.lane.b32.xlu0 %v3796, 126
        %v3814 = vpop.permute.xlu0 %3813
        %3815 = vrot.lane.b32.xlu0 %v3797, 126
        %v3816 = vpop.permute.xlu0 %3815
        %3817 = vrot.lane.b32.xlu0 %v3798, 126
        %v3818 = vpop.permute.xlu0 %3817
        %v3819 = vsel %vm1595, %v3814, %v3816
        %v3820 = vsel %vm1595, %v3816, %v3818
        %3824 = vrot.lane.b32.xlu0 %v3796, 110
        %v3825 = vpop.permute.xlu0 %3824
        %3826 = vrot.lane.b32.xlu0 %v3797, 110
        %v3827 = vpop.permute.xlu0 %3826
        %3828 = vrot.lane.b32.xlu0 %v3798, 110
        %v3829 = vpop.permute.xlu0 %3828
        %v3830 = vsel %vm1607, %v3825, %v3827
        %v3831 = vsel %vm1607, %v3827, %v3829
        %3835 = vrot.lane.b32.xlu0 %v3796, 109
        %v3836 = vpop.permute.xlu0 %3835
        %3837 = vrot.lane.b32.xlu0 %v3797, 109
        %v3838 = vpop.permute.xlu0 %3837
        %3839 = vrot.lane.b32.xlu0 %v3798, 109
        %v3840 = vpop.permute.xlu0 %3839
        %v3841 = vsel %vm1619, %v3836, %v3838
        %v3842 = vsel %vm1619, %v3838, %v3840
        %3846 = vrot.lane.b32.xlu0 %v3796, 108
        %v3847 = vpop.permute.xlu0 %3846
        %3848 = vrot.lane.b32.xlu0 %v3797, 108
        %v3849 = vpop.permute.xlu0 %3848
        %3850 = vrot.lane.b32.xlu0 %v3798, 108
        %v3851 = vpop.permute.xlu0 %3850
        %v3852 = vsel %vm1631, %v3847, %v3849
        %v3853 = vsel %vm1631, %v3849, %v3851
        %3857 = vrot.lane.b32.xlu0 %v3796, 92
        %v3858 = vpop.permute.xlu0 %3857
        %3859 = vrot.lane.b32.xlu0 %v3797, 92
        %v3860 = vpop.permute.xlu0 %3859
        %3861 = vrot.lane.b32.xlu0 %v3798, 92
        %v3862 = vpop.permute.xlu0 %3861
        %v3863 = vsel %vm1643, %v3858, %v3860
        %v3864 = vsel %vm1643, %v3860, %v3862
        %3868 = vrot.lane.b32.xlu0 %v3796, 91
        %v3869 = vpop.permute.xlu0 %3868
        %3870 = vrot.lane.b32.xlu0 %v3797, 91
        %v3871 = vpop.permute.xlu0 %3870
        %3872 = vrot.lane.b32.xlu0 %v3798, 91
        %v3873 = vpop.permute.xlu0 %3872
        %v3874 = vsel %vm1655, %v3869, %v3871
        %v3875 = vsel %vm1655, %v3871, %v3873
        %3879 = vrot.lane.b32.xlu0 %v3796, 90
        %v3880 = vpop.permute.xlu0 %3879
        %3881 = vrot.lane.b32.xlu0 %v3797, 90
        %v3882 = vpop.permute.xlu0 %3881
        %3883 = vrot.lane.b32.xlu0 %v3798, 90
        %v3884 = vpop.permute.xlu0 %3883
        %v3885 = vsel %vm1667, %v3880, %v3882
        %v3886 = vsel %vm1667, %v3882, %v3884
        %v3892 = vunpack.c.l.b16 %v3651
        %v3893 = vunpack.c.h.b16 %v3651
        %v3894 = vunpack.c.l.b16 %v3652
        %v3895 = vunpack.c.h.b16 %v3652
        %v3896 = vpack.c.b16 %v3894, %v3892
        %v3897 = vpack.c.b16 %v3895, %v3893
        %v3900 = vsel %vm1682, %v3897, 0
        %3902 = vmatpush.bf16.msra.mxu0 %v3874
        %3903 = vmatpush.bf16.msra.mxu0 %v3863
        %3904 = vmatpush.bf16.msra.mxu0 %v3852
        %3905 = vmatpush.bf16.msra.mxu0 %v3841
        %3906 = vmatpush.bf16.msra.mxu0 %v3830
        %3907 = vmatpush.bf16.msra.mxu0 %v3819
        %3908 = vmatpush.bf16.msra.mxu0 %v3808
        %3909 = vmatpush.bf16.msra.mxu0 %v3796
        %3910 = vmatmul.bf16.gmra.mxu0 %v3896
        %v3911 = vpop.f32.mrf.mxu0
        %v3912 = vadd.f32 0.0, %v3911
        %v3913 = vpop.f32.mrf.mxu0
        %v3914 = vadd.f32 0.0, %v3913
        %3915 = vdwg.mxu0
        %3916 = vmatpush.bf16.msra.mxu0 0
        %3917 = vmatpush.bf16.msra.mxu0 0
        %3918 = vmatpush.bf16.msra.mxu0 0
        %3919 = vmatpush.bf16.msra.mxu0 0
        %3920 = vmatpush.bf16.msra.mxu0 0
        %3921 = vmatpush.bf16.msra.mxu0 0
        %3922 = vmatpush.bf16.msra.mxu0 0
        %3923 = vmatpush.bf16.msra.mxu0 %v3885
        %3924 = vmatmul.bf16.gmra.mxu0 %v3900
        %v3925 = vpop.f32.mrf.mxu0
        %v3926 = vadd.f32 %v3912, %v3925
        %v3927 = vpop.f32.mrf.mxu0
        %v3928 = vadd.f32 %v3914, %v3927
        %3929 = vdwg.mxu0
        %3930 = vmatpush.bf16.msra.mxu0 %v3875
        %3931 = vmatpush.bf16.msra.mxu0 %v3864
        %3932 = vmatpush.bf16.msra.mxu0 %v3853
        %3933 = vmatpush.bf16.msra.mxu0 %v3842
        %3934 = vmatpush.bf16.msra.mxu0 %v3831
        %3935 = vmatpush.bf16.msra.mxu0 %v3820
        %3936 = vmatpush.bf16.msra.mxu0 %v3809
        %3937 = vmatpush.bf16.msra.mxu0 %v3797
        %3938 = vmatmul.bf16.gmra.mxu0 %v3896
        %v3939 = vpop.f32.mrf.mxu0
        %v3940 = vadd.f32 0.0, %v3939
        %v3941 = vpop.f32.mrf.mxu0
        %v3942 = vadd.f32 0.0, %v3941
        %3943 = vdwg.mxu0
        %3944 = vmatpush.bf16.msra.mxu0 0
        %3945 = vmatpush.bf16.msra.mxu0 0
        %3946 = vmatpush.bf16.msra.mxu0 0
        %3947 = vmatpush.bf16.msra.mxu0 0
        %3948 = vmatpush.bf16.msra.mxu0 0
        %3949 = vmatpush.bf16.msra.mxu0 0
        %3950 = vmatpush.bf16.msra.mxu0 0
        %3951 = vmatpush.bf16.msra.mxu0 %v3886
        %3952 = vmatmul.bf16.gmra.mxu0 %v3900
        %v3953 = vpop.f32.mrf.mxu0
        %v3954 = vadd.f32 %v3940, %v3953
        %v3955 = vpop.f32.mrf.mxu0
        %v3956 = vadd.f32 %v3942, %v3955
        %3957 = vdwg.mxu0
        %3958 = vmatpush.bf16.msra.mxu0 %v3873
        %3959 = vmatpush.bf16.msra.mxu0 %v3862
        %3960 = vmatpush.bf16.msra.mxu0 %v3851
        %3961 = vmatpush.bf16.msra.mxu0 %v3840
        %3962 = vmatpush.bf16.msra.mxu0 %v3829
        %3963 = vmatpush.bf16.msra.mxu0 %v3818
        %3964 = vmatpush.bf16.msra.mxu0 %v3807
        %3965 = vmatpush.bf16.msra.mxu0 %v3798
        %3966 = vmatmul.bf16.gmra.mxu0 %v3896
        %v3967 = vpop.f32.mrf.mxu0
        %v3968 = vadd.f32 0.0, %v3967
        %v3969 = vpop.f32.mrf.mxu0
        %v3970 = vadd.f32 0.0, %v3969
        %3971 = vdwg.mxu0
        %3972 = vmatpush.bf16.msra.mxu0 0
        %3973 = vmatpush.bf16.msra.mxu0 0
        %3974 = vmatpush.bf16.msra.mxu0 0
        %3975 = vmatpush.bf16.msra.mxu0 0
        %3976 = vmatpush.bf16.msra.mxu0 0
        %3977 = vmatpush.bf16.msra.mxu0 0
        %3978 = vmatpush.bf16.msra.mxu0 0
        %3979 = vmatpush.bf16.msra.mxu0 %v3884
        %3980 = vmatmul.bf16.gmra.mxu0 %v3900
        %v3981 = vpop.f32.mrf.mxu0
        %v3982 = vadd.f32 %v3968, %v3981
        %v3983 = vpop.f32.mrf.mxu0
        %v3984 = vadd.f32 %v3970, %v3983
        %3985 = vdwg.mxu0
        %v3987 = vsel %vm1417, %v3982, 0
        %v3990 = vsel %vm1417, %v3984, 0
        %3992 = vmatpush.msra.mxu0 %v590
        %3993 = vmatpush.msra.mxu0 %v589
        %3994 = vmatpush.msra.mxu0 %v588
        %3995 = vmatpush.msra.mxu0 %v587
        %3996 = vmatpush.msra.mxu0 %v586
        %3997 = vmatpush.msra.mxu0 %v585
        %3998 = vmatpush.msra.mxu0 %v584
        %3999 = vmatpush.msra.mxu0 %v583
        %4000 = vmatpush.msra.mxu0 %v582
        %4001 = vmatpush.msra.mxu0 %v581
        %4002 = vmatpush.msra.mxu0 %v580
        %4003 = vmatpush.msra.mxu0 %v579
        %4004 = vmatpush.msra.mxu0 %v578
        %4005 = vmatpush.msra.mxu0 %v577
        %4006 = vmatpush.msra.mxu0 %v576
        %4007 = vmatpush.msra.mxu0 %v575
        %4008 = vmatmul.f32.gmra.mxu0 %v3926
        %v4009 = vpop.f32.mrf.mxu0
        %v4010 = vadd.f32 0.0, %v4009
        %4011 = vmatmul.f32.gmra.mxu0 %v3928
        %v4012 = vpop.f32.mrf.mxu0
        %v4013 = vadd.f32 0.0, %v4012
        %4014 = vdwg.mxu0
        %4015 = vmatpush.msra.mxu0 %v606
        %4016 = vmatpush.msra.mxu0 %v605
        %4017 = vmatpush.msra.mxu0 %v604
        %4018 = vmatpush.msra.mxu0 %v603
        %4019 = vmatpush.msra.mxu0 %v602
        %4020 = vmatpush.msra.mxu0 %v601
        %4021 = vmatpush.msra.mxu0 %v600
        %4022 = vmatpush.msra.mxu0 %v599
        %4023 = vmatpush.msra.mxu0 %v598
        %4024 = vmatpush.msra.mxu0 %v597
        %4025 = vmatpush.msra.mxu0 %v596
        %4026 = vmatpush.msra.mxu0 %v595
        %4027 = vmatpush.msra.mxu0 %v594
        %4028 = vmatpush.msra.mxu0 %v593
        %4029 = vmatpush.msra.mxu0 %v592
        %4030 = vmatpush.msra.mxu0 %v591
        %4031 = vmatmul.f32.gmra.mxu0 %v3954
        %v4032 = vpop.f32.mrf.mxu0
        %v4033 = vadd.f32 %v4010, %v4032
        %4034 = vmatmul.f32.gmra.mxu0 %v3956
        %v4035 = vpop.f32.mrf.mxu0
        %v4036 = vadd.f32 %v4013, %v4035
        %4037 = vdwg.mxu0
        %4038 = vmatpush.msra.mxu0 0.0
        %4039 = vmatpush.msra.mxu0 0.0
        %4040 = vmatpush.msra.mxu0 0.0
        %4041 = vmatpush.msra.mxu0 0.0
        %4042 = vmatpush.msra.mxu0 0.0
        %4043 = vmatpush.msra.mxu0 0.0
        %4044 = vmatpush.msra.mxu0 0.0
        %4045 = vmatpush.msra.mxu0 0.0
        %4046 = vmatpush.msra.mxu0 0.0
        %4047 = vmatpush.msra.mxu0 0.0
        %4048 = vmatpush.msra.mxu0 0.0
        %4049 = vmatpush.msra.mxu0 0.0
        %4050 = vmatpush.msra.mxu0 %v1778
        %4051 = vmatpush.msra.mxu0 %v609
        %4052 = vmatpush.msra.mxu0 %v608
        %4053 = vmatpush.msra.mxu0 %v607
        %4054 = vmatmul.f32.gmra.mxu0 %v3987
        %v4055 = vpop.f32.mrf.mxu0
        %v4056 = vadd.f32 %v4033, %v4055
        %4057 = vmatmul.f32.gmra.mxu0 %v3990
        %v4058 = vpop.f32.mrf.mxu0
        %v4059 = vadd.f32 %v4036, %v4058
        %4060 = vdwg.mxu0
        %4062 = vset.pattern.permute.xlu0 0
        %4063 = vperm.xlu0 %4062, %v4056
        %v4064 = vpop.permute.xlu0 %4063
        %4067 = vset.pattern.permute.xlu0 0
        %4068 = vperm.xlu0 %4067, %v4059
        %v4069 = vpop.permute.xlu0 %4068
        %v4071 = vsub.f32 %v3926, %v4064
        %v4072 = vsub.f32 %v3954, %v4064
        %v4073 = vsub.f32 %v3982, %v4064
        %v4074 = vsub.f32 %v3928, %v4069
        %v4075 = vsub.f32 %v3956, %v4069
        %v4076 = vsub.f32 %v3984, %v4069
        %v4077 = vmul.f32 %v4071, %v4071
        %v4078 = vmul.f32 %v4072, %v4072
        %v4079 = vmul.f32 %v4073, %v4073
        %v4080 = vmul.f32 %v4074, %v4074
        %v4081 = vmul.f32 %v4075, %v4075
        %v4082 = vmul.f32 %v4076, %v4076
        %v4084 = vsel %vm1417, %v4079, 0
        %v4087 = vsel %vm1417, %v4082, 0
        %4089 = vmatpush.msra.mxu0 %v590
        %4090 = vmatpush.msra.mxu0 %v589
        %4091 = vmatpush.msra.mxu0 %v588
        %4092 = vmatpush.msra.mxu0 %v587
        %4093 = vmatpush.msra.mxu0 %v586
        %4094 = vmatpush.msra.mxu0 %v585
        %4095 = vmatpush.msra.mxu0 %v584
        %4096 = vmatpush.msra.mxu0 %v583
        %4097 = vmatpush.msra.mxu0 %v582
        %4098 = vmatpush.msra.mxu0 %v581
        %4099 = vmatpush.msra.mxu0 %v580
        %4100 = vmatpush.msra.mxu0 %v579
        %4101 = vmatpush.msra.mxu0 %v578
        %4102 = vmatpush.msra.mxu0 %v577
        %4103 = vmatpush.msra.mxu0 %v576
        %4104 = vmatpush.msra.mxu0 %v575
        %4105 = vmatmul.f32.gmra.mxu0 %v4077
        %v4106 = vpop.f32.mrf.mxu0
        %v4107 = vadd.f32 1e-05, %v4106
        %4108 = vmatmul.f32.gmra.mxu0 %v4080
        %v4109 = vpop.f32.mrf.mxu0
        %v4110 = vadd.f32 1e-05, %v4109
        %4111 = vdwg.mxu0
        %4112 = vmatpush.msra.mxu0 %v606
        %4113 = vmatpush.msra.mxu0 %v605
        %4114 = vmatpush.msra.mxu0 %v604
        %4115 = vmatpush.msra.mxu0 %v603
        %4116 = vmatpush.msra.mxu0 %v602
        %4117 = vmatpush.msra.mxu0 %v601
        %4118 = vmatpush.msra.mxu0 %v600
        %4119 = vmatpush.msra.mxu0 %v599
        %4120 = vmatpush.msra.mxu0 %v598
        %4121 = vmatpush.msra.mxu0 %v597
        %4122 = vmatpush.msra.mxu0 %v596
        %4123 = vmatpush.msra.mxu0 %v595
        %4124 = vmatpush.msra.mxu0 %v594
        %4125 = vmatpush.msra.mxu0 %v593
        %4126 = vmatpush.msra.mxu0 %v592
        %4127 = vmatpush.msra.mxu0 %v591
        %4128 = vmatmul.f32.gmra.mxu0 %v4078
        %v4129 = vpop.f32.mrf.mxu0
        %v4130 = vadd.f32 %v4107, %v4129
        %4131 = vmatmul.f32.gmra.mxu0 %v4081
        %v4132 = vpop.f32.mrf.mxu0
        %v4133 = vadd.f32 %v4110, %v4132
        %4134 = vdwg.mxu0
        %4135 = vmatpush.msra.mxu0 0.0
        %4136 = vmatpush.msra.mxu0 0.0
        %4137 = vmatpush.msra.mxu0 0.0
        %4138 = vmatpush.msra.mxu0 0.0
        %4139 = vmatpush.msra.mxu0 0.0
        %4140 = vmatpush.msra.mxu0 0.0
        %4141 = vmatpush.msra.mxu0 0.0
        %4142 = vmatpush.msra.mxu0 0.0
        %4143 = vmatpush.msra.mxu0 0.0
        %4144 = vmatpush.msra.mxu0 0.0
        %4145 = vmatpush.msra.mxu0 0.0
        %4146 = vmatpush.msra.mxu0 0.0
        %4147 = vmatpush.msra.mxu0 %v1778
        %4148 = vmatpush.msra.mxu0 %v609
        %4149 = vmatpush.msra.mxu0 %v608
        %4150 = vmatpush.msra.mxu0 %v607
        %4151 = vmatmul.f32.gmra.mxu0 %v4084
        %v4152 = vpop.f32.mrf.mxu0
        %v4153 = vadd.f32 %v4130, %v4152
        %4154 = vmatmul.f32.gmra.mxu0 %v4087
        %v4155 = vpop.f32.mrf.mxu0
        %v4156 = vadd.f32 %v4133, %v4155
        %4157 = vdwg.mxu0
        %v4158 = vrsqrt.pop %v4153
        %v4159 = vmul.f32 %v4158, %v4153
        %v4160 = vmul.f32 %v4159, %v4158
        %v4161 = vmul.f32 0.5, %v4160
        %v4162 = vsub.f32 1.5, %v4161
        %v4163 = vmul.f32 %v4158, %v4162
        %vm4164 = vweird.f32 %v4153
        %vm4165 = vweird.f32 %v4158
        %vm4166 = vmor %vm4164, %vm4165
        %v4167 = vsel %vm4166, %v4158, %v4163
        %v4168 = vrsqrt.pop %v4156
        %v4169 = vmul.f32 %v4168, %v4156
        %v4170 = vmul.f32 %v4169, %v4168
        %v4171 = vmul.f32 0.5, %v4170
        %v4172 = vsub.f32 1.5, %v4171
        %v4173 = vmul.f32 %v4168, %v4172
        %vm4174 = vweird.f32 %v4156
        %vm4175 = vweird.f32 %v4168
        %vm4176 = vmor %vm4174, %vm4175
        %v4177 = vsel %vm4176, %v4168, %v4173
        %4179 = vset.pattern.permute.xlu0 0
        %4180 = vperm.xlu0 %4179, %v4167
        %v4181 = vpop.permute.xlu0 %4180
        %4184 = vset.pattern.permute.xlu0 0
        %4185 = vperm.xlu0 %4184, %v4177
        %v4186 = vpop.permute.xlu0 %4185
        %v4188 = vmul.f32 %v4071, %v4181
        %v4189 = vmul.f32 %v4072, %v4181
        %v4190 = vmul.f32 %v4073, %v4181
        %v4191 = vmul.f32 %v4074, %v4186
        %v4192 = vmul.f32 %v4075, %v4186
        %v4193 = vmul.f32 %v4076, %v4186
        %v4194 = vmax.f32 %v4188, 0.0
        %v4195 = vmax.f32 %v4189, 0.0
        %v4196 = vmax.f32 %v4190, 0.0
        %v4197 = vmax.f32 %v4191, 0.0
        %v4198 = vmax.f32 %v4192, 0.0
        %v4199 = vmax.f32 %v4193, 0.0
        %v4200 = vpack.c.bf16 %v4197, %v4194
        %v4201 = vpack.c.bf16 %v4198, %v4195
        %v4202 = vpack.c.bf16 %v4199, %v4196
        %s4203 = scalar_lea.vmem %s9, 80
        %v4204 = vld [vmem:[%s4203] sm:$0xff]
        %v4205 = vld [vmem:[%s4203 + $0x8] sm:$0xff]
        %v4207 = vsel %vm1417, %v4202, 0
        %4209 = vmatpush.bf16.msra.mxu0 %v1333
        %4210 = vmatpush.bf16.msra.mxu0 %v1330
        %4211 = vmatpush.bf16.msra.mxu0 %v1327
        %4212 = vmatpush.bf16.msra.mxu0 %v1324
        %4213 = vmatpush.bf16.msra.mxu0 %v1321
        %4214 = vmatpush.bf16.msra.mxu0 %v1318
        %4215 = vmatpush.bf16.msra.mxu0 %v1315
        %4216 = vmatpush.bf16.msra.mxu0 %v1312
        %4217 = vmatmul.bf16.gmra.mxu0 %v4200
        %v4218 = vpop.f32.mrf.mxu0
        %v4219 = vadd.f32 0.0, %v4218
        %v4220 = vpop.f32.mrf.mxu0
        %v4221 = vadd.f32 0.0, %v4220
        %4222 = vdwg.mxu0
        %4223 = vmatpush.bf16.msra.mxu0 %v1357
        %4224 = vmatpush.bf16.msra.mxu0 %v1354
        %4225 = vmatpush.bf16.msra.mxu0 %v1351
        %4226 = vmatpush.bf16.msra.mxu0 %v1348
        %4227 = vmatpush.bf16.msra.mxu0 %v1345
        %4228 = vmatpush.bf16.msra.mxu0 %v1342
        %4229 = vmatpush.bf16.msra.mxu0 %v1339
        %4230 = vmatpush.bf16.msra.mxu0 %v1336
        %4231 = vmatmul.bf16.gmra.mxu0 %v4201
        %v4232 = vpop.f32.mrf.mxu0
        %v4233 = vadd.f32 %v4219, %v4232
        %v4234 = vpop.f32.mrf.mxu0
        %v4235 = vadd.f32 %v4221, %v4234
        %4236 = vdwg.mxu0
        %4237 = vmatpush.bf16.msra.mxu0 0
        %4238 = vmatpush.bf16.msra.mxu0 0
        %4239 = vmatpush.bf16.msra.mxu0 0
        %4240 = vmatpush.bf16.msra.mxu0 0
        %4241 = vmatpush.bf16.msra.mxu0 0
        %4242 = vmatpush.bf16.msra.mxu0 0
        %4243 = vmatpush.bf16.msra.mxu0 %v1423
        %4244 = vmatpush.bf16.msra.mxu0 %v1360
        %4245 = vmatmul.bf16.gmra.mxu0 %v4207
        %v4246 = vpop.f32.mrf.mxu0
        %v4247 = vadd.f32 %v4233, %v4246
        %v4248 = vpop.f32.mrf.mxu0
        %v4249 = vadd.f32 %v4235, %v4248
        %4250 = vdwg.mxu0
        %4251 = vmatpush.bf16.msra.mxu0 %v1334
        %4252 = vmatpush.bf16.msra.mxu0 %v1331
        %4253 = vmatpush.bf16.msra.mxu0 %v1328
        %4254 = vmatpush.bf16.msra.mxu0 %v1325
        %4255 = vmatpush.bf16.msra.mxu0 %v1322
        %4256 = vmatpush.bf16.msra.mxu0 %v1319
        %4257 = vmatpush.bf16.msra.mxu0 %v1316
        %4258 = vmatpush.bf16.msra.mxu0 %v1313
        %4259 = vmatmul.bf16.gmra.mxu0 %v4200
        %v4260 = vpop.f32.mrf.mxu0
        %v4261 = vadd.f32 0.0, %v4260
        %v4262 = vpop.f32.mrf.mxu0
        %v4263 = vadd.f32 0.0, %v4262
        %4264 = vdwg.mxu0
        %4265 = vmatpush.bf16.msra.mxu0 %v1358
        %4266 = vmatpush.bf16.msra.mxu0 %v1355
        %4267 = vmatpush.bf16.msra.mxu0 %v1352
        %4268 = vmatpush.bf16.msra.mxu0 %v1349
        %4269 = vmatpush.bf16.msra.mxu0 %v1346
        %4270 = vmatpush.bf16.msra.mxu0 %v1343
        %4271 = vmatpush.bf16.msra.mxu0 %v1340
        %4272 = vmatpush.bf16.msra.mxu0 %v1337
        %4273 = vmatmul.bf16.gmra.mxu0 %v4201
        %v4274 = vpop.f32.mrf.mxu0
        %v4275 = vadd.f32 %v4261, %v4274
        %v4276 = vpop.f32.mrf.mxu0
        %v4277 = vadd.f32 %v4263, %v4276
        %4278 = vdwg.mxu0
        %4279 = vmatpush.bf16.msra.mxu0 0
        %4280 = vmatpush.bf16.msra.mxu0 0
        %4281 = vmatpush.bf16.msra.mxu0 0
        %4282 = vmatpush.bf16.msra.mxu0 0
        %4283 = vmatpush.bf16.msra.mxu0 0
        %4284 = vmatpush.bf16.msra.mxu0 0
        %4285 = vmatpush.bf16.msra.mxu0 %v1426
        %4286 = vmatpush.bf16.msra.mxu0 %v1361
        %4287 = vmatmul.bf16.gmra.mxu0 %v4207
        %v4288 = vpop.f32.mrf.mxu0
        %v4289 = vadd.f32 %v4275, %v4288
        %v4290 = vpop.f32.mrf.mxu0
        %v4291 = vadd.f32 %v4277, %v4290
        %4292 = vdwg.mxu0
        %4293 = vmatpush.bf16.msra.mxu0 %v1335
        %4294 = vmatpush.bf16.msra.mxu0 %v1332
        %4295 = vmatpush.bf16.msra.mxu0 %v1329
        %4296 = vmatpush.bf16.msra.mxu0 %v1326
        %4297 = vmatpush.bf16.msra.mxu0 %v1323
        %4298 = vmatpush.bf16.msra.mxu0 %v1320
        %4299 = vmatpush.bf16.msra.mxu0 %v1317
        %4300 = vmatpush.bf16.msra.mxu0 %v1314
        %4301 = vmatmul.bf16.gmra.mxu0 %v4200
        %v4302 = vpop.f32.mrf.mxu0
        %v4303 = vadd.f32 0.0, %v4302
        %v4304 = vpop.f32.mrf.mxu0
        %v4305 = vadd.f32 0.0, %v4304
        %4306 = vdwg.mxu0
        %4307 = vmatpush.bf16.msra.mxu0 %v1359
        %4308 = vmatpush.bf16.msra.mxu0 %v1356
        %4309 = vmatpush.bf16.msra.mxu0 %v1353
        %4310 = vmatpush.bf16.msra.mxu0 %v1350
        %4311 = vmatpush.bf16.msra.mxu0 %v1347
        %4312 = vmatpush.bf16.msra.mxu0 %v1344
        %4313 = vmatpush.bf16.msra.mxu0 %v1341
        %4314 = vmatpush.bf16.msra.mxu0 %v1338
        %4315 = vmatmul.bf16.gmra.mxu0 %v4201
        %v4316 = vpop.f32.mrf.mxu0
        %v4317 = vadd.f32 %v4303, %v4316
        %v4318 = vpop.f32.mrf.mxu0
        %v4319 = vadd.f32 %v4305, %v4318
        %4320 = vdwg.mxu0
        %4321 = vmatpush.bf16.msra.mxu0 0
        %4322 = vmatpush.bf16.msra.mxu0 0
        %4323 = vmatpush.bf16.msra.mxu0 0
        %4324 = vmatpush.bf16.msra.mxu0 0
        %4325 = vmatpush.bf16.msra.mxu0 0
        %4326 = vmatpush.bf16.msra.mxu0 0
        %4327 = vmatpush.bf16.msra.mxu0 %v1429
        %4328 = vmatpush.bf16.msra.mxu0 %v1362
        %4329 = vmatmul.bf16.gmra.mxu0 %v4207
        %v4330 = vpop.f32.mrf.mxu0
        %v4331 = vadd.f32 %v4317, %v4330
        %v4332 = vpop.f32.mrf.mxu0
        %v4333 = vadd.f32 %v4319, %v4332
        %4334 = vdwg.mxu0
        %v4335 = vpack.c.bf16 %v4289, %v4247
        %v4336 = vpack.c.bf16 %v4331, %v4331
        %v4337 = vpack.c.bf16 %v4291, %v4249
        %v4338 = vpack.c.bf16 %v4333, %v4333
        %v4343 = vunpack.c.l.b16 %v4335
        %v4344 = vunpack.c.h.b16 %v4335
        %v4345 = vunpack.c.l.b16 %v4336
        %v4346 = vunpack.c.l.b16 %v4337
        %v4347 = vunpack.c.h.b16 %v4337
        %v4348 = vunpack.c.l.b16 %v4338
        %v4349 = vpack.c.b16 %v4346, %v4343
        %v4350 = vpack.c.b16 %v4347, %v4344
        %v4351 = vpack.c.b16 %v4348, %v4345
        %4355 = vrot.lane.b32.xlu0 %v4349, 127
        %v4356 = vpop.permute.xlu0 %4355
        %4357 = vrot.lane.b32.xlu0 %v4350, 127
        %v4358 = vpop.permute.xlu0 %4357
        %4359 = vrot.lane.b32.xlu0 %v4351, 127
        %v4360 = vpop.permute.xlu0 %4359
        %v4361 = vsel %vm1583, %v4356, %v4358
        %v4362 = vsel %vm1583, %v4358, %v4360
        %4366 = vrot.lane.b32.xlu0 %v4349, 126
        %v4367 = vpop.permute.xlu0 %4366
        %4368 = vrot.lane.b32.xlu0 %v4350, 126
        %v4369 = vpop.permute.xlu0 %4368
        %4370 = vrot.lane.b32.xlu0 %v4351, 126
        %v4371 = vpop.permute.xlu0 %4370
        %v4372 = vsel %vm1595, %v4367, %v4369
        %v4373 = vsel %vm1595, %v4369, %v4371
        %4377 = vrot.lane.b32.xlu0 %v4349, 110
        %v4378 = vpop.permute.xlu0 %4377
        %4379 = vrot.lane.b32.xlu0 %v4350, 110
        %v4380 = vpop.permute.xlu0 %4379
        %4381 = vrot.lane.b32.xlu0 %v4351, 110
        %v4382 = vpop.permute.xlu0 %4381
        %v4383 = vsel %vm1607, %v4378, %v4380
        %v4384 = vsel %vm1607, %v4380, %v4382
        %4388 = vrot.lane.b32.xlu0 %v4349, 109
        %v4389 = vpop.permute.xlu0 %4388
        %4390 = vrot.lane.b32.xlu0 %v4350, 109
        %v4391 = vpop.permute.xlu0 %4390
        %4392 = vrot.lane.b32.xlu0 %v4351, 109
        %v4393 = vpop.permute.xlu0 %4392
        %v4394 = vsel %vm1619, %v4389, %v4391
        %v4395 = vsel %vm1619, %v4391, %v4393
        %4399 = vrot.lane.b32.xlu0 %v4349, 108
        %v4400 = vpop.permute.xlu0 %4399
        %4401 = vrot.lane.b32.xlu0 %v4350, 108
        %v4402 = vpop.permute.xlu0 %4401
        %4403 = vrot.lane.b32.xlu0 %v4351, 108
        %v4404 = vpop.permute.xlu0 %4403
        %v4405 = vsel %vm1631, %v4400, %v4402
        %v4406 = vsel %vm1631, %v4402, %v4404
        %4410 = vrot.lane.b32.xlu0 %v4349, 92
        %v4411 = vpop.permute.xlu0 %4410
        %4412 = vrot.lane.b32.xlu0 %v4350, 92
        %v4413 = vpop.permute.xlu0 %4412
        %4414 = vrot.lane.b32.xlu0 %v4351, 92
        %v4415 = vpop.permute.xlu0 %4414
        %v4416 = vsel %vm1643, %v4411, %v4413
        %v4417 = vsel %vm1643, %v4413, %v4415
        %4421 = vrot.lane.b32.xlu0 %v4349, 91
        %v4422 = vpop.permute.xlu0 %4421
        %4423 = vrot.lane.b32.xlu0 %v4350, 91
        %v4424 = vpop.permute.xlu0 %4423
        %4425 = vrot.lane.b32.xlu0 %v4351, 91
        %v4426 = vpop.permute.xlu0 %4425
        %v4427 = vsel %vm1655, %v4422, %v4424
        %v4428 = vsel %vm1655, %v4424, %v4426
        %4432 = vrot.lane.b32.xlu0 %v4349, 90
        %v4433 = vpop.permute.xlu0 %4432
        %4434 = vrot.lane.b32.xlu0 %v4350, 90
        %v4435 = vpop.permute.xlu0 %4434
        %4436 = vrot.lane.b32.xlu0 %v4351, 90
        %v4437 = vpop.permute.xlu0 %4436
        %v4438 = vsel %vm1667, %v4433, %v4435
        %v4439 = vsel %vm1667, %v4435, %v4437
        %v4445 = vunpack.c.l.b16 %v4204
        %v4446 = vunpack.c.h.b16 %v4204
        %v4447 = vunpack.c.l.b16 %v4205
        %v4448 = vunpack.c.h.b16 %v4205
        %v4449 = vpack.c.b16 %v4447, %v4445
        %v4450 = vpack.c.b16 %v4448, %v4446
        %v4453 = vsel %vm1682, %v4450, 0
        %4455 = vmatpush.bf16.msra.mxu0 %v4427
        %4456 = vmatpush.bf16.msra.mxu0 %v4416
        %4457 = vmatpush.bf16.msra.mxu0 %v4405
        %4458 = vmatpush.bf16.msra.mxu0 %v4394
        %4459 = vmatpush.bf16.msra.mxu0 %v4383
        %4460 = vmatpush.bf16.msra.mxu0 %v4372
        %4461 = vmatpush.bf16.msra.mxu0 %v4361
        %4462 = vmatpush.bf16.msra.mxu0 %v4349
        %4463 = vmatmul.bf16.gmra.mxu0 %v4449
        %v4464 = vpop.f32.mrf.mxu0
        %v4465 = vadd.f32 0.0, %v4464
        %v4466 = vpop.f32.mrf.mxu0
        %v4467 = vadd.f32 0.0, %v4466
        %4468 = vdwg.mxu0
        %4469 = vmatpush.bf16.msra.mxu0 0
        %4470 = vmatpush.bf16.msra.mxu0 0
        %4471 = vmatpush.bf16.msra.mxu0 0
        %4472 = vmatpush.bf16.msra.mxu0 0
        %4473 = vmatpush.bf16.msra.mxu0 0
        %4474 = vmatpush.bf16.msra.mxu0 0
        %4475 = vmatpush.bf16.msra.mxu0 0
        %4476 = vmatpush.bf16.msra.mxu0 %v4438
        %4477 = vmatmul.bf16.gmra.mxu0 %v4453
        %v4478 = vpop.f32.mrf.mxu0
        %v4479 = vadd.f32 %v4465, %v4478
        %v4480 = vpop.f32.mrf.mxu0
        %v4481 = vadd.f32 %v4467, %v4480
        %4482 = vdwg.mxu0
        %4483 = vmatpush.bf16.msra.mxu0 %v4428
        %4484 = vmatpush.bf16.msra.mxu0 %v4417
        %4485 = vmatpush.bf16.msra.mxu0 %v4406
        %4486 = vmatpush.bf16.msra.mxu0 %v4395
        %4487 = vmatpush.bf16.msra.mxu0 %v4384
        %4488 = vmatpush.bf16.msra.mxu0 %v4373
        %4489 = vmatpush.bf16.msra.mxu0 %v4362
        %4490 = vmatpush.bf16.msra.mxu0 %v4350
        %4491 = vmatmul.bf16.gmra.mxu0 %v4449
        %v4492 = vpop.f32.mrf.mxu0
        %v4493 = vadd.f32 0.0, %v4492
        %v4494 = vpop.f32.mrf.mxu0
        %v4495 = vadd.f32 0.0, %v4494
        %4496 = vdwg.mxu0
        %4497 = vmatpush.bf16.msra.mxu0 0
        %4498 = vmatpush.bf16.msra.mxu0 0
        %4499 = vmatpush.bf16.msra.mxu0 0
        %4500 = vmatpush.bf16.msra.mxu0 0
        %4501 = vmatpush.bf16.msra.mxu0 0
        %4502 = vmatpush.bf16.msra.mxu0 0
        %4503 = vmatpush.bf16.msra.mxu0 0
        %4504 = vmatpush.bf16.msra.mxu0 %v4439
        %4505 = vmatmul.bf16.gmra.mxu0 %v4453
        %v4506 = vpop.f32.mrf.mxu0
        %v4507 = vadd.f32 %v4493, %v4506
        %v4508 = vpop.f32.mrf.mxu0
        %v4509 = vadd.f32 %v4495, %v4508
        %4510 = vdwg.mxu0
        %4511 = vmatpush.bf16.msra.mxu0 %v4426
        %4512 = vmatpush.bf16.msra.mxu0 %v4415
        %4513 = vmatpush.bf16.msra.mxu0 %v4404
        %4514 = vmatpush.bf16.msra.mxu0 %v4393
        %4515 = vmatpush.bf16.msra.mxu0 %v4382
        %4516 = vmatpush.bf16.msra.mxu0 %v4371
        %4517 = vmatpush.bf16.msra.mxu0 %v4360
        %4518 = vmatpush.bf16.msra.mxu0 %v4351
        %4519 = vmatmul.bf16.gmra.mxu0 %v4449
        %v4520 = vpop.f32.mrf.mxu0
        %v4521 = vadd.f32 0.0, %v4520
        %v4522 = vpop.f32.mrf.mxu0
        %v4523 = vadd.f32 0.0, %v4522
        %4524 = vdwg.mxu0
        %4525 = vmatpush.bf16.msra.mxu0 0
        %4526 = vmatpush.bf16.msra.mxu0 0
        %4527 = vmatpush.bf16.msra.mxu0 0
        %4528 = vmatpush.bf16.msra.mxu0 0
        %4529 = vmatpush.bf16.msra.mxu0 0
        %4530 = vmatpush.bf16.msra.mxu0 0
        %4531 = vmatpush.bf16.msra.mxu0 0
        %4532 = vmatpush.bf16.msra.mxu0 %v4437
        %4533 = vmatmul.bf16.gmra.mxu0 %v4453
        %v4534 = vpop.f32.mrf.mxu0
        %v4535 = vadd.f32 %v4521, %v4534
        %v4536 = vpop.f32.mrf.mxu0
        %v4537 = vadd.f32 %v4523, %v4536
        %4538 = vdwg.mxu0
        %v4540 = vsel %vm1417, %v4535, 0
        %v4543 = vsel %vm1417, %v4537, 0
        %4545 = vmatpush.msra.mxu0 %v590
        %4546 = vmatpush.msra.mxu0 %v589
        %4547 = vmatpush.msra.mxu0 %v588
        %4548 = vmatpush.msra.mxu0 %v587
        %4549 = vmatpush.msra.mxu0 %v586
        %4550 = vmatpush.msra.mxu0 %v585
        %4551 = vmatpush.msra.mxu0 %v584
        %4552 = vmatpush.msra.mxu0 %v583
        %4553 = vmatpush.msra.mxu0 %v582
        %4554 = vmatpush.msra.mxu0 %v581
        %4555 = vmatpush.msra.mxu0 %v580
        %4556 = vmatpush.msra.mxu0 %v579
        %4557 = vmatpush.msra.mxu0 %v578
        %4558 = vmatpush.msra.mxu0 %v577
        %4559 = vmatpush.msra.mxu0 %v576
        %4560 = vmatpush.msra.mxu0 %v575
        %4561 = vmatmul.f32.gmra.mxu0 %v4479
        %v4562 = vpop.f32.mrf.mxu0
        %v4563 = vadd.f32 0.0, %v4562
        %4564 = vmatmul.f32.gmra.mxu0 %v4481
        %v4565 = vpop.f32.mrf.mxu0
        %v4566 = vadd.f32 0.0, %v4565
        %4567 = vdwg.mxu0
        %4568 = vmatpush.msra.mxu0 %v606
        %4569 = vmatpush.msra.mxu0 %v605
        %4570 = vmatpush.msra.mxu0 %v604
        %4571 = vmatpush.msra.mxu0 %v603
        %4572 = vmatpush.msra.mxu0 %v602
        %4573 = vmatpush.msra.mxu0 %v601
        %4574 = vmatpush.msra.mxu0 %v600
        %4575 = vmatpush.msra.mxu0 %v599
        %4576 = vmatpush.msra.mxu0 %v598
        %4577 = vmatpush.msra.mxu0 %v597
        %4578 = vmatpush.msra.mxu0 %v596
        %4579 = vmatpush.msra.mxu0 %v595
        %4580 = vmatpush.msra.mxu0 %v594
        %4581 = vmatpush.msra.mxu0 %v593
        %4582 = vmatpush.msra.mxu0 %v592
        %4583 = vmatpush.msra.mxu0 %v591
        %4584 = vmatmul.f32.gmra.mxu0 %v4507
        %v4585 = vpop.f32.mrf.mxu0
        %v4586 = vadd.f32 %v4563, %v4585
        %4587 = vmatmul.f32.gmra.mxu0 %v4509
        %v4588 = vpop.f32.mrf.mxu0
        %v4589 = vadd.f32 %v4566, %v4588
        %4590 = vdwg.mxu0
        %4591 = vmatpush.msra.mxu0 0.0
        %4592 = vmatpush.msra.mxu0 0.0
        %4593 = vmatpush.msra.mxu0 0.0
        %4594 = vmatpush.msra.mxu0 0.0
        %4595 = vmatpush.msra.mxu0 0.0
        %4596 = vmatpush.msra.mxu0 0.0
        %4597 = vmatpush.msra.mxu0 0.0
        %4598 = vmatpush.msra.mxu0 0.0
        %4599 = vmatpush.msra.mxu0 0.0
        %4600 = vmatpush.msra.mxu0 0.0
        %4601 = vmatpush.msra.mxu0 0.0
        %4602 = vmatpush.msra.mxu0 0.0
        %4603 = vmatpush.msra.mxu0 %v1778
        %4604 = vmatpush.msra.mxu0 %v609
        %4605 = vmatpush.msra.mxu0 %v608
        %4606 = vmatpush.msra.mxu0 %v607
        %4607 = vmatmul.f32.gmra.mxu0 %v4540
        %v4608 = vpop.f32.mrf.mxu0
        %v4609 = vadd.f32 %v4586, %v4608
        %4610 = vmatmul.f32.gmra.mxu0 %v4543
        %v4611 = vpop.f32.mrf.mxu0
        %v4612 = vadd.f32 %v4589, %v4611
        %4613 = vdwg.mxu0
        %4615 = vset.pattern.permute.xlu0 0
        %4616 = vperm.xlu0 %4615, %v4609
        %v4617 = vpop.permute.xlu0 %4616
        %4620 = vset.pattern.permute.xlu0 0
        %4621 = vperm.xlu0 %4620, %v4612
        %v4622 = vpop.permute.xlu0 %4621
        %v4624 = vsub.f32 %v4479, %v4617
        %v4625 = vsub.f32 %v4507, %v4617
        %v4626 = vsub.f32 %v4535, %v4617
        %v4627 = vsub.f32 %v4481, %v4622
        %v4628 = vsub.f32 %v4509, %v4622
        %v4629 = vsub.f32 %v4537, %v4622
        %v4630 = vmul.f32 %v4624, %v4624
        %v4631 = vmul.f32 %v4625, %v4625
        %v4632 = vmul.f32 %v4626, %v4626
        %v4633 = vmul.f32 %v4627, %v4627
        %v4634 = vmul.f32 %v4628, %v4628
        %v4635 = vmul.f32 %v4629, %v4629
        %v4637 = vsel %vm1417, %v4632, 0
        %v4640 = vsel %vm1417, %v4635, 0
        %4642 = vmatpush.msra.mxu0 %v590
        %4643 = vmatpush.msra.mxu0 %v589
        %4644 = vmatpush.msra.mxu0 %v588
        %4645 = vmatpush.msra.mxu0 %v587
        %4646 = vmatpush.msra.mxu0 %v586
        %4647 = vmatpush.msra.mxu0 %v585
        %4648 = vmatpush.msra.mxu0 %v584
        %4649 = vmatpush.msra.mxu0 %v583
        %4650 = vmatpush.msra.mxu0 %v582
        %4651 = vmatpush.msra.mxu0 %v581
        %4652 = vmatpush.msra.mxu0 %v580
        %4653 = vmatpush.msra.mxu0 %v579
        %4654 = vmatpush.msra.mxu0 %v578
        %4655 = vmatpush.msra.mxu0 %v577
        %4656 = vmatpush.msra.mxu0 %v576
        %4657 = vmatpush.msra.mxu0 %v575
        %4658 = vmatmul.f32.gmra.mxu0 %v4630
        %v4659 = vpop.f32.mrf.mxu0
        %v4660 = vadd.f32 1e-05, %v4659
        %4661 = vmatmul.f32.gmra.mxu0 %v4633
        %v4662 = vpop.f32.mrf.mxu0
        %v4663 = vadd.f32 1e-05, %v4662
        %4664 = vdwg.mxu0
        %4665 = vmatpush.msra.mxu0 %v606
        %4666 = vmatpush.msra.mxu0 %v605
        %4667 = vmatpush.msra.mxu0 %v604
        %4668 = vmatpush.msra.mxu0 %v603
        %4669 = vmatpush.msra.mxu0 %v602
        %4670 = vmatpush.msra.mxu0 %v601
        %4671 = vmatpush.msra.mxu0 %v600
        %4672 = vmatpush.msra.mxu0 %v599
        %4673 = vmatpush.msra.mxu0 %v598
        %4674 = vmatpush.msra.mxu0 %v597
        %4675 = vmatpush.msra.mxu0 %v596
        %4676 = vmatpush.msra.mxu0 %v595
        %4677 = vmatpush.msra.mxu0 %v594
        %4678 = vmatpush.msra.mxu0 %v593
        %4679 = vmatpush.msra.mxu0 %v592
        %4680 = vmatpush.msra.mxu0 %v591
        %4681 = vmatmul.f32.gmra.mxu0 %v4631
        %v4682 = vpop.f32.mrf.mxu0
        %v4683 = vadd.f32 %v4660, %v4682
        %4684 = vmatmul.f32.gmra.mxu0 %v4634
        %v4685 = vpop.f32.mrf.mxu0
        %v4686 = vadd.f32 %v4663, %v4685
        %4687 = vdwg.mxu0
        %4688 = vmatpush.msra.mxu0 0.0
        %4689 = vmatpush.msra.mxu0 0.0
        %4690 = vmatpush.msra.mxu0 0.0
        %4691 = vmatpush.msra.mxu0 0.0
        %4692 = vmatpush.msra.mxu0 0.0
        %4693 = vmatpush.msra.mxu0 0.0
        %4694 = vmatpush.msra.mxu0 0.0
        %4695 = vmatpush.msra.mxu0 0.0
        %4696 = vmatpush.msra.mxu0 0.0
        %4697 = vmatpush.msra.mxu0 0.0
        %4698 = vmatpush.msra.mxu0 0.0
        %4699 = vmatpush.msra.mxu0 0.0
        %4700 = vmatpush.msra.mxu0 %v1778
        %4701 = vmatpush.msra.mxu0 %v609
        %4702 = vmatpush.msra.mxu0 %v608
        %4703 = vmatpush.msra.mxu0 %v607
        %4704 = vmatmul.f32.gmra.mxu0 %v4637
        %v4705 = vpop.f32.mrf.mxu0
        %v4706 = vadd.f32 %v4683, %v4705
        %4707 = vmatmul.f32.gmra.mxu0 %v4640
        %v4708 = vpop.f32.mrf.mxu0
        %v4709 = vadd.f32 %v4686, %v4708
        %4710 = vdwg.mxu0
        %v4711 = vrsqrt.pop %v4706
        %v4712 = vmul.f32 %v4711, %v4706
        %v4713 = vmul.f32 %v4712, %v4711
        %v4714 = vmul.f32 0.5, %v4713
        %v4715 = vsub.f32 1.5, %v4714
        %v4716 = vmul.f32 %v4711, %v4715
        %vm4717 = vweird.f32 %v4706
        %vm4718 = vweird.f32 %v4711
        %vm4719 = vmor %vm4717, %vm4718
        %v4720 = vsel %vm4719, %v4711, %v4716
        %v4721 = vrsqrt.pop %v4709
        %v4722 = vmul.f32 %v4721, %v4709
        %v4723 = vmul.f32 %v4722, %v4721
        %v4724 = vmul.f32 0.5, %v4723
        %v4725 = vsub.f32 1.5, %v4724
        %v4726 = vmul.f32 %v4721, %v4725
        %vm4727 = vweird.f32 %v4709
        %vm4728 = vweird.f32 %v4721
        %vm4729 = vmor %vm4727, %vm4728
        %v4730 = vsel %vm4729, %v4721, %v4726
        %4732 = vset.pattern.permute.xlu0 0
        %4733 = vperm.xlu0 %4732, %v4720
        %v4734 = vpop.permute.xlu0 %4733
        %4737 = vset.pattern.permute.xlu0 0
        %4738 = vperm.xlu0 %4737, %v4730
        %v4739 = vpop.permute.xlu0 %4738
        %v4741 = vmul.f32 %v4624, %v4734
        %v4742 = vmul.f32 %v4625, %v4734
        %v4743 = vmul.f32 %v4626, %v4734
        %v4744 = vmul.f32 %v4627, %v4739
        %v4745 = vmul.f32 %v4628, %v4739
        %v4746 = vmul.f32 %v4629, %v4739
        %v4747 = vadd.f32 %v3641, %v4741
        %v4748 = vadd.f32 %v3642, %v4742
        %v4749 = vadd.f32 %v3643, %v4743
        %v4750 = vadd.f32 %v3644, %v4744
        %v4751 = vadd.f32 %v3645, %v4745
        %v4752 = vadd.f32 %v3646, %v4746
        %v4753 = vpack.c.bf16 %v4750, %v4747
        %v4754 = vpack.c.bf16 %v4751, %v4748
        %v4755 = vpack.c.bf16 %v4752, %v4749
        %s4756 = scalar_lea.vmem %s9, 96
        %v4757 = vld [vmem:[%s4756] sm:$0xff]
        %v4758 = vld [vmem:[%s4756 + $0x8] sm:$0xff]
        %v4760 = vsel %vm1417, %v4755, 0
        %4762 = vmatpush.bf16.msra.mxu0 %v1333
        %4763 = vmatpush.bf16.msra.mxu0 %v1330
        %4764 = vmatpush.bf16.msra.mxu0 %v1327
        %4765 = vmatpush.bf16.msra.mxu0 %v1324
        %4766 = vmatpush.bf16.msra.mxu0 %v1321
        %4767 = vmatpush.bf16.msra.mxu0 %v1318
        %4768 = vmatpush.bf16.msra.mxu0 %v1315
        %4769 = vmatpush.bf16.msra.mxu0 %v1312
        %4770 = vmatmul.bf16.gmra.mxu0 %v4753
        %v4771 = vpop.f32.mrf.mxu0
        %v4772 = vadd.f32 0.0, %v4771
        %v4773 = vpop.f32.mrf.mxu0
        %v4774 = vadd.f32 0.0, %v4773
        %4775 = vdwg.mxu0
        %4776 = vmatpush.bf16.msra.mxu0 %v1357
        %4777 = vmatpush.bf16.msra.mxu0 %v1354
        %4778 = vmatpush.bf16.msra.mxu0 %v1351
        %4779 = vmatpush.bf16.msra.mxu0 %v1348
        %4780 = vmatpush.bf16.msra.mxu0 %v1345
        %4781 = vmatpush.bf16.msra.mxu0 %v1342
        %4782 = vmatpush.bf16.msra.mxu0 %v1339
        %4783 = vmatpush.bf16.msra.mxu0 %v1336
        %4784 = vmatmul.bf16.gmra.mxu0 %v4754
        %v4785 = vpop.f32.mrf.mxu0
        %v4786 = vadd.f32 %v4772, %v4785
        %v4787 = vpop.f32.mrf.mxu0
        %v4788 = vadd.f32 %v4774, %v4787
        %4789 = vdwg.mxu0
        %4790 = vmatpush.bf16.msra.mxu0 0
        %4791 = vmatpush.bf16.msra.mxu0 0
        %4792 = vmatpush.bf16.msra.mxu0 0
        %4793 = vmatpush.bf16.msra.mxu0 0
        %4794 = vmatpush.bf16.msra.mxu0 0
        %4795 = vmatpush.bf16.msra.mxu0 0
        %4796 = vmatpush.bf16.msra.mxu0 %v1423
        %4797 = vmatpush.bf16.msra.mxu0 %v1360
        %4798 = vmatmul.bf16.gmra.mxu0 %v4760
        %v4799 = vpop.f32.mrf.mxu0
        %v4800 = vadd.f32 %v4786, %v4799
        %v4801 = vpop.f32.mrf.mxu0
        %v4802 = vadd.f32 %v4788, %v4801
        %4803 = vdwg.mxu0
        %4804 = vmatpush.bf16.msra.mxu0 %v1334
        %4805 = vmatpush.bf16.msra.mxu0 %v1331
        %4806 = vmatpush.bf16.msra.mxu0 %v1328
        %4807 = vmatpush.bf16.msra.mxu0 %v1325
        %4808 = vmatpush.bf16.msra.mxu0 %v1322
        %4809 = vmatpush.bf16.msra.mxu0 %v1319
        %4810 = vmatpush.bf16.msra.mxu0 %v1316
        %4811 = vmatpush.bf16.msra.mxu0 %v1313
        %4812 = vmatmul.bf16.gmra.mxu0 %v4753
        %v4813 = vpop.f32.mrf.mxu0
        %v4814 = vadd.f32 0.0, %v4813
        %v4815 = vpop.f32.mrf.mxu0
        %v4816 = vadd.f32 0.0, %v4815
        %4817 = vdwg.mxu0
        %4818 = vmatpush.bf16.msra.mxu0 %v1358
        %4819 = vmatpush.bf16.msra.mxu0 %v1355
        %4820 = vmatpush.bf16.msra.mxu0 %v1352
        %4821 = vmatpush.bf16.msra.mxu0 %v1349
        %4822 = vmatpush.bf16.msra.mxu0 %v1346
        %4823 = vmatpush.bf16.msra.mxu0 %v1343
        %4824 = vmatpush.bf16.msra.mxu0 %v1340
        %4825 = vmatpush.bf16.msra.mxu0 %v1337
        %4826 = vmatmul.bf16.gmra.mxu0 %v4754
        %v4827 = vpop.f32.mrf.mxu0
        %v4828 = vadd.f32 %v4814, %v4827
        %v4829 = vpop.f32.mrf.mxu0
        %v4830 = vadd.f32 %v4816, %v4829
        %4831 = vdwg.mxu0
        %4832 = vmatpush.bf16.msra.mxu0 0
        %4833 = vmatpush.bf16.msra.mxu0 0
        %4834 = vmatpush.bf16.msra.mxu0 0
        %4835 = vmatpush.bf16.msra.mxu0 0
        %4836 = vmatpush.bf16.msra.mxu0 0
        %4837 = vmatpush.bf16.msra.mxu0 0
        %4838 = vmatpush.bf16.msra.mxu0 %v1426
        %4839 = vmatpush.bf16.msra.mxu0 %v1361
        %4840 = vmatmul.bf16.gmra.mxu0 %v4760
        %v4841 = vpop.f32.mrf.mxu0
        %v4842 = vadd.f32 %v4828, %v4841
        %v4843 = vpop.f32.mrf.mxu0
        %v4844 = vadd.f32 %v4830, %v4843
        %4845 = vdwg.mxu0
        %4846 = vmatpush.bf16.msra.mxu0 %v1335
        %4847 = vmatpush.bf16.msra.mxu0 %v1332
        %4848 = vmatpush.bf16.msra.mxu0 %v1329
        %4849 = vmatpush.bf16.msra.mxu0 %v1326
        %4850 = vmatpush.bf16.msra.mxu0 %v1323
        %4851 = vmatpush.bf16.msra.mxu0 %v1320
        %4852 = vmatpush.bf16.msra.mxu0 %v1317
        %4853 = vmatpush.bf16.msra.mxu0 %v1314
        %4854 = vmatmul.bf16.gmra.mxu0 %v4753
        %v4855 = vpop.f32.mrf.mxu0
        %v4856 = vadd.f32 0.0, %v4855
        %v4857 = vpop.f32.mrf.mxu0
        %v4858 = vadd.f32 0.0, %v4857
        %4859 = vdwg.mxu0
        %4860 = vmatpush.bf16.msra.mxu0 %v1359
        %4861 = vmatpush.bf16.msra.mxu0 %v1356
        %4862 = vmatpush.bf16.msra.mxu0 %v1353
        %4863 = vmatpush.bf16.msra.mxu0 %v1350
        %4864 = vmatpush.bf16.msra.mxu0 %v1347
        %4865 = vmatpush.bf16.msra.mxu0 %v1344
        %4866 = vmatpush.bf16.msra.mxu0 %v1341
        %4867 = vmatpush.bf16.msra.mxu0 %v1338
        %4868 = vmatmul.bf16.gmra.mxu0 %v4754
        %v4869 = vpop.f32.mrf.mxu0
        %v4870 = vadd.f32 %v4856, %v4869
        %v4871 = vpop.f32.mrf.mxu0
        %v4872 = vadd.f32 %v4858, %v4871
        %4873 = vdwg.mxu0
        %4874 = vmatpush.bf16.msra.mxu0 0
        %4875 = vmatpush.bf16.msra.mxu0 0
        %4876 = vmatpush.bf16.msra.mxu0 0
        %4877 = vmatpush.bf16.msra.mxu0 0
        %4878 = vmatpush.bf16.msra.mxu0 0
        %4879 = vmatpush.bf16.msra.mxu0 0
        %4880 = vmatpush.bf16.msra.mxu0 %v1429
        %4881 = vmatpush.bf16.msra.mxu0 %v1362
        %4882 = vmatmul.bf16.gmra.mxu0 %v4760
        %v4883 = vpop.f32.mrf.mxu0
        %v4884 = vadd.f32 %v4870, %v4883
        %v4885 = vpop.f32.mrf.mxu0
        %v4886 = vadd.f32 %v4872, %v4885
        %4887 = vdwg.mxu0
        %v4888 = vpack.c.bf16 %v4842, %v4800
        %v4889 = vpack.c.bf16 %v4884, %v4884
        %v4890 = vpack.c.bf16 %v4844, %v4802
        %v4891 = vpack.c.bf16 %v4886, %v4886
        %v4896 = vunpack.c.l.b16 %v4888
        %v4897 = vunpack.c.h.b16 %v4888
        %v4898 = vunpack.c.l.b16 %v4889
        %v4899 = vunpack.c.l.b16 %v4890
        %v4900 = vunpack.c.h.b16 %v4890
        %v4901 = vunpack.c.l.b16 %v4891
        %v4902 = vpack.c.b16 %v4899, %v4896
        %v4903 = vpack.c.b16 %v4900, %v4897
        %v4904 = vpack.c.b16 %v4901, %v4898
        %4908 = vrot.lane.b32.xlu0 %v4902, 127
        %v4909 = vpop.permute.xlu0 %4908
        %4910 = vrot.lane.b32.xlu0 %v4903, 127
        %v4911 = vpop.permute.xlu0 %4910
        %4912 = vrot.lane.b32.xlu0 %v4904, 127
        %v4913 = vpop.permute.xlu0 %4912
        %v4914 = vsel %vm1583, %v4909, %v4911
        %v4915 = vsel %vm1583, %v4911, %v4913
        %4919 = vrot.lane.b32.xlu0 %v4902, 126
        %v4920 = vpop.permute.xlu0 %4919
        %4921 = vrot.lane.b32.xlu0 %v4903, 126
        %v4922 = vpop.permute.xlu0 %4921
        %4923 = vrot.lane.b32.xlu0 %v4904, 126
        %v4924 = vpop.permute.xlu0 %4923
        %v4925 = vsel %vm1595, %v4920, %v4922
        %v4926 = vsel %vm1595, %v4922, %v4924
        %4930 = vrot.lane.b32.xlu0 %v4902, 110
        %v4931 = vpop.permute.xlu0 %4930
        %4932 = vrot.lane.b32.xlu0 %v4903, 110
        %v4933 = vpop.permute.xlu0 %4932
        %4934 = vrot.lane.b32.xlu0 %v4904, 110
        %v4935 = vpop.permute.xlu0 %4934
        %v4936 = vsel %vm1607, %v4931, %v4933
        %v4937 = vsel %vm1607, %v4933, %v4935
        %4941 = vrot.lane.b32.xlu0 %v4902, 109
        %v4942 = vpop.permute.xlu0 %4941
        %4943 = vrot.lane.b32.xlu0 %v4903, 109
        %v4944 = vpop.permute.xlu0 %4943
        %4945 = vrot.lane.b32.xlu0 %v4904, 109
        %v4946 = vpop.permute.xlu0 %4945
        %v4947 = vsel %vm1619, %v4942, %v4944
        %v4948 = vsel %vm1619, %v4944, %v4946
        %4952 = vrot.lane.b32.xlu0 %v4902, 108
        %v4953 = vpop.permute.xlu0 %4952
        %4954 = vrot.lane.b32.xlu0 %v4903, 108
        %v4955 = vpop.permute.xlu0 %4954
        %4956 = vrot.lane.b32.xlu0 %v4904, 108
        %v4957 = vpop.permute.xlu0 %4956
        %v4958 = vsel %vm1631, %v4953, %v4955
        %v4959 = vsel %vm1631, %v4955, %v4957
        %4963 = vrot.lane.b32.xlu0 %v4902, 92
        %v4964 = vpop.permute.xlu0 %4963
        %4965 = vrot.lane.b32.xlu0 %v4903, 92
        %v4966 = vpop.permute.xlu0 %4965
        %4967 = vrot.lane.b32.xlu0 %v4904, 92
        %v4968 = vpop.permute.xlu0 %4967
        %v4969 = vsel %vm1643, %v4964, %v4966
        %v4970 = vsel %vm1643, %v4966, %v4968
        %4974 = vrot.lane.b32.xlu0 %v4902, 91
        %v4975 = vpop.permute.xlu0 %4974
        %4976 = vrot.lane.b32.xlu0 %v4903, 91
        %v4977 = vpop.permute.xlu0 %4976
        %4978 = vrot.lane.b32.xlu0 %v4904, 91
        %v4979 = vpop.permute.xlu0 %4978
        %v4980 = vsel %vm1655, %v4975, %v4977
        %v4981 = vsel %vm1655, %v4977, %v4979
        %4985 = vrot.lane.b32.xlu0 %v4902, 90
        %v4986 = vpop.permute.xlu0 %4985
        %4987 = vrot.lane.b32.xlu0 %v4903, 90
        %v4988 = vpop.permute.xlu0 %4987
        %4989 = vrot.lane.b32.xlu0 %v4904, 90
        %v4990 = vpop.permute.xlu0 %4989
        %v4991 = vsel %vm1667, %v4986, %v4988
        %v4992 = vsel %vm1667, %v4988, %v4990
        %v4998 = vunpack.c.l.b16 %v4757
        %v4999 = vunpack.c.h.b16 %v4757
        %v5000 = vunpack.c.l.b16 %v4758
        %v5001 = vunpack.c.h.b16 %v4758
        %v5002 = vpack.c.b16 %v5000, %v4998
        %v5003 = vpack.c.b16 %v5001, %v4999
        %v5006 = vsel %vm1682, %v5003, 0
        %5008 = vmatpush.bf16.msra.mxu0 %v4980
        %5009 = vmatpush.bf16.msra.mxu0 %v4969
        %5010 = vmatpush.bf16.msra.mxu0 %v4958
        %5011 = vmatpush.bf16.msra.mxu0 %v4947
        %5012 = vmatpush.bf16.msra.mxu0 %v4936
        %5013 = vmatpush.bf16.msra.mxu0 %v4925
        %5014 = vmatpush.bf16.msra.mxu0 %v4914
        %5015 = vmatpush.bf16.msra.mxu0 %v4902
        %5016 = vmatmul.bf16.gmra.mxu0 %v5002
        %v5017 = vpop.f32.mrf.mxu0
        %v5018 = vadd.f32 0.0, %v5017
        %v5019 = vpop.f32.mrf.mxu0
        %v5020 = vadd.f32 0.0, %v5019
        %5021 = vdwg.mxu0
        %5022 = vmatpush.bf16.msra.mxu0 0
        %5023 = vmatpush.bf16.msra.mxu0 0
        %5024 = vmatpush.bf16.msra.mxu0 0
        %5025 = vmatpush.bf16.msra.mxu0 0
        %5026 = vmatpush.bf16.msra.mxu0 0
        %5027 = vmatpush.bf16.msra.mxu0 0
        %5028 = vmatpush.bf16.msra.mxu0 0
        %5029 = vmatpush.bf16.msra.mxu0 %v4991
        %5030 = vmatmul.bf16.gmra.mxu0 %v5006
        %v5031 = vpop.f32.mrf.mxu0
        %v5032 = vadd.f32 %v5018, %v5031
        %v5033 = vpop.f32.mrf.mxu0
        %v5034 = vadd.f32 %v5020, %v5033
        %5035 = vdwg.mxu0
        %5036 = vmatpush.bf16.msra.mxu0 %v4981
        %5037 = vmatpush.bf16.msra.mxu0 %v4970
        %5038 = vmatpush.bf16.msra.mxu0 %v4959
        %5039 = vmatpush.bf16.msra.mxu0 %v4948
        %5040 = vmatpush.bf16.msra.mxu0 %v4937
        %5041 = vmatpush.bf16.msra.mxu0 %v4926
        %5042 = vmatpush.bf16.msra.mxu0 %v4915
        %5043 = vmatpush.bf16.msra.mxu0 %v4903
        %5044 = vmatmul.bf16.gmra.mxu0 %v5002
        %v5045 = vpop.f32.mrf.mxu0
        %v5046 = vadd.f32 0.0, %v5045
        %v5047 = vpop.f32.mrf.mxu0
        %v5048 = vadd.f32 0.0, %v5047
        %5049 = vdwg.mxu0
        %5050 = vmatpush.bf16.msra.mxu0 0
        %5051 = vmatpush.bf16.msra.mxu0 0
        %5052 = vmatpush.bf16.msra.mxu0 0
        %5053 = vmatpush.bf16.msra.mxu0 0
        %5054 = vmatpush.bf16.msra.mxu0 0
        %5055 = vmatpush.bf16.msra.mxu0 0
        %5056 = vmatpush.bf16.msra.mxu0 0
        %5057 = vmatpush.bf16.msra.mxu0 %v4992
        %5058 = vmatmul.bf16.gmra.mxu0 %v5006
        %v5059 = vpop.f32.mrf.mxu0
        %v5060 = vadd.f32 %v5046, %v5059
        %v5061 = vpop.f32.mrf.mxu0
        %v5062 = vadd.f32 %v5048, %v5061
        %5063 = vdwg.mxu0
        %5064 = vmatpush.bf16.msra.mxu0 %v4979
        %5065 = vmatpush.bf16.msra.mxu0 %v4968
        %5066 = vmatpush.bf16.msra.mxu0 %v4957
        %5067 = vmatpush.bf16.msra.mxu0 %v4946
        %5068 = vmatpush.bf16.msra.mxu0 %v4935
        %5069 = vmatpush.bf16.msra.mxu0 %v4924
        %5070 = vmatpush.bf16.msra.mxu0 %v4913
        %5071 = vmatpush.bf16.msra.mxu0 %v4904
        %5072 = vmatmul.bf16.gmra.mxu0 %v5002
        %v5073 = vpop.f32.mrf.mxu0
        %v5074 = vadd.f32 0.0, %v5073
        %v5075 = vpop.f32.mrf.mxu0
        %v5076 = vadd.f32 0.0, %v5075
        %5077 = vdwg.mxu0
        %5078 = vmatpush.bf16.msra.mxu0 0
        %5079 = vmatpush.bf16.msra.mxu0 0
        %5080 = vmatpush.bf16.msra.mxu0 0
        %5081 = vmatpush.bf16.msra.mxu0 0
        %5082 = vmatpush.bf16.msra.mxu0 0
        %5083 = vmatpush.bf16.msra.mxu0 0
        %5084 = vmatpush.bf16.msra.mxu0 0
        %5085 = vmatpush.bf16.msra.mxu0 %v4990
        %5086 = vmatmul.bf16.gmra.mxu0 %v5006
        %v5087 = vpop.f32.mrf.mxu0
        %v5088 = vadd.f32 %v5074, %v5087
        %v5089 = vpop.f32.mrf.mxu0
        %v5090 = vadd.f32 %v5076, %v5089
        %5091 = vdwg.mxu0
        %v5093 = vsel %vm1417, %v5088, 0
        %v5096 = vsel %vm1417, %v5090, 0
        %5098 = vmatpush.msra.mxu0 %v590
        %5099 = vmatpush.msra.mxu0 %v589
        %5100 = vmatpush.msra.mxu0 %v588
        %5101 = vmatpush.msra.mxu0 %v587
        %5102 = vmatpush.msra.mxu0 %v586
        %5103 = vmatpush.msra.mxu0 %v585
        %5104 = vmatpush.msra.mxu0 %v584
        %5105 = vmatpush.msra.mxu0 %v583
        %5106 = vmatpush.msra.mxu0 %v582
        %5107 = vmatpush.msra.mxu0 %v581
        %5108 = vmatpush.msra.mxu0 %v580
        %5109 = vmatpush.msra.mxu0 %v579
        %5110 = vmatpush.msra.mxu0 %v578
        %5111 = vmatpush.msra.mxu0 %v577
        %5112 = vmatpush.msra.mxu0 %v576
        %5113 = vmatpush.msra.mxu0 %v575
        %5114 = vmatmul.f32.gmra.mxu0 %v5032
        %v5115 = vpop.f32.mrf.mxu0
        %v5116 = vadd.f32 0.0, %v5115
        %5117 = vmatmul.f32.gmra.mxu0 %v5034
        %v5118 = vpop.f32.mrf.mxu0
        %v5119 = vadd.f32 0.0, %v5118
        %5120 = vdwg.mxu0
        %5121 = vmatpush.msra.mxu0 %v606
        %5122 = vmatpush.msra.mxu0 %v605
        %5123 = vmatpush.msra.mxu0 %v604
        %5124 = vmatpush.msra.mxu0 %v603
        %5125 = vmatpush.msra.mxu0 %v602
        %5126 = vmatpush.msra.mxu0 %v601
        %5127 = vmatpush.msra.mxu0 %v600
        %5128 = vmatpush.msra.mxu0 %v599
        %5129 = vmatpush.msra.mxu0 %v598
        %5130 = vmatpush.msra.mxu0 %v597
        %5131 = vmatpush.msra.mxu0 %v596
        %5132 = vmatpush.msra.mxu0 %v595
        %5133 = vmatpush.msra.mxu0 %v594
        %5134 = vmatpush.msra.mxu0 %v593
        %5135 = vmatpush.msra.mxu0 %v592
        %5136 = vmatpush.msra.mxu0 %v591
        %5137 = vmatmul.f32.gmra.mxu0 %v5060
        %v5138 = vpop.f32.mrf.mxu0
        %v5139 = vadd.f32 %v5116, %v5138
        %5140 = vmatmul.f32.gmra.mxu0 %v5062
        %v5141 = vpop.f32.mrf.mxu0
        %v5142 = vadd.f32 %v5119, %v5141
        %5143 = vdwg.mxu0
        %5144 = vmatpush.msra.mxu0 0.0
        %5145 = vmatpush.msra.mxu0 0.0
        %5146 = vmatpush.msra.mxu0 0.0
        %5147 = vmatpush.msra.mxu0 0.0
        %5148 = vmatpush.msra.mxu0 0.0
        %5149 = vmatpush.msra.mxu0 0.0
        %5150 = vmatpush.msra.mxu0 0.0
        %5151 = vmatpush.msra.mxu0 0.0
        %5152 = vmatpush.msra.mxu0 0.0
        %5153 = vmatpush.msra.mxu0 0.0
        %5154 = vmatpush.msra.mxu0 0.0
        %5155 = vmatpush.msra.mxu0 0.0
        %5156 = vmatpush.msra.mxu0 %v1778
        %5157 = vmatpush.msra.mxu0 %v609
        %5158 = vmatpush.msra.mxu0 %v608
        %5159 = vmatpush.msra.mxu0 %v607
        %5160 = vmatmul.f32.gmra.mxu0 %v5093
        %v5161 = vpop.f32.mrf.mxu0
        %v5162 = vadd.f32 %v5139, %v5161
        %5163 = vmatmul.f32.gmra.mxu0 %v5096
        %v5164 = vpop.f32.mrf.mxu0
        %v5165 = vadd.f32 %v5142, %v5164
        %5166 = vdwg.mxu0
        %5168 = vset.pattern.permute.xlu0 0
        %5169 = vperm.xlu0 %5168, %v5162
        %v5170 = vpop.permute.xlu0 %5169
        %5173 = vset.pattern.permute.xlu0 0
        %5174 = vperm.xlu0 %5173, %v5165
        %v5175 = vpop.permute.xlu0 %5174
        %v5177 = vsub.f32 %v5032, %v5170
        %v5178 = vsub.f32 %v5060, %v5170
        %v5179 = vsub.f32 %v5088, %v5170
        %v5180 = vsub.f32 %v5034, %v5175
        %v5181 = vsub.f32 %v5062, %v5175
        %v5182 = vsub.f32 %v5090, %v5175
        %v5183 = vmul.f32 %v5177, %v5177
        %v5184 = vmul.f32 %v5178, %v5178
        %v5185 = vmul.f32 %v5179, %v5179
        %v5186 = vmul.f32 %v5180, %v5180
        %v5187 = vmul.f32 %v5181, %v5181
        %v5188 = vmul.f32 %v5182, %v5182
        %v5190 = vsel %vm1417, %v5185, 0
        %v5193 = vsel %vm1417, %v5188, 0
        %5195 = vmatpush.msra.mxu0 %v590
        %5196 = vmatpush.msra.mxu0 %v589
        %5197 = vmatpush.msra.mxu0 %v588
        %5198 = vmatpush.msra.mxu0 %v587
        %5199 = vmatpush.msra.mxu0 %v586
        %5200 = vmatpush.msra.mxu0 %v585
        %5201 = vmatpush.msra.mxu0 %v584
        %5202 = vmatpush.msra.mxu0 %v583
        %5203 = vmatpush.msra.mxu0 %v582
        %5204 = vmatpush.msra.mxu0 %v581
        %5205 = vmatpush.msra.mxu0 %v580
        %5206 = vmatpush.msra.mxu0 %v579
        %5207 = vmatpush.msra.mxu0 %v578
        %5208 = vmatpush.msra.mxu0 %v577
        %5209 = vmatpush.msra.mxu0 %v576
        %5210 = vmatpush.msra.mxu0 %v575
        %5211 = vmatmul.f32.gmra.mxu0 %v5183
        %v5212 = vpop.f32.mrf.mxu0
        %v5213 = vadd.f32 1e-05, %v5212
        %5214 = vmatmul.f32.gmra.mxu0 %v5186
        %v5215 = vpop.f32.mrf.mxu0
        %v5216 = vadd.f32 1e-05, %v5215
        %5217 = vdwg.mxu0
        %5218 = vmatpush.msra.mxu0 %v606
        %5219 = vmatpush.msra.mxu0 %v605
        %5220 = vmatpush.msra.mxu0 %v604
        %5221 = vmatpush.msra.mxu0 %v603
        %5222 = vmatpush.msra.mxu0 %v602
        %5223 = vmatpush.msra.mxu0 %v601
        %5224 = vmatpush.msra.mxu0 %v600
        %5225 = vmatpush.msra.mxu0 %v599
        %5226 = vmatpush.msra.mxu0 %v598
        %5227 = vmatpush.msra.mxu0 %v597
        %5228 = vmatpush.msra.mxu0 %v596
        %5229 = vmatpush.msra.mxu0 %v595
        %5230 = vmatpush.msra.mxu0 %v594
        %5231 = vmatpush.msra.mxu0 %v593
        %5232 = vmatpush.msra.mxu0 %v592
        %5233 = vmatpush.msra.mxu0 %v591
        %5234 = vmatmul.f32.gmra.mxu0 %v5184
        %v5235 = vpop.f32.mrf.mxu0
        %v5236 = vadd.f32 %v5213, %v5235
        %5237 = vmatmul.f32.gmra.mxu0 %v5187
        %v5238 = vpop.f32.mrf.mxu0
        %v5239 = vadd.f32 %v5216, %v5238
        %5240 = vdwg.mxu0
        %5241 = vmatpush.msra.mxu0 0.0
        %5242 = vmatpush.msra.mxu0 0.0
        %5243 = vmatpush.msra.mxu0 0.0
        %5244 = vmatpush.msra.mxu0 0.0
        %5245 = vmatpush.msra.mxu0 0.0
        %5246 = vmatpush.msra.mxu0 0.0
        %5247 = vmatpush.msra.mxu0 0.0
        %5248 = vmatpush.msra.mxu0 0.0
        %5249 = vmatpush.msra.mxu0 0.0
        %5250 = vmatpush.msra.mxu0 0.0
        %5251 = vmatpush.msra.mxu0 0.0
        %5252 = vmatpush.msra.mxu0 0.0
        %5253 = vmatpush.msra.mxu0 %v1778
        %5254 = vmatpush.msra.mxu0 %v609
        %5255 = vmatpush.msra.mxu0 %v608
        %5256 = vmatpush.msra.mxu0 %v607
        %5257 = vmatmul.f32.gmra.mxu0 %v5190
        %v5258 = vpop.f32.mrf.mxu0
        %v5259 = vadd.f32 %v5236, %v5258
        %5260 = vmatmul.f32.gmra.mxu0 %v5193
        %v5261 = vpop.f32.mrf.mxu0
        %v5262 = vadd.f32 %v5239, %v5261
        %5263 = vdwg.mxu0
        %v5264 = vrsqrt.pop %v5259
        %v5265 = vmul.f32 %v5264, %v5259
        %v5266 = vmul.f32 %v5265, %v5264
        %v5267 = vmul.f32 0.5, %v5266
        %v5268 = vsub.f32 1.5, %v5267
        %v5269 = vmul.f32 %v5264, %v5268
        %vm5270 = vweird.f32 %v5259
        %vm5271 = vweird.f32 %v5264
        %vm5272 = vmor %vm5270, %vm5271
        %v5273 = vsel %vm5272, %v5264, %v5269
        %v5274 = vrsqrt.pop %v5262
        %v5275 = vmul.f32 %v5274, %v5262
        %v5276 = vmul.f32 %v5275, %v5274
        %v5277 = vmul.f32 0.5, %v5276
        %v5278 = vsub.f32 1.5, %v5277
        %v5279 = vmul.f32 %v5274, %v5278
        %vm5280 = vweird.f32 %v5262
        %vm5281 = vweird.f32 %v5274
        %vm5282 = vmor %vm5280, %vm5281
        %v5283 = vsel %vm5282, %v5274, %v5279
        %5285 = vset.pattern.permute.xlu0 0
        %5286 = vperm.xlu0 %5285, %v5273
        %v5287 = vpop.permute.xlu0 %5286
        %5290 = vset.pattern.permute.xlu0 0
        %5291 = vperm.xlu0 %5290, %v5283
        %v5292 = vpop.permute.xlu0 %5291
        %v5294 = vmul.f32 %v5177, %v5287
        %v5295 = vmul.f32 %v5178, %v5287
        %v5296 = vmul.f32 %v5179, %v5287
        %v5297 = vmul.f32 %v5180, %v5292
        %v5298 = vmul.f32 %v5181, %v5292
        %v5299 = vmul.f32 %v5182, %v5292
        %v5300 = vmax.f32 %v5294, 0.0
        %v5301 = vmax.f32 %v5295, 0.0
        %v5302 = vmax.f32 %v5296, 0.0
        %v5303 = vmax.f32 %v5297, 0.0
        %v5304 = vmax.f32 %v5298, 0.0
        %v5305 = vmax.f32 %v5299, 0.0
        %v5306 = vpack.c.bf16 %v5303, %v5300
        %v5307 = vpack.c.bf16 %v5304, %v5301
        %v5308 = vpack.c.bf16 %v5305, %v5302
        %s5309 = scalar_lea.vmem %s9, 112
        %v5310 = vld [vmem:[%s5309] sm:$0xff]
        %v5311 = vld [vmem:[%s5309 + $0x8] sm:$0xff]
        %v5313 = vsel %vm1417, %v5308, 0
        %5315 = vmatpush.bf16.msra.mxu0 %v1333
        %5316 = vmatpush.bf16.msra.mxu0 %v1330
        %5317 = vmatpush.bf16.msra.mxu0 %v1327
        %5318 = vmatpush.bf16.msra.mxu0 %v1324
        %5319 = vmatpush.bf16.msra.mxu0 %v1321
        %5320 = vmatpush.bf16.msra.mxu0 %v1318
        %5321 = vmatpush.bf16.msra.mxu0 %v1315
        %5322 = vmatpush.bf16.msra.mxu0 %v1312
        %5323 = vmatmul.bf16.gmra.mxu0 %v5306
        %v5324 = vpop.f32.mrf.mxu0
        %v5325 = vadd.f32 0.0, %v5324
        %v5326 = vpop.f32.mrf.mxu0
        %v5327 = vadd.f32 0.0, %v5326
        %5328 = vdwg.mxu0
        %5329 = vmatpush.bf16.msra.mxu0 %v1357
        %5330 = vmatpush.bf16.msra.mxu0 %v1354
        %5331 = vmatpush.bf16.msra.mxu0 %v1351
        %5332 = vmatpush.bf16.msra.mxu0 %v1348
        %5333 = vmatpush.bf16.msra.mxu0 %v1345
        %5334 = vmatpush.bf16.msra.mxu0 %v1342
        %5335 = vmatpush.bf16.msra.mxu0 %v1339
        %5336 = vmatpush.bf16.msra.mxu0 %v1336
        %5337 = vmatmul.bf16.gmra.mxu0 %v5307
        %v5338 = vpop.f32.mrf.mxu0
        %v5339 = vadd.f32 %v5325, %v5338
        %v5340 = vpop.f32.mrf.mxu0
        %v5341 = vadd.f32 %v5327, %v5340
        %5342 = vdwg.mxu0
        %5343 = vmatpush.bf16.msra.mxu0 0
        %5344 = vmatpush.bf16.msra.mxu0 0
        %5345 = vmatpush.bf16.msra.mxu0 0
        %5346 = vmatpush.bf16.msra.mxu0 0
        %5347 = vmatpush.bf16.msra.mxu0 0
        %5348 = vmatpush.bf16.msra.mxu0 0
        %5349 = vmatpush.bf16.msra.mxu0 %v1423
        %5350 = vmatpush.bf16.msra.mxu0 %v1360
        %5351 = vmatmul.bf16.gmra.mxu0 %v5313
        %v5352 = vpop.f32.mrf.mxu0
        %v5353 = vadd.f32 %v5339, %v5352
        %v5354 = vpop.f32.mrf.mxu0
        %v5355 = vadd.f32 %v5341, %v5354
        %5356 = vdwg.mxu0
        %5357 = vmatpush.bf16.msra.mxu0 %v1334
        %5358 = vmatpush.bf16.msra.mxu0 %v1331
        %5359 = vmatpush.bf16.msra.mxu0 %v1328
        %5360 = vmatpush.bf16.msra.mxu0 %v1325
        %5361 = vmatpush.bf16.msra.mxu0 %v1322
        %5362 = vmatpush.bf16.msra.mxu0 %v1319
        %5363 = vmatpush.bf16.msra.mxu0 %v1316
        %5364 = vmatpush.bf16.msra.mxu0 %v1313
        %5365 = vmatmul.bf16.gmra.mxu0 %v5306
        %v5366 = vpop.f32.mrf.mxu0
        %v5367 = vadd.f32 0.0, %v5366
        %v5368 = vpop.f32.mrf.mxu0
        %v5369 = vadd.f32 0.0, %v5368
        %5370 = vdwg.mxu0
        %5371 = vmatpush.bf16.msra.mxu0 %v1358
        %5372 = vmatpush.bf16.msra.mxu0 %v1355
        %5373 = vmatpush.bf16.msra.mxu0 %v1352
        %5374 = vmatpush.bf16.msra.mxu0 %v1349
        %5375 = vmatpush.bf16.msra.mxu0 %v1346
        %5376 = vmatpush.bf16.msra.mxu0 %v1343
        %5377 = vmatpush.bf16.msra.mxu0 %v1340
        %5378 = vmatpush.bf16.msra.mxu0 %v1337
        %5379 = vmatmul.bf16.gmra.mxu0 %v5307
        %v5380 = vpop.f32.mrf.mxu0
        %v5381 = vadd.f32 %v5367, %v5380
        %v5382 = vpop.f32.mrf.mxu0
        %v5383 = vadd.f32 %v5369, %v5382
        %5384 = vdwg.mxu0
        %5385 = vmatpush.bf16.msra.mxu0 0
        %5386 = vmatpush.bf16.msra.mxu0 0
        %5387 = vmatpush.bf16.msra.mxu0 0
        %5388 = vmatpush.bf16.msra.mxu0 0
        %5389 = vmatpush.bf16.msra.mxu0 0
        %5390 = vmatpush.bf16.msra.mxu0 0
        %5391 = vmatpush.bf16.msra.mxu0 %v1426
        %5392 = vmatpush.bf16.msra.mxu0 %v1361
        %5393 = vmatmul.bf16.gmra.mxu0 %v5313
        %v5394 = vpop.f32.mrf.mxu0
        %v5395 = vadd.f32 %v5381, %v5394
        %v5396 = vpop.f32.mrf.mxu0
        %v5397 = vadd.f32 %v5383, %v5396
        %5398 = vdwg.mxu0
        %5399 = vmatpush.bf16.msra.mxu0 %v1335
        %5400 = vmatpush.bf16.msra.mxu0 %v1332
        %5401 = vmatpush.bf16.msra.mxu0 %v1329
        %5402 = vmatpush.bf16.msra.mxu0 %v1326
        %5403 = vmatpush.bf16.msra.mxu0 %v1323
        %5404 = vmatpush.bf16.msra.mxu0 %v1320
        %5405 = vmatpush.bf16.msra.mxu0 %v1317
        %5406 = vmatpush.bf16.msra.mxu0 %v1314
        %5407 = vmatmul.bf16.gmra.mxu0 %v5306
        %v5408 = vpop.f32.mrf.mxu0
        %v5409 = vadd.f32 0.0, %v5408
        %v5410 = vpop.f32.mrf.mxu0
        %v5411 = vadd.f32 0.0, %v5410
        %5412 = vdwg.mxu0
        %5413 = vmatpush.bf16.msra.mxu0 %v1359
        %5414 = vmatpush.bf16.msra.mxu0 %v1356
        %5415 = vmatpush.bf16.msra.mxu0 %v1353
        %5416 = vmatpush.bf16.msra.mxu0 %v1350
        %5417 = vmatpush.bf16.msra.mxu0 %v1347
        %5418 = vmatpush.bf16.msra.mxu0 %v1344
        %5419 = vmatpush.bf16.msra.mxu0 %v1341
        %5420 = vmatpush.bf16.msra.mxu0 %v1338
        %5421 = vmatmul.bf16.gmra.mxu0 %v5307
        %v5422 = vpop.f32.mrf.mxu0
        %v5423 = vadd.f32 %v5409, %v5422
        %v5424 = vpop.f32.mrf.mxu0
        %v5425 = vadd.f32 %v5411, %v5424
        %5426 = vdwg.mxu0
        %5427 = vmatpush.bf16.msra.mxu0 0
        %5428 = vmatpush.bf16.msra.mxu0 0
        %5429 = vmatpush.bf16.msra.mxu0 0
        %5430 = vmatpush.bf16.msra.mxu0 0
        %5431 = vmatpush.bf16.msra.mxu0 0
        %5432 = vmatpush.bf16.msra.mxu0 0
        %5433 = vmatpush.bf16.msra.mxu0 %v1429
        %5434 = vmatpush.bf16.msra.mxu0 %v1362
        %5435 = vmatmul.bf16.gmra.mxu0 %v5313
        %v5436 = vpop.f32.mrf.mxu0
        %v5437 = vadd.f32 %v5423, %v5436
        %v5438 = vpop.f32.mrf.mxu0
        %v5439 = vadd.f32 %v5425, %v5438
        %5440 = vdwg.mxu0
        %v5441 = vpack.c.bf16 %v5395, %v5353
        %v5442 = vpack.c.bf16 %v5437, %v5437
        %v5443 = vpack.c.bf16 %v5397, %v5355
        %v5444 = vpack.c.bf16 %v5439, %v5439
        %v5449 = vunpack.c.l.b16 %v5441
        %v5450 = vunpack.c.h.b16 %v5441
        %v5451 = vunpack.c.l.b16 %v5442
        %v5452 = vunpack.c.l.b16 %v5443
        %v5453 = vunpack.c.h.b16 %v5443
        %v5454 = vunpack.c.l.b16 %v5444
        %v5455 = vpack.c.b16 %v5452, %v5449
        %v5456 = vpack.c.b16 %v5453, %v5450
        %v5457 = vpack.c.b16 %v5454, %v5451
        %5461 = vrot.lane.b32.xlu0 %v5455, 127
        %v5462 = vpop.permute.xlu0 %5461
        %5463 = vrot.lane.b32.xlu0 %v5456, 127
        %v5464 = vpop.permute.xlu0 %5463
        %5465 = vrot.lane.b32.xlu0 %v5457, 127
        %v5466 = vpop.permute.xlu0 %5465
        %v5467 = vsel %vm1583, %v5462, %v5464
        %v5468 = vsel %vm1583, %v5464, %v5466
        %5472 = vrot.lane.b32.xlu0 %v5455, 126
        %v5473 = vpop.permute.xlu0 %5472
        %5474 = vrot.lane.b32.xlu0 %v5456, 126
        %v5475 = vpop.permute.xlu0 %5474
        %5476 = vrot.lane.b32.xlu0 %v5457, 126
        %v5477 = vpop.permute.xlu0 %5476
        %v5478 = vsel %vm1595, %v5473, %v5475
        %v5479 = vsel %vm1595, %v5475, %v5477
        %5483 = vrot.lane.b32.xlu0 %v5455, 110
        %v5484 = vpop.permute.xlu0 %5483
        %5485 = vrot.lane.b32.xlu0 %v5456, 110
        %v5486 = vpop.permute.xlu0 %5485
        %5487 = vrot.lane.b32.xlu0 %v5457, 110
        %v5488 = vpop.permute.xlu0 %5487
        %v5489 = vsel %vm1607, %v5484, %v5486
        %v5490 = vsel %vm1607, %v5486, %v5488
        %5494 = vrot.lane.b32.xlu0 %v5455, 109
        %v5495 = vpop.permute.xlu0 %5494
        %5496 = vrot.lane.b32.xlu0 %v5456, 109
        %v5497 = vpop.permute.xlu0 %5496
        %5498 = vrot.lane.b32.xlu0 %v5457, 109
        %v5499 = vpop.permute.xlu0 %5498
        %v5500 = vsel %vm1619, %v5495, %v5497
        %v5501 = vsel %vm1619, %v5497, %v5499
        %5505 = vrot.lane.b32.xlu0 %v5455, 108
        %v5506 = vpop.permute.xlu0 %5505
        %5507 = vrot.lane.b32.xlu0 %v5456, 108
        %v5508 = vpop.permute.xlu0 %5507
        %5509 = vrot.lane.b32.xlu0 %v5457, 108
        %v5510 = vpop.permute.xlu0 %5509
        %v5511 = vsel %vm1631, %v5506, %v5508
        %v5512 = vsel %vm1631, %v5508, %v5510
        %5516 = vrot.lane.b32.xlu0 %v5455, 92
        %v5517 = vpop.permute.xlu0 %5516
        %5518 = vrot.lane.b32.xlu0 %v5456, 92
        %v5519 = vpop.permute.xlu0 %5518
        %5520 = vrot.lane.b32.xlu0 %v5457, 92
        %v5521 = vpop.permute.xlu0 %5520
        %v5522 = vsel %vm1643, %v5517, %v5519
        %v5523 = vsel %vm1643, %v5519, %v5521
        %5527 = vrot.lane.b32.xlu0 %v5455, 91
        %v5528 = vpop.permute.xlu0 %5527
        %5529 = vrot.lane.b32.xlu0 %v5456, 91
        %v5530 = vpop.permute.xlu0 %5529
        %5531 = vrot.lane.b32.xlu0 %v5457, 91
        %v5532 = vpop.permute.xlu0 %5531
        %v5533 = vsel %vm1655, %v5528, %v5530
        %v5534 = vsel %vm1655, %v5530, %v5532
        %5538 = vrot.lane.b32.xlu0 %v5455, 90
        %v5539 = vpop.permute.xlu0 %5538
        %5540 = vrot.lane.b32.xlu0 %v5456, 90
        %v5541 = vpop.permute.xlu0 %5540
        %5542 = vrot.lane.b32.xlu0 %v5457, 90
        %v5543 = vpop.permute.xlu0 %5542
        %v5544 = vsel %vm1667, %v5539, %v5541
        %v5545 = vsel %vm1667, %v5541, %v5543
        %v5551 = vunpack.c.l.b16 %v5310
        %v5552 = vunpack.c.h.b16 %v5310
        %v5553 = vunpack.c.l.b16 %v5311
        %v5554 = vunpack.c.h.b16 %v5311
        %v5555 = vpack.c.b16 %v5553, %v5551
        %v5556 = vpack.c.b16 %v5554, %v5552
        %v5559 = vsel %vm1682, %v5556, 0
        %5561 = vmatpush.bf16.msra.mxu0 %v5533
        %5562 = vmatpush.bf16.msra.mxu0 %v5522
        %5563 = vmatpush.bf16.msra.mxu0 %v5511
        %5564 = vmatpush.bf16.msra.mxu0 %v5500
        %5565 = vmatpush.bf16.msra.mxu0 %v5489
        %5566 = vmatpush.bf16.msra.mxu0 %v5478
        %5567 = vmatpush.bf16.msra.mxu0 %v5467
        %5568 = vmatpush.bf16.msra.mxu0 %v5455
        %5569 = vmatmul.bf16.gmra.mxu0 %v5555
        %v5570 = vpop.f32.mrf.mxu0
        %v5571 = vadd.f32 0.0, %v5570
        %v5572 = vpop.f32.mrf.mxu0
        %v5573 = vadd.f32 0.0, %v5572
        %5574 = vdwg.mxu0
        %5575 = vmatpush.bf16.msra.mxu0 0
        %5576 = vmatpush.bf16.msra.mxu0 0
        %5577 = vmatpush.bf16.msra.mxu0 0
        %5578 = vmatpush.bf16.msra.mxu0 0
        %5579 = vmatpush.bf16.msra.mxu0 0
        %5580 = vmatpush.bf16.msra.mxu0 0
        %5581 = vmatpush.bf16.msra.mxu0 0
        %5582 = vmatpush.bf16.msra.mxu0 %v5544
        %5583 = vmatmul.bf16.gmra.mxu0 %v5559
        %v5584 = vpop.f32.mrf.mxu0
        %v5585 = vadd.f32 %v5571, %v5584
        %v5586 = vpop.f32.mrf.mxu0
        %v5587 = vadd.f32 %v5573, %v5586
        %5588 = vdwg.mxu0
        %5589 = vmatpush.bf16.msra.mxu0 %v5534
        %5590 = vmatpush.bf16.msra.mxu0 %v5523
        %5591 = vmatpush.bf16.msra.mxu0 %v5512
        %5592 = vmatpush.bf16.msra.mxu0 %v5501
        %5593 = vmatpush.bf16.msra.mxu0 %v5490
        %5594 = vmatpush.bf16.msra.mxu0 %v5479
        %5595 = vmatpush.bf16.msra.mxu0 %v5468
        %5596 = vmatpush.bf16.msra.mxu0 %v5456
        %5597 = vmatmul.bf16.gmra.mxu0 %v5555
        %v5598 = vpop.f32.mrf.mxu0
        %v5599 = vadd.f32 0.0, %v5598
        %v5600 = vpop.f32.mrf.mxu0
        %v5601 = vadd.f32 0.0, %v5600
        %5602 = vdwg.mxu0
        %5603 = vmatpush.bf16.msra.mxu0 0
        %5604 = vmatpush.bf16.msra.mxu0 0
        %5605 = vmatpush.bf16.msra.mxu0 0
        %5606 = vmatpush.bf16.msra.mxu0 0
        %5607 = vmatpush.bf16.msra.mxu0 0
        %5608 = vmatpush.bf16.msra.mxu0 0
        %5609 = vmatpush.bf16.msra.mxu0 0
        %5610 = vmatpush.bf16.msra.mxu0 %v5545
        %5611 = vmatmul.bf16.gmra.mxu0 %v5559
        %v5612 = vpop.f32.mrf.mxu0
        %v5613 = vadd.f32 %v5599, %v5612
        %v5614 = vpop.f32.mrf.mxu0
        %v5615 = vadd.f32 %v5601, %v5614
        %5616 = vdwg.mxu0
        %5617 = vmatpush.bf16.msra.mxu0 %v5532
        %5618 = vmatpush.bf16.msra.mxu0 %v5521
        %5619 = vmatpush.bf16.msra.mxu0 %v5510
        %5620 = vmatpush.bf16.msra.mxu0 %v5499
        %5621 = vmatpush.bf16.msra.mxu0 %v5488
        %5622 = vmatpush.bf16.msra.mxu0 %v5477
        %5623 = vmatpush.bf16.msra.mxu0 %v5466
        %5624 = vmatpush.bf16.msra.mxu0 %v5457
        %5625 = vmatmul.bf16.gmra.mxu0 %v5555
        %v5626 = vpop.f32.mrf.mxu0
        %v5627 = vadd.f32 0.0, %v5626
        %v5628 = vpop.f32.mrf.mxu0
        %v5629 = vadd.f32 0.0, %v5628
        %5630 = vdwg.mxu0
        %5631 = vmatpush.bf16.msra.mxu0 0
        %5632 = vmatpush.bf16.msra.mxu0 0
        %5633 = vmatpush.bf16.msra.mxu0 0
        %5634 = vmatpush.bf16.msra.mxu0 0
        %5635 = vmatpush.bf16.msra.mxu0 0
        %5636 = vmatpush.bf16.msra.mxu0 0
        %5637 = vmatpush.bf16.msra.mxu0 0
        %5638 = vmatpush.bf16.msra.mxu0 %v5543
        %5639 = vmatmul.bf16.gmra.mxu0 %v5559
        %v5640 = vpop.f32.mrf.mxu0
        %v5641 = vadd.f32 %v5627, %v5640
        %v5642 = vpop.f32.mrf.mxu0
        %v5643 = vadd.f32 %v5629, %v5642
        %5644 = vdwg.mxu0
        %v5646 = vsel %vm1417, %v5641, 0
        %v5649 = vsel %vm1417, %v5643, 0
        %5651 = vmatpush.msra.mxu0 %v590
        %5652 = vmatpush.msra.mxu0 %v589
        %5653 = vmatpush.msra.mxu0 %v588
        %5654 = vmatpush.msra.mxu0 %v587
        %5655 = vmatpush.msra.mxu0 %v586
        %5656 = vmatpush.msra.mxu0 %v585
        %5657 = vmatpush.msra.mxu0 %v584
        %5658 = vmatpush.msra.mxu0 %v583
        %5659 = vmatpush.msra.mxu0 %v582
        %5660 = vmatpush.msra.mxu0 %v581
        %5661 = vmatpush.msra.mxu0 %v580
        %5662 = vmatpush.msra.mxu0 %v579
        %5663 = vmatpush.msra.mxu0 %v578
        %5664 = vmatpush.msra.mxu0 %v577
        %5665 = vmatpush.msra.mxu0 %v576
        %5666 = vmatpush.msra.mxu0 %v575
        %5667 = vmatmul.f32.gmra.mxu0 %v5585
        %v5668 = vpop.f32.mrf.mxu0
        %v5669 = vadd.f32 0.0, %v5668
        %5670 = vmatmul.f32.gmra.mxu0 %v5587
        %v5671 = vpop.f32.mrf.mxu0
        %v5672 = vadd.f32 0.0, %v5671
        %5673 = vdwg.mxu0
        %5674 = vmatpush.msra.mxu0 %v606
        %5675 = vmatpush.msra.mxu0 %v605
        %5676 = vmatpush.msra.mxu0 %v604
        %5677 = vmatpush.msra.mxu0 %v603
        %5678 = vmatpush.msra.mxu0 %v602
        %5679 = vmatpush.msra.mxu0 %v601
        %5680 = vmatpush.msra.mxu0 %v600
        %5681 = vmatpush.msra.mxu0 %v599
        %5682 = vmatpush.msra.mxu0 %v598
        %5683 = vmatpush.msra.mxu0 %v597
        %5684 = vmatpush.msra.mxu0 %v596
        %5685 = vmatpush.msra.mxu0 %v595
        %5686 = vmatpush.msra.mxu0 %v594
        %5687 = vmatpush.msra.mxu0 %v593
        %5688 = vmatpush.msra.mxu0 %v592
        %5689 = vmatpush.msra.mxu0 %v591
        %5690 = vmatmul.f32.gmra.mxu0 %v5613
        %v5691 = vpop.f32.mrf.mxu0
        %v5692 = vadd.f32 %v5669, %v5691
        %5693 = vmatmul.f32.gmra.mxu0 %v5615
        %v5694 = vpop.f32.mrf.mxu0
        %v5695 = vadd.f32 %v5672, %v5694
        %5696 = vdwg.mxu0
        %5697 = vmatpush.msra.mxu0 0.0
        %5698 = vmatpush.msra.mxu0 0.0
        %5699 = vmatpush.msra.mxu0 0.0
        %5700 = vmatpush.msra.mxu0 0.0
        %5701 = vmatpush.msra.mxu0 0.0
        %5702 = vmatpush.msra.mxu0 0.0
        %5703 = vmatpush.msra.mxu0 0.0
        %5704 = vmatpush.msra.mxu0 0.0
        %5705 = vmatpush.msra.mxu0 0.0
        %5706 = vmatpush.msra.mxu0 0.0
        %5707 = vmatpush.msra.mxu0 0.0
        %5708 = vmatpush.msra.mxu0 0.0
        %5709 = vmatpush.msra.mxu0 %v1778
        %5710 = vmatpush.msra.mxu0 %v609
        %5711 = vmatpush.msra.mxu0 %v608
        %5712 = vmatpush.msra.mxu0 %v607
        %5713 = vmatmul.f32.gmra.mxu0 %v5646
        %v5714 = vpop.f32.mrf.mxu0
        %v5715 = vadd.f32 %v5692, %v5714
        %5716 = vmatmul.f32.gmra.mxu0 %v5649
        %v5717 = vpop.f32.mrf.mxu0
        %v5718 = vadd.f32 %v5695, %v5717
        %5719 = vdwg.mxu0
        %5721 = vset.pattern.permute.xlu0 0
        %5722 = vperm.xlu0 %5721, %v5715
        %v5723 = vpop.permute.xlu0 %5722
        %5726 = vset.pattern.permute.xlu0 0
        %5727 = vperm.xlu0 %5726, %v5718
        %v5728 = vpop.permute.xlu0 %5727
        %v5730 = vsub.f32 %v5585, %v5723
        %v5731 = vsub.f32 %v5613, %v5723
        %v5732 = vsub.f32 %v5641, %v5723
        %v5733 = vsub.f32 %v5587, %v5728
        %v5734 = vsub.f32 %v5615, %v5728
        %v5735 = vsub.f32 %v5643, %v5728
        %v5736 = vmul.f32 %v5730, %v5730
        %v5737 = vmul.f32 %v5731, %v5731
        %v5738 = vmul.f32 %v5732, %v5732
        %v5739 = vmul.f32 %v5733, %v5733
        %v5740 = vmul.f32 %v5734, %v5734
        %v5741 = vmul.f32 %v5735, %v5735
        %v5743 = vsel %vm1417, %v5738, 0
        %v5746 = vsel %vm1417, %v5741, 0
        %5748 = vmatpush.msra.mxu0 %v590
        %5749 = vmatpush.msra.mxu0 %v589
        %5750 = vmatpush.msra.mxu0 %v588
        %5751 = vmatpush.msra.mxu0 %v587
        %5752 = vmatpush.msra.mxu0 %v586
        %5753 = vmatpush.msra.mxu0 %v585
        %5754 = vmatpush.msra.mxu0 %v584
        %5755 = vmatpush.msra.mxu0 %v583
        %5756 = vmatpush.msra.mxu0 %v582
        %5757 = vmatpush.msra.mxu0 %v581
        %5758 = vmatpush.msra.mxu0 %v580
        %5759 = vmatpush.msra.mxu0 %v579
        %5760 = vmatpush.msra.mxu0 %v578
        %5761 = vmatpush.msra.mxu0 %v577
        %5762 = vmatpush.msra.mxu0 %v576
        %5763 = vmatpush.msra.mxu0 %v575
        %5764 = vmatmul.f32.gmra.mxu0 %v5736
        %v5765 = vpop.f32.mrf.mxu0
        %v5766 = vadd.f32 1e-05, %v5765
        %5767 = vmatmul.f32.gmra.mxu0 %v5739
        %v5768 = vpop.f32.mrf.mxu0
        %v5769 = vadd.f32 1e-05, %v5768
        %5770 = vdwg.mxu0
        %5771 = vmatpush.msra.mxu0 %v606
        %5772 = vmatpush.msra.mxu0 %v605
        %5773 = vmatpush.msra.mxu0 %v604
        %5774 = vmatpush.msra.mxu0 %v603
        %5775 = vmatpush.msra.mxu0 %v602
        %5776 = vmatpush.msra.mxu0 %v601
        %5777 = vmatpush.msra.mxu0 %v600
        %5778 = vmatpush.msra.mxu0 %v599
        %5779 = vmatpush.msra.mxu0 %v598
        %5780 = vmatpush.msra.mxu0 %v597
        %5781 = vmatpush.msra.mxu0 %v596
        %5782 = vmatpush.msra.mxu0 %v595
        %5783 = vmatpush.msra.mxu0 %v594
        %5784 = vmatpush.msra.mxu0 %v593
        %5785 = vmatpush.msra.mxu0 %v592
        %5786 = vmatpush.msra.mxu0 %v591
        %5787 = vmatmul.f32.gmra.mxu0 %v5737
        %v5788 = vpop.f32.mrf.mxu0
        %v5789 = vadd.f32 %v5766, %v5788
        %5790 = vmatmul.f32.gmra.mxu0 %v5740
        %v5791 = vpop.f32.mrf.mxu0
        %v5792 = vadd.f32 %v5769, %v5791
        %5793 = vdwg.mxu0
        %5794 = vmatpush.msra.mxu0 0.0
        %5795 = vmatpush.msra.mxu0 0.0
        %5796 = vmatpush.msra.mxu0 0.0
        %5797 = vmatpush.msra.mxu0 0.0
        %5798 = vmatpush.msra.mxu0 0.0
        %5799 = vmatpush.msra.mxu0 0.0
        %5800 = vmatpush.msra.mxu0 0.0
        %5801 = vmatpush.msra.mxu0 0.0
        %5802 = vmatpush.msra.mxu0 0.0
        %5803 = vmatpush.msra.mxu0 0.0
        %5804 = vmatpush.msra.mxu0 0.0
        %5805 = vmatpush.msra.mxu0 0.0
        %5806 = vmatpush.msra.mxu0 %v1778
        %5807 = vmatpush.msra.mxu0 %v609
        %5808 = vmatpush.msra.mxu0 %v608
        %5809 = vmatpush.msra.mxu0 %v607
        %5810 = vmatmul.f32.gmra.mxu0 %v5743
        %v5811 = vpop.f32.mrf.mxu0
        %v5812 = vadd.f32 %v5789, %v5811
        %5813 = vmatmul.f32.gmra.mxu0 %v5746
        %v5814 = vpop.f32.mrf.mxu0
        %v5815 = vadd.f32 %v5792, %v5814
        %5816 = vdwg.mxu0
        %v5817 = vrsqrt.pop %v5812
        %v5818 = vmul.f32 %v5817, %v5812
        %v5819 = vmul.f32 %v5818, %v5817
        %v5820 = vmul.f32 0.5, %v5819
        %v5821 = vsub.f32 1.5, %v5820
        %v5822 = vmul.f32 %v5817, %v5821
        %vm5823 = vweird.f32 %v5812
        %vm5824 = vweird.f32 %v5817
        %vm5825 = vmor %vm5823, %vm5824
        %v5826 = vsel %vm5825, %v5817, %v5822
        %v5827 = vrsqrt.pop %v5815
        %v5828 = vmul.f32 %v5827, %v5815
        %v5829 = vmul.f32 %v5828, %v5827
        %v5830 = vmul.f32 0.5, %v5829
        %v5831 = vsub.f32 1.5, %v5830
        %v5832 = vmul.f32 %v5827, %v5831
        %vm5833 = vweird.f32 %v5815
        %vm5834 = vweird.f32 %v5827
        %vm5835 = vmor %vm5833, %vm5834
        %v5836 = vsel %vm5835, %v5827, %v5832
        %5838 = vset.pattern.permute.xlu0 0
        %5839 = vperm.xlu0 %5838, %v5826
        %v5840 = vpop.permute.xlu0 %5839
        %5843 = vset.pattern.permute.xlu0 0
        %5844 = vperm.xlu0 %5843, %v5836
        %v5845 = vpop.permute.xlu0 %5844
        %v5847 = vmul.f32 %v5730, %v5840
        %v5848 = vmul.f32 %v5731, %v5840
        %v5849 = vmul.f32 %v5732, %v5840
        %v5850 = vmul.f32 %v5733, %v5845
        %v5851 = vmul.f32 %v5734, %v5845
        %v5852 = vmul.f32 %v5735, %v5845
        %v5853 = vadd.f32 %v4747, %v5847
        %v5854 = vadd.f32 %v4748, %v5848
        %v5855 = vadd.f32 %v4749, %v5849
        %v5856 = vadd.f32 %v4750, %v5850
        %v5857 = vadd.f32 %v4751, %v5851
        %v5858 = vadd.f32 %v4752, %v5852
        %v5859 = vpack.c.bf16 %v5856, %v5853
        %v5860 = vpack.c.bf16 %v5857, %v5854
        %v5861 = vpack.c.bf16 %v5858, %v5855
        %v5862 = vld [vmem:[#allocation2] sm:$0xff]
        %v5863 = vld [vmem:[#allocation2 + $0x8] sm:$0xff]
        %v5864 = vld [vmem:[#allocation2 + $0x10] sm:$0xff]
        %v5865 = vld [vmem:[#allocation2 + $0x18] sm:$0xff]
        %v5866 = vld [vmem:[#allocation2 + $0x20] sm:$0xff]
        %v5867 = vld [vmem:[#allocation2 + $0x28] sm:$0xff]
        %v5868 = vld [vmem:[#allocation2 + $0x30] sm:$0xff]
        %v5869 = vld [vmem:[#allocation2 + $0x38] sm:$0xff]
        %v5870 = vld [vmem:[#allocation2 + $0x40] sm:$0xff]
        %v5871 = vld [vmem:[#allocation2 + $0x48] sm:$0xff]
        %v5872 = vld [vmem:[#allocation2 + $0x50] sm:$0xff]
        %v5873 = vld [vmem:[#allocation2 + $0x58] sm:$0xff]
        %v5874 = vld [vmem:[#allocation2 + $0x60] sm:$0xff]
        %v5875 = vld [vmem:[#allocation2 + $0x68] sm:$0xff]
        %v5876 = vld [vmem:[#allocation2 + $0x70] sm:$0xff]
        %v5877 = vld [vmem:[#allocation2 + $0x78] sm:$0xff]
        %v5878 = vld [vmem:[#allocation2 + $0x80] sm:$0xff]
        %v5879 = vld [vmem:[#allocation2 + $0x88] sm:$0xff]
        %v5880 = vld [vmem:[#allocation2 + $0x90] sm:$0xff]
        %v5881 = vld [vmem:[#allocation2 + $0x98] sm:$0xff]
        %v5882 = vld [vmem:[#allocation2 + $0xa0] sm:$0xff]
        %v5883 = vld [vmem:[#allocation2 + $0xa8] sm:$0xff]
        %v5884 = vld [vmem:[#allocation2 + $0xb0] sm:$0xff]
        %v5885 = vld [vmem:[#allocation2 + $0xb8] sm:$0xff]
        %v5886 = vld [vmem:[#allocation2 + $0xc0] sm:$0xff]
        %v5887 = vld [vmem:[#allocation2 + $0xc8] sm:$0xff]
        %v5888 = vld [vmem:[#allocation2 + $0xd0] sm:$0xff]
        %v5889 = vld [vmem:[#allocation2 + $0xd8] sm:$0xff]
        %v5890 = vld [vmem:[#allocation2 + $0xe0] sm:$0xff]
        %v5891 = vld [vmem:[#allocation2 + $0xe8] sm:$0xff]
        %v5892 = vld [vmem:[#allocation2 + $0xf0] sm:$0xff]
        %v5893 = vld [vmem:[#allocation2 + $0xf8] sm:$0xff]
        %v5894 = vld [vmem:[#allocation2 + $0x100] sm:$0xff]
        %v5895 = vld [vmem:[#allocation2 + $0x108] sm:$0xff]
        %v5896 = vld [vmem:[#allocation2 + $0x110] sm:$0xff]
        %v5897 = vld [vmem:[#allocation2 + $0x118] sm:$0xff]
        %v5898 = vld [vmem:[#allocation2 + $0x120] sm:$0xff]
        %v5899 = vld [vmem:[#allocation2 + $0x128] sm:$0xff]
        %v5900 = vld [vmem:[#allocation2 + $0x130] sm:$0xff]
        %v5901 = vld [vmem:[#allocation2 + $0x138] sm:$0xff]
        %v5902 = vld [vmem:[#allocation2 + $0x140] sm:$0xff]
        %v5903 = vld [vmem:[#allocation2 + $0x148] sm:$0xff]
        %v5904 = vld [vmem:[#allocation2 + $0x150] sm:$0xff]
        %v5905 = vld [vmem:[#allocation2 + $0x158] sm:$0xff]
        %v5906 = vld [vmem:[#allocation2 + $0x160] sm:$0xff]
        %v5907 = vld [vmem:[#allocation2 + $0x168] sm:$0xff]
        %v5908 = vld [vmem:[#allocation2 + $0x170] sm:$0xff]
        %v5909 = vld [vmem:[#allocation2 + $0x178] sm:$0xff]
        %v5910 = vld [vmem:[#allocation2 + $0x180] sm:$0xff]
        %v5911 = vld [vmem:[#allocation2 + $0x188] sm:$0xff]
        %v5912 = vld [vmem:[#allocation2 + $0x190] sm:$0xff]
        %v5913 = vld [vmem:[#allocation2 + $0x198] sm:$0xff]
        %v5914 = vld [vmem:[#allocation2 + $0x1a0] sm:$0xff]
        %v5915 = vld [vmem:[#allocation2 + $0x1a8] sm:$0xff]
        %v5916 = vld [vmem:[#allocation2 + $0x1b0] sm:$0xff]
        %v5917 = vld [vmem:[#allocation2 + $0x1b8] sm:$0xff]
        %v5918 = vld [vmem:[#allocation2 + $0x1c0] sm:$0xff]
        %v5919 = vld [vmem:[#allocation2 + $0x1c8] sm:$0xff]
        %v5920 = vld [vmem:[#allocation2 + $0x1d0] sm:$0xff]
        %v5921 = vld [vmem:[#allocation2 + $0x1d8] sm:$0xff]
        %v5922 = vld [vmem:[#allocation2 + $0x1e0] sm:$0xff]
        %v5923 = vld [vmem:[#allocation2 + $0x1e8] sm:$0xff]
        %v5924 = vld [vmem:[#allocation2 + $0x1f0] sm:$0xff]
        %v5925 = vld [vmem:[#allocation2 + $0x1f8] sm:$0xff]
        %v5926 = vld [vmem:[#allocation2 + $0x200] sm:$0xff]
        %v5927 = vld [vmem:[#allocation2 + $0x208] sm:$0xff]
        %v5928 = vld [vmem:[#allocation2 + $0x210] sm:$0xff]
        %v5929 = vld [vmem:[#allocation2 + $0x218] sm:$0xff]
        %v5930 = vld [vmem:[#allocation2 + $0x220] sm:$0xff]
        %v5931 = vld [vmem:[#allocation2 + $0x228] sm:$0xff]
        %v5932 = vld [vmem:[#allocation2 + $0x230] sm:$0x77]
        %v5933 = vld [vmem:[#allocation2 + $0x238] sm:$0x77]
        %v5934 = vld [vmem:[%s10] sm:$0xff]
        %v6007 = vunpack.c.l.b16 %v5862
        %v6008 = vunpack.c.h.b16 %v5862
        %v6009 = vunpack.c.l.b16 %v5863
        %v6010 = vunpack.c.h.b16 %v5863
        %v6011 = vunpack.c.l.b16 %v5864
        %v6012 = vunpack.c.h.b16 %v5864
        %v6013 = vunpack.c.l.b16 %v5865
        %v6014 = vunpack.c.h.b16 %v5865
        %v6015 = vunpack.c.l.b16 %v5866
        %v6016 = vunpack.c.h.b16 %v5866
        %v6017 = vunpack.c.l.b16 %v5867
        %v6018 = vunpack.c.h.b16 %v5867
        %v6019 = vunpack.c.l.b16 %v5868
        %v6020 = vunpack.c.h.b16 %v5868
        %v6021 = vunpack.c.l.b16 %v5869
        %v6022 = vunpack.c.h.b16 %v5869
        %v6023 = vunpack.c.l.b16 %v5870
        %v6024 = vunpack.c.h.b16 %v5870
        %v6025 = vunpack.c.l.b16 %v5871
        %v6026 = vunpack.c.h.b16 %v5871
        %v6027 = vunpack.c.l.b16 %v5872
        %v6028 = vunpack.c.h.b16 %v5872
        %v6029 = vunpack.c.l.b16 %v5873
        %v6030 = vunpack.c.h.b16 %v5873
        %v6031 = vunpack.c.l.b16 %v5874
        %v6032 = vunpack.c.h.b16 %v5874
        %v6033 = vunpack.c.l.b16 %v5875
        %v6034 = vunpack.c.h.b16 %v5875
        %v6035 = vunpack.c.l.b16 %v5876
        %v6036 = vunpack.c.h.b16 %v5876
        %v6037 = vunpack.c.l.b16 %v5877
        %v6038 = vunpack.c.h.b16 %v5877
        %v6039 = vunpack.c.l.b16 %v5878
        %v6040 = vunpack.c.h.b16 %v5878
        %v6041 = vunpack.c.l.b16 %v5879
        %v6042 = vunpack.c.h.b16 %v5879
        %v6043 = vunpack.c.l.b16 %v5880
        %v6044 = vunpack.c.h.b16 %v5880
        %v6045 = vunpack.c.l.b16 %v5881
        %v6046 = vunpack.c.h.b16 %v5881
        %v6047 = vunpack.c.l.b16 %v5882
        %v6048 = vunpack.c.h.b16 %v5882
        %v6049 = vunpack.c.l.b16 %v5883
        %v6050 = vunpack.c.h.b16 %v5883
        %v6051 = vunpack.c.l.b16 %v5884
        %v6052 = vunpack.c.h.b16 %v5884
        %v6053 = vunpack.c.l.b16 %v5885
        %v6054 = vunpack.c.h.b16 %v5885
        %v6055 = vunpack.c.l.b16 %v5886
        %v6056 = vunpack.c.h.b16 %v5886
        %v6057 = vunpack.c.l.b16 %v5887
        %v6058 = vunpack.c.h.b16 %v5887
        %v6059 = vunpack.c.l.b16 %v5888
        %v6060 = vunpack.c.h.b16 %v5888
        %v6061 = vunpack.c.l.b16 %v5889
        %v6062 = vunpack.c.h.b16 %v5889
        %v6063 = vunpack.c.l.b16 %v5890
        %v6064 = vunpack.c.h.b16 %v5890
        %v6065 = vunpack.c.l.b16 %v5891
        %v6066 = vunpack.c.h.b16 %v5891
        %v6067 = vunpack.c.l.b16 %v5892
        %v6068 = vunpack.c.h.b16 %v5892
        %v6069 = vunpack.c.l.b16 %v5893
        %v6070 = vunpack.c.h.b16 %v5893
        %v6071 = vunpack.c.l.b16 %v5894
        %v6072 = vunpack.c.h.b16 %v5894
        %v6073 = vunpack.c.l.b16 %v5895
        %v6074 = vunpack.c.h.b16 %v5895
        %v6075 = vunpack.c.l.b16 %v5896
        %v6076 = vunpack.c.h.b16 %v5896
        %v6077 = vunpack.c.l.b16 %v5897
        %v6078 = vunpack.c.h.b16 %v5897
        %v6079 = vunpack.c.l.b16 %v5898
        %v6080 = vunpack.c.h.b16 %v5898
        %v6081 = vunpack.c.l.b16 %v5899
        %v6082 = vunpack.c.h.b16 %v5899
        %v6083 = vunpack.c.l.b16 %v5900
        %v6084 = vunpack.c.h.b16 %v5900
        %v6085 = vunpack.c.l.b16 %v5901
        %v6086 = vunpack.c.h.b16 %v5901
        %v6087 = vunpack.c.l.b16 %v5902
        %v6088 = vunpack.c.h.b16 %v5902
        %v6089 = vunpack.c.l.b16 %v5903
        %v6090 = vunpack.c.h.b16 %v5903
        %v6091 = vunpack.c.l.b16 %v5904
        %v6092 = vunpack.c.h.b16 %v5904
        %v6093 = vunpack.c.l.b16 %v5905
        %v6094 = vunpack.c.h.b16 %v5905
        %v6095 = vunpack.c.l.b16 %v5906
        %v6096 = vunpack.c.h.b16 %v5906
        %v6097 = vunpack.c.l.b16 %v5907
        %v6098 = vunpack.c.h.b16 %v5907
        %v6099 = vunpack.c.l.b16 %v5908
        %v6100 = vunpack.c.h.b16 %v5908
        %v6101 = vunpack.c.l.b16 %v5909
        %v6102 = vunpack.c.h.b16 %v5909
        %v6103 = vunpack.c.l.b16 %v5910
        %v6104 = vunpack.c.h.b16 %v5910
        %v6105 = vunpack.c.l.b16 %v5911
        %v6106 = vunpack.c.h.b16 %v5911
        %v6107 = vunpack.c.l.b16 %v5912
        %v6108 = vunpack.c.h.b16 %v5912
        %v6109 = vunpack.c.l.b16 %v5913
        %v6110 = vunpack.c.h.b16 %v5913
        %v6111 = vunpack.c.l.b16 %v5914
        %v6112 = vunpack.c.h.b16 %v5914
        %v6113 = vunpack.c.l.b16 %v5915
        %v6114 = vunpack.c.h.b16 %v5915
        %v6115 = vunpack.c.l.b16 %v5916
        %v6116 = vunpack.c.h.b16 %v5916
        %v6117 = vunpack.c.l.b16 %v5917
        %v6118 = vunpack.c.h.b16 %v5917
        %v6119 = vunpack.c.l.b16 %v5918
        %v6120 = vunpack.c.h.b16 %v5918
        %v6121 = vunpack.c.l.b16 %v5919
        %v6122 = vunpack.c.h.b16 %v5919
        %v6123 = vunpack.c.l.b16 %v5920
        %v6124 = vunpack.c.h.b16 %v5920
        %v6125 = vunpack.c.l.b16 %v5921
        %v6126 = vunpack.c.h.b16 %v5921
        %v6127 = vunpack.c.l.b16 %v5922
        %v6128 = vunpack.c.h.b16 %v5922
        %v6129 = vunpack.c.l.b16 %v5923
        %v6130 = vunpack.c.h.b16 %v5923
        %v6131 = vunpack.c.l.b16 %v5924
        %v6132 = vunpack.c.h.b16 %v5924
        %v6133 = vunpack.c.l.b16 %v5925
        %v6134 = vunpack.c.h.b16 %v5925
        %v6135 = vunpack.c.l.b16 %v5926
        %v6136 = vunpack.c.h.b16 %v5926
        %v6137 = vunpack.c.l.b16 %v5927
        %v6138 = vunpack.c.h.b16 %v5927
        %v6139 = vunpack.c.l.b16 %v5928
        %v6140 = vunpack.c.h.b16 %v5928
        %v6141 = vunpack.c.l.b16 %v5929
        %v6142 = vunpack.c.h.b16 %v5929
        %v6143 = vunpack.c.l.b16 %v5930
        %v6144 = vunpack.c.h.b16 %v5930
        %v6145 = vunpack.c.l.b16 %v5931
        %v6146 = vunpack.c.h.b16 %v5931
        %v6147 = vunpack.c.l.b16 %v5932
        %v6148 = vunpack.c.h.b16 %v5932
        %v6149 = vunpack.c.l.b16 %v5933
        %v6150 = vunpack.c.h.b16 %v5933
        %v6151 = vpack.c.b16 %v6011, %v6007
        %v6152 = vpack.c.b16 %v6012, %v6008
        %v6153 = vpack.c.b16 %v6013, %v6009
        %v6154 = vpack.c.b16 %v6014, %v6010
        %v6155 = vpack.c.b16 %v6019, %v6015
        %v6156 = vpack.c.b16 %v6020, %v6016
        %v6157 = vpack.c.b16 %v6021, %v6017
        %v6158 = vpack.c.b16 %v6022, %v6018
        %v6159 = vpack.c.b16 %v6027, %v6023
        %v6160 = vpack.c.b16 %v6028, %v6024
        %v6161 = vpack.c.b16 %v6029, %v6025
        %v6162 = vpack.c.b16 %v6030, %v6026
        %v6163 = vpack.c.b16 %v6035, %v6031
        %v6164 = vpack.c.b16 %v6036, %v6032
        %v6165 = vpack.c.b16 %v6037, %v6033
        %v6166 = vpack.c.b16 %v6038, %v6034
        %v6167 = vpack.c.b16 %v6043, %v6039
        %v6168 = vpack.c.b16 %v6044, %v6040
        %v6169 = vpack.c.b16 %v6045, %v6041
        %v6170 = vpack.c.b16 %v6046, %v6042
        %v6171 = vpack.c.b16 %v6051, %v6047
        %v6172 = vpack.c.b16 %v6052, %v6048
        %v6173 = vpack.c.b16 %v6053, %v6049
        %v6174 = vpack.c.b16 %v6054, %v6050
        %v6175 = vpack.c.b16 %v6059, %v6055
        %v6176 = vpack.c.b16 %v6060, %v6056
        %v6177 = vpack.c.b16 %v6061, %v6057
        %v6178 = vpack.c.b16 %v6062, %v6058
        %v6179 = vpack.c.b16 %v6067, %v6063
        %v6180 = vpack.c.b16 %v6068, %v6064
        %v6181 = vpack.c.b16 %v6069, %v6065
        %v6182 = vpack.c.b16 %v6070, %v6066
        %v6183 = vpack.c.b16 %v6075, %v6071
        %v6184 = vpack.c.b16 %v6076, %v6072
        %v6185 = vpack.c.b16 %v6077, %v6073
        %v6186 = vpack.c.b16 %v6078, %v6074
        %v6187 = vpack.c.b16 %v6083, %v6079
        %v6188 = vpack.c.b16 %v6084, %v6080
        %v6189 = vpack.c.b16 %v6085, %v6081
        %v6190 = vpack.c.b16 %v6086, %v6082
        %v6191 = vpack.c.b16 %v6091, %v6087
        %v6192 = vpack.c.b16 %v6092, %v6088
        %v6193 = vpack.c.b16 %v6093, %v6089
        %v6194 = vpack.c.b16 %v6094, %v6090
        %v6195 = vpack.c.b16 %v6099, %v6095
        %v6196 = vpack.c.b16 %v6100, %v6096
        %v6197 = vpack.c.b16 %v6101, %v6097
        %v6198 = vpack.c.b16 %v6102, %v6098
        %v6199 = vpack.c.b16 %v6107, %v6103
        %v6200 = vpack.c.b16 %v6108, %v6104
        %v6201 = vpack.c.b16 %v6109, %v6105
        %v6202 = vpack.c.b16 %v6110, %v6106
        %v6203 = vpack.c.b16 %v6115, %v6111
        %v6204 = vpack.c.b16 %v6116, %v6112
        %v6205 = vpack.c.b16 %v6117, %v6113
        %v6206 = vpack.c.b16 %v6118, %v6114
        %v6207 = vpack.c.b16 %v6123, %v6119
        %v6208 = vpack.c.b16 %v6124, %v6120
        %v6209 = vpack.c.b16 %v6125, %v6121
        %v6210 = vpack.c.b16 %v6126, %v6122
        %v6211 = vpack.c.b16 %v6131, %v6127
        %v6212 = vpack.c.b16 %v6132, %v6128
        %v6213 = vpack.c.b16 %v6133, %v6129
        %v6214 = vpack.c.b16 %v6134, %v6130
        %v6215 = vpack.c.b16 %v6139, %v6135
        %v6216 = vpack.c.b16 %v6140, %v6136
        %v6217 = vpack.c.b16 %v6141, %v6137
        %v6218 = vpack.c.b16 %v6142, %v6138
        %v6219 = vpack.c.b16 %v6147, %v6143
        %v6220 = vpack.c.b16 %v6148, %v6144
        %v6221 = vpack.c.b16 %v6149, %v6145
        %v6222 = vpack.c.b16 %v6150, %v6146
        %v6292 = vsel %vm1417, %v5861, 0
        %v6295 = vsel %vm1421, %v6219, 0
        %v6298 = vsel %vm1421, %v6220, 0
        %v6301 = vsel %vm1421, %v6221, 0
        %v6304 = vsel %vm1421, %v6222, 0
        %6306 = vmatpush.bf16.msra.mxu0 %v6179
        %6307 = vmatpush.bf16.msra.mxu0 %v6175
        %6308 = vmatpush.bf16.msra.mxu0 %v6171
        %6309 = vmatpush.bf16.msra.mxu0 %v6167
        %6310 = vmatpush.bf16.msra.mxu0 %v6163
        %6311 = vmatpush.bf16.msra.mxu0 %v6159
        %6312 = vmatpush.bf16.msra.mxu0 %v6155
        %6313 = vmatpush.bf16.msra.mxu0 %v6151
        %6314 = vmatmul.bf16.gmra.mxu0 %v5859
        %v6315 = vpop.f32.mrf.mxu0
        %v6316 = vadd.f32 0.0, %v6315
        %v6317 = vpop.f32.mrf.mxu0
        %v6318 = vadd.f32 0.0, %v6317
        %6319 = vdwg.mxu0
        %6320 = vmatpush.bf16.msra.mxu0 %v6211
        %6321 = vmatpush.bf16.msra.mxu0 %v6207
        %6322 = vmatpush.bf16.msra.mxu0 %v6203
        %6323 = vmatpush.bf16.msra.mxu0 %v6199
        %6324 = vmatpush.bf16.msra.mxu0 %v6195
        %6325 = vmatpush.bf16.msra.mxu0 %v6191
        %6326 = vmatpush.bf16.msra.mxu0 %v6187
        %6327 = vmatpush.bf16.msra.mxu0 %v6183
        %6328 = vmatmul.bf16.gmra.mxu0 %v5860
        %v6329 = vpop.f32.mrf.mxu0
        %v6330 = vadd.f32 %v6316, %v6329
        %v6331 = vpop.f32.mrf.mxu0
        %v6332 = vadd.f32 %v6318, %v6331
        %6333 = vdwg.mxu0
        %6334 = vmatpush.bf16.msra.mxu0 0
        %6335 = vmatpush.bf16.msra.mxu0 0
        %6336 = vmatpush.bf16.msra.mxu0 0
        %6337 = vmatpush.bf16.msra.mxu0 0
        %6338 = vmatpush.bf16.msra.mxu0 0
        %6339 = vmatpush.bf16.msra.mxu0 0
        %6340 = vmatpush.bf16.msra.mxu0 %v6295
        %6341 = vmatpush.bf16.msra.mxu0 %v6215
        %6342 = vmatmul.bf16.gmra.mxu0 %v6292
        %v6343 = vpop.f32.mrf.mxu0
        %v6344 = vadd.f32 %v6330, %v6343
        %v6345 = vpop.f32.mrf.mxu0
        %v6346 = vadd.f32 %v6332, %v6345
        %6347 = vdwg.mxu0
        %6348 = vmatpush.bf16.msra.mxu0 %v6180
        %6349 = vmatpush.bf16.msra.mxu0 %v6176
        %6350 = vmatpush.bf16.msra.mxu0 %v6172
        %6351 = vmatpush.bf16.msra.mxu0 %v6168
        %6352 = vmatpush.bf16.msra.mxu0 %v6164
        %6353 = vmatpush.bf16.msra.mxu0 %v6160
        %6354 = vmatpush.bf16.msra.mxu0 %v6156
        %6355 = vmatpush.bf16.msra.mxu0 %v6152
        %6356 = vmatmul.bf16.gmra.mxu0 %v5859
        %v6357 = vpop.f32.mrf.mxu0
        %v6358 = vadd.f32 0.0, %v6357
        %v6359 = vpop.f32.mrf.mxu0
        %v6360 = vadd.f32 0.0, %v6359
        %6361 = vdwg.mxu0
        %6362 = vmatpush.bf16.msra.mxu0 %v6212
        %6363 = vmatpush.bf16.msra.mxu0 %v6208
        %6364 = vmatpush.bf16.msra.mxu0 %v6204
        %6365 = vmatpush.bf16.msra.mxu0 %v6200
        %6366 = vmatpush.bf16.msra.mxu0 %v6196
        %6367 = vmatpush.bf16.msra.mxu0 %v6192
        %6368 = vmatpush.bf16.msra.mxu0 %v6188
        %6369 = vmatpush.bf16.msra.mxu0 %v6184
        %6370 = vmatmul.bf16.gmra.mxu0 %v5860
        %v6371 = vpop.f32.mrf.mxu0
        %v6372 = vadd.f32 %v6358, %v6371
        %v6373 = vpop.f32.mrf.mxu0
        %v6374 = vadd.f32 %v6360, %v6373
        %6375 = vdwg.mxu0
        %6376 = vmatpush.bf16.msra.mxu0 0
        %6377 = vmatpush.bf16.msra.mxu0 0
        %6378 = vmatpush.bf16.msra.mxu0 0
        %6379 = vmatpush.bf16.msra.mxu0 0
        %6380 = vmatpush.bf16.msra.mxu0 0
        %6381 = vmatpush.bf16.msra.mxu0 0
        %6382 = vmatpush.bf16.msra.mxu0 %v6298
        %6383 = vmatpush.bf16.msra.mxu0 %v6216
        %6384 = vmatmul.bf16.gmra.mxu0 %v6292
        %v6385 = vpop.f32.mrf.mxu0
        %v6386 = vadd.f32 %v6372, %v6385
        %v6387 = vpop.f32.mrf.mxu0
        %v6388 = vadd.f32 %v6374, %v6387
        %6389 = vdwg.mxu0
        %6390 = vmatpush.bf16.msra.mxu0 %v6181
        %6391 = vmatpush.bf16.msra.mxu0 %v6177
        %6392 = vmatpush.bf16.msra.mxu0 %v6173
        %6393 = vmatpush.bf16.msra.mxu0 %v6169
        %6394 = vmatpush.bf16.msra.mxu0 %v6165
        %6395 = vmatpush.bf16.msra.mxu0 %v6161
        %6396 = vmatpush.bf16.msra.mxu0 %v6157
        %6397 = vmatpush.bf16.msra.mxu0 %v6153
        %6398 = vmatmul.bf16.gmra.mxu0 %v5859
        %v6399 = vpop.f32.mrf.mxu0
        %v6400 = vadd.f32 0.0, %v6399
        %v6401 = vpop.f32.mrf.mxu0
        %v6402 = vadd.f32 0.0, %v6401
        %6403 = vdwg.mxu0
        %6404 = vmatpush.bf16.msra.mxu0 %v6213
        %6405 = vmatpush.bf16.msra.mxu0 %v6209
        %6406 = vmatpush.bf16.msra.mxu0 %v6205
        %6407 = vmatpush.bf16.msra.mxu0 %v6201
        %6408 = vmatpush.bf16.msra.mxu0 %v6197
        %6409 = vmatpush.bf16.msra.mxu0 %v6193
        %6410 = vmatpush.bf16.msra.mxu0 %v6189
        %6411 = vmatpush.bf16.msra.mxu0 %v6185
        %6412 = vmatmul.bf16.gmra.mxu0 %v5860
        %v6413 = vpop.f32.mrf.mxu0
        %v6414 = vadd.f32 %v6400, %v6413
        %v6415 = vpop.f32.mrf.mxu0
        %v6416 = vadd.f32 %v6402, %v6415
        %6417 = vdwg.mxu0
        %6418 = vmatpush.bf16.msra.mxu0 0
        %6419 = vmatpush.bf16.msra.mxu0 0
        %6420 = vmatpush.bf16.msra.mxu0 0
        %6421 = vmatpush.bf16.msra.mxu0 0
        %6422 = vmatpush.bf16.msra.mxu0 0
        %6423 = vmatpush.bf16.msra.mxu0 0
        %6424 = vmatpush.bf16.msra.mxu0 %v6301
        %6425 = vmatpush.bf16.msra.mxu0 %v6217
        %6426 = vmatmul.bf16.gmra.mxu0 %v6292
        %v6427 = vpop.f32.mrf.mxu0
        %v6428 = vadd.f32 %v6414, %v6427
        %v6429 = vpop.f32.mrf.mxu0
        %v6430 = vadd.f32 %v6416, %v6429
        %6431 = vdwg.mxu0
        %6432 = vmatpush.bf16.msra.mxu0 %v6182
        %6433 = vmatpush.bf16.msra.mxu0 %v6178
        %6434 = vmatpush.bf16.msra.mxu0 %v6174
        %6435 = vmatpush.bf16.msra.mxu0 %v6170
        %6436 = vmatpush.bf16.msra.mxu0 %v6166
        %6437 = vmatpush.bf16.msra.mxu0 %v6162
        %6438 = vmatpush.bf16.msra.mxu0 %v6158
        %6439 = vmatpush.bf16.msra.mxu0 %v6154
        %6440 = vmatmul.bf16.gmra.mxu0 %v5859
        %v6441 = vpop.f32.mrf.mxu0
        %v6442 = vadd.f32 0.0, %v6441
        %v6443 = vpop.f32.mrf.mxu0
        %v6444 = vadd.f32 0.0, %v6443
        %6445 = vdwg.mxu0
        %6446 = vmatpush.bf16.msra.mxu0 %v6214
        %6447 = vmatpush.bf16.msra.mxu0 %v6210
        %6448 = vmatpush.bf16.msra.mxu0 %v6206
        %6449 = vmatpush.bf16.msra.mxu0 %v6202
        %6450 = vmatpush.bf16.msra.mxu0 %v6198
        %6451 = vmatpush.bf16.msra.mxu0 %v6194
        %6452 = vmatpush.bf16.msra.mxu0 %v6190
        %6453 = vmatpush.bf16.msra.mxu0 %v6186
        %6454 = vmatmul.bf16.gmra.mxu0 %v5860
        %v6455 = vpop.f32.mrf.mxu0
        %v6456 = vadd.f32 %v6442, %v6455
        %v6457 = vpop.f32.mrf.mxu0
        %v6458 = vadd.f32 %v6444, %v6457
        %6459 = vdwg.mxu0
        %6460 = vmatpush.bf16.msra.mxu0 0
        %6461 = vmatpush.bf16.msra.mxu0 0
        %6462 = vmatpush.bf16.msra.mxu0 0
        %6463 = vmatpush.bf16.msra.mxu0 0
        %6464 = vmatpush.bf16.msra.mxu0 0
        %6465 = vmatpush.bf16.msra.mxu0 0
        %6466 = vmatpush.bf16.msra.mxu0 %v6304
        %6467 = vmatpush.bf16.msra.mxu0 %v6218
        %6468 = vmatmul.bf16.gmra.mxu0 %v6292
        %v6469 = vpop.f32.mrf.mxu0
        %v6470 = vadd.f32 %v6456, %v6469
        %v6471 = vpop.f32.mrf.mxu0
        %v6472 = vadd.f32 %v6458, %v6471
        %6473 = vdwg.mxu0
        %v6474 = vpack.c.bf16 %v6386, %v6344
        %v6475 = vpack.c.bf16 %v6470, %v6428
        %v6476 = vpack.c.bf16 %v6388, %v6346
        %v6477 = vpack.c.bf16 %v6472, %v6430
        %v6482 = vunpack.c.l.b16 %v6474
        %v6483 = vunpack.c.h.b16 %v6474
        %v6484 = vunpack.c.l.b16 %v6475
        %v6485 = vunpack.c.l.b16 %v6476
        %v6486 = vunpack.c.h.b16 %v6476
        %v6487 = vunpack.c.l.b16 %v6477
        %v6488 = vpack.c.b16 %v6485, %v6482
        %v6489 = vpack.c.b16 %v6486, %v6483
        %v6490 = vpack.c.b16 %v6487, %v6484
        %6494 = vrot.lane.b32.xlu0 %v6488, 127
        %v6495 = vpop.permute.xlu0 %6494
        %6496 = vrot.lane.b32.xlu0 %v6489, 127
        %v6497 = vpop.permute.xlu0 %6496
        %6498 = vrot.lane.b32.xlu0 %v6490, 127
        %v6499 = vpop.permute.xlu0 %6498
        %v6500 = vsel %vm1583, %v6495, %v6497
        %v6501 = vsel %vm1583, %v6497, %v6499
        %6505 = vrot.lane.b32.xlu0 %v6488, 126
        %v6506 = vpop.permute.xlu0 %6505
        %6507 = vrot.lane.b32.xlu0 %v6489, 126
        %v6508 = vpop.permute.xlu0 %6507
        %6509 = vrot.lane.b32.xlu0 %v6490, 126
        %v6510 = vpop.permute.xlu0 %6509
        %v6511 = vsel %vm1595, %v6506, %v6508
        %v6512 = vsel %vm1595, %v6508, %v6510
        %6516 = vrot.lane.b32.xlu0 %v6488, 108
        %v6517 = vpop.permute.xlu0 %6516
        %6518 = vrot.lane.b32.xlu0 %v6489, 108
        %v6519 = vpop.permute.xlu0 %6518
        %6520 = vrot.lane.b32.xlu0 %v6490, 108
        %v6521 = vpop.permute.xlu0 %6520
        %v6522 = vsel %vm1631, %v6517, %v6519
        %v6523 = vsel %vm1631, %v6519, %v6521
        %6527 = vrot.lane.b32.xlu0 %v6488, 107
        %v6528 = vpop.permute.xlu0 %6527
        %6529 = vrot.lane.b32.xlu0 %v6489, 107
        %v6530 = vpop.permute.xlu0 %6529
        %6531 = vrot.lane.b32.xlu0 %v6490, 107
        %v6532 = vpop.permute.xlu0 %6531
        %vm6533 = vcmask 875520
        %v6534 = vsel %vm6533, %v6528, %v6530
        %v6535 = vsel %vm6533, %v6530, %v6532
        %6539 = vrot.lane.b32.xlu0 %v6488, 106
        %v6540 = vpop.permute.xlu0 %6539
        %6541 = vrot.lane.b32.xlu0 %v6489, 106
        %v6542 = vpop.permute.xlu0 %6541
        %6543 = vrot.lane.b32.xlu0 %v6490, 106
        %v6544 = vpop.permute.xlu0 %6543
        %vm6545 = vcmask 867328
        %v6546 = vsel %vm6545, %v6540, %v6542
        %v6547 = vsel %vm6545, %v6542, %v6544
        %v6551 = vunpack.c.h.b16 %v6475
        %v6552 = vunpack.c.h.b16 %v6477
        %v6553 = vpack.c.b16 %v6552, %v6551
        %6554 = vrot.lane.b32.xlu0 %v6488, 88
        %v6555 = vpop.permute.xlu0 %6554
        %6556 = vrot.lane.b32.xlu0 %v6489, 88
        %v6557 = vpop.permute.xlu0 %6556
        %6558 = vrot.lane.b32.xlu0 %v6490, 88
        %v6559 = vpop.permute.xlu0 %6558
        %6560 = vrot.lane.b32.xlu0 %v6553, 88
        %v6561 = vpop.permute.xlu0 %6560
        %vm6562 = vcmask 719872
        %v6563 = vsel %vm6562, %v6555, %v6557
        %v6564 = vsel %vm6562, %v6557, %v6559
        %v6565 = vsel %vm6562, %v6559, %v6561
        %6569 = vrot.lane.b32.xlu0 %v6488, 87
        %v6570 = vpop.permute.xlu0 %6569
        %6571 = vrot.lane.b32.xlu0 %v6489, 87
        %v6572 = vpop.permute.xlu0 %6571
        %6573 = vrot.lane.b32.xlu0 %v6490, 87
        %v6574 = vpop.permute.xlu0 %6573
        %6575 = vrot.lane.b32.xlu0 %v6553, 87
        %v6576 = vpop.permute.xlu0 %6575
        %vm6577 = vcmask 711680
        %v6578 = vsel %vm6577, %v6570, %v6572
        %v6579 = vsel %vm6577, %v6572, %v6574
        %v6580 = vsel %vm6577, %v6574, %v6576
        %6584 = vrot.lane.b32.xlu0 %v6488, 86
        %v6585 = vpop.permute.xlu0 %6584
        %6586 = vrot.lane.b32.xlu0 %v6489, 86
        %v6587 = vpop.permute.xlu0 %6586
        %6588 = vrot.lane.b32.xlu0 %v6490, 86
        %v6589 = vpop.permute.xlu0 %6588
        %6590 = vrot.lane.b32.xlu0 %v6553, 86
        %v6591 = vpop.permute.xlu0 %6590
        %vm6592 = vcmask 703488
        %v6593 = vsel %vm6592, %v6585, %v6587
        %v6594 = vsel %vm6592, %v6587, %v6589
        %v6595 = vsel %vm6592, %v6589, %v6591
        %v6600 = vunpack.c.l.b16 %v5934
        %v6601 = vunpack.c.h.b16 %v5934
        %v6602 = vpack.c.b16 %v6600, %v6600
        %v6603 = vpack.c.b16 %v6601, %v6601
        %v6606 = vsel %vm1682, %v6603, 0
        %6608 = vmatpush.bf16.msra.mxu0 %v6578
        %6609 = vmatpush.bf16.msra.mxu0 %v6563
        %6610 = vmatpush.bf16.msra.mxu0 %v6546
        %6611 = vmatpush.bf16.msra.mxu0 %v6534
        %6612 = vmatpush.bf16.msra.mxu0 %v6522
        %6613 = vmatpush.bf16.msra.mxu0 %v6511
        %6614 = vmatpush.bf16.msra.mxu0 %v6500
        %6615 = vmatpush.bf16.msra.mxu0 %v6488
        %6616 = vmatmul.bf16.gmra.mxu0 %v6602
        %v6617 = vpop.f32.mrf.mxu0
        %v6618 = vadd.f32 0.0, %v6617
        %v6619 = vpop.f32.mrf.mxu0
        %6620 = vdwg.mxu0
        %6621 = vmatpush.bf16.msra.mxu0 0
        %6622 = vmatpush.bf16.msra.mxu0 0
        %6623 = vmatpush.bf16.msra.mxu0 0
        %6624 = vmatpush.bf16.msra.mxu0 0
        %6625 = vmatpush.bf16.msra.mxu0 0
        %6626 = vmatpush.bf16.msra.mxu0 0
        %6627 = vmatpush.bf16.msra.mxu0 0
        %6628 = vmatpush.bf16.msra.mxu0 %v6593
        %6629 = vmatmul.bf16.gmra.mxu0 %v6606
        %v6630 = vpop.f32.mrf.mxu0
        %v6631 = vadd.f32 %v6618, %v6630
        %v6632 = vpop.f32.mrf.mxu0
        %6633 = vdwg.mxu0
        %6634 = vmatpush.bf16.msra.mxu0 %v6579
        %6635 = vmatpush.bf16.msra.mxu0 %v6564
        %6636 = vmatpush.bf16.msra.mxu0 %v6547
        %6637 = vmatpush.bf16.msra.mxu0 %v6535
        %6638 = vmatpush.bf16.msra.mxu0 %v6523
        %6639 = vmatpush.bf16.msra.mxu0 %v6512
        %6640 = vmatpush.bf16.msra.mxu0 %v6501
        %6641 = vmatpush.bf16.msra.mxu0 %v6489
        %6642 = vmatmul.bf16.gmra.mxu0 %v6602
        %v6643 = vpop.f32.mrf.mxu0
        %v6644 = vadd.f32 0.0, %v6643
        %v6645 = vpop.f32.mrf.mxu0
        %6646 = vdwg.mxu0
        %6647 = vmatpush.bf16.msra.mxu0 0
        %6648 = vmatpush.bf16.msra.mxu0 0
        %6649 = vmatpush.bf16.msra.mxu0 0
        %6650 = vmatpush.bf16.msra.mxu0 0
        %6651 = vmatpush.bf16.msra.mxu0 0
        %6652 = vmatpush.bf16.msra.mxu0 0
        %6653 = vmatpush.bf16.msra.mxu0 0
        %6654 = vmatpush.bf16.msra.mxu0 %v6594
        %6655 = vmatmul.bf16.gmra.mxu0 %v6606
        %v6656 = vpop.f32.mrf.mxu0
        %v6657 = vadd.f32 %v6644, %v6656
        %v6658 = vpop.f32.mrf.mxu0
        %6659 = vdwg.mxu0
        %6660 = vmatpush.bf16.msra.mxu0 %v6580
        %6661 = vmatpush.bf16.msra.mxu0 %v6565
        %6662 = vmatpush.bf16.msra.mxu0 %v6544
        %6663 = vmatpush.bf16.msra.mxu0 %v6532
        %6664 = vmatpush.bf16.msra.mxu0 %v6521
        %6665 = vmatpush.bf16.msra.mxu0 %v6510
        %6666 = vmatpush.bf16.msra.mxu0 %v6499
        %6667 = vmatpush.bf16.msra.mxu0 %v6490
        %6668 = vmatmul.bf16.gmra.mxu0 %v6602
        %v6669 = vpop.f32.mrf.mxu0
        %v6670 = vadd.f32 0.0, %v6669
        %v6671 = vpop.f32.mrf.mxu0
        %6672 = vdwg.mxu0
        %6673 = vmatpush.bf16.msra.mxu0 0
        %6674 = vmatpush.bf16.msra.mxu0 0
        %6675 = vmatpush.bf16.msra.mxu0 0
        %6676 = vmatpush.bf16.msra.mxu0 0
        %6677 = vmatpush.bf16.msra.mxu0 0
        %6678 = vmatpush.bf16.msra.mxu0 0
        %6679 = vmatpush.bf16.msra.mxu0 0
        %6680 = vmatpush.bf16.msra.mxu0 %v6595
        %6681 = vmatmul.bf16.gmra.mxu0 %v6606
        %v6682 = vpop.f32.mrf.mxu0
        %v6683 = vadd.f32 %v6670, %v6682
        %v6684 = vpop.f32.mrf.mxu0
        %6685 = vdwg.mxu0
        %vm6686 = vcmask 834560
        %v6688 = vsel %vm6686, %v6683, 0
        %v6691 = vsel %vm1776, %v655, 0
        %6693 = vmatpush.msra.mxu0 %v626
        %6694 = vmatpush.msra.mxu0 %v625
        %6695 = vmatpush.msra.mxu0 %v624
        %6696 = vmatpush.msra.mxu0 %v623
        %6697 = vmatpush.msra.mxu0 %v622
        %6698 = vmatpush.msra.mxu0 %v621
        %6699 = vmatpush.msra.mxu0 %v620
        %6700 = vmatpush.msra.mxu0 %v619
        %6701 = vmatpush.msra.mxu0 %v618
        %6702 = vmatpush.msra.mxu0 %v617
        %6703 = vmatpush.msra.mxu0 %v616
        %6704 = vmatpush.msra.mxu0 %v615
        %6705 = vmatpush.msra.mxu0 %v614
        %6706 = vmatpush.msra.mxu0 %v613
        %6707 = vmatpush.msra.mxu0 %v612
        %6708 = vmatpush.msra.mxu0 %v611
        %6709 = vmatmul.f32.gmra.mxu0 %v6631
        %v6710 = vpop.f32.mrf.mxu0
        %v6711 = vadd.f32 0.0, %v6710
        %6712 = vdwg.mxu0
        %6713 = vmatpush.msra.mxu0 %v642
        %6714 = vmatpush.msra.mxu0 %v641
        %6715 = vmatpush.msra.mxu0 %v640
        %6716 = vmatpush.msra.mxu0 %v639
        %6717 = vmatpush.msra.mxu0 %v638
        %6718 = vmatpush.msra.mxu0 %v637
        %6719 = vmatpush.msra.mxu0 %v636
        %6720 = vmatpush.msra.mxu0 %v635
        %6721 = vmatpush.msra.mxu0 %v634
        %6722 = vmatpush.msra.mxu0 %v633
        %6723 = vmatpush.msra.mxu0 %v632
        %6724 = vmatpush.msra.mxu0 %v631
        %6725 = vmatpush.msra.mxu0 %v630
        %6726 = vmatpush.msra.mxu0 %v629
        %6727 = vmatpush.msra.mxu0 %v628
        %6728 = vmatpush.msra.mxu0 %v627
        %6729 = vmatmul.f32.gmra.mxu0 %v6657
        %v6730 = vpop.f32.mrf.mxu0
        %v6731 = vadd.f32 %v6711, %v6730
        %6732 = vdwg.mxu0
        %6733 = vmatpush.msra.mxu0 0.0
        %6734 = vmatpush.msra.mxu0 0.0
        %6735 = vmatpush.msra.mxu0 0.0
        %6736 = vmatpush.msra.mxu0 %v6691
        %6737 = vmatpush.msra.mxu0 %v654
        %6738 = vmatpush.msra.mxu0 %v653
        %6739 = vmatpush.msra.mxu0 %v652
        %6740 = vmatpush.msra.mxu0 %v651
        %6741 = vmatpush.msra.mxu0 %v650
        %6742 = vmatpush.msra.mxu0 %v649
        %6743 = vmatpush.msra.mxu0 %v648
        %6744 = vmatpush.msra.mxu0 %v647
        %6745 = vmatpush.msra.mxu0 %v646
        %6746 = vmatpush.msra.mxu0 %v645
        %6747 = vmatpush.msra.mxu0 %v644
        %6748 = vmatpush.msra.mxu0 %v643
        %6749 = vmatmul.f32.gmra.mxu0 %v6688
        %v6750 = vpop.f32.mrf.mxu0
        %v6751 = vadd.f32 %v6731, %v6750
        %6752 = vdwg.mxu0
        %6754 = vset.pattern.permute.xlu0 0
        %6755 = vperm.xlu0 %6754, %v6751
        %v6756 = vpop.permute.xlu0 %6755
        %v6758 = vsub.f32 %v6631, %v6756
        %v6759 = vsub.f32 %v6657, %v6756
        %v6760 = vsub.f32 %v6683, %v6756
        %v6761 = vmul.f32 %v6758, %v6758
        %v6762 = vmul.f32 %v6759, %v6759
        %v6763 = vmul.f32 %v6760, %v6760
        %v6765 = vsel %vm6686, %v6763, 0
        %6767 = vmatpush.msra.mxu0 %v626
        %6768 = vmatpush.msra.mxu0 %v625
        %6769 = vmatpush.msra.mxu0 %v624
        %6770 = vmatpush.msra.mxu0 %v623
        %6771 = vmatpush.msra.mxu0 %v622
        %6772 = vmatpush.msra.mxu0 %v621
        %6773 = vmatpush.msra.mxu0 %v620
        %6774 = vmatpush.msra.mxu0 %v619
        %6775 = vmatpush.msra.mxu0 %v618
        %6776 = vmatpush.msra.mxu0 %v617
        %6777 = vmatpush.msra.mxu0 %v616
        %6778 = vmatpush.msra.mxu0 %v615
        %6779 = vmatpush.msra.mxu0 %v614
        %6780 = vmatpush.msra.mxu0 %v613
        %6781 = vmatpush.msra.mxu0 %v612
        %6782 = vmatpush.msra.mxu0 %v611
        %6783 = vmatmul.f32.gmra.mxu0 %v6761
        %v6784 = vpop.f32.mrf.mxu0
        %v6785 = vadd.f32 1e-05, %v6784
        %6786 = vdwg.mxu0
        %6787 = vmatpush.msra.mxu0 %v642
        %6788 = vmatpush.msra.mxu0 %v641
        %6789 = vmatpush.msra.mxu0 %v640
        %6790 = vmatpush.msra.mxu0 %v639
        %6791 = vmatpush.msra.mxu0 %v638
        %6792 = vmatpush.msra.mxu0 %v637
        %6793 = vmatpush.msra.mxu0 %v636
        %6794 = vmatpush.msra.mxu0 %v635
        %6795 = vmatpush.msra.mxu0 %v634
        %6796 = vmatpush.msra.mxu0 %v633
        %6797 = vmatpush.msra.mxu0 %v632
        %6798 = vmatpush.msra.mxu0 %v631
        %6799 = vmatpush.msra.mxu0 %v630
        %6800 = vmatpush.msra.mxu0 %v629
        %6801 = vmatpush.msra.mxu0 %v628
        %6802 = vmatpush.msra.mxu0 %v627
        %6803 = vmatmul.f32.gmra.mxu0 %v6762
        %v6804 = vpop.f32.mrf.mxu0
        %v6805 = vadd.f32 %v6785, %v6804
        %6806 = vdwg.mxu0
        %6807 = vmatpush.msra.mxu0 0.0
        %6808 = vmatpush.msra.mxu0 0.0
        %6809 = vmatpush.msra.mxu0 0.0
        %6810 = vmatpush.msra.mxu0 %v6691
        %6811 = vmatpush.msra.mxu0 %v654
        %6812 = vmatpush.msra.mxu0 %v653
        %6813 = vmatpush.msra.mxu0 %v652
        %6814 = vmatpush.msra.mxu0 %v651
        %6815 = vmatpush.msra.mxu0 %v650
        %6816 = vmatpush.msra.mxu0 %v649
        %6817 = vmatpush.msra.mxu0 %v648
        %6818 = vmatpush.msra.mxu0 %v647
        %6819 = vmatpush.msra.mxu0 %v646
        %6820 = vmatpush.msra.mxu0 %v645
        %6821 = vmatpush.msra.mxu0 %v644
        %6822 = vmatpush.msra.mxu0 %v643
        %6823 = vmatmul.f32.gmra.mxu0 %v6765
        %v6824 = vpop.f32.mrf.mxu0
        %v6825 = vadd.f32 %v6805, %v6824
        %6826 = vdwg.mxu0
        %v6827 = vrsqrt.pop %v6825
        %v6828 = vmul.f32 %v6827, %v6825
        %v6829 = vmul.f32 %v6828, %v6827
        %v6830 = vmul.f32 0.5, %v6829
        %v6831 = vsub.f32 1.5, %v6830
        %v6832 = vmul.f32 %v6827, %v6831
        %vm6833 = vweird.f32 %v6825
        %vm6834 = vweird.f32 %v6827
        %vm6835 = vmor %vm6833, %vm6834
        %v6836 = vsel %vm6835, %v6827, %v6832
        %6838 = vset.pattern.permute.xlu0 0
        %6839 = vperm.xlu0 %6838, %v6836
        %v6840 = vpop.permute.xlu0 %6839
        %v6842 = vmul.f32 %v6758, %v6840
        %v6843 = vmul.f32 %v6759, %v6840
        %v6844 = vmul.f32 %v6760, %v6840
        %v6845 = vmax.f32 %v6842, 0.0
        %v6846 = vmax.f32 %v6843, 0.0
        %v6847 = vmax.f32 %v6844, 0.0
        %v6848 = vpack.c.bf16 %v6845, %v6845
        %v6849 = vpack.c.bf16 %v6846, %v6846
        %v6850 = vpack.c.bf16 %v6847, %v6847
        %v6851 = vld [vmem:[#allocation4] sm:$0xff]
        %v6852 = vld [vmem:[#allocation4 + $0x8] sm:$0xff]
        %v6853 = vld [vmem:[#allocation4 + $0x10] sm:$0xff]
        %v6854 = vld [vmem:[#allocation4 + $0x18] sm:$0xff]
        %v6855 = vld [vmem:[#allocation4 + $0x20] sm:$0xff]
        %v6856 = vld [vmem:[#allocation4 + $0x28] sm:$0xff]
        %v6857 = vld [vmem:[#allocation4 + $0x30] sm:$0xff]
        %v6858 = vld [vmem:[#allocation4 + $0x38] sm:$0xff]
        %v6859 = vld [vmem:[#allocation4 + $0x40] sm:$0xff]
        %v6860 = vld [vmem:[#allocation4 + $0x48] sm:$0xff]
        %v6861 = vld [vmem:[#allocation4 + $0x50] sm:$0xff]
        %v6862 = vld [vmem:[#allocation4 + $0x58] sm:$0xff]
        %v6863 = vld [vmem:[#allocation4 + $0x60] sm:$0xff]
        %v6864 = vld [vmem:[#allocation4 + $0x68] sm:$0xff]
        %v6865 = vld [vmem:[#allocation4 + $0x70] sm:$0xff]
        %v6866 = vld [vmem:[#allocation4 + $0x78] sm:$0xff]
        %v6867 = vld [vmem:[#allocation4 + $0x80] sm:$0xff]
        %v6868 = vld [vmem:[#allocation4 + $0x88] sm:$0xff]
        %v6869 = vld [vmem:[#allocation4 + $0x90] sm:$0xff]
        %v6870 = vld [vmem:[#allocation4 + $0x98] sm:$0xff]
        %v6871 = vld [vmem:[#allocation4 + $0xa0] sm:$0xff]
        %v6872 = vld [vmem:[#allocation4 + $0xa8] sm:$0xff]
        %v6873 = vld [vmem:[#allocation4 + $0xb0] sm:$0xff]
        %v6874 = vld [vmem:[#allocation4 + $0xb8] sm:$0xff]
        %v6875 = vld [vmem:[#allocation4 + $0xc0] sm:$0xff]
        %v6876 = vld [vmem:[#allocation4 + $0xc8] sm:$0xff]
        %v6877 = vld [vmem:[#allocation4 + $0xd0] sm:$0xff]
        %v6878 = vld [vmem:[#allocation4 + $0xd8] sm:$0xff]
        %v6879 = vld [vmem:[#allocation4 + $0xe0] sm:$0xff]
        %v6880 = vld [vmem:[#allocation4 + $0xe8] sm:$0xff]
        %v6881 = vld [vmem:[#allocation4 + $0xf0] sm:$0xff]
        %v6882 = vld [vmem:[#allocation4 + $0xf8] sm:$0xff]
        %v6883 = vld [vmem:[#allocation4 + $0x100] sm:$0xff]
        %v6884 = vld [vmem:[#allocation4 + $0x108] sm:$0xff]
        %v6885 = vld [vmem:[#allocation4 + $0x110] sm:$0xff]
        %v6886 = vld [vmem:[#allocation4 + $0x118] sm:$0xff]
        %v6887 = vld [vmem:[#allocation4 + $0x120] sm:$0xff]
        %v6888 = vld [vmem:[#allocation4 + $0x128] sm:$0xff]
        %v6889 = vld [vmem:[#allocation4 + $0x130] sm:$0xff]
        %v6890 = vld [vmem:[#allocation4 + $0x138] sm:$0xff]
        %v6891 = vld [vmem:[#allocation4 + $0x140] sm:$0xff]
        %v6892 = vld [vmem:[#allocation4 + $0x148] sm:$0xff]
        %v6893 = vld [vmem:[#allocation4 + $0x150] sm:$0xff]
        %v6894 = vld [vmem:[#allocation4 + $0x158] sm:$0xff]
        %v6895 = vld [vmem:[#allocation4 + $0x160] sm:$0xff]
        %v6896 = vld [vmem:[#allocation4 + $0x168] sm:$0xff]
        %v6897 = vld [vmem:[#allocation4 + $0x170] sm:$0xff]
        %v6898 = vld [vmem:[#allocation4 + $0x178] sm:$0xff]
        %v6899 = vld [vmem:[#allocation4 + $0x180] sm:$0xff]
        %v6900 = vld [vmem:[#allocation4 + $0x188] sm:$0xff]
        %v6901 = vld [vmem:[#allocation4 + $0x190] sm:$0xff]
        %v6902 = vld [vmem:[#allocation4 + $0x198] sm:$0xff]
        %v6903 = vld [vmem:[#allocation4 + $0x1a0] sm:$0xff]
        %v6904 = vld [vmem:[#allocation4 + $0x1a8] sm:$0xff]
        %v6905 = vld [vmem:[#allocation4 + $0x1b0] sm:$0xff]
        %v6906 = vld [vmem:[#allocation4 + $0x1b8] sm:$0xff]
        %v6907 = vld [vmem:[#allocation4 + $0x1c0] sm:$0xff]
        %v6908 = vld [vmem:[#allocation4 + $0x1c8] sm:$0xff]
        %v6909 = vld [vmem:[#allocation4 + $0x1d0] sm:$0xff]
        %v6910 = vld [vmem:[#allocation4 + $0x1d8] sm:$0xff]
        %v6911 = vld [vmem:[#allocation4 + $0x1e0] sm:$0xff]
        %v6912 = vld [vmem:[#allocation4 + $0x1e8] sm:$0xff]
        %v6913 = vld [vmem:[#allocation4 + $0x1f0] sm:$0xff]
        %v6914 = vld [vmem:[#allocation4 + $0x1f8] sm:$0xff]
        %v6915 = vld [vmem:[#allocation4 + $0x200] sm:$0xff]
        %v6916 = vld [vmem:[#allocation4 + $0x208] sm:$0xff]
        %v6917 = vld [vmem:[#allocation4 + $0x210] sm:$0xff]
        %v6918 = vld [vmem:[#allocation4 + $0x218] sm:$0xff]
        %v6919 = vld [vmem:[#allocation4 + $0x220] sm:$0xff]
        %v6920 = vld [vmem:[#allocation4 + $0x228] sm:$0xff]
        %v6921 = vld [vmem:[#allocation4 + $0x230] sm:$0xff]
        %v6922 = vld [vmem:[#allocation4 + $0x238] sm:$0xff]
        %v6923 = vld [vmem:[#allocation4 + $0x240] sm:$0xff]
        %v6924 = vld [vmem:[#allocation4 + $0x248] sm:$0xff]
        %v6925 = vld [vmem:[#allocation4 + $0x250] sm:$0xff]
        %v6926 = vld [vmem:[#allocation4 + $0x258] sm:$0xff]
        %v6927 = vld [vmem:[#allocation4 + $0x260] sm:$0xff]
        %v6928 = vld [vmem:[#allocation4 + $0x268] sm:$0xff]
        %v6929 = vld [vmem:[#allocation4 + $0x270] sm:$0xff]
        %v6930 = vld [vmem:[#allocation4 + $0x278] sm:$0xff]
        %v6931 = vld [vmem:[#allocation4 + $0x280] sm:$0xff]
        %v6932 = vld [vmem:[#allocation4 + $0x288] sm:$0xff]
        %v6933 = vld [vmem:[#allocation4 + $0x290] sm:$0xff]
        %v6934 = vld [vmem:[#allocation4 + $0x298] sm:$0xff]
        %v6935 = vld [vmem:[#allocation4 + $0x2a0] sm:$0xff]
        %v6936 = vld [vmem:[#allocation4 + $0x2a8] sm:$0xff]
        %v6937 = vld [vmem:[#allocation4 + $0x2b0] sm:$0xff]
        %v6938 = vld [vmem:[#allocation4 + $0x2b8] sm:$0xff]
        %v6939 = vld [vmem:[#allocation4 + $0x2c0] sm:$0x77]
        %v6940 = vld [vmem:[#allocation4 + $0x2c8] sm:$0x77]
        %v6941 = vld [vmem:[%s11] sm:$0x3]
        %v7032 = vunpack.c.l.b16 %v6851
        %v7033 = vunpack.c.h.b16 %v6851
        %v7034 = vunpack.c.l.b16 %v6852
        %v7035 = vunpack.c.h.b16 %v6852
        %v7036 = vunpack.c.l.b16 %v6853
        %v7037 = vunpack.c.h.b16 %v6853
        %v7038 = vunpack.c.l.b16 %v6854
        %v7039 = vunpack.c.h.b16 %v6854
        %v7040 = vunpack.c.l.b16 %v6855
        %v7041 = vunpack.c.h.b16 %v6855
        %v7042 = vunpack.c.l.b16 %v6856
        %v7043 = vunpack.c.h.b16 %v6856
        %v7044 = vunpack.c.l.b16 %v6857
        %v7045 = vunpack.c.h.b16 %v6857
        %v7046 = vunpack.c.l.b16 %v6858
        %v7047 = vunpack.c.h.b16 %v6858
        %v7048 = vunpack.c.l.b16 %v6859
        %v7049 = vunpack.c.h.b16 %v6859
        %v7050 = vunpack.c.l.b16 %v6860
        %v7051 = vunpack.c.h.b16 %v6860
        %v7052 = vunpack.c.l.b16 %v6861
        %v7053 = vunpack.c.h.b16 %v6861
        %v7054 = vunpack.c.l.b16 %v6862
        %v7055 = vunpack.c.h.b16 %v6862
        %v7056 = vunpack.c.l.b16 %v6863
        %v7057 = vunpack.c.h.b16 %v6863
        %v7058 = vunpack.c.l.b16 %v6864
        %v7059 = vunpack.c.h.b16 %v6864
        %v7060 = vunpack.c.l.b16 %v6865
        %v7061 = vunpack.c.h.b16 %v6865
        %v7062 = vunpack.c.l.b16 %v6866
        %v7063 = vunpack.c.h.b16 %v6866
        %v7064 = vunpack.c.l.b16 %v6867
        %v7065 = vunpack.c.h.b16 %v6867
        %v7066 = vunpack.c.l.b16 %v6868
        %v7067 = vunpack.c.h.b16 %v6868
        %v7068 = vunpack.c.l.b16 %v6869
        %v7069 = vunpack.c.h.b16 %v6869
        %v7070 = vunpack.c.l.b16 %v6870
        %v7071 = vunpack.c.h.b16 %v6870
        %v7072 = vunpack.c.l.b16 %v6871
        %v7073 = vunpack.c.h.b16 %v6871
        %v7074 = vunpack.c.l.b16 %v6872
        %v7075 = vunpack.c.h.b16 %v6872
        %v7076 = vunpack.c.l.b16 %v6873
        %v7077 = vunpack.c.h.b16 %v6873
        %v7078 = vunpack.c.l.b16 %v6874
        %v7079 = vunpack.c.h.b16 %v6874
        %v7080 = vunpack.c.l.b16 %v6875
        %v7081 = vunpack.c.h.b16 %v6875
        %v7082 = vunpack.c.l.b16 %v6876
        %v7083 = vunpack.c.h.b16 %v6876
        %v7084 = vunpack.c.l.b16 %v6877
        %v7085 = vunpack.c.h.b16 %v6877
        %v7086 = vunpack.c.l.b16 %v6878
        %v7087 = vunpack.c.h.b16 %v6878
        %v7088 = vunpack.c.l.b16 %v6879
        %v7089 = vunpack.c.h.b16 %v6879
        %v7090 = vunpack.c.l.b16 %v6880
        %v7091 = vunpack.c.h.b16 %v6880
        %v7092 = vunpack.c.l.b16 %v6881
        %v7093 = vunpack.c.h.b16 %v6881
        %v7094 = vunpack.c.l.b16 %v6882
        %v7095 = vunpack.c.h.b16 %v6882
        %v7096 = vunpack.c.l.b16 %v6883
        %v7097 = vunpack.c.h.b16 %v6883
        %v7098 = vunpack.c.l.b16 %v6884
        %v7099 = vunpack.c.h.b16 %v6884
        %v7100 = vunpack.c.l.b16 %v6885
        %v7101 = vunpack.c.h.b16 %v6885
        %v7102 = vunpack.c.l.b16 %v6886
        %v7103 = vunpack.c.h.b16 %v6886
        %v7104 = vunpack.c.l.b16 %v6887
        %v7105 = vunpack.c.h.b16 %v6887
        %v7106 = vunpack.c.l.b16 %v6888
        %v7107 = vunpack.c.h.b16 %v6888
        %v7108 = vunpack.c.l.b16 %v6889
        %v7109 = vunpack.c.h.b16 %v6889
        %v7110 = vunpack.c.l.b16 %v6890
        %v7111 = vunpack.c.h.b16 %v6890
        %v7112 = vunpack.c.l.b16 %v6891
        %v7113 = vunpack.c.h.b16 %v6891
        %v7114 = vunpack.c.l.b16 %v6892
        %v7115 = vunpack.c.h.b16 %v6892
        %v7116 = vunpack.c.l.b16 %v6893
        %v7117 = vunpack.c.h.b16 %v6893
        %v7118 = vunpack.c.l.b16 %v6894
        %v7119 = vunpack.c.h.b16 %v6894
        %v7120 = vunpack.c.l.b16 %v6895
        %v7121 = vunpack.c.h.b16 %v6895
        %v7122 = vunpack.c.l.b16 %v6896
        %v7123 = vunpack.c.h.b16 %v6896
        %v7124 = vunpack.c.l.b16 %v6897
        %v7125 = vunpack.c.h.b16 %v6897
        %v7126 = vunpack.c.l.b16 %v6898
        %v7127 = vunpack.c.h.b16 %v6898
        %v7128 = vunpack.c.l.b16 %v6899
        %v7129 = vunpack.c.h.b16 %v6899
        %v7130 = vunpack.c.l.b16 %v6900
        %v7131 = vunpack.c.h.b16 %v6900
        %v7132 = vunpack.c.l.b16 %v6901
        %v7133 = vunpack.c.h.b16 %v6901
        %v7134 = vunpack.c.l.b16 %v6902
        %v7135 = vunpack.c.h.b16 %v6902
        %v7136 = vunpack.c.l.b16 %v6903
        %v7137 = vunpack.c.h.b16 %v6903
        %v7138 = vunpack.c.l.b16 %v6904
        %v7139 = vunpack.c.h.b16 %v6904
        %v7140 = vunpack.c.l.b16 %v6905
        %v7141 = vunpack.c.h.b16 %v6905
        %v7142 = vunpack.c.l.b16 %v6906
        %v7143 = vunpack.c.h.b16 %v6906
        %v7144 = vunpack.c.l.b16 %v6907
        %v7145 = vunpack.c.h.b16 %v6907
        %v7146 = vunpack.c.l.b16 %v6908
        %v7147 = vunpack.c.h.b16 %v6908
        %v7148 = vunpack.c.l.b16 %v6909
        %v7149 = vunpack.c.h.b16 %v6909
        %v7150 = vunpack.c.l.b16 %v6910
        %v7151 = vunpack.c.h.b16 %v6910
        %v7152 = vunpack.c.l.b16 %v6911
        %v7153 = vunpack.c.h.b16 %v6911
        %v7154 = vunpack.c.l.b16 %v6912
        %v7155 = vunpack.c.h.b16 %v6912
        %v7156 = vunpack.c.l.b16 %v6913
        %v7157 = vunpack.c.h.b16 %v6913
        %v7158 = vunpack.c.l.b16 %v6914
        %v7159 = vunpack.c.h.b16 %v6914
        %v7160 = vunpack.c.l.b16 %v6915
        %v7161 = vunpack.c.h.b16 %v6915
        %v7162 = vunpack.c.l.b16 %v6916
        %v7163 = vunpack.c.h.b16 %v6916
        %v7164 = vunpack.c.l.b16 %v6917
        %v7165 = vunpack.c.h.b16 %v6917
        %v7166 = vunpack.c.l.b16 %v6918
        %v7167 = vunpack.c.h.b16 %v6918
        %v7168 = vunpack.c.l.b16 %v6919
        %v7169 = vunpack.c.h.b16 %v6919
        %v7170 = vunpack.c.l.b16 %v6920
        %v7171 = vunpack.c.h.b16 %v6920
        %v7172 = vunpack.c.l.b16 %v6921
        %v7173 = vunpack.c.h.b16 %v6921
        %v7174 = vunpack.c.l.b16 %v6922
        %v7175 = vunpack.c.h.b16 %v6922
        %v7176 = vunpack.c.l.b16 %v6923
        %v7177 = vunpack.c.h.b16 %v6923
        %v7178 = vunpack.c.l.b16 %v6924
        %v7179 = vunpack.c.h.b16 %v6924
        %v7180 = vunpack.c.l.b16 %v6925
        %v7181 = vunpack.c.h.b16 %v6925
        %v7182 = vunpack.c.l.b16 %v6926
        %v7183 = vunpack.c.h.b16 %v6926
        %v7184 = vunpack.c.l.b16 %v6927
        %v7185 = vunpack.c.h.b16 %v6927
        %v7186 = vunpack.c.l.b16 %v6928
        %v7187 = vunpack.c.h.b16 %v6928
        %v7188 = vunpack.c.l.b16 %v6929
        %v7189 = vunpack.c.h.b16 %v6929
        %v7190 = vunpack.c.l.b16 %v6930
        %v7191 = vunpack.c.h.b16 %v6930
        %v7192 = vunpack.c.l.b16 %v6931
        %v7193 = vunpack.c.h.b16 %v6931
        %v7194 = vunpack.c.l.b16 %v6932
        %v7195 = vunpack.c.h.b16 %v6932
        %v7196 = vunpack.c.l.b16 %v6933
        %v7197 = vunpack.c.h.b16 %v6933
        %v7198 = vunpack.c.l.b16 %v6934
        %v7199 = vunpack.c.h.b16 %v6934
        %v7200 = vunpack.c.l.b16 %v6935
        %v7201 = vunpack.c.h.b16 %v6935
        %v7202 = vunpack.c.l.b16 %v6936
        %v7203 = vunpack.c.h.b16 %v6936
        %v7204 = vunpack.c.l.b16 %v6937
        %v7205 = vunpack.c.h.b16 %v6937
        %v7206 = vunpack.c.l.b16 %v6938
        %v7207 = vunpack.c.h.b16 %v6938
        %v7208 = vunpack.c.l.b16 %v6939
        %v7209 = vunpack.c.h.b16 %v6939
        %v7210 = vunpack.c.l.b16 %v6940
        %v7211 = vunpack.c.h.b16 %v6940
        %v7212 = vpack.c.b16 %v7036, %v7032
        %v7213 = vpack.c.b16 %v7037, %v7033
        %v7214 = vpack.c.b16 %v7038, %v7034
        %v7215 = vpack.c.b16 %v7039, %v7035
        %v7216 = vpack.c.b16 %v7044, %v7040
        %v7217 = vpack.c.b16 %v7045, %v7041
        %v7218 = vpack.c.b16 %v7046, %v7042
        %v7219 = vpack.c.b16 %v7047, %v7043
        %v7220 = vpack.c.b16 %v7052, %v7048
        %v7221 = vpack.c.b16 %v7053, %v7049
        %v7222 = vpack.c.b16 %v7054, %v7050
        %v7223 = vpack.c.b16 %v7055, %v7051
        %v7224 = vpack.c.b16 %v7060, %v7056
        %v7225 = vpack.c.b16 %v7061, %v7057
        %v7226 = vpack.c.b16 %v7062, %v7058
        %v7227 = vpack.c.b16 %v7063, %v7059
        %v7228 = vpack.c.b16 %v7068, %v7064
        %v7229 = vpack.c.b16 %v7069, %v7065
        %v7230 = vpack.c.b16 %v7070, %v7066
        %v7231 = vpack.c.b16 %v7071, %v7067
        %v7232 = vpack.c.b16 %v7076, %v7072
        %v7233 = vpack.c.b16 %v7077, %v7073
        %v7234 = vpack.c.b16 %v7078, %v7074
        %v7235 = vpack.c.b16 %v7079, %v7075
        %v7236 = vpack.c.b16 %v7084, %v7080
        %v7237 = vpack.c.b16 %v7085, %v7081
        %v7238 = vpack.c.b16 %v7086, %v7082
        %v7239 = vpack.c.b16 %v7087, %v7083
        %v7240 = vpack.c.b16 %v7092, %v7088
        %v7241 = vpack.c.b16 %v7093, %v7089
        %v7242 = vpack.c.b16 %v7094, %v7090
        %v7243 = vpack.c.b16 %v7095, %v7091
        %v7244 = vpack.c.b16 %v7100, %v7096
        %v7245 = vpack.c.b16 %v7101, %v7097
        %v7246 = vpack.c.b16 %v7102, %v7098
        %v7247 = vpack.c.b16 %v7103, %v7099
        %v7248 = vpack.c.b16 %v7108, %v7104
        %v7249 = vpack.c.b16 %v7109, %v7105
        %v7250 = vpack.c.b16 %v7110, %v7106
        %v7251 = vpack.c.b16 %v7111, %v7107
        %v7252 = vpack.c.b16 %v7116, %v7112
        %v7253 = vpack.c.b16 %v7117, %v7113
        %v7254 = vpack.c.b16 %v7118, %v7114
        %v7255 = vpack.c.b16 %v7119, %v7115
        %v7256 = vpack.c.b16 %v7124, %v7120
        %v7257 = vpack.c.b16 %v7125, %v7121
        %v7258 = vpack.c.b16 %v7126, %v7122
        %v7259 = vpack.c.b16 %v7127, %v7123
        %v7260 = vpack.c.b16 %v7132, %v7128
        %v7261 = vpack.c.b16 %v7133, %v7129
        %v7262 = vpack.c.b16 %v7134, %v7130
        %v7263 = vpack.c.b16 %v7135, %v7131
        %v7264 = vpack.c.b16 %v7140, %v7136
        %v7265 = vpack.c.b16 %v7141, %v7137
        %v7266 = vpack.c.b16 %v7142, %v7138
        %v7267 = vpack.c.b16 %v7143, %v7139
        %v7268 = vpack.c.b16 %v7148, %v7144
        %v7269 = vpack.c.b16 %v7149, %v7145
        %v7270 = vpack.c.b16 %v7150, %v7146
        %v7271 = vpack.c.b16 %v7151, %v7147
        %v7272 = vpack.c.b16 %v7156, %v7152
        %v7273 = vpack.c.b16 %v7157, %v7153
        %v7274 = vpack.c.b16 %v7158, %v7154
        %v7275 = vpack.c.b16 %v7159, %v7155
        %v7276 = vpack.c.b16 %v7164, %v7160
        %v7277 = vpack.c.b16 %v7165, %v7161
        %v7278 = vpack.c.b16 %v7166, %v7162
        %v7279 = vpack.c.b16 %v7167, %v7163
        %v7280 = vpack.c.b16 %v7172, %v7168
        %v7281 = vpack.c.b16 %v7173, %v7169
        %v7282 = vpack.c.b16 %v7174, %v7170
        %v7283 = vpack.c.b16 %v7175, %v7171
        %v7284 = vpack.c.b16 %v7180, %v7176
        %v7285 = vpack.c.b16 %v7181, %v7177
        %v7286 = vpack.c.b16 %v7182, %v7178
        %v7287 = vpack.c.b16 %v7183, %v7179
        %v7288 = vpack.c.b16 %v7188, %v7184
        %v7289 = vpack.c.b16 %v7189, %v7185
        %v7290 = vpack.c.b16 %v7190, %v7186
        %v7291 = vpack.c.b16 %v7191, %v7187
        %v7292 = vpack.c.b16 %v7196, %v7192
        %v7293 = vpack.c.b16 %v7197, %v7193
        %v7294 = vpack.c.b16 %v7198, %v7194
        %v7295 = vpack.c.b16 %v7199, %v7195
        %v7296 = vpack.c.b16 %v7204, %v7200
        %v7297 = vpack.c.b16 %v7205, %v7201
        %v7298 = vpack.c.b16 %v7206, %v7202
        %v7299 = vpack.c.b16 %v7207, %v7203
        %v7300 = vpack.c.b16 %v7208, %v7208
        %v7301 = vpack.c.b16 %v7209, %v7209
        %v7302 = vpack.c.b16 %v7210, %v7210
        %v7303 = vpack.c.b16 %v7211, %v7211
        %v7393 = vsel %vm6686, %v6850, 0
        %vm7395 = vcmask 1042432
        %v7397 = vsel %vm7395, %v7300, 0
        %v7400 = vsel %vm7395, %v7301, 0
        %v7403 = vsel %vm7395, %v7302, 0
        %v7406 = vsel %vm7395, %v7303, 0
        %7408 = vmatpush.bf16.msra.mxu0 %v7240
        %7409 = vmatpush.bf16.msra.mxu0 %v7236
        %7410 = vmatpush.bf16.msra.mxu0 %v7232
        %7411 = vmatpush.bf16.msra.mxu0 %v7228
        %7412 = vmatpush.bf16.msra.mxu0 %v7224
        %7413 = vmatpush.bf16.msra.mxu0 %v7220
        %7414 = vmatpush.bf16.msra.mxu0 %v7216
        %7415 = vmatpush.bf16.msra.mxu0 %v7212
        %7416 = vmatmul.bf16.gmra.mxu0 %v6848
        %v7417 = vpop.f32.mrf.mxu0
        %v7418 = vadd.f32 0.0, %v7417
        %v7419 = vpop.f32.mrf.mxu0
        %7420 = vdwg.mxu0
        %7421 = vmatpush.bf16.msra.mxu0 %v7272
        %7422 = vmatpush.bf16.msra.mxu0 %v7268
        %7423 = vmatpush.bf16.msra.mxu0 %v7264
        %7424 = vmatpush.bf16.msra.mxu0 %v7260
        %7425 = vmatpush.bf16.msra.mxu0 %v7256
        %7426 = vmatpush.bf16.msra.mxu0 %v7252
        %7427 = vmatpush.bf16.msra.mxu0 %v7248
        %7428 = vmatpush.bf16.msra.mxu0 %v7244
        %7429 = vmatmul.bf16.gmra.mxu0 %v6849
        %v7430 = vpop.f32.mrf.mxu0
        %v7431 = vadd.f32 %v7418, %v7430
        %v7432 = vpop.f32.mrf.mxu0
        %7433 = vdwg.mxu0
        %7434 = vmatpush.bf16.msra.mxu0 0
        %7435 = vmatpush.bf16.msra.mxu0 %v7397
        %7436 = vmatpush.bf16.msra.mxu0 %v7296
        %7437 = vmatpush.bf16.msra.mxu0 %v7292
        %7438 = vmatpush.bf16.msra.mxu0 %v7288
        %7439 = vmatpush.bf16.msra.mxu0 %v7284
        %7440 = vmatpush.bf16.msra.mxu0 %v7280
        %7441 = vmatpush.bf16.msra.mxu0 %v7276
        %7442 = vmatmul.bf16.gmra.mxu0 %v7393
        %v7443 = vpop.f32.mrf.mxu0
        %v7444 = vadd.f32 %v7431, %v7443
        %v7445 = vpop.f32.mrf.mxu0
        %7446 = vdwg.mxu0
        %7447 = vmatpush.bf16.msra.mxu0 %v7241
        %7448 = vmatpush.bf16.msra.mxu0 %v7237
        %7449 = vmatpush.bf16.msra.mxu0 %v7233
        %7450 = vmatpush.bf16.msra.mxu0 %v7229
        %7451 = vmatpush.bf16.msra.mxu0 %v7225
        %7452 = vmatpush.bf16.msra.mxu0 %v7221
        %7453 = vmatpush.bf16.msra.mxu0 %v7217
        %7454 = vmatpush.bf16.msra.mxu0 %v7213
        %7455 = vmatmul.bf16.gmra.mxu0 %v6848
        %v7456 = vpop.f32.mrf.mxu0
        %v7457 = vadd.f32 0.0, %v7456
        %v7458 = vpop.f32.mrf.mxu0
        %7459 = vdwg.mxu0
        %7460 = vmatpush.bf16.msra.mxu0 %v7273
        %7461 = vmatpush.bf16.msra.mxu0 %v7269
        %7462 = vmatpush.bf16.msra.mxu0 %v7265
        %7463 = vmatpush.bf16.msra.mxu0 %v7261
        %7464 = vmatpush.bf16.msra.mxu0 %v7257
        %7465 = vmatpush.bf16.msra.mxu0 %v7253
        %7466 = vmatpush.bf16.msra.mxu0 %v7249
        %7467 = vmatpush.bf16.msra.mxu0 %v7245
        %7468 = vmatmul.bf16.gmra.mxu0 %v6849
        %v7469 = vpop.f32.mrf.mxu0
        %v7470 = vadd.f32 %v7457, %v7469
        %v7471 = vpop.f32.mrf.mxu0
        %7472 = vdwg.mxu0
        %7473 = vmatpush.bf16.msra.mxu0 0
        %7474 = vmatpush.bf16.msra.mxu0 %v7400
        %7475 = vmatpush.bf16.msra.mxu0 %v7297
        %7476 = vmatpush.bf16.msra.mxu0 %v7293
        %7477 = vmatpush.bf16.msra.mxu0 %v7289
        %7478 = vmatpush.bf16.msra.mxu0 %v7285
        %7479 = vmatpush.bf16.msra.mxu0 %v7281
        %7480 = vmatpush.bf16.msra.mxu0 %v7277
        %7481 = vmatmul.bf16.gmra.mxu0 %v7393
        %v7482 = vpop.f32.mrf.mxu0
        %v7483 = vadd.f32 %v7470, %v7482
        %v7484 = vpop.f32.mrf.mxu0
        %7485 = vdwg.mxu0
        %7486 = vmatpush.bf16.msra.mxu0 %v7242
        %7487 = vmatpush.bf16.msra.mxu0 %v7238
        %7488 = vmatpush.bf16.msra.mxu0 %v7234
        %7489 = vmatpush.bf16.msra.mxu0 %v7230
        %7490 = vmatpush.bf16.msra.mxu0 %v7226
        %7491 = vmatpush.bf16.msra.mxu0 %v7222
        %7492 = vmatpush.bf16.msra.mxu0 %v7218
        %7493 = vmatpush.bf16.msra.mxu0 %v7214
        %7494 = vmatmul.bf16.gmra.mxu0 %v6848
        %v7495 = vpop.f32.mrf.mxu0
        %v7496 = vadd.f32 0.0, %v7495
        %v7497 = vpop.f32.mrf.mxu0
        %7498 = vdwg.mxu0
        %7499 = vmatpush.bf16.msra.mxu0 %v7274
        %7500 = vmatpush.bf16.msra.mxu0 %v7270
        %7501 = vmatpush.bf16.msra.mxu0 %v7266
        %7502 = vmatpush.bf16.msra.mxu0 %v7262
        %7503 = vmatpush.bf16.msra.mxu0 %v7258
        %7504 = vmatpush.bf16.msra.mxu0 %v7254
        %7505 = vmatpush.bf16.msra.mxu0 %v7250
        %7506 = vmatpush.bf16.msra.mxu0 %v7246
        %7507 = vmatmul.bf16.gmra.mxu0 %v6849
        %v7508 = vpop.f32.mrf.mxu0
        %v7509 = vadd.f32 %v7496, %v7508
        %v7510 = vpop.f32.mrf.mxu0
        %7511 = vdwg.mxu0
        %7512 = vmatpush.bf16.msra.mxu0 0
        %7513 = vmatpush.bf16.msra.mxu0 %v7403
        %7514 = vmatpush.bf16.msra.mxu0 %v7298
        %7515 = vmatpush.bf16.msra.mxu0 %v7294
        %7516 = vmatpush.bf16.msra.mxu0 %v7290
        %7517 = vmatpush.bf16.msra.mxu0 %v7286
        %7518 = vmatpush.bf16.msra.mxu0 %v7282
        %7519 = vmatpush.bf16.msra.mxu0 %v7278
        %7520 = vmatmul.bf16.gmra.mxu0 %v7393
        %v7521 = vpop.f32.mrf.mxu0
        %v7522 = vadd.f32 %v7509, %v7521
        %v7523 = vpop.f32.mrf.mxu0
        %7524 = vdwg.mxu0
        %7525 = vmatpush.bf16.msra.mxu0 %v7243
        %7526 = vmatpush.bf16.msra.mxu0 %v7239
        %7527 = vmatpush.bf16.msra.mxu0 %v7235
        %7528 = vmatpush.bf16.msra.mxu0 %v7231
        %7529 = vmatpush.bf16.msra.mxu0 %v7227
        %7530 = vmatpush.bf16.msra.mxu0 %v7223
        %7531 = vmatpush.bf16.msra.mxu0 %v7219
        %7532 = vmatpush.bf16.msra.mxu0 %v7215
        %7533 = vmatmul.bf16.gmra.mxu0 %v6848
        %v7534 = vpop.f32.mrf.mxu0
        %v7535 = vadd.f32 0.0, %v7534
        %v7536 = vpop.f32.mrf.mxu0
        %7537 = vdwg.mxu0
        %7538 = vmatpush.bf16.msra.mxu0 %v7275
        %7539 = vmatpush.bf16.msra.mxu0 %v7271
        %7540 = vmatpush.bf16.msra.mxu0 %v7267
        %7541 = vmatpush.bf16.msra.mxu0 %v7263
        %7542 = vmatpush.bf16.msra.mxu0 %v7259
        %7543 = vmatpush.bf16.msra.mxu0 %v7255
        %7544 = vmatpush.bf16.msra.mxu0 %v7251
        %7545 = vmatpush.bf16.msra.mxu0 %v7247
        %7546 = vmatmul.bf16.gmra.mxu0 %v6849
        %v7547 = vpop.f32.mrf.mxu0
        %v7548 = vadd.f32 %v7535, %v7547
        %v7549 = vpop.f32.mrf.mxu0
        %7550 = vdwg.mxu0
        %7551 = vmatpush.bf16.msra.mxu0 0
        %7552 = vmatpush.bf16.msra.mxu0 %v7406
        %7553 = vmatpush.bf16.msra.mxu0 %v7299
        %7554 = vmatpush.bf16.msra.mxu0 %v7295
        %7555 = vmatpush.bf16.msra.mxu0 %v7291
        %7556 = vmatpush.bf16.msra.mxu0 %v7287
        %7557 = vmatpush.bf16.msra.mxu0 %v7283
        %7558 = vmatpush.bf16.msra.mxu0 %v7279
        %7559 = vmatmul.bf16.gmra.mxu0 %v7393
        %v7560 = vpop.f32.mrf.mxu0
        %v7561 = vadd.f32 %v7548, %v7560
        %v7562 = vpop.f32.mrf.mxu0
        %7563 = vdwg.mxu0
        %v7564 = vpack.c.bf16 %v7483, %v7444
        %v7565 = vpack.c.bf16 %v7561, %v7522
        %v7568 = vunpack.c.l.b16 %v7564
        %v7569 = vunpack.c.h.b16 %v7564
        %v7570 = vunpack.c.l.b16 %v7565
        %v7571 = vunpack.c.h.b16 %v7565
        %v7572 = vpack.c.b16 %v7568, %v7568
        %v7573 = vpack.c.b16 %v7569, %v7569
        %v7574 = vpack.c.b16 %v7570, %v7570
        %v7575 = vpack.c.b16 %v7571, %v7571
        %7576 = vrot.lane.b32.xlu0 %v7572, 127
        %v7577 = vpop.permute.xlu0 %7576
        %7578 = vrot.lane.b32.xlu0 %v7573, 127
        %v7579 = vpop.permute.xlu0 %7578
        %7580 = vrot.lane.b32.xlu0 %v7574, 127
        %v7581 = vpop.permute.xlu0 %7580
        %7582 = vrot.lane.b32.xlu0 %v7575, 127
        %v7583 = vpop.permute.xlu0 %7582
        %v7584 = vsel %vm1583, %v7577, %v7579
        %v7585 = vsel %vm1583, %v7579, %v7581
        %v7586 = vsel %vm1583, %v7581, %v7583
        %7587 = vrot.lane.b32.xlu0 %v7572, 126
        %v7588 = vpop.permute.xlu0 %7587
        %7589 = vrot.lane.b32.xlu0 %v7573, 126
        %v7590 = vpop.permute.xlu0 %7589
        %7591 = vrot.lane.b32.xlu0 %v7574, 126
        %v7592 = vpop.permute.xlu0 %7591
        %7593 = vrot.lane.b32.xlu0 %v7575, 126
        %v7594 = vpop.permute.xlu0 %7593
        %v7595 = vsel %vm1595, %v7588, %v7590
        %v7596 = vsel %vm1595, %v7590, %v7592
        %v7597 = vsel %vm1595, %v7592, %v7594
        %7598 = vrot.lane.b32.xlu0 %v7572, 106
        %v7599 = vpop.permute.xlu0 %7598
        %7600 = vrot.lane.b32.xlu0 %v7573, 106
        %v7601 = vpop.permute.xlu0 %7600
        %7602 = vrot.lane.b32.xlu0 %v7574, 106
        %v7603 = vpop.permute.xlu0 %7602
        %7604 = vrot.lane.b32.xlu0 %v7575, 106
        %v7605 = vpop.permute.xlu0 %7604
        %v7606 = vsel %vm6545, %v7599, %v7601
        %v7607 = vsel %vm6545, %v7601, %v7603
        %v7608 = vsel %vm6545, %v7603, %v7605
        %7609 = vrot.lane.b32.xlu0 %v7572, 105
        %v7610 = vpop.permute.xlu0 %7609
        %7611 = vrot.lane.b32.xlu0 %v7573, 105
        %v7612 = vpop.permute.xlu0 %7611
        %7613 = vrot.lane.b32.xlu0 %v7574, 105
        %v7614 = vpop.permute.xlu0 %7613
        %7615 = vrot.lane.b32.xlu0 %v7575, 105
        %v7616 = vpop.permute.xlu0 %7615
        %vm7617 = vcmask 859136
        %v7618 = vsel %vm7617, %v7610, %v7612
        %v7619 = vsel %vm7617, %v7612, %v7614
        %v7620 = vsel %vm7617, %v7614, %v7616
        %7621 = vrot.lane.b32.xlu0 %v7572, 104
        %v7622 = vpop.permute.xlu0 %7621
        %7623 = vrot.lane.b32.xlu0 %v7573, 104
        %v7624 = vpop.permute.xlu0 %7623
        %7625 = vrot.lane.b32.xlu0 %v7574, 104
        %v7626 = vpop.permute.xlu0 %7625
        %7627 = vrot.lane.b32.xlu0 %v7575, 104
        %v7628 = vpop.permute.xlu0 %7627
        %vm7629 = vcmask 850944
        %v7630 = vsel %vm7629, %v7622, %v7624
        %v7631 = vsel %vm7629, %v7624, %v7626
        %v7632 = vsel %vm7629, %v7626, %v7628
        %7633 = vrot.lane.b32.xlu0 %v7572, 84
        %v7634 = vpop.permute.xlu0 %7633
        %7635 = vrot.lane.b32.xlu0 %v7573, 84
        %v7636 = vpop.permute.xlu0 %7635
        %7637 = vrot.lane.b32.xlu0 %v7574, 84
        %v7638 = vpop.permute.xlu0 %7637
        %7639 = vrot.lane.b32.xlu0 %v7575, 84
        %v7640 = vpop.permute.xlu0 %7639
        %vm7641 = vcmask 687104
        %v7642 = vsel %vm7641, %v7634, %v7636
        %v7643 = vsel %vm7641, %v7636, %v7638
        %v7644 = vsel %vm7641, %v7638, %v7640
        %7645 = vrot.lane.b32.xlu0 %v7572, 83
        %v7646 = vpop.permute.xlu0 %7645
        %7647 = vrot.lane.b32.xlu0 %v7573, 83
        %v7648 = vpop.permute.xlu0 %7647
        %7649 = vrot.lane.b32.xlu0 %v7574, 83
        %v7650 = vpop.permute.xlu0 %7649
        %7651 = vrot.lane.b32.xlu0 %v7575, 83
        %v7652 = vpop.permute.xlu0 %7651
        %vm7653 = vcmask 678912
        %v7654 = vsel %vm7653, %v7646, %v7648
        %v7655 = vsel %vm7653, %v7648, %v7650
        %v7656 = vsel %vm7653, %v7650, %v7652
        %7657 = vrot.lane.b32.xlu0 %v7572, 82
        %v7658 = vpop.permute.xlu0 %7657
        %7659 = vrot.lane.b32.xlu0 %v7573, 82
        %v7660 = vpop.permute.xlu0 %7659
        %7661 = vrot.lane.b32.xlu0 %v7574, 82
        %v7662 = vpop.permute.xlu0 %7661
        %7663 = vrot.lane.b32.xlu0 %v7575, 82
        %v7664 = vpop.permute.xlu0 %7663
        %vm7665 = vcmask 670720
        %v7666 = vsel %vm7665, %v7658, %v7660
        %v7667 = vsel %vm7665, %v7660, %v7662
        %v7668 = vsel %vm7665, %v7662, %v7664
        %vm7669 = vcmask 1043456
        %v7672 = vsel %vm7669, %v7572, %v7584
        %v7676 = vsel %vm7669, %v7573, %v7585
        %v7680 = vsel %vm7669, %v7574, %v7586
        %v7684 = vsel %vm7669, %v7575, %v7583
        %v7688 = vsel %vm7669, %v7595, %v7606
        %v7692 = vsel %vm7669, %v7596, %v7607
        %v7696 = vsel %vm7669, %v7597, %v7608
        %v7700 = vsel %vm7669, %v7594, %v7605
        %v7704 = vsel %vm7669, %v7618, %v7630
        %v7708 = vsel %vm7669, %v7619, %v7631
        %v7712 = vsel %vm7669, %v7620, %v7632
        %v7716 = vsel %vm7669, %v7616, %v7628
        %v7720 = vsel %vm7669, %v7642, %v7654
        %v7724 = vsel %vm7669, %v7643, %v7655
        %v7728 = vsel %vm7669, %v7644, %v7656
        %v7732 = vsel %vm7669, %v7640, %v7652
        %vm7734 = vcmask 588800
        %v7736 = vsel %vm7734, %v6941, 0
        %v7739 = vsel %vm7669, %v7666, 0
        %v7742 = vsel %vm7669, %v7667, 0
        %v7745 = vsel %vm7669, %v7668, 0
        %v7748 = vsel %vm7669, %v7664, 0
        %7750 = vmatpush.bf16.msra.mxu0 0
        %7751 = vmatpush.bf16.msra.mxu0 0
        %7752 = vmatpush.bf16.msra.mxu0 0
        %7753 = vmatpush.bf16.msra.mxu0 %v7739
        %7754 = vmatpush.bf16.msra.mxu0 %v7720
        %7755 = vmatpush.bf16.msra.mxu0 %v7704
        %7756 = vmatpush.bf16.msra.mxu0 %v7688
        %7757 = vmatpush.bf16.msra.mxu0 %v7672
        %7758 = vmatmul.bf16.gmra.mxu0 %v7736
        %v7759 = vpop.f32.mrf.mxu0
        %v7760 = vadd.f32 0.0, %v7759
        %v7761 = vpop.f32.mrf.mxu0
        %7762 = vdwg.mxu0
        %7763 = vmatpush.bf16.msra.mxu0 0
        %7764 = vmatpush.bf16.msra.mxu0 0
        %7765 = vmatpush.bf16.msra.mxu0 0
        %7766 = vmatpush.bf16.msra.mxu0 %v7742
        %7767 = vmatpush.bf16.msra.mxu0 %v7724
        %7768 = vmatpush.bf16.msra.mxu0 %v7708
        %7769 = vmatpush.bf16.msra.mxu0 %v7692
        %7770 = vmatpush.bf16.msra.mxu0 %v7676
        %7771 = vmatmul.bf16.gmra.mxu0 %v7736
        %v7772 = vpop.f32.mrf.mxu0
        %v7773 = vadd.f32 0.0, %v7772
        %v7774 = vpop.f32.mrf.mxu0
        %7775 = vdwg.mxu0
        %7776 = vmatpush.bf16.msra.mxu0 0
        %7777 = vmatpush.bf16.msra.mxu0 0
        %7778 = vmatpush.bf16.msra.mxu0 0
        %7779 = vmatpush.bf16.msra.mxu0 %v7745
        %7780 = vmatpush.bf16.msra.mxu0 %v7728
        %7781 = vmatpush.bf16.msra.mxu0 %v7712
        %7782 = vmatpush.bf16.msra.mxu0 %v7696
        %7783 = vmatpush.bf16.msra.mxu0 %v7680
        %7784 = vmatmul.bf16.gmra.mxu0 %v7736
        %v7785 = vpop.f32.mrf.mxu0
        %v7786 = vadd.f32 0.0, %v7785
        %v7787 = vpop.f32.mrf.mxu0
        %7788 = vdwg.mxu0
        %7789 = vmatpush.bf16.msra.mxu0 0
        %7790 = vmatpush.bf16.msra.mxu0 0
        %7791 = vmatpush.bf16.msra.mxu0 0
        %7792 = vmatpush.bf16.msra.mxu0 %v7748
        %7793 = vmatpush.bf16.msra.mxu0 %v7732
        %7794 = vmatpush.bf16.msra.mxu0 %v7716
        %7795 = vmatpush.bf16.msra.mxu0 %v7700
        %7796 = vmatpush.bf16.msra.mxu0 %v7684
        %7797 = vmatmul.bf16.gmra.mxu0 %v7736
        %v7798 = vpop.f32.mrf.mxu0
        %v7799 = vadd.f32 0.0, %v7798
        %v7800 = vpop.f32.mrf.mxu0
        %7801 = vdwg.mxu0
        %vm7802 = vcmask 441344
        %v7804 = vsel %vm7802, %v7799, 0
        %v7807 = vsel %vm1776, %v710, 0
        %7809 = vmatpush.msra.mxu0 %v671
        %7810 = vmatpush.msra.mxu0 %v670
        %7811 = vmatpush.msra.mxu0 %v669
        %7812 = vmatpush.msra.mxu0 %v668
        %7813 = vmatpush.msra.mxu0 %v667
        %7814 = vmatpush.msra.mxu0 %v666
        %7815 = vmatpush.msra.mxu0 %v665
        %7816 = vmatpush.msra.mxu0 %v664
        %7817 = vmatpush.msra.mxu0 %v663
        %7818 = vmatpush.msra.mxu0 %v662
        %7819 = vmatpush.msra.mxu0 %v661
        %7820 = vmatpush.msra.mxu0 %v660
        %7821 = vmatpush.msra.mxu0 %v659
        %7822 = vmatpush.msra.mxu0 %v658
        %7823 = vmatpush.msra.mxu0 %v657
        %7824 = vmatpush.msra.mxu0 %v656
        %7825 = vmatmul.f32.gmra.mxu0 %v7760
        %v7826 = vpop.f32.mrf.mxu0
        %v7827 = vadd.f32 0.0, %v7826
        %7828 = vdwg.mxu0
        %7829 = vmatpush.msra.mxu0 %v687
        %7830 = vmatpush.msra.mxu0 %v686
        %7831 = vmatpush.msra.mxu0 %v685
        %7832 = vmatpush.msra.mxu0 %v684
        %7833 = vmatpush.msra.mxu0 %v683
        %7834 = vmatpush.msra.mxu0 %v682
        %7835 = vmatpush.msra.mxu0 %v681
        %7836 = vmatpush.msra.mxu0 %v680
        %7837 = vmatpush.msra.mxu0 %v679
        %7838 = vmatpush.msra.mxu0 %v678
        %7839 = vmatpush.msra.mxu0 %v677
        %7840 = vmatpush.msra.mxu0 %v676
        %7841 = vmatpush.msra.mxu0 %v675
        %7842 = vmatpush.msra.mxu0 %v674
        %7843 = vmatpush.msra.mxu0 %v673
        %7844 = vmatpush.msra.mxu0 %v672
        %7845 = vmatmul.f32.gmra.mxu0 %v7773
        %v7846 = vpop.f32.mrf.mxu0
        %v7847 = vadd.f32 %v7827, %v7846
        %7848 = vdwg.mxu0
        %7849 = vmatpush.msra.mxu0 %v703
        %7850 = vmatpush.msra.mxu0 %v702
        %7851 = vmatpush.msra.mxu0 %v701
        %7852 = vmatpush.msra.mxu0 %v700
        %7853 = vmatpush.msra.mxu0 %v699
        %7854 = vmatpush.msra.mxu0 %v698
        %7855 = vmatpush.msra.mxu0 %v697
        %7856 = vmatpush.msra.mxu0 %v696
        %7857 = vmatpush.msra.mxu0 %v695
        %7858 = vmatpush.msra.mxu0 %v694
        %7859 = vmatpush.msra.mxu0 %v693
        %7860 = vmatpush.msra.mxu0 %v692
        %7861 = vmatpush.msra.mxu0 %v691
        %7862 = vmatpush.msra.mxu0 %v690
        %7863 = vmatpush.msra.mxu0 %v689
        %7864 = vmatpush.msra.mxu0 %v688
        %7865 = vmatmul.f32.gmra.mxu0 %v7786
        %v7866 = vpop.f32.mrf.mxu0
        %v7867 = vadd.f32 %v7847, %v7866
        %7868 = vdwg.mxu0
        %7869 = vmatpush.msra.mxu0 0.0
        %7870 = vmatpush.msra.mxu0 0.0
        %7871 = vmatpush.msra.mxu0 0.0
        %7872 = vmatpush.msra.mxu0 0.0
        %7873 = vmatpush.msra.mxu0 0.0
        %7874 = vmatpush.msra.mxu0 0.0
        %7875 = vmatpush.msra.mxu0 0.0
        %7876 = vmatpush.msra.mxu0 0.0
        %7877 = vmatpush.msra.mxu0 0.0
        %7878 = vmatpush.msra.mxu0 %v7807
        %7879 = vmatpush.msra.mxu0 %v709
        %7880 = vmatpush.msra.mxu0 %v708
        %7881 = vmatpush.msra.mxu0 %v707
        %7882 = vmatpush.msra.mxu0 %v706
        %7883 = vmatpush.msra.mxu0 %v705
        %7884 = vmatpush.msra.mxu0 %v704
        %7885 = vmatmul.f32.gmra.mxu0 %v7804
        %v7886 = vpop.f32.mrf.mxu0
        %v7887 = vadd.f32 %v7867, %v7886
        %7888 = vdwg.mxu0
        %7890 = vset.pattern.permute.xlu0 0
        %7891 = vperm.xlu0 %7890, %v7887
        %v7892 = vpop.permute.xlu0 %7891
        %v7894 = vsub.f32 %v7760, %v7892
        %v7895 = vsub.f32 %v7773, %v7892
        %v7896 = vsub.f32 %v7786, %v7892
        %v7897 = vsub.f32 %v7799, %v7892
        %v7898 = vmul.f32 %v7894, %v7894
        %v7899 = vmul.f32 %v7895, %v7895
        %v7900 = vmul.f32 %v7896, %v7896
        %v7901 = vmul.f32 %v7897, %v7897
        %v7903 = vsel %vm7802, %v7901, 0
        %7905 = vmatpush.msra.mxu0 %v671
        %7906 = vmatpush.msra.mxu0 %v670
        %7907 = vmatpush.msra.mxu0 %v669
        %7908 = vmatpush.msra.mxu0 %v668
        %7909 = vmatpush.msra.mxu0 %v667
        %7910 = vmatpush.msra.mxu0 %v666
        %7911 = vmatpush.msra.mxu0 %v665
        %7912 = vmatpush.msra.mxu0 %v664
        %7913 = vmatpush.msra.mxu0 %v663
        %7914 = vmatpush.msra.mxu0 %v662
        %7915 = vmatpush.msra.mxu0 %v661
        %7916 = vmatpush.msra.mxu0 %v660
        %7917 = vmatpush.msra.mxu0 %v659
        %7918 = vmatpush.msra.mxu0 %v658
        %7919 = vmatpush.msra.mxu0 %v657
        %7920 = vmatpush.msra.mxu0 %v656
        %7921 = vmatmul.f32.gmra.mxu0 %v7898
        %v7922 = vpop.f32.mrf.mxu0
        %v7923 = vadd.f32 1e-05, %v7922
        %7924 = vdwg.mxu0
        %7925 = vmatpush.msra.mxu0 %v687
        %7926 = vmatpush.msra.mxu0 %v686
        %7927 = vmatpush.msra.mxu0 %v685
        %7928 = vmatpush.msra.mxu0 %v684
        %7929 = vmatpush.msra.mxu0 %v683
        %7930 = vmatpush.msra.mxu0 %v682
        %7931 = vmatpush.msra.mxu0 %v681
        %7932 = vmatpush.msra.mxu0 %v680
        %7933 = vmatpush.msra.mxu0 %v679
        %7934 = vmatpush.msra.mxu0 %v678
        %7935 = vmatpush.msra.mxu0 %v677
        %7936 = vmatpush.msra.mxu0 %v676
        %7937 = vmatpush.msra.mxu0 %v675
        %7938 = vmatpush.msra.mxu0 %v674
        %7939 = vmatpush.msra.mxu0 %v673
        %7940 = vmatpush.msra.mxu0 %v672
        %7941 = vmatmul.f32.gmra.mxu0 %v7899
        %v7942 = vpop.f32.mrf.mxu0
        %v7943 = vadd.f32 %v7923, %v7942
        %7944 = vdwg.mxu0
        %7945 = vmatpush.msra.mxu0 %v703
        %7946 = vmatpush.msra.mxu0 %v702
        %7947 = vmatpush.msra.mxu0 %v701
        %7948 = vmatpush.msra.mxu0 %v700
        %7949 = vmatpush.msra.mxu0 %v699
        %7950 = vmatpush.msra.mxu0 %v698
        %7951 = vmatpush.msra.mxu0 %v697
        %7952 = vmatpush.msra.mxu0 %v696
        %7953 = vmatpush.msra.mxu0 %v695
        %7954 = vmatpush.msra.mxu0 %v694
        %7955 = vmatpush.msra.mxu0 %v693
        %7956 = vmatpush.msra.mxu0 %v692
        %7957 = vmatpush.msra.mxu0 %v691
        %7958 = vmatpush.msra.mxu0 %v690
        %7959 = vmatpush.msra.mxu0 %v689
        %7960 = vmatpush.msra.mxu0 %v688
        %7961 = vmatmul.f32.gmra.mxu0 %v7900
        %v7962 = vpop.f32.mrf.mxu0
        %v7963 = vadd.f32 %v7943, %v7962
        %7964 = vdwg.mxu0
        %7965 = vmatpush.msra.mxu0 0.0
        %7966 = vmatpush.msra.mxu0 0.0
        %7967 = vmatpush.msra.mxu0 0.0
        %7968 = vmatpush.msra.mxu0 0.0
        %7969 = vmatpush.msra.mxu0 0.0
        %7970 = vmatpush.msra.mxu0 0.0
        %7971 = vmatpush.msra.mxu0 0.0
        %7972 = vmatpush.msra.mxu0 0.0
        %7973 = vmatpush.msra.mxu0 0.0
        %7974 = vmatpush.msra.mxu0 %v7807
        %7975 = vmatpush.msra.mxu0 %v709
        %7976 = vmatpush.msra.mxu0 %v708
        %7977 = vmatpush.msra.mxu0 %v707
        %7978 = vmatpush.msra.mxu0 %v706
        %7979 = vmatpush.msra.mxu0 %v705
        %7980 = vmatpush.msra.mxu0 %v704
        %7981 = vmatmul.f32.gmra.mxu0 %v7903
        %v7982 = vpop.f32.mrf.mxu0
        %v7983 = vadd.f32 %v7963, %v7982
        %7984 = vdwg.mxu0
        %v7985 = vrsqrt.pop %v7983
        %v7986 = vmul.f32 %v7985, %v7983
        %v7987 = vmul.f32 %v7986, %v7985
        %v7988 = vmul.f32 0.5, %v7987
        %v7989 = vsub.f32 1.5, %v7988
        %v7990 = vmul.f32 %v7985, %v7989
        %vm7991 = vweird.f32 %v7983
        %vm7992 = vweird.f32 %v7985
        %vm7993 = vmor %vm7991, %vm7992
        %v7994 = vsel %vm7993, %v7985, %v7990
        %7996 = vset.pattern.permute.xlu0 0
        %7997 = vperm.xlu0 %7996, %v7994
        %v7998 = vpop.permute.xlu0 %7997
        %v8000 = vmul.f32 %v7894, %v7998
        %v8001 = vmul.f32 %v7895, %v7998
        %v8002 = vmul.f32 %v7896, %v7998
        %v8003 = vmul.f32 %v7897, %v7998
        %v8004 = vmax.f32 %v8000, 0.0
        %v8005 = vmax.f32 %v8001, 0.0
        %v8006 = vmax.f32 %v8002, 0.0
        %v8007 = vmax.f32 %v8003, 0.0
        %v8008 = vpack.c.bf16 %v8004, %v8004
        %v8009 = vpack.c.bf16 %v8005, %v8005
        %v8010 = vpack.c.bf16 %v8006, %v8006
        %v8011 = vpack.c.bf16 %v8007, %v8007
        %v8012 = vld [vmem:[%s5] sm:$0xff]
        %v8013 = vld [vmem:[%s5 + $0x8] sm:$0xff]
        %v8014 = vld [vmem:[%s5 + $0x10] sm:$0xff]
        %v8015 = vld [vmem:[%s5 + $0x18] sm:$0xff]
        %v8016 = vld [vmem:[%s5 + $0x20] sm:$0xff]
        %v8017 = vld [vmem:[%s5 + $0x28] sm:$0xff]
        %v8018 = vld [vmem:[%s5 + $0x30] sm:$0xff]
        %v8019 = vld [vmem:[%s5 + $0x38] sm:$0xff]
        %v8020 = vld [vmem:[%s5 + $0x40] sm:$0xff]
        %v8021 = vld [vmem:[%s5 + $0x48] sm:$0xff]
        %v8022 = vld [vmem:[%s5 + $0x50] sm:$0xff]
        %v8023 = vld [vmem:[%s5 + $0x58] sm:$0xff]
        %v8024 = vld [vmem:[%s5 + $0x60] sm:$0xff]
        %v8025 = vld [vmem:[%s5 + $0x68] sm:$0xff]
        %v8026 = vld [vmem:[%s5 + $0x70] sm:$0xff]
        %v8027 = vld [vmem:[%s5 + $0x78] sm:$0xff]
        %v8028 = vld [vmem:[%s5 + $0x80] sm:$0xff]
        %v8029 = vld [vmem:[%s5 + $0x88] sm:$0xff]
        %v8030 = vld [vmem:[%s5 + $0x90] sm:$0xff]
        %v8031 = vld [vmem:[%s5 + $0x98] sm:$0xff]
        %v8032 = vld [vmem:[%s5 + $0xa0] sm:$0xff]
        %v8033 = vld [vmem:[%s5 + $0xa8] sm:$0xff]
        %v8034 = vld [vmem:[%s5 + $0xb0] sm:$0xff]
        %v8035 = vld [vmem:[%s5 + $0xb8] sm:$0xff]
        %v8036 = vld [vmem:[%s5 + $0xc0] sm:$0xff]
        %v8037 = vld [vmem:[%s5 + $0xc8] sm:$0xff]
        %v8038 = vld [vmem:[%s5 + $0xd0] sm:$0xff]
        %v8039 = vld [vmem:[%s5 + $0xd8] sm:$0xff]
        %v8040 = vld [vmem:[%s5 + $0xe0] sm:$0xff]
        %v8041 = vld [vmem:[%s5 + $0xe8] sm:$0xff]
        %v8042 = vld [vmem:[%s5 + $0xf0] sm:$0xff]
        %v8043 = vld [vmem:[%s5 + $0xf8] sm:$0xff]
        %v8044 = vld [vmem:[%s5 + $0x100] sm:$0xff]
        %v8045 = vld [vmem:[%s5 + $0x108] sm:$0xff]
        %v8046 = vld [vmem:[%s5 + $0x110] sm:$0xff]
        %v8047 = vld [vmem:[%s5 + $0x118] sm:$0xff]
        %v8048 = vld [vmem:[%s5 + $0x120] sm:$0xff]
        %v8049 = vld [vmem:[%s5 + $0x128] sm:$0xff]
        %v8050 = vld [vmem:[%s5 + $0x130] sm:$0xff]
        %v8051 = vld [vmem:[%s5 + $0x138] sm:$0xff]
        %v8052 = vld [vmem:[%s5 + $0x140] sm:$0xff]
        %v8053 = vld [vmem:[%s5 + $0x148] sm:$0xff]
        %v8054 = vld [vmem:[%s5 + $0x150] sm:$0xff]
        %v8055 = vld [vmem:[%s5 + $0x158] sm:$0xff]
        %v8056 = vld [vmem:[%s5 + $0x160] sm:$0xff]
        %v8057 = vld [vmem:[%s5 + $0x168] sm:$0xff]
        %v8058 = vld [vmem:[%s5 + $0x170] sm:$0xff]
        %v8059 = vld [vmem:[%s5 + $0x178] sm:$0xff]
        %v8060 = vld [vmem:[%s5 + $0x180] sm:$0xff]
        %v8061 = vld [vmem:[%s5 + $0x188] sm:$0xff]
        %v8062 = vld [vmem:[%s5 + $0x190] sm:$0xff]
        %v8063 = vld [vmem:[%s5 + $0x198] sm:$0xff]
        %v8064 = vld [vmem:[%s5 + $0x1a0] sm:$0xff]
        %v8065 = vld [vmem:[%s5 + $0x1a8] sm:$0xff]
        %v8066 = vld [vmem:[%s5 + $0x1b0] sm:$0xff]
        %v8067 = vld [vmem:[%s5 + $0x1b8] sm:$0xff]
        %v8068 = vld [vmem:[%s5 + $0x1c0] sm:$0xff]
        %v8069 = vld [vmem:[%s5 + $0x1c8] sm:$0xff]
        %v8070 = vld [vmem:[%s5 + $0x1d0] sm:$0xff]
        %v8071 = vld [vmem:[%s5 + $0x1d8] sm:$0xff]
        %v8072 = vld [vmem:[%s5 + $0x1e0] sm:$0xff]
        %v8073 = vld [vmem:[%s5 + $0x1e8] sm:$0xff]
        %v8074 = vld [vmem:[%s5 + $0x1f0] sm:$0xff]
        %v8075 = vld [vmem:[%s5 + $0x1f8] sm:$0xff]
        %v8076 = vld [vmem:[%s5 + $0x200] sm:$0xff]
        %v8077 = vld [vmem:[%s5 + $0x208] sm:$0xff]
        %v8078 = vld [vmem:[%s5 + $0x210] sm:$0xff]
        %v8079 = vld [vmem:[%s5 + $0x218] sm:$0xff]
        %v8080 = vld [vmem:[%s5 + $0x220] sm:$0xff]
        %v8081 = vld [vmem:[%s5 + $0x228] sm:$0xff]
        %v8082 = vld [vmem:[%s5 + $0x230] sm:$0xff]
        %v8083 = vld [vmem:[%s5 + $0x238] sm:$0xff]
        %v8084 = vld [vmem:[%s5 + $0x240] sm:$0xff]
        %v8085 = vld [vmem:[%s5 + $0x248] sm:$0xff]
        %v8086 = vld [vmem:[%s5 + $0x250] sm:$0xff]
        %v8087 = vld [vmem:[%s5 + $0x258] sm:$0xff]
        %v8088 = vld [vmem:[%s5 + $0x260] sm:$0xff]
        %v8089 = vld [vmem:[%s5 + $0x268] sm:$0xff]
        %v8090 = vld [vmem:[%s5 + $0x270] sm:$0xff]
        %v8091 = vld [vmem:[%s5 + $0x278] sm:$0xff]
        %v8092 = vld [vmem:[%s5 + $0x280] sm:$0xff]
        %v8093 = vld [vmem:[%s5 + $0x288] sm:$0xff]
        %v8094 = vld [vmem:[%s5 + $0x290] sm:$0xff]
        %v8095 = vld [vmem:[%s5 + $0x298] sm:$0xff]
        %v8096 = vld [vmem:[%s5 + $0x2a0] sm:$0xff]
        %v8097 = vld [vmem:[%s5 + $0x2a8] sm:$0xff]
        %v8098 = vld [vmem:[%s5 + $0x2b0] sm:$0xff]
        %v8099 = vld [vmem:[%s5 + $0x2b8] sm:$0xff]
        %v8100 = vld [vmem:[%s5 + $0x2c0] sm:$0xff]
        %v8101 = vld [vmem:[%s5 + $0x2c8] sm:$0xff]
        %v8102 = vld [vmem:[%s5 + $0x2d0] sm:$0xff]
        %v8103 = vld [vmem:[%s5 + $0x2d8] sm:$0xff]
        %v8104 = vld [vmem:[%s5 + $0x2e0] sm:$0xff]
        %v8105 = vld [vmem:[%s5 + $0x2e8] sm:$0xff]
        %v8106 = vld [vmem:[%s5 + $0x2f0] sm:$0xff]
        %v8107 = vld [vmem:[%s5 + $0x2f8] sm:$0xff]
        %v8108 = vld [vmem:[%s5 + $0x300] sm:$0xff]
        %v8109 = vld [vmem:[%s5 + $0x308] sm:$0xff]
        %v8110 = vld [vmem:[%s5 + $0x310] sm:$0xff]
        %v8111 = vld [vmem:[%s5 + $0x318] sm:$0xff]
        %v8112 = vld [vmem:[%s5 + $0x320] sm:$0xff]
        %v8113 = vld [vmem:[%s5 + $0x328] sm:$0xff]
        %v8114 = vld [vmem:[%s5 + $0x330] sm:$0xff]
        %v8115 = vld [vmem:[%s5 + $0x338] sm:$0xff]
        %v8116 = vld [vmem:[%s5 + $0x340] sm:$0xff]
        %v8117 = vld [vmem:[%s5 + $0x348] sm:$0xff]
        %v8118 = vld [vmem:[%s5 + $0x350] sm:$0xff]
        %v8119 = vld [vmem:[%s5 + $0x358] sm:$0xff]
        %v8120 = vld [vmem:[%s5 + $0x360] sm:$0xff]
        %v8121 = vld [vmem:[%s5 + $0x368] sm:$0xff]
        %v8122 = vld [vmem:[%s5 + $0x370] sm:$0xff]
        %v8123 = vld [vmem:[%s5 + $0x378] sm:$0xff]
        %v8124 = vld [vmem:[%s5 + $0x380] sm:$0xff]
        %v8125 = vld [vmem:[%s5 + $0x388] sm:$0xff]
        %v8126 = vld [vmem:[%s5 + $0x390] sm:$0xff]
        %v8127 = vld [vmem:[%s5 + $0x398] sm:$0xff]
        %v8128 = vld [vmem:[%s5 + $0x3a0] sm:$0xff]
        %v8129 = vld [vmem:[%s5 + $0x3a8] sm:$0xff]
        %v8130 = vld [vmem:[%s5 + $0x3b0] sm:$0xff]
        %v8131 = vld [vmem:[%s5 + $0x3b8] sm:$0xff]
        %v8132 = vld [vmem:[%s5 + $0x3c0] sm:$0xff]
        %v8133 = vld [vmem:[%s5 + $0x3c8] sm:$0xff]
        %v8134 = vld [vmem:[%s5 + $0x3d0] sm:$0xff]
        %v8135 = vld [vmem:[%s5 + $0x3d8] sm:$0xff]
        %v8136 = vld [vmem:[%s5 + $0x3e0] sm:$0xff]
        %v8137 = vld [vmem:[%s5 + $0x3e8] sm:$0xff]
        %v8138 = vld [vmem:[%s5 + $0x3f0] sm:$0xff]
        %v8139 = vld [vmem:[%s5 + $0x3f8] sm:$0xff]
        %v8140 = vld [vmem:[%s5 + $0x400] sm:$0xff]
        %v8141 = vld [vmem:[%s5 + $0x408] sm:$0xff]
        %v8142 = vld [vmem:[%s5 + $0x410] sm:$0xff]
        %v8143 = vld [vmem:[%s5 + $0x418] sm:$0xff]
        %v8144 = vld [vmem:[%s5 + $0x420] sm:$0xff]
        %v8145 = vld [vmem:[%s5 + $0x428] sm:$0xff]
        %v8146 = vld [vmem:[%s5 + $0x430] sm:$0xff]
        %v8147 = vld [vmem:[%s5 + $0x438] sm:$0xff]
        %v8148 = vld [vmem:[%s5 + $0x440] sm:$0xff]
        %v8149 = vld [vmem:[%s5 + $0x448] sm:$0xff]
        %v8150 = vld [vmem:[%s5 + $0x450] sm:$0xff]
        %v8151 = vld [vmem:[%s5 + $0x458] sm:$0xff]
        %v8152 = vld [vmem:[%s5 + $0x460] sm:$0xff]
        %v8153 = vld [vmem:[%s5 + $0x468] sm:$0xff]
        %v8154 = vld [vmem:[%s5 + $0x470] sm:$0xff]
        %v8155 = vld [vmem:[%s5 + $0x478] sm:$0xff]
        %v8156 = vld [vmem:[%s5 + $0x480] sm:$0xff]
        %v8157 = vld [vmem:[%s5 + $0x488] sm:$0xff]
        %v8158 = vld [vmem:[%s5 + $0x490] sm:$0xff]
        %v8159 = vld [vmem:[%s5 + $0x498] sm:$0xff]
        %v8160 = vld [vmem:[%s5 + $0x4a0] sm:$0xff]
        %v8161 = vld [vmem:[%s5 + $0x4a8] sm:$0xff]
        %v8162 = vld [vmem:[%s5 + $0x4b0] sm:$0xff]
        %v8163 = vld [vmem:[%s5 + $0x4b8] sm:$0xff]
        %v8164 = vld [vmem:[%s5 + $0x4c0] sm:$0xff]
        %v8165 = vld [vmem:[%s5 + $0x4c8] sm:$0xff]
        %v8166 = vld [vmem:[%s5 + $0x4d0] sm:$0xff]
        %v8167 = vld [vmem:[%s5 + $0x4d8] sm:$0xff]
        %v8168 = vld [vmem:[%s5 + $0x4e0] sm:$0xff]
        %v8169 = vld [vmem:[%s5 + $0x4e8] sm:$0xff]
        %v8170 = vld [vmem:[%s5 + $0x4f0] sm:$0xff]
        %v8171 = vld [vmem:[%s5 + $0x4f8] sm:$0xff]
        %v8172 = vld [vmem:[%s5 + $0x500] sm:$0xff]
        %v8173 = vld [vmem:[%s5 + $0x508] sm:$0xff]
        %v8174 = vld [vmem:[%s5 + $0x510] sm:$0x77]
        %v8175 = vld [vmem:[%s5 + $0x518] sm:$0x77]
        %v8176 = vld [vmem:[%s5 + $0x520] sm:$0x77]
        %v8177 = vld [vmem:[%s12] sm:$0xf]
        %v8343 = vunpack.c.l.b16 %v8012
        %v8344 = vunpack.c.h.b16 %v8012
        %v8345 = vunpack.c.l.b16 %v8013
        %v8346 = vunpack.c.h.b16 %v8013
        %v8347 = vunpack.c.l.b16 %v8014
        %v8348 = vunpack.c.h.b16 %v8014
        %v8349 = vunpack.c.l.b16 %v8015
        %v8350 = vunpack.c.h.b16 %v8015
        %v8351 = vunpack.c.l.b16 %v8016
        %v8352 = vunpack.c.h.b16 %v8016
        %v8353 = vunpack.c.l.b16 %v8017
        %v8354 = vunpack.c.h.b16 %v8017
        %v8355 = vunpack.c.l.b16 %v8018
        %v8356 = vunpack.c.h.b16 %v8018
        %v8357 = vunpack.c.l.b16 %v8019
        %v8358 = vunpack.c.h.b16 %v8019
        %v8359 = vunpack.c.l.b16 %v8020
        %v8360 = vunpack.c.h.b16 %v8020
        %v8361 = vunpack.c.l.b16 %v8021
        %v8362 = vunpack.c.h.b16 %v8021
        %v8363 = vunpack.c.l.b16 %v8022
        %v8364 = vunpack.c.h.b16 %v8022
        %v8365 = vunpack.c.l.b16 %v8023
        %v8366 = vunpack.c.h.b16 %v8023
        %v8367 = vunpack.c.l.b16 %v8024
        %v8368 = vunpack.c.h.b16 %v8024
        %v8369 = vunpack.c.l.b16 %v8025
        %v8370 = vunpack.c.h.b16 %v8025
        %v8371 = vunpack.c.l.b16 %v8026
        %v8372 = vunpack.c.h.b16 %v8026
        %v8373 = vunpack.c.l.b16 %v8027
        %v8374 = vunpack.c.h.b16 %v8027
        %v8375 = vunpack.c.l.b16 %v8028
        %v8376 = vunpack.c.h.b16 %v8028
        %v8377 = vunpack.c.l.b16 %v8029
        %v8378 = vunpack.c.h.b16 %v8029
        %v8379 = vunpack.c.l.b16 %v8030
        %v8380 = vunpack.c.h.b16 %v8030
        %v8381 = vunpack.c.l.b16 %v8031
        %v8382 = vunpack.c.h.b16 %v8031
        %v8383 = vunpack.c.l.b16 %v8032
        %v8384 = vunpack.c.h.b16 %v8032
        %v8385 = vunpack.c.l.b16 %v8033
        %v8386 = vunpack.c.h.b16 %v8033
        %v8387 = vunpack.c.l.b16 %v8034
        %v8388 = vunpack.c.h.b16 %v8034
        %v8389 = vunpack.c.l.b16 %v8035
        %v8390 = vunpack.c.h.b16 %v8035
        %v8391 = vunpack.c.l.b16 %v8036
        %v8392 = vunpack.c.h.b16 %v8036
        %v8393 = vunpack.c.l.b16 %v8037
        %v8394 = vunpack.c.h.b16 %v8037
        %v8395 = vunpack.c.l.b16 %v8038
        %v8396 = vunpack.c.h.b16 %v8038
        %v8397 = vunpack.c.l.b16 %v8039
        %v8398 = vunpack.c.h.b16 %v8039
        %v8399 = vunpack.c.l.b16 %v8040
        %v8400 = vunpack.c.h.b16 %v8040
        %v8401 = vunpack.c.l.b16 %v8041
        %v8402 = vunpack.c.h.b16 %v8041
        %v8403 = vunpack.c.l.b16 %v8042
        %v8404 = vunpack.c.h.b16 %v8042
        %v8405 = vunpack.c.l.b16 %v8043
        %v8406 = vunpack.c.h.b16 %v8043
        %v8407 = vunpack.c.l.b16 %v8044
        %v8408 = vunpack.c.h.b16 %v8044
        %v8409 = vunpack.c.l.b16 %v8045
        %v8410 = vunpack.c.h.b16 %v8045
        %v8411 = vunpack.c.l.b16 %v8046
        %v8412 = vunpack.c.h.b16 %v8046
        %v8413 = vunpack.c.l.b16 %v8047
        %v8414 = vunpack.c.h.b16 %v8047
        %v8415 = vunpack.c.l.b16 %v8048
        %v8416 = vunpack.c.h.b16 %v8048
        %v8417 = vunpack.c.l.b16 %v8049
        %v8418 = vunpack.c.h.b16 %v8049
        %v8419 = vunpack.c.l.b16 %v8050
        %v8420 = vunpack.c.h.b16 %v8050
        %v8421 = vunpack.c.l.b16 %v8051
        %v8422 = vunpack.c.h.b16 %v8051
        %v8423 = vunpack.c.l.b16 %v8052
        %v8424 = vunpack.c.h.b16 %v8052
        %v8425 = vunpack.c.l.b16 %v8053
        %v8426 = vunpack.c.h.b16 %v8053
        %v8427 = vunpack.c.l.b16 %v8054
        %v8428 = vunpack.c.h.b16 %v8054
        %v8429 = vunpack.c.l.b16 %v8055
        %v8430 = vunpack.c.h.b16 %v8055
        %v8431 = vunpack.c.l.b16 %v8056
        %v8432 = vunpack.c.h.b16 %v8056
        %v8433 = vunpack.c.l.b16 %v8057
        %v8434 = vunpack.c.h.b16 %v8057
        %v8435 = vunpack.c.l.b16 %v8058
        %v8436 = vunpack.c.h.b16 %v8058
        %v8437 = vunpack.c.l.b16 %v8059
        %v8438 = vunpack.c.h.b16 %v8059
        %v8439 = vunpack.c.l.b16 %v8060
        %v8440 = vunpack.c.h.b16 %v8060
        %v8441 = vunpack.c.l.b16 %v8061
        %v8442 = vunpack.c.h.b16 %v8061
        %v8443 = vunpack.c.l.b16 %v8062
        %v8444 = vunpack.c.h.b16 %v8062
        %v8445 = vunpack.c.l.b16 %v8063
        %v8446 = vunpack.c.h.b16 %v8063
        %v8447 = vunpack.c.l.b16 %v8064
        %v8448 = vunpack.c.h.b16 %v8064
        %v8449 = vunpack.c.l.b16 %v8065
        %v8450 = vunpack.c.h.b16 %v8065
        %v8451 = vunpack.c.l.b16 %v8066
        %v8452 = vunpack.c.h.b16 %v8066
        %v8453 = vunpack.c.l.b16 %v8067
        %v8454 = vunpack.c.h.b16 %v8067
        %v8455 = vunpack.c.l.b16 %v8068
        %v8456 = vunpack.c.h.b16 %v8068
        %v8457 = vunpack.c.l.b16 %v8069
        %v8458 = vunpack.c.h.b16 %v8069
        %v8459 = vunpack.c.l.b16 %v8070
        %v8460 = vunpack.c.h.b16 %v8070
        %v8461 = vunpack.c.l.b16 %v8071
        %v8462 = vunpack.c.h.b16 %v8071
        %v8463 = vunpack.c.l.b16 %v8072
        %v8464 = vunpack.c.h.b16 %v8072
        %v8465 = vunpack.c.l.b16 %v8073
        %v8466 = vunpack.c.h.b16 %v8073
        %v8467 = vunpack.c.l.b16 %v8074
        %v8468 = vunpack.c.h.b16 %v8074
        %v8469 = vunpack.c.l.b16 %v8075
        %v8470 = vunpack.c.h.b16 %v8075
        %v8471 = vunpack.c.l.b16 %v8076
        %v8472 = vunpack.c.h.b16 %v8076
        %v8473 = vunpack.c.l.b16 %v8077
        %v8474 = vunpack.c.h.b16 %v8077
        %v8475 = vunpack.c.l.b16 %v8078
        %v8476 = vunpack.c.h.b16 %v8078
        %v8477 = vunpack.c.l.b16 %v8079
        %v8478 = vunpack.c.h.b16 %v8079
        %v8479 = vunpack.c.l.b16 %v8080
        %v8480 = vunpack.c.h.b16 %v8080
        %v8481 = vunpack.c.l.b16 %v8081
        %v8482 = vunpack.c.h.b16 %v8081
        %v8483 = vunpack.c.l.b16 %v8082
        %v8484 = vunpack.c.h.b16 %v8082
        %v8485 = vunpack.c.l.b16 %v8083
        %v8486 = vunpack.c.h.b16 %v8083
        %v8487 = vunpack.c.l.b16 %v8084
        %v8488 = vunpack.c.h.b16 %v8084
        %v8489 = vunpack.c.l.b16 %v8085
        %v8490 = vunpack.c.h.b16 %v8085
        %v8491 = vunpack.c.l.b16 %v8086
        %v8492 = vunpack.c.h.b16 %v8086
        %v8493 = vunpack.c.l.b16 %v8087
        %v8494 = vunpack.c.h.b16 %v8087
        %v8495 = vunpack.c.l.b16 %v8088
        %v8496 = vunpack.c.h.b16 %v8088
        %v8497 = vunpack.c.l.b16 %v8089
        %v8498 = vunpack.c.h.b16 %v8089
        %v8499 = vunpack.c.l.b16 %v8090
        %v8500 = vunpack.c.h.b16 %v8090
        %v8501 = vunpack.c.l.b16 %v8091
        %v8502 = vunpack.c.h.b16 %v8091
        %v8503 = vunpack.c.l.b16 %v8092
        %v8504 = vunpack.c.h.b16 %v8092
        %v8505 = vunpack.c.l.b16 %v8093
        %v8506 = vunpack.c.h.b16 %v8093
        %v8507 = vunpack.c.l.b16 %v8094
        %v8508 = vunpack.c.h.b16 %v8094
        %v8509 = vunpack.c.l.b16 %v8095
        %v8510 = vunpack.c.h.b16 %v8095
        %v8511 = vunpack.c.l.b16 %v8096
        %v8512 = vunpack.c.h.b16 %v8096
        %v8513 = vunpack.c.l.b16 %v8097
        %v8514 = vunpack.c.h.b16 %v8097
        %v8515 = vunpack.c.l.b16 %v8098
        %v8516 = vunpack.c.h.b16 %v8098
        %v8517 = vunpack.c.l.b16 %v8099
        %v8518 = vunpack.c.h.b16 %v8099
        %v8519 = vunpack.c.l.b16 %v8100
        %v8520 = vunpack.c.h.b16 %v8100
        %v8521 = vunpack.c.l.b16 %v8101
        %v8522 = vunpack.c.h.b16 %v8101
        %v8523 = vunpack.c.l.b16 %v8102
        %v8524 = vunpack.c.h.b16 %v8102
        %v8525 = vunpack.c.l.b16 %v8103
        %v8526 = vunpack.c.h.b16 %v8103
        %v8527 = vunpack.c.l.b16 %v8104
        %v8528 = vunpack.c.h.b16 %v8104
        %v8529 = vunpack.c.l.b16 %v8105
        %v8530 = vunpack.c.h.b16 %v8105
        %v8531 = vunpack.c.l.b16 %v8106
        %v8532 = vunpack.c.h.b16 %v8106
        %v8533 = vunpack.c.l.b16 %v8107
        %v8534 = vunpack.c.h.b16 %v8107
        %v8535 = vunpack.c.l.b16 %v8108
        %v8536 = vunpack.c.h.b16 %v8108
        %v8537 = vunpack.c.l.b16 %v8109
        %v8538 = vunpack.c.h.b16 %v8109
        %v8539 = vunpack.c.l.b16 %v8110
        %v8540 = vunpack.c.h.b16 %v8110
        %v8541 = vunpack.c.l.b16 %v8111
        %v8542 = vunpack.c.h.b16 %v8111
        %v8543 = vunpack.c.l.b16 %v8112
        %v8544 = vunpack.c.h.b16 %v8112
        %v8545 = vunpack.c.l.b16 %v8113
        %v8546 = vunpack.c.h.b16 %v8113
        %v8547 = vunpack.c.l.b16 %v8114
        %v8548 = vunpack.c.h.b16 %v8114
        %v8549 = vunpack.c.l.b16 %v8115
        %v8550 = vunpack.c.h.b16 %v8115
        %v8551 = vunpack.c.l.b16 %v8116
        %v8552 = vunpack.c.h.b16 %v8116
        %v8553 = vunpack.c.l.b16 %v8117
        %v8554 = vunpack.c.h.b16 %v8117
        %v8555 = vunpack.c.l.b16 %v8118
        %v8556 = vunpack.c.h.b16 %v8118
        %v8557 = vunpack.c.l.b16 %v8119
        %v8558 = vunpack.c.h.b16 %v8119
        %v8559 = vunpack.c.l.b16 %v8120
        %v8560 = vunpack.c.h.b16 %v8120
        %v8561 = vunpack.c.l.b16 %v8121
        %v8562 = vunpack.c.h.b16 %v8121
        %v8563 = vunpack.c.l.b16 %v8122
        %v8564 = vunpack.c.h.b16 %v8122
        %v8565 = vunpack.c.l.b16 %v8123
        %v8566 = vunpack.c.h.b16 %v8123
        %v8567 = vunpack.c.l.b16 %v8124
        %v8568 = vunpack.c.h.b16 %v8124
        %v8569 = vunpack.c.l.b16 %v8125
        %v8570 = vunpack.c.h.b16 %v8125
        %v8571 = vunpack.c.l.b16 %v8126
        %v8572 = vunpack.c.h.b16 %v8126
        %v8573 = vunpack.c.l.b16 %v8127
        %v8574 = vunpack.c.h.b16 %v8127
        %v8575 = vunpack.c.l.b16 %v8128
        %v8576 = vunpack.c.h.b16 %v8128
        %v8577 = vunpack.c.l.b16 %v8129
        %v8578 = vunpack.c.h.b16 %v8129
        %v8579 = vunpack.c.l.b16 %v8130
        %v8580 = vunpack.c.h.b16 %v8130
        %v8581 = vunpack.c.l.b16 %v8131
        %v8582 = vunpack.c.h.b16 %v8131
        %v8583 = vunpack.c.l.b16 %v8132
        %v8584 = vunpack.c.h.b16 %v8132
        %v8585 = vunpack.c.l.b16 %v8133
        %v8586 = vunpack.c.h.b16 %v8133
        %v8587 = vunpack.c.l.b16 %v8134
        %v8588 = vunpack.c.h.b16 %v8134
        %v8589 = vunpack.c.l.b16 %v8135
        %v8590 = vunpack.c.h.b16 %v8135
        %v8591 = vunpack.c.l.b16 %v8136
        %v8592 = vunpack.c.h.b16 %v8136
        %v8593 = vunpack.c.l.b16 %v8137
        %v8594 = vunpack.c.h.b16 %v8137
        %v8595 = vunpack.c.l.b16 %v8138
        %v8596 = vunpack.c.h.b16 %v8138
        %v8597 = vunpack.c.l.b16 %v8139
        %v8598 = vunpack.c.h.b16 %v8139
        %v8599 = vunpack.c.l.b16 %v8140
        %v8600 = vunpack.c.h.b16 %v8140
        %v8601 = vunpack.c.l.b16 %v8141
        %v8602 = vunpack.c.h.b16 %v8141
        %v8603 = vunpack.c.l.b16 %v8142
        %v8604 = vunpack.c.h.b16 %v8142
        %v8605 = vunpack.c.l.b16 %v8143
        %v8606 = vunpack.c.h.b16 %v8143
        %v8607 = vunpack.c.l.b16 %v8144
        %v8608 = vunpack.c.h.b16 %v8144
        %v8609 = vunpack.c.l.b16 %v8145
        %v8610 = vunpack.c.h.b16 %v8145
        %v8611 = vunpack.c.l.b16 %v8146
        %v8612 = vunpack.c.h.b16 %v8146
        %v8613 = vunpack.c.l.b16 %v8147
        %v8614 = vunpack.c.h.b16 %v8147
        %v8615 = vunpack.c.l.b16 %v8148
        %v8616 = vunpack.c.h.b16 %v8148
        %v8617 = vunpack.c.l.b16 %v8149
        %v8618 = vunpack.c.h.b16 %v8149
        %v8619 = vunpack.c.l.b16 %v8150
        %v8620 = vunpack.c.h.b16 %v8150
        %v8621 = vunpack.c.l.b16 %v8151
        %v8622 = vunpack.c.h.b16 %v8151
        %v8623 = vunpack.c.l.b16 %v8152
        %v8624 = vunpack.c.h.b16 %v8152
        %v8625 = vunpack.c.l.b16 %v8153
        %v8626 = vunpack.c.h.b16 %v8153
        %v8627 = vunpack.c.l.b16 %v8154
        %v8628 = vunpack.c.h.b16 %v8154
        %v8629 = vunpack.c.l.b16 %v8155
        %v8630 = vunpack.c.h.b16 %v8155
        %v8631 = vunpack.c.l.b16 %v8156
        %v8632 = vunpack.c.h.b16 %v8156
        %v8633 = vunpack.c.l.b16 %v8157
        %v8634 = vunpack.c.h.b16 %v8157
        %v8635 = vunpack.c.l.b16 %v8158
        %v8636 = vunpack.c.h.b16 %v8158
        %v8637 = vunpack.c.l.b16 %v8159
        %v8638 = vunpack.c.h.b16 %v8159
        %v8639 = vunpack.c.l.b16 %v8160
        %v8640 = vunpack.c.h.b16 %v8160
        %v8641 = vunpack.c.l.b16 %v8161
        %v8642 = vunpack.c.h.b16 %v8161
        %v8643 = vunpack.c.l.b16 %v8162
        %v8644 = vunpack.c.h.b16 %v8162
        %v8645 = vunpack.c.l.b16 %v8163
        %v8646 = vunpack.c.h.b16 %v8163
        %v8647 = vunpack.c.l.b16 %v8164
        %v8648 = vunpack.c.h.b16 %v8164
        %v8649 = vunpack.c.l.b16 %v8165
        %v8650 = vunpack.c.h.b16 %v8165
        %v8651 = vunpack.c.l.b16 %v8166
        %v8652 = vunpack.c.h.b16 %v8166
        %v8653 = vunpack.c.l.b16 %v8167
        %v8654 = vunpack.c.h.b16 %v8167
        %v8655 = vunpack.c.l.b16 %v8168
        %v8656 = vunpack.c.h.b16 %v8168
        %v8657 = vunpack.c.l.b16 %v8169
        %v8658 = vunpack.c.h.b16 %v8169
        %v8659 = vunpack.c.l.b16 %v8170
        %v8660 = vunpack.c.h.b16 %v8170
        %v8661 = vunpack.c.l.b16 %v8171
        %v8662 = vunpack.c.h.b16 %v8171
        %v8663 = vunpack.c.l.b16 %v8172
        %v8664 = vunpack.c.h.b16 %v8172
        %v8665 = vunpack.c.l.b16 %v8173
        %v8666 = vunpack.c.h.b16 %v8173
        %v8667 = vunpack.c.l.b16 %v8174
        %v8668 = vunpack.c.h.b16 %v8174
        %v8669 = vunpack.c.l.b16 %v8175
        %v8670 = vunpack.c.h.b16 %v8175
        %v8671 = vunpack.c.l.b16 %v8176
        %v8672 = vunpack.c.h.b16 %v8176
        %v8673 = vpack.c.b16 %v8349, %v8343
        %v8674 = vpack.c.b16 %v8350, %v8344
        %v8675 = vpack.c.b16 %v8351, %v8345
        %v8676 = vpack.c.b16 %v8352, %v8346
        %v8677 = vpack.c.b16 %v8353, %v8347
        %v8678 = vpack.c.b16 %v8354, %v8348
        %v8679 = vpack.c.b16 %v8361, %v8355
        %v8680 = vpack.c.b16 %v8362, %v8356
        %v8681 = vpack.c.b16 %v8363, %v8357
        %v8682 = vpack.c.b16 %v8364, %v8358
        %v8683 = vpack.c.b16 %v8365, %v8359
        %v8684 = vpack.c.b16 %v8366, %v8360
        %v8685 = vpack.c.b16 %v8373, %v8367
        %v8686 = vpack.c.b16 %v8374, %v8368
        %v8687 = vpack.c.b16 %v8375, %v8369
        %v8688 = vpack.c.b16 %v8376, %v8370
        %v8689 = vpack.c.b16 %v8377, %v8371
        %v8690 = vpack.c.b16 %v8378, %v8372
        %v8691 = vpack.c.b16 %v8385, %v8379
        %v8692 = vpack.c.b16 %v8386, %v8380
        %v8693 = vpack.c.b16 %v8387, %v8381
        %v8694 = vpack.c.b16 %v8388, %v8382
        %v8695 = vpack.c.b16 %v8389, %v8383
        %v8696 = vpack.c.b16 %v8390, %v8384
        %v8697 = vpack.c.b16 %v8397, %v8391
        %v8698 = vpack.c.b16 %v8398, %v8392
        %v8699 = vpack.c.b16 %v8399, %v8393
        %v8700 = vpack.c.b16 %v8400, %v8394
        %v8701 = vpack.c.b16 %v8401, %v8395
        %v8702 = vpack.c.b16 %v8402, %v8396
        %v8703 = vpack.c.b16 %v8409, %v8403
        %v8704 = vpack.c.b16 %v8410, %v8404
        %v8705 = vpack.c.b16 %v8411, %v8405
        %v8706 = vpack.c.b16 %v8412, %v8406
        %v8707 = vpack.c.b16 %v8413, %v8407
        %v8708 = vpack.c.b16 %v8414, %v8408
        %v8709 = vpack.c.b16 %v8421, %v8415
        %v8710 = vpack.c.b16 %v8422, %v8416
        %v8711 = vpack.c.b16 %v8423, %v8417
        %v8712 = vpack.c.b16 %v8424, %v8418
        %v8713 = vpack.c.b16 %v8425, %v8419
        %v8714 = vpack.c.b16 %v8426, %v8420
        %v8715 = vpack.c.b16 %v8433, %v8427
        %v8716 = vpack.c.b16 %v8434, %v8428
        %v8717 = vpack.c.b16 %v8435, %v8429
        %v8718 = vpack.c.b16 %v8436, %v8430
        %v8719 = vpack.c.b16 %v8437, %v8431
        %v8720 = vpack.c.b16 %v8438, %v8432
        %v8721 = vpack.c.b16 %v8445, %v8439
        %v8722 = vpack.c.b16 %v8446, %v8440
        %v8723 = vpack.c.b16 %v8447, %v8441
        %v8724 = vpack.c.b16 %v8448, %v8442
        %v8725 = vpack.c.b16 %v8449, %v8443
        %v8726 = vpack.c.b16 %v8450, %v8444
        %v8727 = vpack.c.b16 %v8457, %v8451
        %v8728 = vpack.c.b16 %v8458, %v8452
        %v8729 = vpack.c.b16 %v8459, %v8453
        %v8730 = vpack.c.b16 %v8460, %v8454
        %v8731 = vpack.c.b16 %v8461, %v8455
        %v8732 = vpack.c.b16 %v8462, %v8456
        %v8733 = vpack.c.b16 %v8469, %v8463
        %v8734 = vpack.c.b16 %v8470, %v8464
        %v8735 = vpack.c.b16 %v8471, %v8465
        %v8736 = vpack.c.b16 %v8472, %v8466
        %v8737 = vpack.c.b16 %v8473, %v8467
        %v8738 = vpack.c.b16 %v8474, %v8468
        %v8739 = vpack.c.b16 %v8481, %v8475
        %v8740 = vpack.c.b16 %v8482, %v8476
        %v8741 = vpack.c.b16 %v8483, %v8477
        %v8742 = vpack.c.b16 %v8484, %v8478
        %v8743 = vpack.c.b16 %v8485, %v8479
        %v8744 = vpack.c.b16 %v8486, %v8480
        %v8745 = vpack.c.b16 %v8493, %v8487
        %v8746 = vpack.c.b16 %v8494, %v8488
        %v8747 = vpack.c.b16 %v8495, %v8489
        %v8748 = vpack.c.b16 %v8496, %v8490
        %v8749 = vpack.c.b16 %v8497, %v8491
        %v8750 = vpack.c.b16 %v8498, %v8492
        %v8751 = vpack.c.b16 %v8505, %v8499
        %v8752 = vpack.c.b16 %v8506, %v8500
        %v8753 = vpack.c.b16 %v8507, %v8501
        %v8754 = vpack.c.b16 %v8508, %v8502
        %v8755 = vpack.c.b16 %v8509, %v8503
        %v8756 = vpack.c.b16 %v8510, %v8504
        %v8757 = vpack.c.b16 %v8517, %v8511
        %v8758 = vpack.c.b16 %v8518, %v8512
        %v8759 = vpack.c.b16 %v8519, %v8513
        %v8760 = vpack.c.b16 %v8520, %v8514
        %v8761 = vpack.c.b16 %v8521, %v8515
        %v8762 = vpack.c.b16 %v8522, %v8516
        %v8763 = vpack.c.b16 %v8529, %v8523
        %v8764 = vpack.c.b16 %v8530, %v8524
        %v8765 = vpack.c.b16 %v8531, %v8525
        %v8766 = vpack.c.b16 %v8532, %v8526
        %v8767 = vpack.c.b16 %v8533, %v8527
        %v8768 = vpack.c.b16 %v8534, %v8528
        %v8769 = vpack.c.b16 %v8541, %v8535
        %v8770 = vpack.c.b16 %v8542, %v8536
        %v8771 = vpack.c.b16 %v8543, %v8537
        %v8772 = vpack.c.b16 %v8544, %v8538
        %v8773 = vpack.c.b16 %v8545, %v8539
        %v8774 = vpack.c.b16 %v8546, %v8540
        %v8775 = vpack.c.b16 %v8553, %v8547
        %v8776 = vpack.c.b16 %v8554, %v8548
        %v8777 = vpack.c.b16 %v8555, %v8549
        %v8778 = vpack.c.b16 %v8556, %v8550
        %v8779 = vpack.c.b16 %v8557, %v8551
        %v8780 = vpack.c.b16 %v8558, %v8552
        %v8781 = vpack.c.b16 %v8565, %v8559
        %v8782 = vpack.c.b16 %v8566, %v8560
        %v8783 = vpack.c.b16 %v8567, %v8561
        %v8784 = vpack.c.b16 %v8568, %v8562
        %v8785 = vpack.c.b16 %v8569, %v8563
        %v8786 = vpack.c.b16 %v8570, %v8564
        %v8787 = vpack.c.b16 %v8577, %v8571
        %v8788 = vpack.c.b16 %v8578, %v8572
        %v8789 = vpack.c.b16 %v8579, %v8573
        %v8790 = vpack.c.b16 %v8580, %v8574
        %v8791 = vpack.c.b16 %v8581, %v8575
        %v8792 = vpack.c.b16 %v8582, %v8576
        %v8793 = vpack.c.b16 %v8589, %v8583
        %v8794 = vpack.c.b16 %v8590, %v8584
        %v8795 = vpack.c.b16 %v8591, %v8585
        %v8796 = vpack.c.b16 %v8592, %v8586
        %v8797 = vpack.c.b16 %v8593, %v8587
        %v8798 = vpack.c.b16 %v8594, %v8588
        %v8799 = vpack.c.b16 %v8601, %v8595
        %v8800 = vpack.c.b16 %v8602, %v8596
        %v8801 = vpack.c.b16 %v8603, %v8597
        %v8802 = vpack.c.b16 %v8604, %v8598
        %v8803 = vpack.c.b16 %v8605, %v8599
        %v8804 = vpack.c.b16 %v8606, %v8600
        %v8805 = vpack.c.b16 %v8613, %v8607
        %v8806 = vpack.c.b16 %v8614, %v8608
        %v8807 = vpack.c.b16 %v8615, %v8609
        %v8808 = vpack.c.b16 %v8616, %v8610
        %v8809 = vpack.c.b16 %v8617, %v8611
        %v8810 = vpack.c.b16 %v8618, %v8612
        %v8811 = vpack.c.b16 %v8625, %v8619
        %v8812 = vpack.c.b16 %v8626, %v8620
        %v8813 = vpack.c.b16 %v8627, %v8621
        %v8814 = vpack.c.b16 %v8628, %v8622
        %v8815 = vpack.c.b16 %v8629, %v8623
        %v8816 = vpack.c.b16 %v8630, %v8624
        %v8817 = vpack.c.b16 %v8637, %v8631
        %v8818 = vpack.c.b16 %v8638, %v8632
        %v8819 = vpack.c.b16 %v8639, %v8633
        %v8820 = vpack.c.b16 %v8640, %v8634
        %v8821 = vpack.c.b16 %v8641, %v8635
        %v8822 = vpack.c.b16 %v8642, %v8636
        %v8823 = vpack.c.b16 %v8649, %v8643
        %v8824 = vpack.c.b16 %v8650, %v8644
        %v8825 = vpack.c.b16 %v8651, %v8645
        %v8826 = vpack.c.b16 %v8652, %v8646
        %v8827 = vpack.c.b16 %v8653, %v8647
        %v8828 = vpack.c.b16 %v8654, %v8648
        %v8829 = vpack.c.b16 %v8661, %v8655
        %v8830 = vpack.c.b16 %v8662, %v8656
        %v8831 = vpack.c.b16 %v8663, %v8657
        %v8832 = vpack.c.b16 %v8664, %v8658
        %v8833 = vpack.c.b16 %v8665, %v8659
        %v8834 = vpack.c.b16 %v8666, %v8660
        %v8835 = vpack.c.b16 %v8667, %v8667
        %v8836 = vpack.c.b16 %v8668, %v8668
        %v8837 = vpack.c.b16 %v8669, %v8669
        %v8838 = vpack.c.b16 %v8670, %v8670
        %v8839 = vpack.c.b16 %v8671, %v8671
        %v8840 = vpack.c.b16 %v8672, %v8672
        %v9004 = vsel %vm7802, %v8011, 0
        %v9007 = vsel %vm7395, %v8835, 0
        %v9010 = vsel %vm7395, %v8836, 0
        %v9013 = vsel %vm7395, %v8837, 0
        %v9016 = vsel %vm7395, %v8838, 0
        %v9019 = vsel %vm7395, %v8839, 0
        %v9022 = vsel %vm7395, %v8840, 0
        %9024 = vmatpush.bf16.msra.mxu0 %v8715
        %9025 = vmatpush.bf16.msra.mxu0 %v8709
        %9026 = vmatpush.bf16.msra.mxu0 %v8703
        %9027 = vmatpush.bf16.msra.mxu0 %v8697
        %9028 = vmatpush.bf16.msra.mxu0 %v8691
        %9029 = vmatpush.bf16.msra.mxu0 %v8685
        %9030 = vmatpush.bf16.msra.mxu0 %v8679
        %9031 = vmatpush.bf16.msra.mxu0 %v8673
        %9032 = vmatmul.bf16.gmra.mxu0 %v8008
        %v9033 = vpop.f32.mrf.mxu0
        %v9034 = vadd.f32 0.0, %v9033
        %v9035 = vpop.f32.mrf.mxu0
        %9036 = vdwg.mxu0
        %9037 = vmatpush.bf16.msra.mxu0 %v8763
        %9038 = vmatpush.bf16.msra.mxu0 %v8757
        %9039 = vmatpush.bf16.msra.mxu0 %v8751
        %9040 = vmatpush.bf16.msra.mxu0 %v8745
        %9041 = vmatpush.bf16.msra.mxu0 %v8739
        %9042 = vmatpush.bf16.msra.mxu0 %v8733
        %9043 = vmatpush.bf16.msra.mxu0 %v8727
        %9044 = vmatpush.bf16.msra.mxu0 %v8721
        %9045 = vmatmul.bf16.gmra.mxu0 %v8009
        %v9046 = vpop.f32.mrf.mxu0
        %v9047 = vadd.f32 %v9034, %v9046
        %v9048 = vpop.f32.mrf.mxu0
        %9049 = vdwg.mxu0
        %9050 = vmatpush.bf16.msra.mxu0 %v8811
        %9051 = vmatpush.bf16.msra.mxu0 %v8805
        %9052 = vmatpush.bf16.msra.mxu0 %v8799
        %9053 = vmatpush.bf16.msra.mxu0 %v8793
        %9054 = vmatpush.bf16.msra.mxu0 %v8787
        %9055 = vmatpush.bf16.msra.mxu0 %v8781
        %9056 = vmatpush.bf16.msra.mxu0 %v8775
        %9057 = vmatpush.bf16.msra.mxu0 %v8769
        %9058 = vmatmul.bf16.gmra.mxu0 %v8010
        %v9059 = vpop.f32.mrf.mxu0
        %v9060 = vadd.f32 %v9047, %v9059
        %v9061 = vpop.f32.mrf.mxu0
        %9062 = vdwg.mxu0
        %9063 = vmatpush.bf16.msra.mxu0 0
        %9064 = vmatpush.bf16.msra.mxu0 0
        %9065 = vmatpush.bf16.msra.mxu0 0
        %9066 = vmatpush.bf16.msra.mxu0 0
        %9067 = vmatpush.bf16.msra.mxu0 %v9007
        %9068 = vmatpush.bf16.msra.mxu0 %v8829
        %9069 = vmatpush.bf16.msra.mxu0 %v8823
        %9070 = vmatpush.bf16.msra.mxu0 %v8817
        %9071 = vmatmul.bf16.gmra.mxu0 %v9004
        %v9072 = vpop.f32.mrf.mxu0
        %v9073 = vadd.f32 %v9060, %v9072
        %v9074 = vpop.f32.mrf.mxu0
        %9075 = vdwg.mxu0
        %9076 = vmatpush.bf16.msra.mxu0 %v8716
        %9077 = vmatpush.bf16.msra.mxu0 %v8710
        %9078 = vmatpush.bf16.msra.mxu0 %v8704
        %9079 = vmatpush.bf16.msra.mxu0 %v8698
        %9080 = vmatpush.bf16.msra.mxu0 %v8692
        %9081 = vmatpush.bf16.msra.mxu0 %v8686
        %9082 = vmatpush.bf16.msra.mxu0 %v8680
        %9083 = vmatpush.bf16.msra.mxu0 %v8674
        %9084 = vmatmul.bf16.gmra.mxu0 %v8008
        %v9085 = vpop.f32.mrf.mxu0
        %v9086 = vadd.f32 0.0, %v9085
        %v9087 = vpop.f32.mrf.mxu0
        %9088 = vdwg.mxu0
        %9089 = vmatpush.bf16.msra.mxu0 %v8764
        %9090 = vmatpush.bf16.msra.mxu0 %v8758
        %9091 = vmatpush.bf16.msra.mxu0 %v8752
        %9092 = vmatpush.bf16.msra.mxu0 %v8746
        %9093 = vmatpush.bf16.msra.mxu0 %v8740
        %9094 = vmatpush.bf16.msra.mxu0 %v8734
        %9095 = vmatpush.bf16.msra.mxu0 %v8728
        %9096 = vmatpush.bf16.msra.mxu0 %v8722
        %9097 = vmatmul.bf16.gmra.mxu0 %v8009
        %v9098 = vpop.f32.mrf.mxu0
        %v9099 = vadd.f32 %v9086, %v9098
        %v9100 = vpop.f32.mrf.mxu0
        %9101 = vdwg.mxu0
        %9102 = vmatpush.bf16.msra.mxu0 %v8812
        %9103 = vmatpush.bf16.msra.mxu0 %v8806
        %9104 = vmatpush.bf16.msra.mxu0 %v8800
        %9105 = vmatpush.bf16.msra.mxu0 %v8794
        %9106 = vmatpush.bf16.msra.mxu0 %v8788
        %9107 = vmatpush.bf16.msra.mxu0 %v8782
        %9108 = vmatpush.bf16.msra.mxu0 %v8776
        %9109 = vmatpush.bf16.msra.mxu0 %v8770
        %9110 = vmatmul.bf16.gmra.mxu0 %v8010
        %v9111 = vpop.f32.mrf.mxu0
        %v9112 = vadd.f32 %v9099, %v9111
        %v9113 = vpop.f32.mrf.mxu0
        %9114 = vdwg.mxu0
        %9115 = vmatpush.bf16.msra.mxu0 0
        %9116 = vmatpush.bf16.msra.mxu0 0
        %9117 = vmatpush.bf16.msra.mxu0 0
        %9118 = vmatpush.bf16.msra.mxu0 0
        %9119 = vmatpush.bf16.msra.mxu0 %v9010
        %9120 = vmatpush.bf16.msra.mxu0 %v8830
        %9121 = vmatpush.bf16.msra.mxu0 %v8824
        %9122 = vmatpush.bf16.msra.mxu0 %v8818
        %9123 = vmatmul.bf16.gmra.mxu0 %v9004
        %v9124 = vpop.f32.mrf.mxu0
        %v9125 = vadd.f32 %v9112, %v9124
        %v9126 = vpop.f32.mrf.mxu0
        %9127 = vdwg.mxu0
        %9128 = vmatpush.bf16.msra.mxu0 %v8717
        %9129 = vmatpush.bf16.msra.mxu0 %v8711
        %9130 = vmatpush.bf16.msra.mxu0 %v8705
        %9131 = vmatpush.bf16.msra.mxu0 %v8699
        %9132 = vmatpush.bf16.msra.mxu0 %v8693
        %9133 = vmatpush.bf16.msra.mxu0 %v8687
        %9134 = vmatpush.bf16.msra.mxu0 %v8681
        %9135 = vmatpush.bf16.msra.mxu0 %v8675
        %9136 = vmatmul.bf16.gmra.mxu0 %v8008
        %v9137 = vpop.f32.mrf.mxu0
        %v9138 = vadd.f32 0.0, %v9137
        %v9139 = vpop.f32.mrf.mxu0
        %9140 = vdwg.mxu0
        %9141 = vmatpush.bf16.msra.mxu0 %v8765
        %9142 = vmatpush.bf16.msra.mxu0 %v8759
        %9143 = vmatpush.bf16.msra.mxu0 %v8753
        %9144 = vmatpush.bf16.msra.mxu0 %v8747
        %9145 = vmatpush.bf16.msra.mxu0 %v8741
        %9146 = vmatpush.bf16.msra.mxu0 %v8735
        %9147 = vmatpush.bf16.msra.mxu0 %v8729
        %9148 = vmatpush.bf16.msra.mxu0 %v8723
        %9149 = vmatmul.bf16.gmra.mxu0 %v8009
        %v9150 = vpop.f32.mrf.mxu0
        %v9151 = vadd.f32 %v9138, %v9150
        %v9152 = vpop.f32.mrf.mxu0
        %9153 = vdwg.mxu0
        %9154 = vmatpush.bf16.msra.mxu0 %v8813
        %9155 = vmatpush.bf16.msra.mxu0 %v8807
        %9156 = vmatpush.bf16.msra.mxu0 %v8801
        %9157 = vmatpush.bf16.msra.mxu0 %v8795
        %9158 = vmatpush.bf16.msra.mxu0 %v8789
        %9159 = vmatpush.bf16.msra.mxu0 %v8783
        %9160 = vmatpush.bf16.msra.mxu0 %v8777
        %9161 = vmatpush.bf16.msra.mxu0 %v8771
        %9162 = vmatmul.bf16.gmra.mxu0 %v8010
        %v9163 = vpop.f32.mrf.mxu0
        %v9164 = vadd.f32 %v9151, %v9163
        %v9165 = vpop.f32.mrf.mxu0
        %9166 = vdwg.mxu0
        %9167 = vmatpush.bf16.msra.mxu0 0
        %9168 = vmatpush.bf16.msra.mxu0 0
        %9169 = vmatpush.bf16.msra.mxu0 0
        %9170 = vmatpush.bf16.msra.mxu0 0
        %9171 = vmatpush.bf16.msra.mxu0 %v9013
        %9172 = vmatpush.bf16.msra.mxu0 %v8831
        %9173 = vmatpush.bf16.msra.mxu0 %v8825
        %9174 = vmatpush.bf16.msra.mxu0 %v8819
        %9175 = vmatmul.bf16.gmra.mxu0 %v9004
        %v9176 = vpop.f32.mrf.mxu0
        %v9177 = vadd.f32 %v9164, %v9176
        %v9178 = vpop.f32.mrf.mxu0
        %9179 = vdwg.mxu0
        %9180 = vmatpush.bf16.msra.mxu0 %v8718
        %9181 = vmatpush.bf16.msra.mxu0 %v8712
        %9182 = vmatpush.bf16.msra.mxu0 %v8706
        %9183 = vmatpush.bf16.msra.mxu0 %v8700
        %9184 = vmatpush.bf16.msra.mxu0 %v8694
        %9185 = vmatpush.bf16.msra.mxu0 %v8688
        %9186 = vmatpush.bf16.msra.mxu0 %v8682
        %9187 = vmatpush.bf16.msra.mxu0 %v8676
        %9188 = vmatmul.bf16.gmra.mxu0 %v8008
        %v9189 = vpop.f32.mrf.mxu0
        %v9190 = vadd.f32 0.0, %v9189
        %v9191 = vpop.f32.mrf.mxu0
        %9192 = vdwg.mxu0
        %9193 = vmatpush.bf16.msra.mxu0 %v8766
        %9194 = vmatpush.bf16.msra.mxu0 %v8760
        %9195 = vmatpush.bf16.msra.mxu0 %v8754
        %9196 = vmatpush.bf16.msra.mxu0 %v8748
        %9197 = vmatpush.bf16.msra.mxu0 %v8742
        %9198 = vmatpush.bf16.msra.mxu0 %v8736
        %9199 = vmatpush.bf16.msra.mxu0 %v8730
        %9200 = vmatpush.bf16.msra.mxu0 %v8724
        %9201 = vmatmul.bf16.gmra.mxu0 %v8009
        %v9202 = vpop.f32.mrf.mxu0
        %v9203 = vadd.f32 %v9190, %v9202
        %v9204 = vpop.f32.mrf.mxu0
        %9205 = vdwg.mxu0
        %9206 = vmatpush.bf16.msra.mxu0 %v8814
        %9207 = vmatpush.bf16.msra.mxu0 %v8808
        %9208 = vmatpush.bf16.msra.mxu0 %v8802
        %9209 = vmatpush.bf16.msra.mxu0 %v8796
        %9210 = vmatpush.bf16.msra.mxu0 %v8790
        %9211 = vmatpush.bf16.msra.mxu0 %v8784
        %9212 = vmatpush.bf16.msra.mxu0 %v8778
        %9213 = vmatpush.bf16.msra.mxu0 %v8772
        %9214 = vmatmul.bf16.gmra.mxu0 %v8010
        %v9215 = vpop.f32.mrf.mxu0
        %v9216 = vadd.f32 %v9203, %v9215
        %v9217 = vpop.f32.mrf.mxu0
        %9218 = vdwg.mxu0
        %9219 = vmatpush.bf16.msra.mxu0 0
        %9220 = vmatpush.bf16.msra.mxu0 0
        %9221 = vmatpush.bf16.msra.mxu0 0
        %9222 = vmatpush.bf16.msra.mxu0 0
        %9223 = vmatpush.bf16.msra.mxu0 %v9016
        %9224 = vmatpush.bf16.msra.mxu0 %v8832
        %9225 = vmatpush.bf16.msra.mxu0 %v8826
        %9226 = vmatpush.bf16.msra.mxu0 %v8820
        %9227 = vmatmul.bf16.gmra.mxu0 %v9004
        %v9228 = vpop.f32.mrf.mxu0
        %v9229 = vadd.f32 %v9216, %v9228
        %v9230 = vpop.f32.mrf.mxu0
        %9231 = vdwg.mxu0
        %9232 = vmatpush.bf16.msra.mxu0 %v8719
        %9233 = vmatpush.bf16.msra.mxu0 %v8713
        %9234 = vmatpush.bf16.msra.mxu0 %v8707
        %9235 = vmatpush.bf16.msra.mxu0 %v8701
        %9236 = vmatpush.bf16.msra.mxu0 %v8695
        %9237 = vmatpush.bf16.msra.mxu0 %v8689
        %9238 = vmatpush.bf16.msra.mxu0 %v8683
        %9239 = vmatpush.bf16.msra.mxu0 %v8677
        %9240 = vmatmul.bf16.gmra.mxu0 %v8008
        %v9241 = vpop.f32.mrf.mxu0
        %v9242 = vadd.f32 0.0, %v9241
        %v9243 = vpop.f32.mrf.mxu0
        %9244 = vdwg.mxu0
        %9245 = vmatpush.bf16.msra.mxu0 %v8767
        %9246 = vmatpush.bf16.msra.mxu0 %v8761
        %9247 = vmatpush.bf16.msra.mxu0 %v8755
        %9248 = vmatpush.bf16.msra.mxu0 %v8749
        %9249 = vmatpush.bf16.msra.mxu0 %v8743
        %9250 = vmatpush.bf16.msra.mxu0 %v8737
        %9251 = vmatpush.bf16.msra.mxu0 %v8731
        %9252 = vmatpush.bf16.msra.mxu0 %v8725
        %9253 = vmatmul.bf16.gmra.mxu0 %v8009
        %v9254 = vpop.f32.mrf.mxu0
        %v9255 = vadd.f32 %v9242, %v9254
        %v9256 = vpop.f32.mrf.mxu0
        %9257 = vdwg.mxu0
        %9258 = vmatpush.bf16.msra.mxu0 %v8815
        %9259 = vmatpush.bf16.msra.mxu0 %v8809
        %9260 = vmatpush.bf16.msra.mxu0 %v8803
        %9261 = vmatpush.bf16.msra.mxu0 %v8797
        %9262 = vmatpush.bf16.msra.mxu0 %v8791
        %9263 = vmatpush.bf16.msra.mxu0 %v8785
        %9264 = vmatpush.bf16.msra.mxu0 %v8779
        %9265 = vmatpush.bf16.msra.mxu0 %v8773
        %9266 = vmatmul.bf16.gmra.mxu0 %v8010
        %v9267 = vpop.f32.mrf.mxu0
        %v9268 = vadd.f32 %v9255, %v9267
        %v9269 = vpop.f32.mrf.mxu0
        %9270 = vdwg.mxu0
        %9271 = vmatpush.bf16.msra.mxu0 0
        %9272 = vmatpush.bf16.msra.mxu0 0
        %9273 = vmatpush.bf16.msra.mxu0 0
        %9274 = vmatpush.bf16.msra.mxu0 0
        %9275 = vmatpush.bf16.msra.mxu0 %v9019
        %9276 = vmatpush.bf16.msra.mxu0 %v8833
        %9277 = vmatpush.bf16.msra.mxu0 %v8827
        %9278 = vmatpush.bf16.msra.mxu0 %v8821
        %9279 = vmatmul.bf16.gmra.mxu0 %v9004
        %v9280 = vpop.f32.mrf.mxu0
        %v9281 = vadd.f32 %v9268, %v9280
        %v9282 = vpop.f32.mrf.mxu0
        %9283 = vdwg.mxu0
        %9284 = vmatpush.bf16.msra.mxu0 %v8720
        %9285 = vmatpush.bf16.msra.mxu0 %v8714
        %9286 = vmatpush.bf16.msra.mxu0 %v8708
        %9287 = vmatpush.bf16.msra.mxu0 %v8702
        %9288 = vmatpush.bf16.msra.mxu0 %v8696
        %9289 = vmatpush.bf16.msra.mxu0 %v8690
        %9290 = vmatpush.bf16.msra.mxu0 %v8684
        %9291 = vmatpush.bf16.msra.mxu0 %v8678
        %9292 = vmatmul.bf16.gmra.mxu0 %v8008
        %v9293 = vpop.f32.mrf.mxu0
        %v9294 = vadd.f32 0.0, %v9293
        %v9295 = vpop.f32.mrf.mxu0
        %9296 = vdwg.mxu0
        %9297 = vmatpush.bf16.msra.mxu0 %v8768
        %9298 = vmatpush.bf16.msra.mxu0 %v8762
        %9299 = vmatpush.bf16.msra.mxu0 %v8756
        %9300 = vmatpush.bf16.msra.mxu0 %v8750
        %9301 = vmatpush.bf16.msra.mxu0 %v8744
        %9302 = vmatpush.bf16.msra.mxu0 %v8738
        %9303 = vmatpush.bf16.msra.mxu0 %v8732
        %9304 = vmatpush.bf16.msra.mxu0 %v8726
        %9305 = vmatmul.bf16.gmra.mxu0 %v8009
        %v9306 = vpop.f32.mrf.mxu0
        %v9307 = vadd.f32 %v9294, %v9306
        %v9308 = vpop.f32.mrf.mxu0
        %9309 = vdwg.mxu0
        %9310 = vmatpush.bf16.msra.mxu0 %v8816
        %9311 = vmatpush.bf16.msra.mxu0 %v8810
        %9312 = vmatpush.bf16.msra.mxu0 %v8804
        %9313 = vmatpush.bf16.msra.mxu0 %v8798
        %9314 = vmatpush.bf16.msra.mxu0 %v8792
        %9315 = vmatpush.bf16.msra.mxu0 %v8786
        %9316 = vmatpush.bf16.msra.mxu0 %v8780
        %9317 = vmatpush.bf16.msra.mxu0 %v8774
        %9318 = vmatmul.bf16.gmra.mxu0 %v8010
        %v9319 = vpop.f32.mrf.mxu0
        %v9320 = vadd.f32 %v9307, %v9319
        %v9321 = vpop.f32.mrf.mxu0
        %9322 = vdwg.mxu0
        %9323 = vmatpush.bf16.msra.mxu0 0
        %9324 = vmatpush.bf16.msra.mxu0 0
        %9325 = vmatpush.bf16.msra.mxu0 0
        %9326 = vmatpush.bf16.msra.mxu0 0
        %9327 = vmatpush.bf16.msra.mxu0 %v9022
        %9328 = vmatpush.bf16.msra.mxu0 %v8834
        %9329 = vmatpush.bf16.msra.mxu0 %v8828
        %9330 = vmatpush.bf16.msra.mxu0 %v8822
        %9331 = vmatmul.bf16.gmra.mxu0 %v9004
        %v9332 = vpop.f32.mrf.mxu0
        %v9333 = vadd.f32 %v9320, %v9332
        %v9334 = vpop.f32.mrf.mxu0
        %9335 = vdwg.mxu0
        %v9336 = vpack.c.bf16 %v9125, %v9073
        %v9337 = vpack.c.bf16 %v9229, %v9177
        %v9338 = vpack.c.bf16 %v9333, %v9281
        %v9342 = vunpack.c.l.b16 %v9336
        %v9343 = vunpack.c.h.b16 %v9336
        %v9344 = vunpack.c.l.b16 %v9337
        %v9345 = vunpack.c.h.b16 %v9337
        %v9346 = vunpack.c.l.b16 %v9338
        %v9347 = vpack.c.b16 %v9342, %v9342
        %v9348 = vpack.c.b16 %v9343, %v9343
        %v9349 = vpack.c.b16 %v9344, %v9344
        %v9350 = vpack.c.b16 %v9345, %v9345
        %v9351 = vpack.c.b16 %v9346, %v9346
        %v9352 = vrot.slane %v9347, 6
        %v9353 = vrot.slane %v9348, 6
        %v9354 = vrot.slane %v9349, 6
        %v9355 = vrot.slane %v9350, 6
        %v9356 = vrot.slane %v9351, 6
        %9357 = vrot.lane.b32.xlu0 %v9352, 127
        %v9358 = vpop.permute.xlu0 %9357
        %9359 = vrot.lane.b32.xlu0 %v9353, 127
        %v9360 = vpop.permute.xlu0 %9359
        %9361 = vrot.lane.b32.xlu0 %v9354, 127
        %v9362 = vpop.permute.xlu0 %9361
        %9363 = vrot.lane.b32.xlu0 %v9355, 127
        %v9364 = vpop.permute.xlu0 %9363
        %9365 = vrot.lane.b32.xlu0 %v9356, 127
        %v9366 = vpop.permute.xlu0 %9365
        %v9367 = vsel %vm1583, %v9358, %v9360
        %v9368 = vsel %vm1583, %v9360, %v9362
        %v9369 = vsel %vm1583, %v9362, %v9364
        %v9370 = vsel %vm1583, %v9364, %v9366
        %9371 = vrot.lane.b32.xlu0 %v9347, 126
        %v9372 = vpop.permute.xlu0 %9371
        %9373 = vrot.lane.b32.xlu0 %v9348, 126
        %v9374 = vpop.permute.xlu0 %9373
        %9375 = vrot.lane.b32.xlu0 %v9349, 126
        %v9376 = vpop.permute.xlu0 %9375
        %9377 = vrot.lane.b32.xlu0 %v9350, 126
        %v9378 = vpop.permute.xlu0 %9377
        %9379 = vrot.lane.b32.xlu0 %v9351, 126
        %v9380 = vpop.permute.xlu0 %9379
        %v9381 = vsel %vm1595, %v9372, %v9374
        %v9382 = vsel %vm1595, %v9374, %v9376
        %v9383 = vsel %vm1595, %v9376, %v9378
        %v9384 = vsel %vm1595, %v9378, %v9380
        %v9385 = vrot.slane %v9347, 2
        %v9386 = vrot.slane %v9348, 2
        %v9387 = vrot.slane %v9349, 2
        %v9388 = vrot.slane %v9350, 2
        %v9389 = vrot.slane %v9351, 2
        %9390 = vrot.lane.b32.xlu0 %v9385, 125
        %v9391 = vpop.permute.xlu0 %9390
        %9392 = vrot.lane.b32.xlu0 %v9386, 125
        %v9393 = vpop.permute.xlu0 %9392
        %9394 = vrot.lane.b32.xlu0 %v9387, 125
        %v9395 = vpop.permute.xlu0 %9394
        %9396 = vrot.lane.b32.xlu0 %v9388, 125
        %v9397 = vpop.permute.xlu0 %9396
        %9398 = vrot.lane.b32.xlu0 %v9389, 125
        %v9399 = vpop.permute.xlu0 %9398
        %vm9400 = vcmask 1022976
        %v9401 = vsel %vm9400, %v9391, %v9393
        %v9402 = vsel %vm9400, %v9393, %v9395
        %v9403 = vsel %vm9400, %v9395, %v9397
        %v9404 = vsel %vm9400, %v9397, %v9399
        %9405 = vrot.lane.b32.xlu0 %v9347, 124
        %v9406 = vpop.permute.xlu0 %9405
        %9407 = vrot.lane.b32.xlu0 %v9348, 124
        %v9408 = vpop.permute.xlu0 %9407
        %9409 = vrot.lane.b32.xlu0 %v9349, 124
        %v9410 = vpop.permute.xlu0 %9409
        %9411 = vrot.lane.b32.xlu0 %v9350, 124
        %v9412 = vpop.permute.xlu0 %9411
        %9413 = vrot.lane.b32.xlu0 %v9351, 124
        %v9414 = vpop.permute.xlu0 %9413
        %vm9415 = vcmask 1014784
        %v9416 = vsel %vm9415, %v9406, %v9408
        %v9417 = vsel %vm9415, %v9408, %v9410
        %v9418 = vsel %vm9415, %v9410, %v9412
        %v9419 = vsel %vm9415, %v9412, %v9414
        %9420 = vrot.lane.b32.xlu0 %v9352, 123
        %v9421 = vpop.permute.xlu0 %9420
        %9422 = vrot.lane.b32.xlu0 %v9353, 123
        %v9423 = vpop.permute.xlu0 %9422
        %9424 = vrot.lane.b32.xlu0 %v9354, 123
        %v9425 = vpop.permute.xlu0 %9424
        %9426 = vrot.lane.b32.xlu0 %v9355, 123
        %v9427 = vpop.permute.xlu0 %9426
        %9428 = vrot.lane.b32.xlu0 %v9356, 123
        %v9429 = vpop.permute.xlu0 %9428
        %vm9430 = vcmask 1006592
        %v9431 = vsel %vm9430, %v9421, %v9423
        %v9432 = vsel %vm9430, %v9423, %v9425
        %v9433 = vsel %vm9430, %v9425, %v9427
        %v9434 = vsel %vm9430, %v9427, %v9429
        %9435 = vrot.lane.b32.xlu0 %v9347, 122
        %v9436 = vpop.permute.xlu0 %9435
        %9437 = vrot.lane.b32.xlu0 %v9348, 122
        %v9438 = vpop.permute.xlu0 %9437
        %9439 = vrot.lane.b32.xlu0 %v9349, 122
        %v9440 = vpop.permute.xlu0 %9439
        %9441 = vrot.lane.b32.xlu0 %v9350, 122
        %v9442 = vpop.permute.xlu0 %9441
        %9443 = vrot.lane.b32.xlu0 %v9351, 122
        %v9444 = vpop.permute.xlu0 %9443
        %vm9445 = vcmask 998400
        %v9446 = vsel %vm9445, %v9436, %v9438
        %v9447 = vsel %vm9445, %v9438, %v9440
        %v9448 = vsel %vm9445, %v9440, %v9442
        %v9449 = vsel %vm9445, %v9442, %v9444
        %9450 = vrot.lane.b32.xlu0 %v9385, 102
        %v9451 = vpop.permute.xlu0 %9450
        %9452 = vrot.lane.b32.xlu0 %v9386, 102
        %v9453 = vpop.permute.xlu0 %9452
        %9454 = vrot.lane.b32.xlu0 %v9387, 102
        %v9455 = vpop.permute.xlu0 %9454
        %9456 = vrot.lane.b32.xlu0 %v9388, 102
        %v9457 = vpop.permute.xlu0 %9456
        %9458 = vrot.lane.b32.xlu0 %v9389, 102
        %v9459 = vpop.permute.xlu0 %9458
        %vm9460 = vcmask 834560
        %v9461 = vsel %vm9460, %v9451, %v9453
        %v9462 = vsel %vm9460, %v9453, %v9455
        %v9463 = vsel %vm9460, %v9455, %v9457
        %v9464 = vsel %vm9460, %v9457, %v9459
        %9465 = vrot.lane.b32.xlu0 %v9347, 101
        %v9466 = vpop.permute.xlu0 %9465
        %9467 = vrot.lane.b32.xlu0 %v9348, 101
        %v9468 = vpop.permute.xlu0 %9467
        %9469 = vrot.lane.b32.xlu0 %v9349, 101
        %v9470 = vpop.permute.xlu0 %9469
        %9471 = vrot.lane.b32.xlu0 %v9350, 101
        %v9472 = vpop.permute.xlu0 %9471
        %9473 = vrot.lane.b32.xlu0 %v9351, 101
        %v9474 = vpop.permute.xlu0 %9473
        %vm9475 = vcmask 826368
        %v9476 = vsel %vm9475, %v9466, %v9468
        %v9477 = vsel %vm9475, %v9468, %v9470
        %v9478 = vsel %vm9475, %v9470, %v9472
        %v9479 = vsel %vm9475, %v9472, %v9474
        %9480 = vrot.lane.b32.xlu0 %v9352, 100
        %v9481 = vpop.permute.xlu0 %9480
        %9482 = vrot.lane.b32.xlu0 %v9353, 100
        %v9483 = vpop.permute.xlu0 %9482
        %9484 = vrot.lane.b32.xlu0 %v9354, 100
        %v9485 = vpop.permute.xlu0 %9484
        %9486 = vrot.lane.b32.xlu0 %v9355, 100
        %v9487 = vpop.permute.xlu0 %9486
        %9488 = vrot.lane.b32.xlu0 %v9356, 100
        %v9489 = vpop.permute.xlu0 %9488
        %vm9490 = vcmask 818176
        %v9491 = vsel %vm9490, %v9481, %v9483
        %v9492 = vsel %vm9490, %v9483, %v9485
        %v9493 = vsel %vm9490, %v9485, %v9487
        %v9494 = vsel %vm9490, %v9487, %v9489
        %9495 = vrot.lane.b32.xlu0 %v9347, 99
        %v9496 = vpop.permute.xlu0 %9495
        %9497 = vrot.lane.b32.xlu0 %v9348, 99
        %v9498 = vpop.permute.xlu0 %9497
        %9499 = vrot.lane.b32.xlu0 %v9349, 99
        %v9500 = vpop.permute.xlu0 %9499
        %9501 = vrot.lane.b32.xlu0 %v9350, 99
        %v9502 = vpop.permute.xlu0 %9501
        %9503 = vrot.lane.b32.xlu0 %v9351, 99
        %v9504 = vpop.permute.xlu0 %9503
        %vm9505 = vcmask 809984
        %v9506 = vsel %vm9505, %v9496, %v9498
        %v9507 = vsel %vm9505, %v9498, %v9500
        %v9508 = vsel %vm9505, %v9500, %v9502
        %v9509 = vsel %vm9505, %v9502, %v9504
        %9510 = vrot.lane.b32.xlu0 %v9385, 98
        %v9511 = vpop.permute.xlu0 %9510
        %9512 = vrot.lane.b32.xlu0 %v9386, 98
        %v9513 = vpop.permute.xlu0 %9512
        %9514 = vrot.lane.b32.xlu0 %v9387, 98
        %v9515 = vpop.permute.xlu0 %9514
        %9516 = vrot.lane.b32.xlu0 %v9388, 98
        %v9517 = vpop.permute.xlu0 %9516
        %9518 = vrot.lane.b32.xlu0 %v9389, 98
        %v9519 = vpop.permute.xlu0 %9518
        %vm9520 = vcmask 801792
        %v9521 = vsel %vm9520, %v9511, %v9513
        %v9522 = vsel %vm9520, %v9513, %v9515
        %v9523 = vsel %vm9520, %v9515, %v9517
        %v9524 = vsel %vm9520, %v9517, %v9519
        %9525 = vrot.lane.b32.xlu0 %v9347, 97
        %v9526 = vpop.permute.xlu0 %9525
        %9527 = vrot.lane.b32.xlu0 %v9348, 97
        %v9528 = vpop.permute.xlu0 %9527
        %9529 = vrot.lane.b32.xlu0 %v9349, 97
        %v9530 = vpop.permute.xlu0 %9529
        %9531 = vrot.lane.b32.xlu0 %v9350, 97
        %v9532 = vpop.permute.xlu0 %9531
        %9533 = vrot.lane.b32.xlu0 %v9351, 97
        %v9534 = vpop.permute.xlu0 %9533
        %vm9535 = vcmask 793600
        %v9536 = vsel %vm9535, %v9526, %v9528
        %v9537 = vsel %vm9535, %v9528, %v9530
        %v9538 = vsel %vm9535, %v9530, %v9532
        %v9539 = vsel %vm9535, %v9532, %v9534
        %9540 = vrot.lane.b32.xlu0 %v9352, 96
        %v9541 = vpop.permute.xlu0 %9540
        %9542 = vrot.lane.b32.xlu0 %v9353, 96
        %v9543 = vpop.permute.xlu0 %9542
        %9544 = vrot.lane.b32.xlu0 %v9354, 96
        %v9545 = vpop.permute.xlu0 %9544
        %9546 = vrot.lane.b32.xlu0 %v9355, 96
        %v9547 = vpop.permute.xlu0 %9546
        %9548 = vrot.lane.b32.xlu0 %v9356, 96
        %v9549 = vpop.permute.xlu0 %9548
        %vm9550 = vcmask 785408
        %v9551 = vsel %vm9550, %v9541, %v9543
        %v9552 = vsel %vm9550, %v9543, %v9545
        %v9553 = vsel %vm9550, %v9545, %v9547
        %v9554 = vsel %vm9550, %v9547, %v9549
        %9555 = vrot.lane.b32.xlu0 %v9347, 76
        %v9556 = vpop.permute.xlu0 %9555
        %9557 = vrot.lane.b32.xlu0 %v9348, 76
        %v9558 = vpop.permute.xlu0 %9557
        %9559 = vrot.lane.b32.xlu0 %v9349, 76
        %v9560 = vpop.permute.xlu0 %9559
        %9561 = vrot.lane.b32.xlu0 %v9350, 76
        %v9562 = vpop.permute.xlu0 %9561
        %9563 = vrot.lane.b32.xlu0 %v9351, 76
        %v9564 = vpop.permute.xlu0 %9563
        %vm9565 = vcmask 621568
        %v9566 = vsel %vm9565, %v9556, %v9558
        %v9567 = vsel %vm9565, %v9558, %v9560
        %v9568 = vsel %vm9565, %v9560, %v9562
        %v9569 = vsel %vm9565, %v9562, %v9564
        %9570 = vrot.lane.b32.xlu0 %v9385, 75
        %v9571 = vpop.permute.xlu0 %9570
        %9572 = vrot.lane.b32.xlu0 %v9386, 75
        %v9573 = vpop.permute.xlu0 %9572
        %9574 = vrot.lane.b32.xlu0 %v9387, 75
        %v9575 = vpop.permute.xlu0 %9574
        %9576 = vrot.lane.b32.xlu0 %v9388, 75
        %v9577 = vpop.permute.xlu0 %9576
        %9578 = vrot.lane.b32.xlu0 %v9389, 75
        %v9579 = vpop.permute.xlu0 %9578
        %vm9580 = vcmask 613376
        %v9581 = vsel %vm9580, %v9571, %v9573
        %v9582 = vsel %vm9580, %v9573, %v9575
        %v9583 = vsel %vm9580, %v9575, %v9577
        %v9584 = vsel %vm9580, %v9577, %v9579
        %vm9585 = vcmask 1041408
        %v9588 = vsel %vm9585, %v9347, %v9367
        %v9591 = vsel %vm9585, %v9348, %v9368
        %v9594 = vsel %vm9585, %v9349, %v9369
        %v9597 = vsel %vm9585, %v9350, %v9370
        %v9600 = vsel %vm9585, %v9351, %v9366
        %v9602 = vsel %vm7669, %v9588, %v9381
        %v9604 = vsel %vm7669, %v9591, %v9382
        %v9606 = vsel %vm7669, %v9594, %v9383
        %v9608 = vsel %vm7669, %v9597, %v9384
        %v9610 = vsel %vm7669, %v9600, %v9380
        %v9612 = vsel %vm1776, %v9602, %v9401
        %v9615 = vsel %vm1776, %v9604, %v9402
        %v9618 = vsel %vm1776, %v9606, %v9403
        %v9621 = vsel %vm1776, %v9608, %v9404
        %v9624 = vsel %vm1776, %v9610, %v9399
        %v9628 = vsel %vm9585, %v9416, %v9431
        %v9631 = vsel %vm9585, %v9417, %v9432
        %v9634 = vsel %vm9585, %v9418, %v9433
        %v9637 = vsel %vm9585, %v9419, %v9434
        %v9640 = vsel %vm9585, %v9414, %v9429
        %v9642 = vsel %vm7669, %v9628, %v9446
        %v9644 = vsel %vm7669, %v9631, %v9447
        %v9646 = vsel %vm7669, %v9634, %v9448
        %v9648 = vsel %vm7669, %v9637, %v9449
        %v9650 = vsel %vm7669, %v9640, %v9444
        %v9652 = vsel %vm1776, %v9642, %v9461
        %v9655 = vsel %vm1776, %v9644, %v9462
        %v9658 = vsel %vm1776, %v9646, %v9463
        %v9661 = vsel %vm1776, %v9648, %v9464
        %v9664 = vsel %vm1776, %v9650, %v9459
        %v9668 = vsel %vm9585, %v9476, %v9491
        %v9671 = vsel %vm9585, %v9477, %v9492
        %v9674 = vsel %vm9585, %v9478, %v9493
        %v9677 = vsel %vm9585, %v9479, %v9494
        %v9680 = vsel %vm9585, %v9474, %v9489
        %v9682 = vsel %vm7669, %v9668, %v9506
        %v9684 = vsel %vm7669, %v9671, %v9507
        %v9686 = vsel %vm7669, %v9674, %v9508
        %v9688 = vsel %vm7669, %v9677, %v9509
        %v9690 = vsel %vm7669, %v9680, %v9504
        %v9692 = vsel %vm1776, %v9682, %v9521
        %v9695 = vsel %vm1776, %v9684, %v9522
        %v9698 = vsel %vm1776, %v9686, %v9523
        %v9701 = vsel %vm1776, %v9688, %v9524
        %v9704 = vsel %vm1776, %v9690, %v9519
        %v9708 = vsel %vm9585, %v9536, %v9551
        %v9711 = vsel %vm9585, %v9537, %v9552
        %v9714 = vsel %vm9585, %v9538, %v9553
        %v9717 = vsel %vm9585, %v9539, %v9554
        %v9720 = vsel %vm9585, %v9534, %v9549
        %v9722 = vsel %vm7669, %v9708, %v9566
        %v9724 = vsel %vm7669, %v9711, %v9567
        %v9726 = vsel %vm7669, %v9714, %v9568
        %v9728 = vsel %vm7669, %v9717, %v9569
        %v9730 = vsel %vm7669, %v9720, %v9564
        %v9732 = vsel %vm1776, %v9722, %v9581
        %v9735 = vsel %vm1776, %v9724, %v9582
        %v9738 = vsel %vm1776, %v9726, %v9583
        %v9741 = vsel %vm1776, %v9728, %v9584
        %v9744 = vsel %vm1776, %v9730, %v9579
        %9746 = vrot.lane.b32.xlu0 %v9352, 104
        %v9747 = vpop.permute.xlu0 %9746
        %9748 = vrot.lane.b32.xlu0 %v9353, 104
        %v9749 = vpop.permute.xlu0 %9748
        %9750 = vrot.lane.b32.xlu0 %v9354, 104
        %v9751 = vpop.permute.xlu0 %9750
        %9752 = vrot.lane.b32.xlu0 %v9355, 104
        %v9753 = vpop.permute.xlu0 %9752
        %9754 = vrot.lane.b32.xlu0 %v9356, 104
        %v9755 = vpop.permute.xlu0 %9754
        %v9756 = vsel %vm7629, %v9747, %v9749
        %v9757 = vsel %vm7629, %v9749, %v9751
        %v9758 = vsel %vm7629, %v9751, %v9753
        %v9759 = vsel %vm7629, %v9753, %v9755
        %9760 = vrot.lane.b32.xlu0 %v9347, 103
        %v9761 = vpop.permute.xlu0 %9760
        %9762 = vrot.lane.b32.xlu0 %v9348, 103
        %v9763 = vpop.permute.xlu0 %9762
        %9764 = vrot.lane.b32.xlu0 %v9349, 103
        %v9765 = vpop.permute.xlu0 %9764
        %9766 = vrot.lane.b32.xlu0 %v9350, 103
        %v9767 = vpop.permute.xlu0 %9766
        %9768 = vrot.lane.b32.xlu0 %v9351, 103
        %v9769 = vpop.permute.xlu0 %9768
        %vm9770 = vcmask 842752
        %v9771 = vsel %vm9770, %v9761, %v9763
        %v9772 = vsel %vm9770, %v9763, %v9765
        %v9773 = vsel %vm9770, %v9765, %v9767
        %v9774 = vsel %vm9770, %v9767, %v9769
        %9775 = vrot.lane.b32.xlu0 %v9347, 78
        %v9776 = vpop.permute.xlu0 %9775
        %9777 = vrot.lane.b32.xlu0 %v9348, 78
        %v9778 = vpop.permute.xlu0 %9777
        %9779 = vrot.lane.b32.xlu0 %v9349, 78
        %v9780 = vpop.permute.xlu0 %9779
        %9781 = vrot.lane.b32.xlu0 %v9350, 78
        %v9782 = vpop.permute.xlu0 %9781
        %9783 = vrot.lane.b32.xlu0 %v9351, 78
        %v9784 = vpop.permute.xlu0 %9783
        %vm9785 = vcmask 637952
        %v9786 = vsel %vm9785, %v9776, %v9778
        %v9787 = vsel %vm9785, %v9778, %v9780
        %v9788 = vsel %vm9785, %v9780, %v9782
        %v9789 = vsel %vm9785, %v9782, %v9784
        %9790 = vrot.lane.b32.xlu0 %v9352, 77
        %v9791 = vpop.permute.xlu0 %9790
        %9792 = vrot.lane.b32.xlu0 %v9353, 77
        %v9793 = vpop.permute.xlu0 %9792
        %9794 = vrot.lane.b32.xlu0 %v9354, 77
        %v9795 = vpop.permute.xlu0 %9794
        %9796 = vrot.lane.b32.xlu0 %v9355, 77
        %v9797 = vpop.permute.xlu0 %9796
        %9798 = vrot.lane.b32.xlu0 %v9356, 77
        %v9799 = vpop.permute.xlu0 %9798
        %vm9800 = vcmask 629760
        %v9801 = vsel %vm9800, %v9791, %v9793
        %v9802 = vsel %vm9800, %v9793, %v9795
        %v9803 = vsel %vm9800, %v9795, %v9797
        %v9804 = vsel %vm9800, %v9797, %v9799
        %v9806 = vsel %vm9585, %v9416, %v9756
        %v9808 = vsel %vm9585, %v9417, %v9757
        %v9810 = vsel %vm9585, %v9418, %v9758
        %v9812 = vsel %vm9585, %v9419, %v9759
        %v9814 = vsel %vm9585, %v9414, %v9755
        %v9816 = vsel %vm7669, %v9806, %v9771
        %v9818 = vsel %vm7669, %v9808, %v9772
        %v9820 = vsel %vm7669, %v9810, %v9773
        %v9822 = vsel %vm7669, %v9812, %v9774
        %v9824 = vsel %vm7669, %v9814, %v9769
        %v9825 = vsel %vm1776, %v9816, %v9461
        %v9826 = vsel %vm1776, %v9818, %v9462
        %v9827 = vsel %vm1776, %v9820, %v9463
        %v9828 = vsel %vm1776, %v9822, %v9464
        %v9829 = vsel %vm1776, %v9824, %v9459
        %v9832 = vsel %vm9585, %v9786, %v9801
        %v9835 = vsel %vm9585, %v9787, %v9802
        %v9838 = vsel %vm9585, %v9788, %v9803
        %v9841 = vsel %vm9585, %v9789, %v9804
        %v9844 = vsel %vm9585, %v9784, %v9799
        %v9845 = vsel %vm7669, %v9832, %v9566
        %v9846 = vsel %vm7669, %v9835, %v9567
        %v9847 = vsel %vm7669, %v9838, %v9568
        %v9848 = vsel %vm7669, %v9841, %v9569
        %v9849 = vsel %vm7669, %v9844, %v9564
        %v9850 = vsel %vm1776, %v9845, %v9581
        %v9851 = vsel %vm1776, %v9846, %v9582
        %v9852 = vsel %vm1776, %v9847, %v9583
        %v9853 = vsel %vm1776, %v9848, %v9584
        %v9854 = vsel %vm1776, %v9849, %v9579
        %v9855 = vunpack.c.h.b16 %v9338
        %v9856 = vpack.c.b16 %v9855, %v9855
        %v9857 = vrot.slane %v9856, 2
        %9858 = vrot.lane.b32.xlu0 %v9386, 106
        %v9859 = vpop.permute.xlu0 %9858
        %9860 = vrot.lane.b32.xlu0 %v9387, 106
        %v9861 = vpop.permute.xlu0 %9860
        %9862 = vrot.lane.b32.xlu0 %v9388, 106
        %v9863 = vpop.permute.xlu0 %9862
        %9864 = vrot.lane.b32.xlu0 %v9389, 106
        %v9865 = vpop.permute.xlu0 %9864
        %9866 = vrot.lane.b32.xlu0 %v9857, 106
        %v9867 = vpop.permute.xlu0 %9866
        %v9868 = vsel %vm6545, %v9859, %v9861
        %v9869 = vsel %vm6545, %v9861, %v9863
        %v9870 = vsel %vm6545, %v9863, %v9865
        %v9871 = vsel %vm6545, %v9865, %v9867
        %9872 = vrot.lane.b32.xlu0 %v9348, 105
        %v9873 = vpop.permute.xlu0 %9872
        %9874 = vrot.lane.b32.xlu0 %v9349, 105
        %v9875 = vpop.permute.xlu0 %9874
        %9876 = vrot.lane.b32.xlu0 %v9350, 105
        %v9877 = vpop.permute.xlu0 %9876
        %9878 = vrot.lane.b32.xlu0 %v9351, 105
        %v9879 = vpop.permute.xlu0 %9878
        %9880 = vrot.lane.b32.xlu0 %v9856, 105
        %v9881 = vpop.permute.xlu0 %9880
        %v9882 = vsel %vm7617, %v9873, %v9875
        %v9883 = vsel %vm7617, %v9875, %v9877
        %v9884 = vsel %vm7617, %v9877, %v9879
        %v9885 = vsel %vm7617, %v9879, %v9881
        %v9886 = vrot.slane %v9856, 6
        %9887 = vrot.lane.b32.xlu0 %v9886, 104
        %v9888 = vpop.permute.xlu0 %9887
        %v9889 = vsel %vm7629, %v9755, %v9888
        %9890 = vrot.lane.b32.xlu0 %v9856, 103
        %v9891 = vpop.permute.xlu0 %9890
        %v9892 = vsel %vm9770, %v9769, %v9891
        %9893 = vrot.lane.b32.xlu0 %v9857, 102
        %v9894 = vpop.permute.xlu0 %9893
        %v9895 = vsel %vm9460, %v9459, %v9894
        %9896 = vrot.lane.b32.xlu0 %v9856, 101
        %v9897 = vpop.permute.xlu0 %9896
        %v9898 = vsel %vm9475, %v9474, %v9897
        %9899 = vrot.lane.b32.xlu0 %v9886, 100
        %v9900 = vpop.permute.xlu0 %9899
        %v9901 = vsel %vm9490, %v9489, %v9900
        %9902 = vrot.lane.b32.xlu0 %v9348, 80
        %v9903 = vpop.permute.xlu0 %9902
        %9904 = vrot.lane.b32.xlu0 %v9349, 80
        %v9905 = vpop.permute.xlu0 %9904
        %9906 = vrot.lane.b32.xlu0 %v9350, 80
        %v9907 = vpop.permute.xlu0 %9906
        %9908 = vrot.lane.b32.xlu0 %v9351, 80
        %v9909 = vpop.permute.xlu0 %9908
        %9910 = vrot.lane.b32.xlu0 %v9856, 80
        %v9911 = vpop.permute.xlu0 %9910
        %vm9912 = vcmask 654336
        %v9913 = vsel %vm9912, %v9903, %v9905
        %v9914 = vsel %vm9912, %v9905, %v9907
        %v9915 = vsel %vm9912, %v9907, %v9909
        %v9916 = vsel %vm9912, %v9909, %v9911
        %9917 = vrot.lane.b32.xlu0 %v9386, 79
        %v9918 = vpop.permute.xlu0 %9917
        %9919 = vrot.lane.b32.xlu0 %v9387, 79
        %v9920 = vpop.permute.xlu0 %9919
        %9921 = vrot.lane.b32.xlu0 %v9388, 79
        %v9922 = vpop.permute.xlu0 %9921
        %9923 = vrot.lane.b32.xlu0 %v9389, 79
        %v9924 = vpop.permute.xlu0 %9923
        %9925 = vrot.lane.b32.xlu0 %v9857, 79
        %v9926 = vpop.permute.xlu0 %9925
        %vm9927 = vcmask 646144
        %v9928 = vsel %vm9927, %v9918, %v9920
        %v9929 = vsel %vm9927, %v9920, %v9922
        %v9930 = vsel %vm9927, %v9922, %v9924
        %v9931 = vsel %vm9927, %v9924, %v9926
        %9932 = vrot.lane.b32.xlu0 %v9856, 78
        %v9933 = vpop.permute.xlu0 %9932
        %v9934 = vsel %vm9785, %v9784, %v9933
        %9935 = vrot.lane.b32.xlu0 %v9886, 77
        %v9936 = vpop.permute.xlu0 %9935
        %v9937 = vsel %vm9800, %v9799, %v9936
        %9938 = vrot.lane.b32.xlu0 %v9856, 76
        %v9939 = vpop.permute.xlu0 %9938
        %v9940 = vsel %vm9565, %v9564, %v9939
        %9941 = vrot.lane.b32.xlu0 %v9857, 75
        %v9942 = vpop.permute.xlu0 %9941
        %v9943 = vsel %vm9580, %v9579, %v9942
        %v9945 = vsel %vm1776, %v9602, %v9859
        %v9947 = vsel %vm1776, %v9604, %v9868
        %v9949 = vsel %vm1776, %v9606, %v9869
        %v9951 = vsel %vm1776, %v9608, %v9870
        %v9953 = vsel %vm1776, %v9610, %v9871
        %v9956 = vsel %vm9585, %v9873, %v9749
        %v9958 = vsel %vm9585, %v9882, %v9757
        %v9960 = vsel %vm9585, %v9883, %v9758
        %v9962 = vsel %vm9585, %v9884, %v9759
        %v9965 = vsel %vm9585, %v9885, %v9889
        %v9967 = vsel %vm7669, %v9956, %v9763
        %v9968 = vsel %vm7669, %v9958, %v9772
        %v9969 = vsel %vm7669, %v9960, %v9773
        %v9970 = vsel %vm7669, %v9962, %v9774
        %v9972 = vsel %vm7669, %v9965, %v9892
        %v9974 = vsel %vm1776, %v9967, %v9453
        %v9975 = vsel %vm1776, %v9968, %v9462
        %v9976 = vsel %vm1776, %v9969, %v9463
        %v9977 = vsel %vm1776, %v9970, %v9464
        %v9979 = vsel %vm1776, %v9972, %v9895
        %v9982 = vsel %vm9585, %v9468, %v9483
        %v9985 = vsel %vm9585, %v9898, %v9901
        %v9987 = vsel %vm7669, %v9982, %v9903
        %v9989 = vsel %vm7669, %v9671, %v9913
        %v9991 = vsel %vm7669, %v9674, %v9914
        %v9993 = vsel %vm7669, %v9677, %v9915
        %v9995 = vsel %vm7669, %v9985, %v9916
        %v9997 = vsel %vm1776, %v9987, %v9918
        %v9999 = vsel %vm1776, %v9989, %v9928
        %v10001 = vsel %vm1776, %v9991, %v9929
        %v10003 = vsel %vm1776, %v9993, %v9930
        %v10005 = vsel %vm1776, %v9995, %v9931
        %v10008 = vsel %vm9585, %v9778, %v9793
        %v10011 = vsel %vm9585, %v9934, %v9937
        %v10013 = vsel %vm7669, %v10008, %v9558
        %v10015 = vsel %vm7669, %v10011, %v9940
        %v10017 = vsel %vm1776, %v10013, %v9573
        %v10019 = vsel %vm1776, %v10015, %v9943
        %10040 = vrot.lane.b32.xlu0 %v9612, 74
        %v10041 = vpop.permute.xlu0 %10040
        %10042 = vrot.lane.b32.xlu0 %v9615, 74
        %v10043 = vpop.permute.xlu0 %10042
        %10044 = vrot.lane.b32.xlu0 %v9618, 74
        %v10045 = vpop.permute.xlu0 %10044
        %10046 = vrot.lane.b32.xlu0 %v9621, 74
        %v10047 = vpop.permute.xlu0 %10046
        %10048 = vrot.lane.b32.xlu0 %v9624, 74
        %v10049 = vpop.permute.xlu0 %10048
        %10050 = vrot.lane.b32.xlu0 %v9825, 74
        %v10051 = vpop.permute.xlu0 %10050
        %10052 = vrot.lane.b32.xlu0 %v9826, 74
        %v10053 = vpop.permute.xlu0 %10052
        %10054 = vrot.lane.b32.xlu0 %v9827, 74
        %v10055 = vpop.permute.xlu0 %10054
        %10056 = vrot.lane.b32.xlu0 %v9828, 74
        %v10057 = vpop.permute.xlu0 %10056
        %10058 = vrot.lane.b32.xlu0 %v9829, 74
        %v10059 = vpop.permute.xlu0 %10058
        %10060 = vrot.lane.b32.xlu0 %v9692, 74
        %v10061 = vpop.permute.xlu0 %10060
        %10062 = vrot.lane.b32.xlu0 %v9695, 74
        %v10063 = vpop.permute.xlu0 %10062
        %10064 = vrot.lane.b32.xlu0 %v9698, 74
        %v10065 = vpop.permute.xlu0 %10064
        %10066 = vrot.lane.b32.xlu0 %v9701, 74
        %v10067 = vpop.permute.xlu0 %10066
        %10068 = vrot.lane.b32.xlu0 %v9704, 74
        %v10069 = vpop.permute.xlu0 %10068
        %10070 = vrot.lane.b32.xlu0 %v9850, 74
        %v10071 = vpop.permute.xlu0 %10070
        %10072 = vrot.lane.b32.xlu0 %v9851, 74
        %v10073 = vpop.permute.xlu0 %10072
        %10074 = vrot.lane.b32.xlu0 %v9852, 74
        %v10075 = vpop.permute.xlu0 %10074
        %10076 = vrot.lane.b32.xlu0 %v9853, 74
        %v10077 = vpop.permute.xlu0 %10076
        %10078 = vrot.lane.b32.xlu0 %v9854, 74
        %v10079 = vpop.permute.xlu0 %10078
        %vm10080 = vcmask 605184
        %v10081 = vsel %vm10080, %v10041, %v10043
        %v10082 = vsel %vm10080, %v10043, %v10045
        %v10083 = vsel %vm10080, %v10045, %v10047
        %v10084 = vsel %vm10080, %v10047, %v10049
        %v10085 = vsel %vm10080, %v10051, %v10053
        %v10086 = vsel %vm10080, %v10053, %v10055
        %v10087 = vsel %vm10080, %v10055, %v10057
        %v10088 = vsel %vm10080, %v10057, %v10059
        %v10089 = vsel %vm10080, %v10061, %v10063
        %v10090 = vsel %vm10080, %v10063, %v10065
        %v10091 = vsel %vm10080, %v10065, %v10067
        %v10092 = vsel %vm10080, %v10067, %v10069
        %v10093 = vsel %vm10080, %v10071, %v10073
        %v10094 = vsel %vm10080, %v10073, %v10075
        %v10095 = vsel %vm10080, %v10075, %v10077
        %v10096 = vsel %vm10080, %v10077, %v10079
        %10134 = vrot.lane.b32.xlu0 %v9945, 20
        %v10135 = vpop.permute.xlu0 %10134
        %10136 = vrot.lane.b32.xlu0 %v9947, 20
        %v10137 = vpop.permute.xlu0 %10136
        %10138 = vrot.lane.b32.xlu0 %v9949, 20
        %v10139 = vpop.permute.xlu0 %10138
        %10140 = vrot.lane.b32.xlu0 %v9951, 20
        %v10141 = vpop.permute.xlu0 %10140
        %10142 = vrot.lane.b32.xlu0 %v9953, 20
        %v10143 = vpop.permute.xlu0 %10142
        %10144 = vrot.lane.b32.xlu0 %v9974, 20
        %v10145 = vpop.permute.xlu0 %10144
        %10146 = vrot.lane.b32.xlu0 %v9975, 20
        %v10147 = vpop.permute.xlu0 %10146
        %10148 = vrot.lane.b32.xlu0 %v9976, 20
        %v10149 = vpop.permute.xlu0 %10148
        %10150 = vrot.lane.b32.xlu0 %v9977, 20
        %v10151 = vpop.permute.xlu0 %10150
        %10152 = vrot.lane.b32.xlu0 %v9979, 20
        %v10153 = vpop.permute.xlu0 %10152
        %10154 = vrot.lane.b32.xlu0 %v9997, 20
        %v10155 = vpop.permute.xlu0 %10154
        %10156 = vrot.lane.b32.xlu0 %v9999, 20
        %v10157 = vpop.permute.xlu0 %10156
        %10158 = vrot.lane.b32.xlu0 %v10001, 20
        %v10159 = vpop.permute.xlu0 %10158
        %10160 = vrot.lane.b32.xlu0 %v10003, 20
        %v10161 = vpop.permute.xlu0 %10160
        %10162 = vrot.lane.b32.xlu0 %v10005, 20
        %v10163 = vpop.permute.xlu0 %10162
        %10164 = vrot.lane.b32.xlu0 %v10017, 20
        %v10165 = vpop.permute.xlu0 %10164
        %10166 = vrot.lane.b32.xlu0 %v9851, 20
        %v10167 = vpop.permute.xlu0 %10166
        %10168 = vrot.lane.b32.xlu0 %v9852, 20
        %v10169 = vpop.permute.xlu0 %10168
        %10170 = vrot.lane.b32.xlu0 %v9853, 20
        %v10171 = vpop.permute.xlu0 %10170
        %10172 = vrot.lane.b32.xlu0 %v10019, 20
        %v10173 = vpop.permute.xlu0 %10172
        %vm10174 = vcmask 162816
        %v10175 = vsel %vm10174, %v10135, %v10137
        %v10176 = vsel %vm10174, %v10137, %v10139
        %v10177 = vsel %vm10174, %v10139, %v10141
        %v10178 = vsel %vm10174, %v10141, %v10143
        %v10179 = vsel %vm10174, %v10145, %v10147
        %v10180 = vsel %vm10174, %v10147, %v10149
        %v10181 = vsel %vm10174, %v10149, %v10151
        %v10182 = vsel %vm10174, %v10151, %v10153
        %v10183 = vsel %vm10174, %v10155, %v10157
        %v10184 = vsel %vm10174, %v10157, %v10159
        %v10185 = vsel %vm10174, %v10159, %v10161
        %v10186 = vsel %vm10174, %v10161, %v10163
        %v10187 = vsel %vm10174, %v10165, %v10167
        %v10188 = vsel %vm10174, %v10167, %v10169
        %v10189 = vsel %vm10174, %v10169, %v10171
        %v10190 = vsel %vm10174, %v10171, %v10173
        %10211 = vrot.lane.b32.xlu0 %v9348, 94
        %v10212 = vpop.permute.xlu0 %10211
        %10213 = vrot.lane.b32.xlu0 %v9349, 94
        %v10214 = vpop.permute.xlu0 %10213
        %10215 = vrot.lane.b32.xlu0 %v9350, 94
        %v10216 = vpop.permute.xlu0 %10215
        %10217 = vrot.lane.b32.xlu0 %v9351, 94
        %v10218 = vpop.permute.xlu0 %10217
        %10219 = vrot.lane.b32.xlu0 %v9856, 94
        %v10220 = vpop.permute.xlu0 %10219
        %vm10221 = vcmask 769024
        %v10222 = vsel %vm10221, %v10212, %v10214
        %v10223 = vsel %vm10221, %v10214, %v10216
        %v10224 = vsel %vm10221, %v10216, %v10218
        %v10225 = vsel %vm10221, %v10218, %v10220
        %v10226 = vld [vmem:[%s13] sm:$0x7]
        %10228 = vset.pattern.permute.xlu0 0
        %10229 = vperm.xlu0 %10228, %v10226
        %v10230 = vpop.permute.xlu0 %10229
        %10233 = vst [vmem:[#allocation1] ss:$4 sm:$0xff] %v8177
        %v10234 = vld.sshfl [vmem:[#allocation1] sm:$0xff pattern:$0x73625140]
        %v10235 = vld.sshfl [vmem:[#allocation1 + $0x8] sm:$0xff pattern:$0x73625140]
        %vm10237 = vcmask 556032
        %v10238 = vsel %vm10237, %v10235, 0
        %v10241 = vsel %vm9585, %v10222, 0
        %v10244 = vsel %vm9585, %v10223, 0
        %v10247 = vsel %vm9585, %v10224, 0
        %v10250 = vsel %vm9585, %v10225, 0
        %v10253 = vsel %vm9585, %v10220, 0
        %10255 = vmatpush.bf16.msra.mxu0 %v10093
        %10256 = vmatpush.bf16.msra.mxu0 %v10089
        %10257 = vmatpush.bf16.msra.mxu0 %v10085
        %10258 = vmatpush.bf16.msra.mxu0 %v10081
        %10259 = vmatpush.bf16.msra.mxu0 %v9732
        %10260 = vmatpush.bf16.msra.mxu0 %v9692
        %10261 = vmatpush.bf16.msra.mxu0 %v9652
        %10262 = vmatpush.bf16.msra.mxu0 %v9612
        %10263 = vmatmul.bf16.gmra.mxu0 %v10234
        %v10264 = vpop.f32.mrf.mxu0
        %v10265 = vadd.f32 %v10230, %v10264
        %v10266 = vpop.f32.mrf.mxu0
        %10267 = vdwg.mxu0
        %10268 = vmatpush.bf16.msra.mxu0 0
        %10269 = vmatpush.bf16.msra.mxu0 0
        %10270 = vmatpush.bf16.msra.mxu0 0
        %10271 = vmatpush.bf16.msra.mxu0 %v10241
        %10272 = vmatpush.bf16.msra.mxu0 %v10187
        %10273 = vmatpush.bf16.msra.mxu0 %v10183
        %10274 = vmatpush.bf16.msra.mxu0 %v10179
        %10275 = vmatpush.bf16.msra.mxu0 %v10175
        %10276 = vmatmul.bf16.gmra.mxu0 %v10238
        %v10277 = vpop.f32.mrf.mxu0
        %v10278 = vadd.f32 %v10265, %v10277
        %v10279 = vpop.f32.mrf.mxu0
        %10280 = vdwg.mxu0
        %10281 = vmatpush.bf16.msra.mxu0 %v10094
        %10282 = vmatpush.bf16.msra.mxu0 %v10090
        %10283 = vmatpush.bf16.msra.mxu0 %v10086
        %10284 = vmatpush.bf16.msra.mxu0 %v10082
        %10285 = vmatpush.bf16.msra.mxu0 %v9735
        %10286 = vmatpush.bf16.msra.mxu0 %v9695
        %10287 = vmatpush.bf16.msra.mxu0 %v9655
        %10288 = vmatpush.bf16.msra.mxu0 %v9615
        %10289 = vmatmul.bf16.gmra.mxu0 %v10234
        %v10290 = vpop.f32.mrf.mxu0
        %v10291 = vadd.f32 %v10230, %v10290
        %v10292 = vpop.f32.mrf.mxu0
        %10293 = vdwg.mxu0
        %10294 = vmatpush.bf16.msra.mxu0 0
        %10295 = vmatpush.bf16.msra.mxu0 0
        %10296 = vmatpush.bf16.msra.mxu0 0
        %10297 = vmatpush.bf16.msra.mxu0 %v10244
        %10298 = vmatpush.bf16.msra.mxu0 %v10188
        %10299 = vmatpush.bf16.msra.mxu0 %v10184
        %10300 = vmatpush.bf16.msra.mxu0 %v10180
        %10301 = vmatpush.bf16.msra.mxu0 %v10176
        %10302 = vmatmul.bf16.gmra.mxu0 %v10238
        %v10303 = vpop.f32.mrf.mxu0
        %v10304 = vadd.f32 %v10291, %v10303
        %v10305 = vpop.f32.mrf.mxu0
        %10306 = vdwg.mxu0
        %10307 = vmatpush.bf16.msra.mxu0 %v10095
        %10308 = vmatpush.bf16.msra.mxu0 %v10091
        %10309 = vmatpush.bf16.msra.mxu0 %v10087
        %10310 = vmatpush.bf16.msra.mxu0 %v10083
        %10311 = vmatpush.bf16.msra.mxu0 %v9738
        %10312 = vmatpush.bf16.msra.mxu0 %v9698
        %10313 = vmatpush.bf16.msra.mxu0 %v9658
        %10314 = vmatpush.bf16.msra.mxu0 %v9618
        %10315 = vmatmul.bf16.gmra.mxu0 %v10234
        %v10316 = vpop.f32.mrf.mxu0
        %v10317 = vadd.f32 %v10230, %v10316
        %v10318 = vpop.f32.mrf.mxu0
        %10319 = vdwg.mxu0
        %10320 = vmatpush.bf16.msra.mxu0 0
        %10321 = vmatpush.bf16.msra.mxu0 0
        %10322 = vmatpush.bf16.msra.mxu0 0
        %10323 = vmatpush.bf16.msra.mxu0 %v10247
        %10324 = vmatpush.bf16.msra.mxu0 %v10189
        %10325 = vmatpush.bf16.msra.mxu0 %v10185
        %10326 = vmatpush.bf16.msra.mxu0 %v10181
        %10327 = vmatpush.bf16.msra.mxu0 %v10177
        %10328 = vmatmul.bf16.gmra.mxu0 %v10238
        %v10329 = vpop.f32.mrf.mxu0
        %v10330 = vadd.f32 %v10317, %v10329
        %v10331 = vpop.f32.mrf.mxu0
        %10332 = vdwg.mxu0
        %10333 = vmatpush.bf16.msra.mxu0 %v10096
        %10334 = vmatpush.bf16.msra.mxu0 %v10092
        %10335 = vmatpush.bf16.msra.mxu0 %v10088
        %10336 = vmatpush.bf16.msra.mxu0 %v10084
        %10337 = vmatpush.bf16.msra.mxu0 %v9741
        %10338 = vmatpush.bf16.msra.mxu0 %v9701
        %10339 = vmatpush.bf16.msra.mxu0 %v9661
        %10340 = vmatpush.bf16.msra.mxu0 %v9621
        %10341 = vmatmul.bf16.gmra.mxu0 %v10234
        %v10342 = vpop.f32.mrf.mxu0
        %v10343 = vadd.f32 %v10230, %v10342
        %v10344 = vpop.f32.mrf.mxu0
        %10345 = vdwg.mxu0
        %10346 = vmatpush.bf16.msra.mxu0 0
        %10347 = vmatpush.bf16.msra.mxu0 0
        %10348 = vmatpush.bf16.msra.mxu0 0
        %10349 = vmatpush.bf16.msra.mxu0 %v10250
        %10350 = vmatpush.bf16.msra.mxu0 %v10190
        %10351 = vmatpush.bf16.msra.mxu0 %v10186
        %10352 = vmatpush.bf16.msra.mxu0 %v10182
        %10353 = vmatpush.bf16.msra.mxu0 %v10178
        %10354 = vmatmul.bf16.gmra.mxu0 %v10238
        %v10355 = vpop.f32.mrf.mxu0
        %v10356 = vadd.f32 %v10343, %v10355
        %v10357 = vpop.f32.mrf.mxu0
        %10358 = vdwg.mxu0
        %10359 = vmatpush.bf16.msra.mxu0 %v10079
        %10360 = vmatpush.bf16.msra.mxu0 %v10069
        %10361 = vmatpush.bf16.msra.mxu0 %v10059
        %10362 = vmatpush.bf16.msra.mxu0 %v10049
        %10363 = vmatpush.bf16.msra.mxu0 %v9744
        %10364 = vmatpush.bf16.msra.mxu0 %v9704
        %10365 = vmatpush.bf16.msra.mxu0 %v9664
        %10366 = vmatpush.bf16.msra.mxu0 %v9624
        %10367 = vmatmul.bf16.gmra.mxu0 %v10234
        %v10368 = vpop.f32.mrf.mxu0
        %v10369 = vadd.f32 %v10230, %v10368
        %v10370 = vpop.f32.mrf.mxu0
        %10371 = vdwg.mxu0
        %10372 = vmatpush.bf16.msra.mxu0 0
        %10373 = vmatpush.bf16.msra.mxu0 0
        %10374 = vmatpush.bf16.msra.mxu0 0
        %10375 = vmatpush.bf16.msra.mxu0 %v10253
        %10376 = vmatpush.bf16.msra.mxu0 %v10173
        %10377 = vmatpush.bf16.msra.mxu0 %v10163
        %10378 = vmatpush.bf16.msra.mxu0 %v10153
        %10379 = vmatpush.bf16.msra.mxu0 %v10143
        %10380 = vmatmul.bf16.gmra.mxu0 %v10238
        %v10381 = vpop.f32.mrf.mxu0
        %v10382 = vadd.f32 %v10369, %v10381
        %v10383 = vpop.f32.mrf.mxu0
        %10384 = vdwg.mxu0
        %v10385 = vtanh.pop %v10278
        %v10386 = vtanh.pop %v10304
        %v10387 = vtanh.pop %v10330
        %v10388 = vtanh.pop %v10356
        %v10389 = vtanh.pop %v10382
        %v10394 = vrot.slane %v10386, 4
        %v10395 = vrot.slane %v10388, 4
        %v10396 = vsel %vm7669, %v10385, %v10394
        %v10397 = vsel %vm7669, %v10387, %v10395
        %10400 = vst [vmem:[%s501] sm:$0x77] %v10396
        %10401 = vst [vmem:[%s501 + $0x8] sm:$0x77] %v10397
        %vm10402 = vcmask 10240
        %10403 = vst.msk [vmem:[%s501 + $0x10] sm:$0x7] %vm10402, %v10389
        %p10404 = scmp.lt.s32.totalorder %s27, 1
        %s10405 = scalar_select %p10404, %s27, 1
        %s10406 = smul.addr %s10405, 5
        %s10407 = smul.addr %s10406, 4
        %s10408 = scalar_lea.vmem %s14, %s10407
        // Predicated region
        $region85: #{decoder_forward.1} parent=75 // pred_check
          %p10409 = pneg %p344
        $region86: #{decoder_forward.1} parent=75 // pred_check_branch
          %10411 = sbr.rel (%p10409) target = $region88
        $region87: #{decoder_forward.1} parent=75 // pred_region
          _
        $region88: #{decoder_forward.1} parent=75 // pred_fallthru
          _
      $region76: #{decoder_forward.1} parent=5 // pred_fallthru
        _
      %p10412 = scmp.le.s32.totalorder 2, %s22
      // Predicated region
      $region89: #{decoder_forward.1} parent=5 // pred_check
        %p10413 = pneg %p10412
      $region90: #{decoder_forward.1} parent=5 // pred_check_branch
        %10415 = sbr.rel (%p10413) target = $region92
      $region91: #{decoder_forward.1} parent=5 // pred_region
        %s10416 = ssub.s32 %s22, 2
        // Predicated region
        $region93: #{decoder_forward.1} parent=91 // pred_check
          %p10417 = pneg %p350
        $region94: #{decoder_forward.1} parent=91 // pred_check_branch
          %10419 = sbr.rel (%p10417) target = $region96
        $region95: #{decoder_forward.1} parent=91 // pred_region
          %p10420 = scmp.lt.s32.totalorder %s28, 1
          %s10421 = scalar_select %p10420, %s28, 1
          %s10422 = smul.addr %s10421, 5
          %s10423 = smul.addr %s10422, 4
          %s10424 = scalar_lea.vmem %s14, %s10423
        $region96: #{decoder_forward.1} parent=91 // pred_fallthru
          _
      $region92: #{decoder_forward.1} parent=5 // pred_fallthru
        _
    $region6: #{decoder_forward.1} parent=1 // loop_footer
      %s26 = sadd.s32 1, %s22
    $region7: #{decoder_forward.1} parent=1 // loop_footer_branch
      %21 = sbr.rel target = $region3
    $region8: #{decoder_forward.1} parent=1 // loop_exit
      _
    %10425 = vsyncpa [#allocation3], 1
    %s10426 = scalar_lea.sflag [#allocation3], 1
    %10427 = vsyncpa %s10426, 1
    %10428 = vsyncpa [#allocation5], 1

</llo_original>
